<compile_context>
chip_gen: v5e
topology: v5e:2x2
jax: 0.10.0
libtpu: 0.0.40
codegen_flags: <defaults>
</compile_context>

<pallas_src>
from functools import partial

import jax
import jax.numpy as jnp
from jax.experimental import pallas as pl
from jax.experimental.pallas import tpu as pltpu

_EPS = 1e-5
_SQRT_HALF = 0.7071067811865476


def _gelu_exact(x):
    # nn.GELU() default (approximate='none'): 0.5*x*(1+erf(x/sqrt(2)))
    return 0.5 * x * (1.0 + jax.lax.erf(x * _SQRT_HALF))


def _bn_gelu(y, gamma, beta):
    """Training-mode BatchNorm2d (stats over rows, biased var) + exact GELU.
    Single pass: sum and sum-of-squares.  y: (M, C); gamma/beta: (1, C)."""
    inv_m = 1.0 / y.shape[0]
    mean = jnp.sum(y, axis=0, keepdims=True) * inv_m
    ex2 = jnp.sum(y * y, axis=0, keepdims=True) * inv_m
    var = jnp.maximum(ex2 - mean * mean, 0.0)
    yhat = (y - mean) * jax.lax.rsqrt(var + _EPS)
    return _gelu_exact(yhat * gamma + beta)


def _unet_down_kernel(p_ref, w1_ref, b1_ref, g1_ref, be1_ref,
                      w2_ref, b2_ref, g2_ref, be2_ref,
                      o_ref, hpad_ref, qpad_ref, mpool_ref,
                      *, N, H, W):
    C = o_ref.shape[-1]
    R = N * H * W

    # ---- conv1 (single MXU matmul on im2col patches) -> BN1 -> GELU ---------
    y1 = jnp.dot(p_ref[...], w1_ref[...],
                 preferred_element_type=jnp.float32) + b1_ref[...]
    h1 = _bn_gelu(y1, g1_ref[...], be1_ref[...])                 # (R, C)

    # h1 with a zero border along H only (H is a leading dim -> aligned stores;
    # only the two border rows are zeroed, never the whole buffer).
    hpad_ref[:, 0:1, :, :] = jnp.zeros((N, 1, W, C), jnp.float32)
    hpad_ref[:, H + 1:H + 2, :, :] = jnp.zeros((N, 1, W, C), jnp.float32)
    hpad_ref[:, 1:H + 1, :, :] = h1.reshape(N, H, W, C)

    # ---- conv2 via output-shift decomposition -------------------------------
    # y2[n,h,w] = Q0[n,h,w-1] + Q1[n,h,w] + Q2[n,h,w+1]   (zero outside [0,W))
    # where Qkw[n,h,w,:] = sum_kh h1padH[n,h+kh,w,:] @ W2[kh,kw]
    q = [None, None, None]
    for kh in range(3):
        slab = hpad_ref[:, kh:kh + H, :, :].reshape(R, C)        # aligned H slices
        for kw in range(3):
            t = jnp.dot(slab, w2_ref[kh, kw],
                        preferred_element_type=jnp.float32)
            q[kw] = t if q[kw] is None else q[kw] + t

    # W-shifts of Q0 / Q2 through a W-padded scratch (width padded to a sublane
    # multiple so the slice->reshape stays aligned).  Exactly one unaligned store
    # (Q0 at offset 1) and one unaligned read (Q2 at offset 1) remain.
    qpad_ref[:, :, 0:1, :] = jnp.zeros((N, H, 1, C), jnp.float32)
    qpad_ref[:, :, 1:W + 1, :] = q[0].reshape(N, H, W, C)
    sq0 = qpad_ref[:, :, 0:W, :].reshape(R, C)                   # sq0[w] = Q0[w-1]

    qpad_ref[:, :, 0:W, :] = q[2].reshape(N, H, W, C)
    qpad_ref[:, :, W:W + 1, :] = jnp.zeros((N, H, 1, C), jnp.float32)
    sq2 = qpad_ref[:, :, 1:W + 1, :].reshape(R, C)               # sq2[w] = Q2[w+1]

    y2 = q[1] + sq0 + sq2 + b2_ref[...]
    h2 = _bn_gelu(y2, g2_ref[...], be2_ref[...])                 # (R, C)

    # ---- MaxPool2d(kernel=2, stride=2) ---------------------------------------
    Ho, Wo = H // 2, W // 2
    h2_5d = h2.reshape(N, Ho, 2, W, C)                           # leading split: free
    mpool_ref[...] = jnp.maximum(h2_5d[:, :, 0, :, :], h2_5d[:, :, 1, :, :])
    a = mpool_ref[:, :, pl.ds(0, Wo, 2), :]
    b = mpool_ref[:, :, pl.ds(1, Wo, 2), :]
    o_ref[...] = jnp.maximum(a, b)


def _full_spec(shape):
    nd = len(shape)
    return pl.BlockSpec(shape, lambda *_: (0,) * nd)


def init_params(key, in_channels, out_channels):
    k1, k2, k3, k4 = jax.random.split(key, 4)
    # Conv weights stored HWIO (3,3,Cin,Cout); deterministic synthetic init.
    w1 = jax.random.normal(k1, (3, 3, in_channels, out_channels), jnp.float32) * 0.1
    b1 = jax.random.normal(k2, (1, out_channels), jnp.float32) * 0.1
    w2 = jax.random.normal(k3, (3, 3, out_channels, out_channels), jnp.float32) * 0.1
    b2 = jax.random.normal(k4, (1, out_channels), jnp.float32) * 0.1
    # BatchNorm2d defaults: weight(gamma)=1, bias(beta)=0
    g1 = jnp.ones((1, out_channels), jnp.float32)
    be1 = jnp.zeros((1, out_channels), jnp.float32)
    g2 = jnp.ones((1, out_channels), jnp.float32)
    be2 = jnp.zeros((1, out_channels), jnp.float32)
    return dict(w1=w1, b1=b1, g1=g1, be1=be1, w2=w2, b2=b2, g2=g2, be2=be2)


@jax.jit
def unet_down(x_nchw, params):
    x = jnp.transpose(x_nchw, (0, 2, 3, 1)).astype(jnp.float32)   # NCHW -> NHWC
    N, H, W, Cin = x.shape
    assert H % 2 == 0 and W % 2 == 0, "MaxPool2d(2) assumes even spatial dims"
    Cout = params["w1"].shape[-1]
    Ho, Wo = H // 2, W // 2

    # im2col for conv1 (wrapper-side layout plumbing): (N*H*W, 9*Cin),
    # channel order (kh, kw, ci) matches w1.reshape(9*Cin, Cout).
    xp = jnp.pad(x, ((0, 0), (1, 1), (1, 1), (0, 0)))
    patches = jnp.concatenate(
        [xp[:, dy:dy + H, dx:dx + W, :] for dy in range(3) for dx in range(3)],
        axis=-1).reshape(N * H * W, 9 * Cin)
    w1m = params["w1"].reshape(9 * Cin, Cout)

    args = (patches, w1m, params["b1"], params["g1"], params["be1"],
            params["w2"], params["b2"], params["g2"], params["be2"])

    kernel = partial(_unet_down_kernel, N=N, H=H, W=W)
    out_nhwc = pl.pallas_call(
        kernel,
        out_shape=jax.ShapeDtypeStruct((N, Ho, Wo, Cout), jnp.float32),
        in_specs=[_full_spec(a.shape) for a in args],
        out_specs=_full_spec((N, Ho, Wo, Cout)),
        scratch_shapes=[
            pltpu.VMEM((N, H + 2, W, Cout), jnp.float32),   # H-padded h1
            pltpu.VMEM((N, H, W + 8, Cout), jnp.float32),   # W-shift staging
            pltpu.VMEM((N, Ho, W, Cout), jnp.float32),      # pool intermediate
        ],
        compiler_params=pltpu.CompilerParams(
            vmem_limit_bytes=32 * 1024 * 1024),
    )(*args)
    return jnp.transpose(out_nhwc, (0, 3, 1, 2))                  # NHWC -> NCHW


def unet_down_ref(x_nchw, params):
    """Pure-JAX reference (same math, XLA conv / reduce_window)."""
    x = jnp.transpose(x_nchw, (0, 2, 3, 1)).astype(jnp.float32)

    def conv(x, w, b):
        y = jax.lax.conv_general_dilated(
            x, w, window_strides=(1, 1), padding="SAME",
            dimension_numbers=("NHWC", "HWIO", "NHWC"))
        return y + b.reshape(1, 1, 1, -1)

    def bn_gelu(y, g, be):
        mean = jnp.mean(y, axis=(0, 1, 2), keepdims=True)
        var = jnp.mean(jnp.square(y - mean), axis=(0, 1, 2), keepdims=True)
        yh = (y - mean) / jnp.sqrt(var + _EPS)
        return jax.nn.gelu(yh * g.reshape(1, 1, 1, -1) + be.reshape(1, 1, 1, -1),
                           approximate=False)

    h1 = bn_gelu(conv(x, params["w1"], params["b1"]), params["g1"], params["be1"])
    h2 = bn_gelu(conv(h1, params["w2"], params["b2"]), params["g2"], params["be2"])
    pooled = jax.lax.reduce_window(h2, -jnp.inf, jax.lax.max,
                                   (1, 2, 2, 1), (1, 2, 2, 1), "VALID")
    return jnp.transpose(pooled, (0, 3, 1, 2))


if __name__ == "__main__":
    key = jax.random.PRNGKey(0)
    kx, kp = jax.random.split(key)
    in_channels, out_channels = 4, 8
    x = jax.random.normal(kx, (2, in_channels, 16, 16), jnp.float32)  # NCHW
    params = init_params(kp, in_channels, out_channels)

    out = unet_down(x, params)
    jax.block_until_ready(out)

    ref = unet_down_ref(x, params)
    assert out.shape == (2, out_channels, 8, 8), out.shape
    max_err = float(jnp.max(jnp.abs(out - ref)))
    assert max_err < 2e-3, f"mismatch vs JAX reference: {max_err}"
    print("KERNEL_OK")
</pallas_src>

<mosaic_0001>
module attributes {stable_mosaic.version = 11 : i64} {
  func.func @_unet_down_kernel(%arg0: memref<512x36xf32, #tpu.memory_space<vmem>>, %arg1: memref<36x8xf32, #tpu.memory_space<vmem>>, %arg2: memref<1x8xf32, #tpu.memory_space<vmem>>, %arg3: memref<1x8xf32, #tpu.memory_space<vmem>>, %arg4: memref<1x8xf32, #tpu.memory_space<vmem>>, %arg5: memref<3x3x8x8xf32, #tpu.memory_space<vmem>>, %arg6: memref<1x8xf32, #tpu.memory_space<vmem>>, %arg7: memref<1x8xf32, #tpu.memory_space<vmem>>, %arg8: memref<1x8xf32, #tpu.memory_space<vmem>>, %arg9: memref<2x8x8x8xf32, #tpu.memory_space<vmem>>, %arg10: memref<2x18x16x8xf32, #tpu.memory_space<vmem>>, %arg11: memref<2x16x24x8xf32, #tpu.memory_space<vmem>>, %arg12: memref<2x8x16x8xf32, #tpu.memory_space<vmem>>) attributes {dimension_semantics = [], scalar_prefetch = 0 : i64, scratch_operands = 3 : i64, tpu.core_type = #tpu.core_type<tc>} {
    %c0 = arith.constant 0 : index
    %c0_0 = arith.constant 0 : index
    %0 = vector.load %arg0[%c0, %c0_0] : memref<512x36xf32, #tpu.memory_space<vmem>>, vector<512x36xf32>
    %c0_1 = arith.constant 0 : index
    %c0_2 = arith.constant 0 : index
    %1 = vector.load %arg1[%c0_1, %c0_2] : memref<36x8xf32, #tpu.memory_space<vmem>>, vector<36x8xf32>
    %cst = arith.constant dense<0.000000e+00> : vector<512x8xf32>
    %2 = tpu.matmul %0, %1, %cst {dimension_numbers = #tpu.dot_dimension_numbers<[1], [0], [0], [1], [0, 0, 1, 1], [], []>} : vector<512x36xf32>, vector<36x8xf32>, vector<512x8xf32> -> vector<512x8xf32>
    %c0_3 = arith.constant 0 : index
    %c0_4 = arith.constant 0 : index
    %3 = vector.load %arg2[%c0_3, %c0_4] : memref<1x8xf32, #tpu.memory_space<vmem>>, vector<1x8xf32>
    %4 = vector.broadcast %3 : vector<1x8xf32> to vector<512x8xf32>
    %5 = arith.addf %2, %4 : vector<512x8xf32>
    %c0_5 = arith.constant 0 : index
    %c0_6 = arith.constant 0 : index
    %6 = vector.load %arg3[%c0_5, %c0_6] : memref<1x8xf32, #tpu.memory_space<vmem>>, vector<1x8xf32>
    %c0_7 = arith.constant 0 : index
    %c0_8 = arith.constant 0 : index
    %7 = vector.load %arg4[%c0_7, %c0_8] : memref<1x8xf32, #tpu.memory_space<vmem>>, vector<1x8xf32>
    %cst_9 = arith.constant dense<0.000000e+00> : vector<8xf32>
    %8 = vector.multi_reduction <add>, %5, %cst_9 [0] : vector<512x8xf32> to vector<8xf32>
    %9 = vector.shape_cast %8 : vector<8xf32> to vector<1x8xf32>
    %cst_10 = arith.constant 0.001953125 : f32
    %10 = vector.broadcast %cst_10 : f32 to vector<1x8xf32>
    %11 = arith.mulf %9, %10 : vector<1x8xf32>
    %12 = arith.mulf %5, %5 : vector<512x8xf32>
    %cst_11 = arith.constant dense<0.000000e+00> : vector<8xf32>
    %13 = vector.multi_reduction <add>, %12, %cst_11 [0] : vector<512x8xf32> to vector<8xf32>
    %14 = vector.shape_cast %13 : vector<8xf32> to vector<1x8xf32>
    %cst_12 = arith.constant 0.001953125 : f32
    %15 = vector.broadcast %cst_12 : f32 to vector<1x8xf32>
    %16 = arith.mulf %14, %15 : vector<1x8xf32>
    %17 = arith.mulf %11, %11 : vector<1x8xf32>
    %18 = arith.subf %16, %17 : vector<1x8xf32>
    %cst_13 = arith.constant 0.000000e+00 : f32
    %19 = vector.broadcast %cst_13 : f32 to vector<1x8xf32>
    %20 = arith.maximumf %18, %19 : vector<1x8xf32>
    %21 = vector.broadcast %11 : vector<1x8xf32> to vector<512x8xf32>
    %22 = arith.subf %5, %21 : vector<512x8xf32>
    %cst_14 = arith.constant 9.99999974E-6 : f32
    %23 = vector.broadcast %cst_14 : f32 to vector<1x8xf32>
    %24 = arith.addf %20, %23 : vector<1x8xf32>
    %25 = math.rsqrt %24 : vector<1x8xf32>
    %26 = vector.broadcast %25 : vector<1x8xf32> to vector<512x8xf32>
    %27 = arith.mulf %22, %26 : vector<512x8xf32>
    %28 = vector.broadcast %6 : vector<1x8xf32> to vector<512x8xf32>
    %29 = arith.mulf %27, %28 : vector<512x8xf32>
    %30 = vector.broadcast %7 : vector<1x8xf32> to vector<512x8xf32>
    %31 = arith.addf %29, %30 : vector<512x8xf32>
    %cst_15 = arith.constant 5.000000e-01 : f32
    %32 = vector.broadcast %cst_15 : f32 to vector<512x8xf32>
    %33 = arith.mulf %32, %31 : vector<512x8xf32>
    %cst_16 = arith.constant 0.707106769 : f32
    %34 = vector.broadcast %cst_16 : f32 to vector<512x8xf32>
    %35 = arith.mulf %31, %34 : vector<512x8xf32>
    %36 = math.erf %35 : vector<512x8xf32>
    %cst_17 = arith.constant 1.000000e+00 : f32
    %37 = vector.broadcast %cst_17 : f32 to vector<512x8xf32>
    %38 = arith.addf %37, %36 : vector<512x8xf32>
    %39 = arith.mulf %33, %38 : vector<512x8xf32>
    %cst_18 = arith.constant 0.000000e+00 : f32
    %40 = vector.broadcast %cst_18 : f32 to vector<2x1x16x8xf32>
    %c0_19 = arith.constant 0 : index
    %c0_20 = arith.constant 0 : index
    %c0_21 = arith.constant 0 : index
    %c0_22 = arith.constant 0 : index
    %41 = vector.load %arg10[%c0_19, %c0_20, %c0_21, %c0_22] : memref<2x18x16x8xf32, #tpu.memory_space<vmem>>, vector<2x1x16x8xf32>
    tpu.vector_store %arg10[%c0_19, %c0_20, %c0_21, %c0_22], %40 {strides = array<i32>} : memref<2x18x16x8xf32, #tpu.memory_space<vmem>>, vector<2x1x16x8xf32>,
    %cst_23 = arith.constant 0.000000e+00 : f32
    %42 = vector.broadcast %cst_23 : f32 to vector<2x1x16x8xf32>
    %c0_24 = arith.constant 0 : index
    %c17 = arith.constant 17 : index
    %c0_25 = arith.constant 0 : index
    %c0_26 = arith.constant 0 : index
    %43 = vector.load %arg10[%c0_24, %c17, %c0_25, %c0_26] : memref<2x18x16x8xf32, #tpu.memory_space<vmem>>, vector<2x1x16x8xf32>
    tpu.vector_store %arg10[%c0_24, %c17, %c0_25, %c0_26], %42 {strides = array<i32>} : memref<2x18x16x8xf32, #tpu.memory_space<vmem>>, vector<2x1x16x8xf32>,
    %44 = vector.shape_cast %39 : vector<512x8xf32> to vector<2x16x16x8xf32>
    %c0_27 = arith.constant 0 : index
    %c1 = arith.constant 1 : index
    %c0_28 = arith.constant 0 : index
    %c0_29 = arith.constant 0 : index
    %45 = vector.load %arg10[%c0_27, %c1, %c0_28, %c0_29] : memref<2x18x16x8xf32, #tpu.memory_space<vmem>>, vector<2x16x16x8xf32>
    tpu.vector_store %arg10[%c0_27, %c1, %c0_28, %c0_29], %44 {strides = array<i32>} : memref<2x18x16x8xf32, #tpu.memory_space<vmem>>, vector<2x16x16x8xf32>,
    %c0_30 = arith.constant 0 : index
    %c0_31 = arith.constant 0 : index
    %c0_32 = arith.constant 0 : index
    %c0_33 = arith.constant 0 : index
    %46 = vector.load %arg10[%c0_30, %c0_31, %c0_32, %c0_33] : memref<2x18x16x8xf32, #tpu.memory_space<vmem>>, vector<2x16x16x8xf32>
    %47 = vector.shape_cast %46 : vector<2x16x16x8xf32> to vector<512x8xf32>
    %c0_34 = arith.constant 0 : index
    %c0_35 = arith.constant 0 : index
    %c0_36 = arith.constant 0 : index
    %c0_37 = arith.constant 0 : index
    %48 = vector.load %arg5[%c0_34, %c0_35, %c0_36, %c0_37] : memref<3x3x8x8xf32, #tpu.memory_space<vmem>>, vector<1x1x8x8xf32>
    %49 = vector.shape_cast %48 : vector<1x1x8x8xf32> to vector<8x8xf32>
    %cst_38 = arith.constant dense<0.000000e+00> : vector<512x8xf32>
    %50 = tpu.matmul %47, %49, %cst_38 {dimension_numbers = #tpu.dot_dimension_numbers<[1], [0], [0], [1], [0, 0, 1, 1], [], []>} : vector<512x8xf32>, vector<8x8xf32>, vector<512x8xf32> -> vector<512x8xf32>
    %c0_39 = arith.constant 0 : index
    %c1_40 = arith.constant 1 : index
    %c0_41 = arith.constant 0 : index
    %c0_42 = arith.constant 0 : index
    %51 = vector.load %arg5[%c0_39, %c1_40, %c0_41, %c0_42] : memref<3x3x8x8xf32, #tpu.memory_space<vmem>>, vector<1x1x8x8xf32>
    %52 = vector.shape_cast %51 : vector<1x1x8x8xf32> to vector<8x8xf32>
    %cst_43 = arith.constant dense<0.000000e+00> : vector<512x8xf32>
    %53 = tpu.matmul %47, %52, %cst_43 {dimension_numbers = #tpu.dot_dimension_numbers<[1], [0], [0], [1], [0, 0, 1, 1], [], []>} : vector<512x8xf32>, vector<8x8xf32>, vector<512x8xf32> -> vector<512x8xf32>
    %c0_44 = arith.constant 0 : index
    %c2 = arith.constant 2 : index
    %c0_45 = arith.constant 0 : index
    %c0_46 = arith.constant 0 : index
    %54 = vector.load %arg5[%c0_44, %c2, %c0_45, %c0_46] : memref<3x3x8x8xf32, #tpu.memory_space<vmem>>, vector<1x1x8x8xf32>
    %55 = vector.shape_cast %54 : vector<1x1x8x8xf32> to vector<8x8xf32>
    %cst_47 = arith.constant dense<0.000000e+00> : vector<512x8xf32>
    %56 = tpu.matmul %47, %55, %cst_47 {dimension_numbers = #tpu.dot_dimension_numbers<[1], [0], [0], [1], [0, 0, 1, 1], [], []>} : vector<512x8xf32>, vector<8x8xf32>, vector<512x8xf32> -> vector<512x8xf32>
    %c0_48 = arith.constant 0 : index
    %c1_49 = arith.constant 1 : index
    %c0_50 = arith.constant 0 : index
    %c0_51 = arith.constant 0 : index
    %57 = vector.load %arg10[%c0_48, %c1_49, %c0_50, %c0_51] : memref<2x18x16x8xf32, #tpu.memory_space<vmem>>, vector<2x16x16x8xf32>
    %58 = vector.shape_cast %57 : vector<2x16x16x8xf32> to vector<512x8xf32>
    %c1_52 = arith.constant 1 : index
    %c0_53 = arith.constant 0 : index
    %c0_54 = arith.constant 0 : index
    %c0_55 = arith.constant 0 : index
    %59 = vector.load %arg5[%c1_52, %c0_53, %c0_54, %c0_55] : memref<3x3x8x8xf32, #tpu.memory_space<vmem>>, vector<1x1x8x8xf32>
    %60 = vector.shape_cast %59 : vector<1x1x8x8xf32> to vector<8x8xf32>
    %cst_56 = arith.constant dense<0.000000e+00> : vector<512x8xf32>
    %61 = tpu.matmul %58, %60, %cst_56 {dimension_numbers = #tpu.dot_dimension_numbers<[1], [0], [0], [1], [0, 0, 1, 1], [], []>} : vector<512x8xf32>, vector<8x8xf32>, vector<512x8xf32> -> vector<512x8xf32>
    %62 = arith.addf %50, %61 : vector<512x8xf32>
    %c1_57 = arith.constant 1 : index
    %c1_58 = arith.constant 1 : index
    %c0_59 = arith.constant 0 : index
    %c0_60 = arith.constant 0 : index
    %63 = vector.load %arg5[%c1_57, %c1_58, %c0_59, %c0_60] : memref<3x3x8x8xf32, #tpu.memory_space<vmem>>, vector<1x1x8x8xf32>
    %64 = vector.shape_cast %63 : vector<1x1x8x8xf32> to vector<8x8xf32>
    %cst_61 = arith.constant dense<0.000000e+00> : vector<512x8xf32>
    %65 = tpu.matmul %58, %64, %cst_61 {dimension_numbers = #tpu.dot_dimension_numbers<[1], [0], [0], [1], [0, 0, 1, 1], [], []>} : vector<512x8xf32>, vector<8x8xf32>, vector<512x8xf32> -> vector<512x8xf32>
    %66 = arith.addf %53, %65 : vector<512x8xf32>
    %c1_62 = arith.constant 1 : index
    %c2_63 = arith.constant 2 : index
    %c0_64 = arith.constant 0 : index
    %c0_65 = arith.constant 0 : index
    %67 = vector.load %arg5[%c1_62, %c2_63, %c0_64, %c0_65] : memref<3x3x8x8xf32, #tpu.memory_space<vmem>>, vector<1x1x8x8xf32>
    %68 = vector.shape_cast %67 : vector<1x1x8x8xf32> to vector<8x8xf32>
    %cst_66 = arith.constant dense<0.000000e+00> : vector<512x8xf32>
    %69 = tpu.matmul %58, %68, %cst_66 {dimension_numbers = #tpu.dot_dimension_numbers<[1], [0], [0], [1], [0, 0, 1, 1], [], []>} : vector<512x8xf32>, vector<8x8xf32>, vector<512x8xf32> -> vector<512x8xf32>
    %70 = arith.addf %56, %69 : vector<512x8xf32>
    %c0_67 = arith.constant 0 : index
    %c2_68 = arith.constant 2 : index
    %c0_69 = arith.constant 0 : index
    %c0_70 = arith.constant 0 : index
    %71 = vector.load %arg10[%c0_67, %c2_68, %c0_69, %c0_70] : memref<2x18x16x8xf32, #tpu.memory_space<vmem>>, vector<2x16x16x8xf32>
    %72 = vector.shape_cast %71 : vector<2x16x16x8xf32> to vector<512x8xf32>
    %c2_71 = arith.constant 2 : index
    %c0_72 = arith.constant 0 : index
    %c0_73 = arith.constant 0 : index
    %c0_74 = arith.constant 0 : index
    %73 = vector.load %arg5[%c2_71, %c0_72, %c0_73, %c0_74] : memref<3x3x8x8xf32, #tpu.memory_space<vmem>>, vector<1x1x8x8xf32>
    %74 = vector.shape_cast %73 : vector<1x1x8x8xf32> to vector<8x8xf32>
    %cst_75 = arith.constant dense<0.000000e+00> : vector<512x8xf32>
    %75 = tpu.matmul %72, %74, %cst_75 {dimension_numbers = #tpu.dot_dimension_numbers<[1], [0], [0], [1], [0, 0, 1, 1], [], []>} : vector<512x8xf32>, vector<8x8xf32>, vector<512x8xf32> -> vector<512x8xf32>
    %76 = arith.addf %62, %75 : vector<512x8xf32>
    %c2_76 = arith.constant 2 : index
    %c1_77 = arith.constant 1 : index
    %c0_78 = arith.constant 0 : index
    %c0_79 = arith.constant 0 : index
    %77 = vector.load %arg5[%c2_76, %c1_77, %c0_78, %c0_79] : memref<3x3x8x8xf32, #tpu.memory_space<vmem>>, vector<1x1x8x8xf32>
    %78 = vector.shape_cast %77 : vector<1x1x8x8xf32> to vector<8x8xf32>
    %cst_80 = arith.constant dense<0.000000e+00> : vector<512x8xf32>
    %79 = tpu.matmul %72, %78, %cst_80 {dimension_numbers = #tpu.dot_dimension_numbers<[1], [0], [0], [1], [0, 0, 1, 1], [], []>} : vector<512x8xf32>, vector<8x8xf32>, vector<512x8xf32> -> vector<512x8xf32>
    %80 = arith.addf %66, %79 : vector<512x8xf32>
    %c2_81 = arith.constant 2 : index
    %c2_82 = arith.constant 2 : index
    %c0_83 = arith.constant 0 : index
    %c0_84 = arith.constant 0 : index
    %81 = vector.load %arg5[%c2_81, %c2_82, %c0_83, %c0_84] : memref<3x3x8x8xf32, #tpu.memory_space<vmem>>, vector<1x1x8x8xf32>
    %82 = vector.shape_cast %81 : vector<1x1x8x8xf32> to vector<8x8xf32>
    %cst_85 = arith.constant dense<0.000000e+00> : vector<512x8xf32>
    %83 = tpu.matmul %72, %82, %cst_85 {dimension_numbers = #tpu.dot_dimension_numbers<[1], [0], [0], [1], [0, 0, 1, 1], [], []>} : vector<512x8xf32>, vector<8x8xf32>, vector<512x8xf32> -> vector<512x8xf32>
    %84 = arith.addf %70, %83 : vector<512x8xf32>
    %cst_86 = arith.constant 0.000000e+00 : f32
    %85 = vector.broadcast %cst_86 : f32 to vector<2x16x1x8xf32>
    %c0_87 = arith.constant 0 : index
    %c0_88 = arith.constant 0 : index
    %c0_89 = arith.constant 0 : index
    %c0_90 = arith.constant 0 : index
    %86 = vector.load %arg11[%c0_87, %c0_88, %c0_89, %c0_90] : memref<2x16x24x8xf32, #tpu.memory_space<vmem>>, vector<2x16x1x8xf32>
    tpu.vector_store %arg11[%c0_87, %c0_88, %c0_89, %c0_90], %85 {strides = array<i32>} : memref<2x16x24x8xf32, #tpu.memory_space<vmem>>, vector<2x16x1x8xf32>,
    %87 = vector.shape_cast %76 : vector<512x8xf32> to vector<2x16x16x8xf32>
    %c0_91 = arith.constant 0 : index
    %c0_92 = arith.constant 0 : index
    %c1_93 = arith.constant 1 : index
    %c0_94 = arith.constant 0 : index
    %88 = vector.load %arg11[%c0_91, %c0_92, %c1_93, %c0_94] : memref<2x16x24x8xf32, #tpu.memory_space<vmem>>, vector<2x16x16x8xf32>
    tpu.vector_store %arg11[%c0_91, %c0_92, %c1_93, %c0_94], %87 {strides = array<i32>} : memref<2x16x24x8xf32, #tpu.memory_space<vmem>>, vector<2x16x16x8xf32>,
    %c0_95 = arith.constant 0 : index
    %c0_96 = arith.constant 0 : index
    %c0_97 = arith.constant 0 : index
    %c0_98 = arith.constant 0 : index
    %89 = vector.load %arg11[%c0_95, %c0_96, %c0_97, %c0_98] : memref<2x16x24x8xf32, #tpu.memory_space<vmem>>, vector<2x16x16x8xf32>
    %90 = vector.shape_cast %89 : vector<2x16x16x8xf32> to vector<512x8xf32>
    %91 = vector.shape_cast %84 : vector<512x8xf32> to vector<2x16x16x8xf32>
    %c0_99 = arith.constant 0 : index
    %c0_100 = arith.constant 0 : index
    %c0_101 = arith.constant 0 : index
    %c0_102 = arith.constant 0 : index
    %92 = vector.load %arg11[%c0_99, %c0_100, %c0_101, %c0_102] : memref<2x16x24x8xf32, #tpu.memory_space<vmem>>, vector<2x16x16x8xf32>
    tpu.vector_store %arg11[%c0_99, %c0_100, %c0_101, %c0_102], %91 {strides = array<i32>} : memref<2x16x24x8xf32, #tpu.memory_space<vmem>>, vector<2x16x16x8xf32>,
    %cst_103 = arith.constant 0.000000e+00 : f32
    %93 = vector.broadcast %cst_103 : f32 to vector<2x16x1x8xf32>
    %c0_104 = arith.constant 0 : index
    %c0_105 = arith.constant 0 : index
    %c16 = arith.constant 16 : index
    %c0_106 = arith.constant 0 : index
    %94 = vector.load %arg11[%c0_104, %c0_105, %c16, %c0_106] : memref<2x16x24x8xf32, #tpu.memory_space<vmem>>, vector<2x16x1x8xf32>
    tpu.vector_store %arg11[%c0_104, %c0_105, %c16, %c0_106], %93 {strides = array<i32>} : memref<2x16x24x8xf32, #tpu.memory_space<vmem>>, vector<2x16x1x8xf32>,
    %c0_107 = arith.constant 0 : index
    %c0_108 = arith.constant 0 : index
    %c1_109 = arith.constant 1 : index
    %c0_110 = arith.constant 0 : index
    %95 = vector.load %arg11[%c0_107, %c0_108, %c1_109, %c0_110] : memref<2x16x24x8xf32, #tpu.memory_space<vmem>>, vector<2x16x16x8xf32>
    %96 = vector.shape_cast %95 : vector<2x16x16x8xf32> to vector<512x8xf32>
    %97 = arith.addf %80, %90 : vector<512x8xf32>
    %98 = arith.addf %97, %96 : vector<512x8xf32>
    %c0_111 = arith.constant 0 : index
    %c0_112 = arith.constant 0 : index
    %99 = vector.load %arg6[%c0_111, %c0_112] : memref<1x8xf32, #tpu.memory_space<vmem>>, vector<1x8xf32>
    %100 = vector.broadcast %99 : vector<1x8xf32> to vector<512x8xf32>
    %101 = arith.addf %98, %100 : vector<512x8xf32>
    %c0_113 = arith.constant 0 : index
    %c0_114 = arith.constant 0 : index
    %102 = vector.load %arg7[%c0_113, %c0_114] : memref<1x8xf32, #tpu.memory_space<vmem>>, vector<1x8xf32>
    %c0_115 = arith.constant 0 : index
    %c0_116 = arith.constant 0 : index
    %103 = vector.load %arg8[%c0_115, %c0_116] : memref<1x8xf32, #tpu.memory_space<vmem>>, vector<1x8xf32>
    %cst_117 = arith.constant dense<0.000000e+00> : vector<8xf32>
    %104 = vector.multi_reduction <add>, %101, %cst_117 [0] : vector<512x8xf32> to vector<8xf32>
    %105 = vector.shape_cast %104 : vector<8xf32> to vector<1x8xf32>
    %cst_118 = arith.constant 0.001953125 : f32
    %106 = vector.broadcast %cst_118 : f32 to vector<1x8xf32>
    %107 = arith.mulf %105, %106 : vector<1x8xf32>
    %108 = arith.mulf %101, %101 : vector<512x8xf32>
    %cst_119 = arith.constant dense<0.000000e+00> : vector<8xf32>
    %109 = vector.multi_reduction <add>, %108, %cst_119 [0] : vector<512x8xf32> to vector<8xf32>
    %110 = vector.shape_cast %109 : vector<8xf32> to vector<1x8xf32>
    %cst_120 = arith.constant 0.001953125 : f32
    %111 = vector.broadcast %cst_120 : f32 to vector<1x8xf32>
    %112 = arith.mulf %110, %111 : vector<1x8xf32>
    %113 = arith.mulf %107, %107 : vector<1x8xf32>
    %114 = arith.subf %112, %113 : vector<1x8xf32>
    %cst_121 = arith.constant 0.000000e+00 : f32
    %115 = vector.broadcast %cst_121 : f32 to vector<1x8xf32>
    %116 = arith.maximumf %114, %115 : vector<1x8xf32>
    %117 = vector.broadcast %107 : vector<1x8xf32> to vector<512x8xf32>
    %118 = arith.subf %101, %117 : vector<512x8xf32>
    %cst_122 = arith.constant 9.99999974E-6 : f32
    %119 = vector.broadcast %cst_122 : f32 to vector<1x8xf32>
    %120 = arith.addf %116, %119 : vector<1x8xf32>
    %121 = math.rsqrt %120 : vector<1x8xf32>
    %122 = vector.broadcast %121 : vector<1x8xf32> to vector<512x8xf32>
    %123 = arith.mulf %118, %122 : vector<512x8xf32>
    %124 = vector.broadcast %102 : vector<1x8xf32> to vector<512x8xf32>
    %125 = arith.mulf %123, %124 : vector<512x8xf32>
    %126 = vector.broadcast %103 : vector<1x8xf32> to vector<512x8xf32>
    %127 = arith.addf %125, %126 : vector<512x8xf32>
    %cst_123 = arith.constant 5.000000e-01 : f32
    %128 = vector.broadcast %cst_123 : f32 to vector<512x8xf32>
    %129 = arith.mulf %128, %127 : vector<512x8xf32>
    %cst_124 = arith.constant 0.707106769 : f32
    %130 = vector.broadcast %cst_124 : f32 to vector<512x8xf32>
    %131 = arith.mulf %127, %130 : vector<512x8xf32>
    %132 = math.erf %131 : vector<512x8xf32>
    %cst_125 = arith.constant 1.000000e+00 : f32
    %133 = vector.broadcast %cst_125 : f32 to vector<512x8xf32>
    %134 = arith.addf %133, %132 : vector<512x8xf32>
    %135 = arith.mulf %129, %134 : vector<512x8xf32>
    %136 = vector.shape_cast %135 : vector<512x8xf32> to vector<2x8x2x16x8xf32>
    %137 = vector.extract_strided_slice %136 {offsets = [0, 0, 0, 0, 0], sizes = [2, 8, 1, 16, 8], strides = [1, 1, 1, 1, 1]} : vector<2x8x2x16x8xf32> to vector<2x8x1x16x8xf32>
    %138 = vector.shape_cast %137 : vector<2x8x1x16x8xf32> to vector<2x8x16x8xf32>
    %139 = vector.extract_strided_slice %136 {offsets = [0, 0, 1, 0, 0], sizes = [2, 8, 1, 16, 8], strides = [1, 1, 1, 1, 1]} : vector<2x8x2x16x8xf32> to vector<2x8x1x16x8xf32>
    %140 = vector.shape_cast %139 : vector<2x8x1x16x8xf32> to vector<2x8x16x8xf32>
    %141 = arith.maximumf %138, %140 : vector<2x8x16x8xf32>
    %c0_126 = arith.constant 0 : index
    %c0_127 = arith.constant 0 : index
    %c0_128 = arith.constant 0 : index
    %c0_129 = arith.constant 0 : index
    %142 = vector.load %arg12[%c0_126, %c0_127, %c0_128, %c0_129] : memref<2x8x16x8xf32, #tpu.memory_space<vmem>>, vector<2x8x16x8xf32>
    tpu.vector_store %arg12[%c0_126, %c0_127, %c0_128, %c0_129], %141 {strides = array<i32>} : memref<2x8x16x8xf32, #tpu.memory_space<vmem>>, vector<2x8x16x8xf32>,
    %c0_130 = arith.constant 0 : index
    %c0_131 = arith.constant 0 : index
    %c0_132 = arith.constant 0 : index
    %c0_133 = arith.constant 0 : index
    %143 = tpu.strided_load %arg12[%c0_130, %c0_131, %c0_132, %c0_133] {strides = array<i32: 1, 1, 2, 1>} : memref<2x8x16x8xf32, #tpu.memory_space<vmem>>, vector<2x8x8x8xf32>
    %c0_134 = arith.constant 0 : index
    %c0_135 = arith.constant 0 : index
    %c1_136 = arith.constant 1 : index
    %c0_137 = arith.constant 0 : index
    %144 = tpu.strided_load %arg12[%c0_134, %c0_135, %c1_136, %c0_137] {strides = array<i32: 1, 1, 2, 1>} : memref<2x8x16x8xf32, #tpu.memory_space<vmem>>, vector<2x8x8x8xf32>
    %145 = arith.maximumf %143, %144 : vector<2x8x8x8xf32>
    %c0_138 = arith.constant 0 : index
    %c0_139 = arith.constant 0 : index
    %c0_140 = arith.constant 0 : index
    %c0_141 = arith.constant 0 : index
    %146 = vector.load %arg9[%c0_138, %c0_139, %c0_140, %c0_141] : memref<2x8x8x8xf32, #tpu.memory_space<vmem>>, vector<2x8x8x8xf32>
    tpu.vector_store %arg9[%c0_138, %c0_139, %c0_140, %c0_141], %145 {strides = array<i32>} : memref<2x8x8x8xf32, #tpu.memory_space<vmem>>, vector<2x8x8x8xf32>,
    return
  }
}

</mosaic_0001>

<llo_original>
// kernel: unet_down.1
$region0: #{unet_down.1}
  #allocation0 [shape = 'u32[]', space=smem, size = 0x4, offset = 0x4, fixed_abs, tag = 'smem constant byte address 0x4 - core index']
  #allocation1 [shape = 'u32[72,128]{1,0:T(1,128)}', space=vmem, size = 0x9000, scoped, tag = 'internal scratch']
  #allocation2 [shape = 'f32[2,18,16,8]{3,2,1,0:T(8,128)}', space=vmem, size = 0x48000, scoped, tag = 'scratch operand']
  #allocation3 [shape = 'f32[2,16,24,8]{3,2,1,0:T(8,128)}', space=vmem, size = 0x60000, scoped, tag = 'scratch operand']
  #allocation4 [shape = 'f32[2,8,16,8]{3,2,1,0:T(8,128)}', space=vmem, size = 0x20000, scoped, tag = 'scratch operand']
  %s0 = inlined_call_operand.vmem [shape: f32[512,36], index: 0, kind: input, shape index: {}]
  %s1 = inlined_call_operand.vmem [shape: f32[36,8], index: 1, kind: input, shape index: {}]
  %s2 = inlined_call_operand.vmem [shape: f32[1,8], index: 2, kind: input, shape index: {}]
  %s3 = inlined_call_operand.vmem [shape: f32[1,8], index: 3, kind: input, shape index: {}]
  %s4 = inlined_call_operand.vmem [shape: f32[1,8], index: 4, kind: input, shape index: {}]
  %s5 = inlined_call_operand.vmem [shape: f32[3,3,8,8], index: 5, kind: input, shape index: {}]
  %s6 = inlined_call_operand.vmem [shape: f32[1,8], index: 6, kind: input, shape index: {}]
  %s7 = inlined_call_operand.vmem [shape: f32[1,8], index: 7, kind: input, shape index: {}]
  %s8 = inlined_call_operand.vmem [shape: f32[1,8], index: 8, kind: input, shape index: {}]
  %s9 = inlined_call_operand.vmem [shape: f32[2,8,8,8], index: 9, kind: output, shape index: {}]
  %s10 = sld [smem:[#allocation0]]
  $region46: #{unet_down.1} parent=0
    _
  %s12 = ssub.s32 1, %s10
  %s13 = scalar_select 0, %s12, %s10
  // Predicated region
  $region2: #{unet_down.1} parent=0 // pred_check
    _
  $region3: #{unet_down.1} parent=0 // pred_check_branch
    %15 = sbr.rel (0) target = $region5
  $region4: #{unet_down.1} parent=0 // pred_region
    _
  $region5: #{unet_down.1} parent=0 // pred_fallthru
    _
  // Predicated region
  $region6: #{unet_down.1} parent=0 // pred_check
    _
  $region7: #{unet_down.1} parent=0 // pred_check_branch
    %17 = sbr.rel (0) target = $region9
  $region8: #{unet_down.1} parent=0 // pred_region
    _
  $region9: #{unet_down.1} parent=0 // pred_fallthru
    _
  // Predicated region
  $region10: #{unet_down.1} parent=0 // pred_check
    _
  $region11: #{unet_down.1} parent=0 // pred_check_branch
    %19 = sbr.rel (0) target = $region13
  $region12: #{unet_down.1} parent=0 // pred_region
    _
  $region13: #{unet_down.1} parent=0 // pred_fallthru
    _
  // Predicated region
  $region14: #{unet_down.1} parent=0 // pred_check
    _
  $region15: #{unet_down.1} parent=0 // pred_check_branch
    %21 = sbr.rel (0) target = $region17
  $region16: #{unet_down.1} parent=0 // pred_region
    _
  $region17: #{unet_down.1} parent=0 // pred_fallthru
    _
  // Predicated region
  $region18: #{unet_down.1} parent=0 // pred_check
    _
  $region19: #{unet_down.1} parent=0 // pred_check_branch
    %23 = sbr.rel (0) target = $region21
  $region20: #{unet_down.1} parent=0 // pred_region
    _
  $region21: #{unet_down.1} parent=0 // pred_fallthru
    _
  // Predicated region
  $region22: #{unet_down.1} parent=0 // pred_check
    _
  $region23: #{unet_down.1} parent=0 // pred_check_branch
    %25 = sbr.rel (0) target = $region25
  $region24: #{unet_down.1} parent=0 // pred_region
    _
  $region25: #{unet_down.1} parent=0 // pred_fallthru
    _
  // Predicated region
  $region26: #{unet_down.1} parent=0 // pred_check
    _
  $region27: #{unet_down.1} parent=0 // pred_check_branch
    %27 = sbr.rel (0) target = $region29
  $region28: #{unet_down.1} parent=0 // pred_region
    _
  $region29: #{unet_down.1} parent=0 // pred_fallthru
    _
  // Predicated region
  $region30: #{unet_down.1} parent=0 // pred_check
    _
  $region31: #{unet_down.1} parent=0 // pred_check_branch
    %29 = sbr.rel (0) target = $region33
  $region32: #{unet_down.1} parent=0 // pred_region
    _
  $region33: #{unet_down.1} parent=0 // pred_fallthru
    _
  // Predicated region
  $region34: #{unet_down.1} parent=0 // pred_check
    _
  $region35: #{unet_down.1} parent=0 // pred_check_branch
    %31 = sbr.rel (0) target = $region37
  $region36: #{unet_down.1} parent=0 // pred_region
    _
  $region37: #{unet_down.1} parent=0 // pred_fallthru
    _
  %v32 = vld [vmem:[%s0] sm:$0xff]
  %v33 = vld [vmem:[%s0 + $0x8] sm:$0xff]
  %v34 = vld [vmem:[%s0 + $0x10] sm:$0xff]
  %v35 = vld [vmem:[%s0 + $0x18] sm:$0xff]
  %v36 = vld [vmem:[%s0 + $0x20] sm:$0xff]
  %v37 = vld [vmem:[%s0 + $0x28] sm:$0xff]
  %v38 = vld [vmem:[%s0 + $0x30] sm:$0xff]
  %v39 = vld [vmem:[%s0 + $0x38] sm:$0xff]
  %v40 = vld [vmem:[%s0 + $0x40] sm:$0xff]
  %v41 = vld [vmem:[%s0 + $0x48] sm:$0xff]
  %v42 = vld [vmem:[%s0 + $0x50] sm:$0xff]
  %v43 = vld [vmem:[%s0 + $0x58] sm:$0xff]
  %v44 = vld [vmem:[%s0 + $0x60] sm:$0xff]
  %v45 = vld [vmem:[%s0 + $0x68] sm:$0xff]
  %v46 = vld [vmem:[%s0 + $0x70] sm:$0xff]
  %v47 = vld [vmem:[%s0 + $0x78] sm:$0xff]
  %v48 = vld [vmem:[%s0 + $0x80] sm:$0xff]
  %v49 = vld [vmem:[%s0 + $0x88] sm:$0xff]
  %v50 = vld [vmem:[%s0 + $0x90] sm:$0xff]
  %v51 = vld [vmem:[%s0 + $0x98] sm:$0xff]
  %v52 = vld [vmem:[%s0 + $0xa0] sm:$0xff]
  %v53 = vld [vmem:[%s0 + $0xa8] sm:$0xff]
  %v54 = vld [vmem:[%s0 + $0xb0] sm:$0xff]
  %v55 = vld [vmem:[%s0 + $0xb8] sm:$0xff]
  %v56 = vld [vmem:[%s0 + $0xc0] sm:$0xff]
  %v57 = vld [vmem:[%s0 + $0xc8] sm:$0xff]
  %v58 = vld [vmem:[%s0 + $0xd0] sm:$0xff]
  %v59 = vld [vmem:[%s0 + $0xd8] sm:$0xff]
  %v60 = vld [vmem:[%s0 + $0xe0] sm:$0xff]
  %v61 = vld [vmem:[%s0 + $0xe8] sm:$0xff]
  %v62 = vld [vmem:[%s0 + $0xf0] sm:$0xff]
  %v63 = vld [vmem:[%s0 + $0xf8] sm:$0xff]
  %v64 = vld [vmem:[%s0 + $0x100] sm:$0xff]
  %v65 = vld [vmem:[%s0 + $0x108] sm:$0xff]
  %v66 = vld [vmem:[%s0 + $0x110] sm:$0xff]
  %v67 = vld [vmem:[%s0 + $0x118] sm:$0xff]
  %v68 = vld [vmem:[%s0 + $0x120] sm:$0xff]
  %v69 = vld [vmem:[%s0 + $0x128] sm:$0xff]
  %v70 = vld [vmem:[%s0 + $0x130] sm:$0xff]
  %v71 = vld [vmem:[%s0 + $0x138] sm:$0xff]
  %v72 = vld [vmem:[%s0 + $0x140] sm:$0xff]
  %v73 = vld [vmem:[%s0 + $0x148] sm:$0xff]
  %v74 = vld [vmem:[%s0 + $0x150] sm:$0xff]
  %v75 = vld [vmem:[%s0 + $0x158] sm:$0xff]
  %v76 = vld [vmem:[%s0 + $0x160] sm:$0xff]
  %v77 = vld [vmem:[%s0 + $0x168] sm:$0xff]
  %v78 = vld [vmem:[%s0 + $0x170] sm:$0xff]
  %v79 = vld [vmem:[%s0 + $0x178] sm:$0xff]
  %v80 = vld [vmem:[%s0 + $0x180] sm:$0xff]
  %v81 = vld [vmem:[%s0 + $0x188] sm:$0xff]
  %v82 = vld [vmem:[%s0 + $0x190] sm:$0xff]
  %v83 = vld [vmem:[%s0 + $0x198] sm:$0xff]
  %v84 = vld [vmem:[%s0 + $0x1a0] sm:$0xff]
  %v85 = vld [vmem:[%s0 + $0x1a8] sm:$0xff]
  %v86 = vld [vmem:[%s0 + $0x1b0] sm:$0xff]
  %v87 = vld [vmem:[%s0 + $0x1b8] sm:$0xff]
  %v88 = vld [vmem:[%s0 + $0x1c0] sm:$0xff]
  %v89 = vld [vmem:[%s0 + $0x1c8] sm:$0xff]
  %v90 = vld [vmem:[%s0 + $0x1d0] sm:$0xff]
  %v91 = vld [vmem:[%s0 + $0x1d8] sm:$0xff]
  %v92 = vld [vmem:[%s0 + $0x1e0] sm:$0xff]
  %v93 = vld [vmem:[%s0 + $0x1e8] sm:$0xff]
  %v94 = vld [vmem:[%s0 + $0x1f0] sm:$0xff]
  %v95 = vld [vmem:[%s0 + $0x1f8] sm:$0xff]
  %v96 = vld [vmem:[%s1] sm:$0xff]
  %v97 = vld [vmem:[%s1 + $0x8] sm:$0xff]
  %v98 = vld [vmem:[%s1 + $0x10] sm:$0xff]
  %v99 = vld [vmem:[%s1 + $0x18] sm:$0xff]
  %v100 = vld [vmem:[%s1 + $0x20] sm:$0xf]
  %v101 = vld [vmem:[%s2] sm:$0x1]
  %v103 = vperm.slane %v101, 0
  %vm105 = vcmask 293888
  %v107 = vsel %vm105, %v32, 0
  %v110 = vsel %vm105, %v33, 0
  %v113 = vsel %vm105, %v34, 0
  %v116 = vsel %vm105, %v35, 0
  %v119 = vsel %vm105, %v36, 0
  %v122 = vsel %vm105, %v37, 0
  %v125 = vsel %vm105, %v38, 0
  %v128 = vsel %vm105, %v39, 0
  %v131 = vsel %vm105, %v40, 0
  %v134 = vsel %vm105, %v41, 0
  %v137 = vsel %vm105, %v42, 0
  %v140 = vsel %vm105, %v43, 0
  %v143 = vsel %vm105, %v44, 0
  %v146 = vsel %vm105, %v45, 0
  %v149 = vsel %vm105, %v46, 0
  %v152 = vsel %vm105, %v47, 0
  %v155 = vsel %vm105, %v48, 0
  %v158 = vsel %vm105, %v49, 0
  %v161 = vsel %vm105, %v50, 0
  %v164 = vsel %vm105, %v51, 0
  %v167 = vsel %vm105, %v52, 0
  %v170 = vsel %vm105, %v53, 0
  %v173 = vsel %vm105, %v54, 0
  %v176 = vsel %vm105, %v55, 0
  %v179 = vsel %vm105, %v56, 0
  %v182 = vsel %vm105, %v57, 0
  %v185 = vsel %vm105, %v58, 0
  %v188 = vsel %vm105, %v59, 0
  %v191 = vsel %vm105, %v60, 0
  %v194 = vsel %vm105, %v61, 0
  %v197 = vsel %vm105, %v62, 0
  %v200 = vsel %vm105, %v63, 0
  %v203 = vsel %vm105, %v64, 0
  %v206 = vsel %vm105, %v65, 0
  %v209 = vsel %vm105, %v66, 0
  %v212 = vsel %vm105, %v67, 0
  %v215 = vsel %vm105, %v68, 0
  %v218 = vsel %vm105, %v69, 0
  %v221 = vsel %vm105, %v70, 0
  %v224 = vsel %vm105, %v71, 0
  %v227 = vsel %vm105, %v72, 0
  %v230 = vsel %vm105, %v73, 0
  %v233 = vsel %vm105, %v74, 0
  %v236 = vsel %vm105, %v75, 0
  %v239 = vsel %vm105, %v76, 0
  %v242 = vsel %vm105, %v77, 0
  %v245 = vsel %vm105, %v78, 0
  %v248 = vsel %vm105, %v79, 0
  %v251 = vsel %vm105, %v80, 0
  %v254 = vsel %vm105, %v81, 0
  %v257 = vsel %vm105, %v82, 0
  %v260 = vsel %vm105, %v83, 0
  %v263 = vsel %vm105, %v84, 0
  %v266 = vsel %vm105, %v85, 0
  %v269 = vsel %vm105, %v86, 0
  %v272 = vsel %vm105, %v87, 0
  %v275 = vsel %vm105, %v88, 0
  %v278 = vsel %vm105, %v89, 0
  %v281 = vsel %vm105, %v90, 0
  %v284 = vsel %vm105, %v91, 0
  %v287 = vsel %vm105, %v92, 0
  %v290 = vsel %vm105, %v93, 0
  %v293 = vsel %vm105, %v94, 0
  %v296 = vsel %vm105, %v95, 0
  %vm298 = vcmask 1043456
  %v300 = vsel %vm298, %v100, 0
  %302 = vmatpush.msra.mxu0 0.0
  %303 = vmatpush.msra.mxu0 0.0
  %304 = vmatpush.msra.mxu0 0.0
  %305 = vmatpush.msra.mxu0 0.0
  %306 = vmatpush.msra.mxu0 0.0
  %307 = vmatpush.msra.mxu0 0.0
  %308 = vmatpush.msra.mxu0 0.0
  %309 = vmatpush.msra.mxu0 0.0
  %310 = vmatpush.msra.mxu0 0.0
  %311 = vmatpush.msra.mxu0 0.0
  %312 = vmatpush.msra.mxu0 0.0
  %313 = vmatpush.msra.mxu0 %v300
  %314 = vmatpush.msra.mxu0 %v99
  %315 = vmatpush.msra.mxu0 %v98
  %316 = vmatpush.msra.mxu0 %v97
  %317 = vmatpush.msra.mxu0 %v96
  %318 = vmatmul.f32.gmra.mxu0 %v107
  %v319 = vpop.f32.mrf.mxu0
  %v320 = vadd.f32 %v103, %v319
  %321 = vmatmul.f32.gmra.mxu0 %v110
  %v322 = vpop.f32.mrf.mxu0
  %v323 = vadd.f32 %v103, %v322
  %324 = vmatmul.f32.gmra.mxu0 %v113
  %v325 = vpop.f32.mrf.mxu0
  %v326 = vadd.f32 %v103, %v325
  %327 = vmatmul.f32.gmra.mxu0 %v116
  %v328 = vpop.f32.mrf.mxu0
  %v329 = vadd.f32 %v103, %v328
  %330 = vmatmul.f32.gmra.mxu0 %v119
  %v331 = vpop.f32.mrf.mxu0
  %v332 = vadd.f32 %v103, %v331
  %333 = vmatmul.f32.gmra.mxu0 %v122
  %v334 = vpop.f32.mrf.mxu0
  %v335 = vadd.f32 %v103, %v334
  %336 = vmatmul.f32.gmra.mxu0 %v125
  %v337 = vpop.f32.mrf.mxu0
  %v338 = vadd.f32 %v103, %v337
  %339 = vmatmul.f32.gmra.mxu0 %v128
  %v340 = vpop.f32.mrf.mxu0
  %v341 = vadd.f32 %v103, %v340
  %342 = vmatmul.f32.gmra.mxu0 %v131
  %v343 = vpop.f32.mrf.mxu0
  %v344 = vadd.f32 %v103, %v343
  %345 = vmatmul.f32.gmra.mxu0 %v134
  %v346 = vpop.f32.mrf.mxu0
  %v347 = vadd.f32 %v103, %v346
  %348 = vmatmul.f32.gmra.mxu0 %v137
  %v349 = vpop.f32.mrf.mxu0
  %v350 = vadd.f32 %v103, %v349
  %351 = vmatmul.f32.gmra.mxu0 %v140
  %v352 = vpop.f32.mrf.mxu0
  %v353 = vadd.f32 %v103, %v352
  %354 = vmatmul.f32.gmra.mxu0 %v143
  %v355 = vpop.f32.mrf.mxu0
  %v356 = vadd.f32 %v103, %v355
  %357 = vmatmul.f32.gmra.mxu0 %v146
  %v358 = vpop.f32.mrf.mxu0
  %v359 = vadd.f32 %v103, %v358
  %360 = vmatmul.f32.gmra.mxu0 %v149
  %v361 = vpop.f32.mrf.mxu0
  %v362 = vadd.f32 %v103, %v361
  %363 = vmatmul.f32.gmra.mxu0 %v152
  %v364 = vpop.f32.mrf.mxu0
  %v365 = vadd.f32 %v103, %v364
  %366 = vmatmul.f32.gmra.mxu0 %v155
  %v367 = vpop.f32.mrf.mxu0
  %v368 = vadd.f32 %v103, %v367
  %369 = vmatmul.f32.gmra.mxu0 %v158
  %v370 = vpop.f32.mrf.mxu0
  %v371 = vadd.f32 %v103, %v370
  %372 = vmatmul.f32.gmra.mxu0 %v161
  %v373 = vpop.f32.mrf.mxu0
  %v374 = vadd.f32 %v103, %v373
  %375 = vmatmul.f32.gmra.mxu0 %v164
  %v376 = vpop.f32.mrf.mxu0
  %v377 = vadd.f32 %v103, %v376
  %378 = vmatmul.f32.gmra.mxu0 %v167
  %v379 = vpop.f32.mrf.mxu0
  %v380 = vadd.f32 %v103, %v379
  %381 = vmatmul.f32.gmra.mxu0 %v170
  %v382 = vpop.f32.mrf.mxu0
  %v383 = vadd.f32 %v103, %v382
  %384 = vmatmul.f32.gmra.mxu0 %v173
  %v385 = vpop.f32.mrf.mxu0
  %v386 = vadd.f32 %v103, %v385
  %387 = vmatmul.f32.gmra.mxu0 %v176
  %v388 = vpop.f32.mrf.mxu0
  %v389 = vadd.f32 %v103, %v388
  %390 = vmatmul.f32.gmra.mxu0 %v179
  %v391 = vpop.f32.mrf.mxu0
  %v392 = vadd.f32 %v103, %v391
  %393 = vmatmul.f32.gmra.mxu0 %v182
  %v394 = vpop.f32.mrf.mxu0
  %v395 = vadd.f32 %v103, %v394
  %396 = vmatmul.f32.gmra.mxu0 %v185
  %v397 = vpop.f32.mrf.mxu0
  %v398 = vadd.f32 %v103, %v397
  %399 = vmatmul.f32.gmra.mxu0 %v188
  %v400 = vpop.f32.mrf.mxu0
  %v401 = vadd.f32 %v103, %v400
  %402 = vmatmul.f32.gmra.mxu0 %v191
  %v403 = vpop.f32.mrf.mxu0
  %v404 = vadd.f32 %v103, %v403
  %405 = vmatmul.f32.gmra.mxu0 %v194
  %v406 = vpop.f32.mrf.mxu0
  %v407 = vadd.f32 %v103, %v406
  %408 = vmatmul.f32.gmra.mxu0 %v197
  %v409 = vpop.f32.mrf.mxu0
  %v410 = vadd.f32 %v103, %v409
  %411 = vmatmul.f32.gmra.mxu0 %v200
  %v412 = vpop.f32.mrf.mxu0
  %v413 = vadd.f32 %v103, %v412
  %414 = vmatmul.f32.gmra.mxu0 %v203
  %v415 = vpop.f32.mrf.mxu0
  %v416 = vadd.f32 %v103, %v415
  %417 = vmatmul.f32.gmra.mxu0 %v206
  %v418 = vpop.f32.mrf.mxu0
  %v419 = vadd.f32 %v103, %v418
  %420 = vmatmul.f32.gmra.mxu0 %v209
  %v421 = vpop.f32.mrf.mxu0
  %v422 = vadd.f32 %v103, %v421
  %423 = vmatmul.f32.gmra.mxu0 %v212
  %v424 = vpop.f32.mrf.mxu0
  %v425 = vadd.f32 %v103, %v424
  %426 = vmatmul.f32.gmra.mxu0 %v215
  %v427 = vpop.f32.mrf.mxu0
  %v428 = vadd.f32 %v103, %v427
  %429 = vmatmul.f32.gmra.mxu0 %v218
  %v430 = vpop.f32.mrf.mxu0
  %v431 = vadd.f32 %v103, %v430
  %432 = vmatmul.f32.gmra.mxu0 %v221
  %v433 = vpop.f32.mrf.mxu0
  %v434 = vadd.f32 %v103, %v433
  %435 = vmatmul.f32.gmra.mxu0 %v224
  %v436 = vpop.f32.mrf.mxu0
  %v437 = vadd.f32 %v103, %v436
  %438 = vmatmul.f32.gmra.mxu0 %v227
  %v439 = vpop.f32.mrf.mxu0
  %v440 = vadd.f32 %v103, %v439
  %441 = vmatmul.f32.gmra.mxu0 %v230
  %v442 = vpop.f32.mrf.mxu0
  %v443 = vadd.f32 %v103, %v442
  %444 = vmatmul.f32.gmra.mxu0 %v233
  %v445 = vpop.f32.mrf.mxu0
  %v446 = vadd.f32 %v103, %v445
  %447 = vmatmul.f32.gmra.mxu0 %v236
  %v448 = vpop.f32.mrf.mxu0
  %v449 = vadd.f32 %v103, %v448
  %450 = vmatmul.f32.gmra.mxu0 %v239
  %v451 = vpop.f32.mrf.mxu0
  %v452 = vadd.f32 %v103, %v451
  %453 = vmatmul.f32.gmra.mxu0 %v242
  %v454 = vpop.f32.mrf.mxu0
  %v455 = vadd.f32 %v103, %v454
  %456 = vmatmul.f32.gmra.mxu0 %v245
  %v457 = vpop.f32.mrf.mxu0
  %v458 = vadd.f32 %v103, %v457
  %459 = vmatmul.f32.gmra.mxu0 %v248
  %v460 = vpop.f32.mrf.mxu0
  %v461 = vadd.f32 %v103, %v460
  %462 = vmatmul.f32.gmra.mxu0 %v251
  %v463 = vpop.f32.mrf.mxu0
  %v464 = vadd.f32 %v103, %v463
  %465 = vmatmul.f32.gmra.mxu0 %v254
  %v466 = vpop.f32.mrf.mxu0
  %v467 = vadd.f32 %v103, %v466
  %468 = vmatmul.f32.gmra.mxu0 %v257
  %v469 = vpop.f32.mrf.mxu0
  %v470 = vadd.f32 %v103, %v469
  %471 = vmatmul.f32.gmra.mxu0 %v260
  %v472 = vpop.f32.mrf.mxu0
  %v473 = vadd.f32 %v103, %v472
  %474 = vmatmul.f32.gmra.mxu0 %v263
  %v475 = vpop.f32.mrf.mxu0
  %v476 = vadd.f32 %v103, %v475
  %477 = vmatmul.f32.gmra.mxu0 %v266
  %v478 = vpop.f32.mrf.mxu0
  %v479 = vadd.f32 %v103, %v478
  %480 = vmatmul.f32.gmra.mxu0 %v269
  %v481 = vpop.f32.mrf.mxu0
  %v482 = vadd.f32 %v103, %v481
  %483 = vmatmul.f32.gmra.mxu0 %v272
  %v484 = vpop.f32.mrf.mxu0
  %v485 = vadd.f32 %v103, %v484
  %486 = vmatmul.f32.gmra.mxu0 %v275
  %v487 = vpop.f32.mrf.mxu0
  %v488 = vadd.f32 %v103, %v487
  %489 = vmatmul.f32.gmra.mxu0 %v278
  %v490 = vpop.f32.mrf.mxu0
  %v491 = vadd.f32 %v103, %v490
  %492 = vmatmul.f32.gmra.mxu0 %v281
  %v493 = vpop.f32.mrf.mxu0
  %v494 = vadd.f32 %v103, %v493
  %495 = vmatmul.f32.gmra.mxu0 %v284
  %v496 = vpop.f32.mrf.mxu0
  %v497 = vadd.f32 %v103, %v496
  %498 = vmatmul.f32.gmra.mxu0 %v287
  %v499 = vpop.f32.mrf.mxu0
  %v500 = vadd.f32 %v103, %v499
  %501 = vmatmul.f32.gmra.mxu0 %v290
  %v502 = vpop.f32.mrf.mxu0
  %v503 = vadd.f32 %v103, %v502
  %504 = vmatmul.f32.gmra.mxu0 %v293
  %v505 = vpop.f32.mrf.mxu0
  %v506 = vadd.f32 %v103, %v505
  %507 = vmatmul.f32.gmra.mxu0 %v296
  %v508 = vpop.f32.mrf.mxu0
  %v509 = vadd.f32 %v103, %v508
  %510 = vdwg.mxu0
  %v511 = vld [vmem:[%s3] sm:$0x1]
  %v512 = vld [vmem:[%s4] sm:$0x1]
  %vm513 = vcmask 64512
  %v514 = vsel %vm513, %v320, 0.0
  %v515 = vsel %vm513, %v323, 0.0
  %v516 = vadd.f32 %v514, %v515
  %v517 = vsel %vm513, %v326, 0.0
  %v518 = vadd.f32 %v516, %v517
  %v519 = vsel %vm513, %v329, 0.0
  %v520 = vadd.f32 %v518, %v519
  %v521 = vsel %vm513, %v332, 0.0
  %v522 = vadd.f32 %v520, %v521
  %v523 = vsel %vm513, %v335, 0.0
  %v524 = vadd.f32 %v522, %v523
  %v525 = vsel %vm513, %v338, 0.0
  %v526 = vadd.f32 %v524, %v525
  %v527 = vsel %vm513, %v341, 0.0
  %v528 = vadd.f32 %v526, %v527
  %v529 = vsel %vm513, %v344, 0.0
  %v530 = vadd.f32 %v528, %v529
  %v531 = vsel %vm513, %v347, 0.0
  %v532 = vadd.f32 %v530, %v531
  %v533 = vsel %vm513, %v350, 0.0
  %v534 = vadd.f32 %v532, %v533
  %v535 = vsel %vm513, %v353, 0.0
  %v536 = vadd.f32 %v534, %v535
  %v537 = vsel %vm513, %v356, 0.0
  %v538 = vadd.f32 %v536, %v537
  %v539 = vsel %vm513, %v359, 0.0
  %v540 = vadd.f32 %v538, %v539
  %v541 = vsel %vm513, %v362, 0.0
  %v542 = vadd.f32 %v540, %v541
  %v543 = vsel %vm513, %v365, 0.0
  %v544 = vadd.f32 %v542, %v543
  %v545 = vsel %vm513, %v368, 0.0
  %v546 = vadd.f32 %v544, %v545
  %v547 = vsel %vm513, %v371, 0.0
  %v548 = vadd.f32 %v546, %v547
  %v549 = vsel %vm513, %v374, 0.0
  %v550 = vadd.f32 %v548, %v549
  %v551 = vsel %vm513, %v377, 0.0
  %v552 = vadd.f32 %v550, %v551
  %v553 = vsel %vm513, %v380, 0.0
  %v554 = vadd.f32 %v552, %v553
  %v555 = vsel %vm513, %v383, 0.0
  %v556 = vadd.f32 %v554, %v555
  %v557 = vsel %vm513, %v386, 0.0
  %v558 = vadd.f32 %v556, %v557
  %v559 = vsel %vm513, %v389, 0.0
  %v560 = vadd.f32 %v558, %v559
  %v561 = vsel %vm513, %v392, 0.0
  %v562 = vadd.f32 %v560, %v561
  %v563 = vsel %vm513, %v395, 0.0
  %v564 = vadd.f32 %v562, %v563
  %v565 = vsel %vm513, %v398, 0.0
  %v566 = vadd.f32 %v564, %v565
  %v567 = vsel %vm513, %v401, 0.0
  %v568 = vadd.f32 %v566, %v567
  %v569 = vsel %vm513, %v404, 0.0
  %v570 = vadd.f32 %v568, %v569
  %v571 = vsel %vm513, %v407, 0.0
  %v572 = vadd.f32 %v570, %v571
  %v573 = vsel %vm513, %v410, 0.0
  %v574 = vadd.f32 %v572, %v573
  %v575 = vsel %vm513, %v413, 0.0
  %v576 = vadd.f32 %v574, %v575
  %v577 = vsel %vm513, %v416, 0.0
  %v578 = vadd.f32 %v576, %v577
  %v579 = vsel %vm513, %v419, 0.0
  %v580 = vadd.f32 %v578, %v579
  %v581 = vsel %vm513, %v422, 0.0
  %v582 = vadd.f32 %v580, %v581
  %v583 = vsel %vm513, %v425, 0.0
  %v584 = vadd.f32 %v582, %v583
  %v585 = vsel %vm513, %v428, 0.0
  %v586 = vadd.f32 %v584, %v585
  %v587 = vsel %vm513, %v431, 0.0
  %v588 = vadd.f32 %v586, %v587
  %v589 = vsel %vm513, %v434, 0.0
  %v590 = vadd.f32 %v588, %v589
  %v591 = vsel %vm513, %v437, 0.0
  %v592 = vadd.f32 %v590, %v591
  %v593 = vsel %vm513, %v440, 0.0
  %v594 = vadd.f32 %v592, %v593
  %v595 = vsel %vm513, %v443, 0.0
  %v596 = vadd.f32 %v594, %v595
  %v597 = vsel %vm513, %v446, 0.0
  %v598 = vadd.f32 %v596, %v597
  %v599 = vsel %vm513, %v449, 0.0
  %v600 = vadd.f32 %v598, %v599
  %v601 = vsel %vm513, %v452, 0.0
  %v602 = vadd.f32 %v600, %v601
  %v603 = vsel %vm513, %v455, 0.0
  %v604 = vadd.f32 %v602, %v603
  %v605 = vsel %vm513, %v458, 0.0
  %v606 = vadd.f32 %v604, %v605
  %v607 = vsel %vm513, %v461, 0.0
  %v608 = vadd.f32 %v606, %v607
  %v609 = vsel %vm513, %v464, 0.0
  %v610 = vadd.f32 %v608, %v609
  %v611 = vsel %vm513, %v467, 0.0
  %v612 = vadd.f32 %v610, %v611
  %v613 = vsel %vm513, %v470, 0.0
  %v614 = vadd.f32 %v612, %v613
  %v615 = vsel %vm513, %v473, 0.0
  %v616 = vadd.f32 %v614, %v615
  %v617 = vsel %vm513, %v476, 0.0
  %v618 = vadd.f32 %v616, %v617
  %v619 = vsel %vm513, %v479, 0.0
  %v620 = vadd.f32 %v618, %v619
  %v621 = vsel %vm513, %v482, 0.0
  %v622 = vadd.f32 %v620, %v621
  %v623 = vsel %vm513, %v485, 0.0
  %v624 = vadd.f32 %v622, %v623
  %v625 = vsel %vm513, %v488, 0.0
  %v626 = vadd.f32 %v624, %v625
  %v627 = vsel %vm513, %v491, 0.0
  %v628 = vadd.f32 %v626, %v627
  %v629 = vsel %vm513, %v494, 0.0
  %v630 = vadd.f32 %v628, %v629
  %v631 = vsel %vm513, %v497, 0.0
  %v632 = vadd.f32 %v630, %v631
  %v633 = vsel %vm513, %v500, 0.0
  %v634 = vadd.f32 %v632, %v633
  %v635 = vsel %vm513, %v503, 0.0
  %v636 = vadd.f32 %v634, %v635
  %v637 = vsel %vm513, %v506, 0.0
  %v638 = vadd.f32 %v636, %v637
  %v639 = vsel %vm513, %v509, 0.0
  %v640 = vadd.f32 %v638, %v639
  %v641 = vrot.slane %v640, 4
  %v642 = vadd.f32 %v640, %v641
  %v643 = vrot.slane %v642, 2
  %v644 = vadd.f32 %v642, %v643
  %v645 = vrot.slane %v644, 1
  %v646 = vadd.f32 %v644, %v645
  %v647 = vmul.f32 %v646, 0.001953125
  %v648 = vmul.f32 %v320, %v320
  %v649 = vmul.f32 %v323, %v323
  %v650 = vmul.f32 %v326, %v326
  %v651 = vmul.f32 %v329, %v329
  %v652 = vmul.f32 %v332, %v332
  %v653 = vmul.f32 %v335, %v335
  %v654 = vmul.f32 %v338, %v338
  %v655 = vmul.f32 %v341, %v341
  %v656 = vmul.f32 %v344, %v344
  %v657 = vmul.f32 %v347, %v347
  %v658 = vmul.f32 %v350, %v350
  %v659 = vmul.f32 %v353, %v353
  %v660 = vmul.f32 %v356, %v356
  %v661 = vmul.f32 %v359, %v359
  %v662 = vmul.f32 %v362, %v362
  %v663 = vmul.f32 %v365, %v365
  %v664 = vmul.f32 %v368, %v368
  %v665 = vmul.f32 %v371, %v371
  %v666 = vmul.f32 %v374, %v374
  %v667 = vmul.f32 %v377, %v377
  %v668 = vmul.f32 %v380, %v380
  %v669 = vmul.f32 %v383, %v383
  %v670 = vmul.f32 %v386, %v386
  %v671 = vmul.f32 %v389, %v389
  %v672 = vmul.f32 %v392, %v392
  %v673 = vmul.f32 %v395, %v395
  %v674 = vmul.f32 %v398, %v398
  %v675 = vmul.f32 %v401, %v401
  %v676 = vmul.f32 %v404, %v404
  %v677 = vmul.f32 %v407, %v407
  %v678 = vmul.f32 %v410, %v410
  %v679 = vmul.f32 %v413, %v413
  %v680 = vmul.f32 %v416, %v416
  %v681 = vmul.f32 %v419, %v419
  %v682 = vmul.f32 %v422, %v422
  %v683 = vmul.f32 %v425, %v425
  %v684 = vmul.f32 %v428, %v428
  %v685 = vmul.f32 %v431, %v431
  %v686 = vmul.f32 %v434, %v434
  %v687 = vmul.f32 %v437, %v437
  %v688 = vmul.f32 %v440, %v440
  %v689 = vmul.f32 %v443, %v443
  %v690 = vmul.f32 %v446, %v446
  %v691 = vmul.f32 %v449, %v449
  %v692 = vmul.f32 %v452, %v452
  %v693 = vmul.f32 %v455, %v455
  %v694 = vmul.f32 %v458, %v458
  %v695 = vmul.f32 %v461, %v461
  %v696 = vmul.f32 %v464, %v464
  %v697 = vmul.f32 %v467, %v467
  %v698 = vmul.f32 %v470, %v470
  %v699 = vmul.f32 %v473, %v473
  %v700 = vmul.f32 %v476, %v476
  %v701 = vmul.f32 %v479, %v479
  %v702 = vmul.f32 %v482, %v482
  %v703 = vmul.f32 %v485, %v485
  %v704 = vmul.f32 %v488, %v488
  %v705 = vmul.f32 %v491, %v491
  %v706 = vmul.f32 %v494, %v494
  %v707 = vmul.f32 %v497, %v497
  %v708 = vmul.f32 %v500, %v500
  %v709 = vmul.f32 %v503, %v503
  %v710 = vmul.f32 %v506, %v506
  %v711 = vmul.f32 %v509, %v509
  %v712 = vsel %vm513, %v648, 0.0
  %v713 = vsel %vm513, %v649, 0.0
  %v714 = vadd.f32 %v712, %v713
  %v715 = vsel %vm513, %v650, 0.0
  %v716 = vadd.f32 %v714, %v715
  %v717 = vsel %vm513, %v651, 0.0
  %v718 = vadd.f32 %v716, %v717
  %v719 = vsel %vm513, %v652, 0.0
  %v720 = vadd.f32 %v718, %v719
  %v721 = vsel %vm513, %v653, 0.0
  %v722 = vadd.f32 %v720, %v721
  %v723 = vsel %vm513, %v654, 0.0
  %v724 = vadd.f32 %v722, %v723
  %v725 = vsel %vm513, %v655, 0.0
  %v726 = vadd.f32 %v724, %v725
  %v727 = vsel %vm513, %v656, 0.0
  %v728 = vadd.f32 %v726, %v727
  %v729 = vsel %vm513, %v657, 0.0
  %v730 = vadd.f32 %v728, %v729
  %v731 = vsel %vm513, %v658, 0.0
  %v732 = vadd.f32 %v730, %v731
  %v733 = vsel %vm513, %v659, 0.0
  %v734 = vadd.f32 %v732, %v733
  %v735 = vsel %vm513, %v660, 0.0
  %v736 = vadd.f32 %v734, %v735
  %v737 = vsel %vm513, %v661, 0.0
  %v738 = vadd.f32 %v736, %v737
  %v739 = vsel %vm513, %v662, 0.0
  %v740 = vadd.f32 %v738, %v739
  %v741 = vsel %vm513, %v663, 0.0
  %v742 = vadd.f32 %v740, %v741
  %v743 = vsel %vm513, %v664, 0.0
  %v744 = vadd.f32 %v742, %v743
  %v745 = vsel %vm513, %v665, 0.0
  %v746 = vadd.f32 %v744, %v745
  %v747 = vsel %vm513, %v666, 0.0
  %v748 = vadd.f32 %v746, %v747
  %v749 = vsel %vm513, %v667, 0.0
  %v750 = vadd.f32 %v748, %v749
  %v751 = vsel %vm513, %v668, 0.0
  %v752 = vadd.f32 %v750, %v751
  %v753 = vsel %vm513, %v669, 0.0
  %v754 = vadd.f32 %v752, %v753
  %v755 = vsel %vm513, %v670, 0.0
  %v756 = vadd.f32 %v754, %v755
  %v757 = vsel %vm513, %v671, 0.0
  %v758 = vadd.f32 %v756, %v757
  %v759 = vsel %vm513, %v672, 0.0
  %v760 = vadd.f32 %v758, %v759
  %v761 = vsel %vm513, %v673, 0.0
  %v762 = vadd.f32 %v760, %v761
  %v763 = vsel %vm513, %v674, 0.0
  %v764 = vadd.f32 %v762, %v763
  %v765 = vsel %vm513, %v675, 0.0
  %v766 = vadd.f32 %v764, %v765
  %v767 = vsel %vm513, %v676, 0.0
  %v768 = vadd.f32 %v766, %v767
  %v769 = vsel %vm513, %v677, 0.0
  %v770 = vadd.f32 %v768, %v769
  %v771 = vsel %vm513, %v678, 0.0
  %v772 = vadd.f32 %v770, %v771
  %v773 = vsel %vm513, %v679, 0.0
  %v774 = vadd.f32 %v772, %v773
  %v775 = vsel %vm513, %v680, 0.0
  %v776 = vadd.f32 %v774, %v775
  %v777 = vsel %vm513, %v681, 0.0
  %v778 = vadd.f32 %v776, %v777
  %v779 = vsel %vm513, %v682, 0.0
  %v780 = vadd.f32 %v778, %v779
  %v781 = vsel %vm513, %v683, 0.0
  %v782 = vadd.f32 %v780, %v781
  %v783 = vsel %vm513, %v684, 0.0
  %v784 = vadd.f32 %v782, %v783
  %v785 = vsel %vm513, %v685, 0.0
  %v786 = vadd.f32 %v784, %v785
  %v787 = vsel %vm513, %v686, 0.0
  %v788 = vadd.f32 %v786, %v787
  %v789 = vsel %vm513, %v687, 0.0
  %v790 = vadd.f32 %v788, %v789
  %v791 = vsel %vm513, %v688, 0.0
  %v792 = vadd.f32 %v790, %v791
  %v793 = vsel %vm513, %v689, 0.0
  %v794 = vadd.f32 %v792, %v793
  %v795 = vsel %vm513, %v690, 0.0
  %v796 = vadd.f32 %v794, %v795
  %v797 = vsel %vm513, %v691, 0.0
  %v798 = vadd.f32 %v796, %v797
  %v799 = vsel %vm513, %v692, 0.0
  %v800 = vadd.f32 %v798, %v799
  %v801 = vsel %vm513, %v693, 0.0
  %v802 = vadd.f32 %v800, %v801
  %v803 = vsel %vm513, %v694, 0.0
  %v804 = vadd.f32 %v802, %v803
  %v805 = vsel %vm513, %v695, 0.0
  %v806 = vadd.f32 %v804, %v805
  %v807 = vsel %vm513, %v696, 0.0
  %v808 = vadd.f32 %v806, %v807
  %v809 = vsel %vm513, %v697, 0.0
  %v810 = vadd.f32 %v808, %v809
  %v811 = vsel %vm513, %v698, 0.0
  %v812 = vadd.f32 %v810, %v811
  %v813 = vsel %vm513, %v699, 0.0
  %v814 = vadd.f32 %v812, %v813
  %v815 = vsel %vm513, %v700, 0.0
  %v816 = vadd.f32 %v814, %v815
  %v817 = vsel %vm513, %v701, 0.0
  %v818 = vadd.f32 %v816, %v817
  %v819 = vsel %vm513, %v702, 0.0
  %v820 = vadd.f32 %v818, %v819
  %v821 = vsel %vm513, %v703, 0.0
  %v822 = vadd.f32 %v820, %v821
  %v823 = vsel %vm513, %v704, 0.0
  %v824 = vadd.f32 %v822, %v823
  %v825 = vsel %vm513, %v705, 0.0
  %v826 = vadd.f32 %v824, %v825
  %v827 = vsel %vm513, %v706, 0.0
  %v828 = vadd.f32 %v826, %v827
  %v829 = vsel %vm513, %v707, 0.0
  %v830 = vadd.f32 %v828, %v829
  %v831 = vsel %vm513, %v708, 0.0
  %v832 = vadd.f32 %v830, %v831
  %v833 = vsel %vm513, %v709, 0.0
  %v834 = vadd.f32 %v832, %v833
  %v835 = vsel %vm513, %v710, 0.0
  %v836 = vadd.f32 %v834, %v835
  %v837 = vsel %vm513, %v711, 0.0
  %v838 = vadd.f32 %v836, %v837
  %v839 = vrot.slane %v838, 4
  %v840 = vadd.f32 %v838, %v839
  %v841 = vrot.slane %v840, 2
  %v842 = vadd.f32 %v840, %v841
  %v843 = vrot.slane %v842, 1
  %v844 = vadd.f32 %v842, %v843
  %v845 = vmul.f32 %v844, 0.001953125
  %v846 = vmul.f32 %v647, %v647
  %v847 = vsub.f32 %v845, %v846
  %v848 = vmax.f32 %v847, 0.0
  %v849 = vsub.f32 %v320, %v647
  %v850 = vsub.f32 %v323, %v647
  %v851 = vsub.f32 %v326, %v647
  %v852 = vsub.f32 %v329, %v647
  %v853 = vsub.f32 %v332, %v647
  %v854 = vsub.f32 %v335, %v647
  %v855 = vsub.f32 %v338, %v647
  %v856 = vsub.f32 %v341, %v647
  %v857 = vsub.f32 %v344, %v647
  %v858 = vsub.f32 %v347, %v647
  %v859 = vsub.f32 %v350, %v647
  %v860 = vsub.f32 %v353, %v647
  %v861 = vsub.f32 %v356, %v647
  %v862 = vsub.f32 %v359, %v647
  %v863 = vsub.f32 %v362, %v647
  %v864 = vsub.f32 %v365, %v647
  %v865 = vsub.f32 %v368, %v647
  %v866 = vsub.f32 %v371, %v647
  %v867 = vsub.f32 %v374, %v647
  %v868 = vsub.f32 %v377, %v647
  %v869 = vsub.f32 %v380, %v647
  %v870 = vsub.f32 %v383, %v647
  %v871 = vsub.f32 %v386, %v647
  %v872 = vsub.f32 %v389, %v647
  %v873 = vsub.f32 %v392, %v647
  %v874 = vsub.f32 %v395, %v647
  %v875 = vsub.f32 %v398, %v647
  %v876 = vsub.f32 %v401, %v647
  %v877 = vsub.f32 %v404, %v647
  %v878 = vsub.f32 %v407, %v647
  %v879 = vsub.f32 %v410, %v647
  %v880 = vsub.f32 %v413, %v647
  %v881 = vsub.f32 %v416, %v647
  %v882 = vsub.f32 %v419, %v647
  %v883 = vsub.f32 %v422, %v647
  %v884 = vsub.f32 %v425, %v647
  %v885 = vsub.f32 %v428, %v647
  %v886 = vsub.f32 %v431, %v647
  %v887 = vsub.f32 %v434, %v647
  %v888 = vsub.f32 %v437, %v647
  %v889 = vsub.f32 %v440, %v647
  %v890 = vsub.f32 %v443, %v647
  %v891 = vsub.f32 %v446, %v647
  %v892 = vsub.f32 %v449, %v647
  %v893 = vsub.f32 %v452, %v647
  %v894 = vsub.f32 %v455, %v647
  %v895 = vsub.f32 %v458, %v647
  %v896 = vsub.f32 %v461, %v647
  %v897 = vsub.f32 %v464, %v647
  %v898 = vsub.f32 %v467, %v647
  %v899 = vsub.f32 %v470, %v647
  %v900 = vsub.f32 %v473, %v647
  %v901 = vsub.f32 %v476, %v647
  %v902 = vsub.f32 %v479, %v647
  %v903 = vsub.f32 %v482, %v647
  %v904 = vsub.f32 %v485, %v647
  %v905 = vsub.f32 %v488, %v647
  %v906 = vsub.f32 %v491, %v647
  %v907 = vsub.f32 %v494, %v647
  %v908 = vsub.f32 %v497, %v647
  %v909 = vsub.f32 %v500, %v647
  %v910 = vsub.f32 %v503, %v647
  %v911 = vsub.f32 %v506, %v647
  %v912 = vsub.f32 %v509, %v647
  %v913 = vadd.f32 %v848, 1e-05
  %v914 = vrsqrt.pop %v913
  %v915 = vmul.f32 %v914, %v913
  %v916 = vmul.f32 %v915, %v914
  %v917 = vmul.f32 0.5, %v916
  %v918 = vsub.f32 1.5, %v917
  %v919 = vmul.f32 %v914, %v918
  %vm920 = vweird.f32 %v913
  %vm921 = vweird.f32 %v914
  %vm922 = vmor %vm920, %vm921
  %v923 = vsel %vm922, %v914, %v919
  %v924 = vmul.f32 %v849, %v923
  %v925 = vmul.f32 %v850, %v923
  %v926 = vmul.f32 %v851, %v923
  %v927 = vmul.f32 %v852, %v923
  %v928 = vmul.f32 %v853, %v923
  %v929 = vmul.f32 %v854, %v923
  %v930 = vmul.f32 %v855, %v923
  %v931 = vmul.f32 %v856, %v923
  %v932 = vmul.f32 %v857, %v923
  %v933 = vmul.f32 %v858, %v923
  %v934 = vmul.f32 %v859, %v923
  %v935 = vmul.f32 %v860, %v923
  %v936 = vmul.f32 %v861, %v923
  %v937 = vmul.f32 %v862, %v923
  %v938 = vmul.f32 %v863, %v923
  %v939 = vmul.f32 %v864, %v923
  %v940 = vmul.f32 %v865, %v923
  %v941 = vmul.f32 %v866, %v923
  %v942 = vmul.f32 %v867, %v923
  %v943 = vmul.f32 %v868, %v923
  %v944 = vmul.f32 %v869, %v923
  %v945 = vmul.f32 %v870, %v923
  %v946 = vmul.f32 %v871, %v923
  %v947 = vmul.f32 %v872, %v923
  %v948 = vmul.f32 %v873, %v923
  %v949 = vmul.f32 %v874, %v923
  %v950 = vmul.f32 %v875, %v923
  %v951 = vmul.f32 %v876, %v923
  %v952 = vmul.f32 %v877, %v923
  %v953 = vmul.f32 %v878, %v923
  %v954 = vmul.f32 %v879, %v923
  %v955 = vmul.f32 %v880, %v923
  %v956 = vmul.f32 %v881, %v923
  %v957 = vmul.f32 %v882, %v923
  %v958 = vmul.f32 %v883, %v923
  %v959 = vmul.f32 %v884, %v923
  %v960 = vmul.f32 %v885, %v923
  %v961 = vmul.f32 %v886, %v923
  %v962 = vmul.f32 %v887, %v923
  %v963 = vmul.f32 %v888, %v923
  %v964 = vmul.f32 %v889, %v923
  %v965 = vmul.f32 %v890, %v923
  %v966 = vmul.f32 %v891, %v923
  %v967 = vmul.f32 %v892, %v923
  %v968 = vmul.f32 %v893, %v923
  %v969 = vmul.f32 %v894, %v923
  %v970 = vmul.f32 %v895, %v923
  %v971 = vmul.f32 %v896, %v923
  %v972 = vmul.f32 %v897, %v923
  %v973 = vmul.f32 %v898, %v923
  %v974 = vmul.f32 %v899, %v923
  %v975 = vmul.f32 %v900, %v923
  %v976 = vmul.f32 %v901, %v923
  %v977 = vmul.f32 %v902, %v923
  %v978 = vmul.f32 %v903, %v923
  %v979 = vmul.f32 %v904, %v923
  %v980 = vmul.f32 %v905, %v923
  %v981 = vmul.f32 %v906, %v923
  %v982 = vmul.f32 %v907, %v923
  %v983 = vmul.f32 %v908, %v923
  %v984 = vmul.f32 %v909, %v923
  %v985 = vmul.f32 %v910, %v923
  %v986 = vmul.f32 %v911, %v923
  %v987 = vmul.f32 %v912, %v923
  %v989 = vperm.slane %v511, 0
  %v991 = vmul.f32 %v924, %v989
  %v992 = vmul.f32 %v925, %v989
  %v993 = vmul.f32 %v926, %v989
  %v994 = vmul.f32 %v927, %v989
  %v995 = vmul.f32 %v928, %v989
  %v996 = vmul.f32 %v929, %v989
  %v997 = vmul.f32 %v930, %v989
  %v998 = vmul.f32 %v931, %v989
  %v999 = vmul.f32 %v932, %v989
  %v1000 = vmul.f32 %v933, %v989
  %v1001 = vmul.f32 %v934, %v989
  %v1002 = vmul.f32 %v935, %v989
  %v1003 = vmul.f32 %v936, %v989
  %v1004 = vmul.f32 %v937, %v989
  %v1005 = vmul.f32 %v938, %v989
  %v1006 = vmul.f32 %v939, %v989
  %v1007 = vmul.f32 %v940, %v989
  %v1008 = vmul.f32 %v941, %v989
  %v1009 = vmul.f32 %v942, %v989
  %v1010 = vmul.f32 %v943, %v989
  %v1011 = vmul.f32 %v944, %v989
  %v1012 = vmul.f32 %v945, %v989
  %v1013 = vmul.f32 %v946, %v989
  %v1014 = vmul.f32 %v947, %v989
  %v1015 = vmul.f32 %v948, %v989
  %v1016 = vmul.f32 %v949, %v989
  %v1017 = vmul.f32 %v950, %v989
  %v1018 = vmul.f32 %v951, %v989
  %v1019 = vmul.f32 %v952, %v989
  %v1020 = vmul.f32 %v953, %v989
  %v1021 = vmul.f32 %v954, %v989
  %v1022 = vmul.f32 %v955, %v989
  %v1023 = vmul.f32 %v956, %v989
  %v1024 = vmul.f32 %v957, %v989
  %v1025 = vmul.f32 %v958, %v989
  %v1026 = vmul.f32 %v959, %v989
  %v1027 = vmul.f32 %v960, %v989
  %v1028 = vmul.f32 %v961, %v989
  %v1029 = vmul.f32 %v962, %v989
  %v1030 = vmul.f32 %v963, %v989
  %v1031 = vmul.f32 %v964, %v989
  %v1032 = vmul.f32 %v965, %v989
  %v1033 = vmul.f32 %v966, %v989
  %v1034 = vmul.f32 %v967, %v989
  %v1035 = vmul.f32 %v968, %v989
  %v1036 = vmul.f32 %v969, %v989
  %v1037 = vmul.f32 %v970, %v989
  %v1038 = vmul.f32 %v971, %v989
  %v1039 = vmul.f32 %v972, %v989
  %v1040 = vmul.f32 %v973, %v989
  %v1041 = vmul.f32 %v974, %v989
  %v1042 = vmul.f32 %v975, %v989
  %v1043 = vmul.f32 %v976, %v989
  %v1044 = vmul.f32 %v977, %v989
  %v1045 = vmul.f32 %v978, %v989
  %v1046 = vmul.f32 %v979, %v989
  %v1047 = vmul.f32 %v980, %v989
  %v1048 = vmul.f32 %v981, %v989
  %v1049 = vmul.f32 %v982, %v989
  %v1050 = vmul.f32 %v983, %v989
  %v1051 = vmul.f32 %v984, %v989
  %v1052 = vmul.f32 %v985, %v989
  %v1053 = vmul.f32 %v986, %v989
  %v1054 = vmul.f32 %v987, %v989
  %v1056 = vperm.slane %v512, 0
  %v1058 = vadd.f32 %v991, %v1056
  %v1059 = vadd.f32 %v992, %v1056
  %v1060 = vadd.f32 %v993, %v1056
  %v1061 = vadd.f32 %v994, %v1056
  %v1062 = vadd.f32 %v995, %v1056
  %v1063 = vadd.f32 %v996, %v1056
  %v1064 = vadd.f32 %v997, %v1056
  %v1065 = vadd.f32 %v998, %v1056
  %v1066 = vadd.f32 %v999, %v1056
  %v1067 = vadd.f32 %v1000, %v1056
  %v1068 = vadd.f32 %v1001, %v1056
  %v1069 = vadd.f32 %v1002, %v1056
  %v1070 = vadd.f32 %v1003, %v1056
  %v1071 = vadd.f32 %v1004, %v1056
  %v1072 = vadd.f32 %v1005, %v1056
  %v1073 = vadd.f32 %v1006, %v1056
  %v1074 = vadd.f32 %v1007, %v1056
  %v1075 = vadd.f32 %v1008, %v1056
  %v1076 = vadd.f32 %v1009, %v1056
  %v1077 = vadd.f32 %v1010, %v1056
  %v1078 = vadd.f32 %v1011, %v1056
  %v1079 = vadd.f32 %v1012, %v1056
  %v1080 = vadd.f32 %v1013, %v1056
  %v1081 = vadd.f32 %v1014, %v1056
  %v1082 = vadd.f32 %v1015, %v1056
  %v1083 = vadd.f32 %v1016, %v1056
  %v1084 = vadd.f32 %v1017, %v1056
  %v1085 = vadd.f32 %v1018, %v1056
  %v1086 = vadd.f32 %v1019, %v1056
  %v1087 = vadd.f32 %v1020, %v1056
  %v1088 = vadd.f32 %v1021, %v1056
  %v1089 = vadd.f32 %v1022, %v1056
  %v1090 = vadd.f32 %v1023, %v1056
  %v1091 = vadd.f32 %v1024, %v1056
  %v1092 = vadd.f32 %v1025, %v1056
  %v1093 = vadd.f32 %v1026, %v1056
  %v1094 = vadd.f32 %v1027, %v1056
  %v1095 = vadd.f32 %v1028, %v1056
  %v1096 = vadd.f32 %v1029, %v1056
  %v1097 = vadd.f32 %v1030, %v1056
  %v1098 = vadd.f32 %v1031, %v1056
  %v1099 = vadd.f32 %v1032, %v1056
  %v1100 = vadd.f32 %v1033, %v1056
  %v1101 = vadd.f32 %v1034, %v1056
  %v1102 = vadd.f32 %v1035, %v1056
  %v1103 = vadd.f32 %v1036, %v1056
  %v1104 = vadd.f32 %v1037, %v1056
  %v1105 = vadd.f32 %v1038, %v1056
  %v1106 = vadd.f32 %v1039, %v1056
  %v1107 = vadd.f32 %v1040, %v1056
  %v1108 = vadd.f32 %v1041, %v1056
  %v1109 = vadd.f32 %v1042, %v1056
  %v1110 = vadd.f32 %v1043, %v1056
  %v1111 = vadd.f32 %v1044, %v1056
  %v1112 = vadd.f32 %v1045, %v1056
  %v1113 = vadd.f32 %v1046, %v1056
  %v1114 = vadd.f32 %v1047, %v1056
  %v1115 = vadd.f32 %v1048, %v1056
  %v1116 = vadd.f32 %v1049, %v1056
  %v1117 = vadd.f32 %v1050, %v1056
  %v1118 = vadd.f32 %v1051, %v1056
  %v1119 = vadd.f32 %v1052, %v1056
  %v1120 = vadd.f32 %v1053, %v1056
  %v1121 = vadd.f32 %v1054, %v1056
  %v1122 = vmul.f32 %v1058, 0.5
  %v1123 = vmul.f32 %v1059, 0.5
  %v1124 = vmul.f32 %v1060, 0.5
  %v1125 = vmul.f32 %v1061, 0.5
  %v1126 = vmul.f32 %v1062, 0.5
  %v1127 = vmul.f32 %v1063, 0.5
  %v1128 = vmul.f32 %v1064, 0.5
  %v1129 = vmul.f32 %v1065, 0.5
  %v1130 = vmul.f32 %v1066, 0.5
  %v1131 = vmul.f32 %v1067, 0.5
  %v1132 = vmul.f32 %v1068, 0.5
  %v1133 = vmul.f32 %v1069, 0.5
  %v1134 = vmul.f32 %v1070, 0.5
  %v1135 = vmul.f32 %v1071, 0.5
  %v1136 = vmul.f32 %v1072, 0.5
  %v1137 = vmul.f32 %v1073, 0.5
  %v1138 = vmul.f32 %v1074, 0.5
  %v1139 = vmul.f32 %v1075, 0.5
  %v1140 = vmul.f32 %v1076, 0.5
  %v1141 = vmul.f32 %v1077, 0.5
  %v1142 = vmul.f32 %v1078, 0.5
  %v1143 = vmul.f32 %v1079, 0.5
  %v1144 = vmul.f32 %v1080, 0.5
  %v1145 = vmul.f32 %v1081, 0.5
  %v1146 = vmul.f32 %v1082, 0.5
  %v1147 = vmul.f32 %v1083, 0.5
  %v1148 = vmul.f32 %v1084, 0.5
  %v1149 = vmul.f32 %v1085, 0.5
  %v1150 = vmul.f32 %v1086, 0.5
  %v1151 = vmul.f32 %v1087, 0.5
  %v1152 = vmul.f32 %v1088, 0.5
  %v1153 = vmul.f32 %v1089, 0.5
  %v1154 = vmul.f32 %v1090, 0.5
  %v1155 = vmul.f32 %v1091, 0.5
  %v1156 = vmul.f32 %v1092, 0.5
  %v1157 = vmul.f32 %v1093, 0.5
  %v1158 = vmul.f32 %v1094, 0.5
  %v1159 = vmul.f32 %v1095, 0.5
  %v1160 = vmul.f32 %v1096, 0.5
  %v1161 = vmul.f32 %v1097, 0.5
  %v1162 = vmul.f32 %v1098, 0.5
  %v1163 = vmul.f32 %v1099, 0.5
  %v1164 = vmul.f32 %v1100, 0.5
  %v1165 = vmul.f32 %v1101, 0.5
  %v1166 = vmul.f32 %v1102, 0.5
  %v1167 = vmul.f32 %v1103, 0.5
  %v1168 = vmul.f32 %v1104, 0.5
  %v1169 = vmul.f32 %v1105, 0.5
  %v1170 = vmul.f32 %v1106, 0.5
  %v1171 = vmul.f32 %v1107, 0.5
  %v1172 = vmul.f32 %v1108, 0.5
  %v1173 = vmul.f32 %v1109, 0.5
  %v1174 = vmul.f32 %v1110, 0.5
  %v1175 = vmul.f32 %v1111, 0.5
  %v1176 = vmul.f32 %v1112, 0.5
  %v1177 = vmul.f32 %v1113, 0.5
  %v1178 = vmul.f32 %v1114, 0.5
  %v1179 = vmul.f32 %v1115, 0.5
  %v1180 = vmul.f32 %v1116, 0.5
  %v1181 = vmul.f32 %v1117, 0.5
  %v1182 = vmul.f32 %v1118, 0.5
  %v1183 = vmul.f32 %v1119, 0.5
  %v1184 = vmul.f32 %v1120, 0.5
  %v1185 = vmul.f32 %v1121, 0.5
  %v1186 = vmul.f32 %v1058, 0.70710677
  %v1187 = vmul.f32 %v1059, 0.70710677
  %v1188 = vmul.f32 %v1060, 0.70710677
  %v1189 = vmul.f32 %v1061, 0.70710677
  %v1190 = vmul.f32 %v1062, 0.70710677
  %v1191 = vmul.f32 %v1063, 0.70710677
  %v1192 = vmul.f32 %v1064, 0.70710677
  %v1193 = vmul.f32 %v1065, 0.70710677
  %v1194 = vmul.f32 %v1066, 0.70710677
  %v1195 = vmul.f32 %v1067, 0.70710677
  %v1196 = vmul.f32 %v1068, 0.70710677
  %v1197 = vmul.f32 %v1069, 0.70710677
  %v1198 = vmul.f32 %v1070, 0.70710677
  %v1199 = vmul.f32 %v1071, 0.70710677
  %v1200 = vmul.f32 %v1072, 0.70710677
  %v1201 = vmul.f32 %v1073, 0.70710677
  %v1202 = vmul.f32 %v1074, 0.70710677
  %v1203 = vmul.f32 %v1075, 0.70710677
  %v1204 = vmul.f32 %v1076, 0.70710677
  %v1205 = vmul.f32 %v1077, 0.70710677
  %v1206 = vmul.f32 %v1078, 0.70710677
  %v1207 = vmul.f32 %v1079, 0.70710677
  %v1208 = vmul.f32 %v1080, 0.70710677
  %v1209 = vmul.f32 %v1081, 0.70710677
  %v1210 = vmul.f32 %v1082, 0.70710677
  %v1211 = vmul.f32 %v1083, 0.70710677
  %v1212 = vmul.f32 %v1084, 0.70710677
  %v1213 = vmul.f32 %v1085, 0.70710677
  %v1214 = vmul.f32 %v1086, 0.70710677
  %v1215 = vmul.f32 %v1087, 0.70710677
  %v1216 = vmul.f32 %v1088, 0.70710677
  %v1217 = vmul.f32 %v1089, 0.70710677
  %v1218 = vmul.f32 %v1090, 0.70710677
  %v1219 = vmul.f32 %v1091, 0.70710677
  %v1220 = vmul.f32 %v1092, 0.70710677
  %v1221 = vmul.f32 %v1093, 0.70710677
  %v1222 = vmul.f32 %v1094, 0.70710677
  %v1223 = vmul.f32 %v1095, 0.70710677
  %v1224 = vmul.f32 %v1096, 0.70710677
  %v1225 = vmul.f32 %v1097, 0.70710677
  %v1226 = vmul.f32 %v1098, 0.70710677
  %v1227 = vmul.f32 %v1099, 0.70710677
  %v1228 = vmul.f32 %v1100, 0.70710677
  %v1229 = vmul.f32 %v1101, 0.70710677
  %v1230 = vmul.f32 %v1102, 0.70710677
  %v1231 = vmul.f32 %v1103, 0.70710677
  %v1232 = vmul.f32 %v1104, 0.70710677
  %v1233 = vmul.f32 %v1105, 0.70710677
  %v1234 = vmul.f32 %v1106, 0.70710677
  %v1235 = vmul.f32 %v1107, 0.70710677
  %v1236 = vmul.f32 %v1108, 0.70710677
  %v1237 = vmul.f32 %v1109, 0.70710677
  %v1238 = vmul.f32 %v1110, 0.70710677
  %v1239 = vmul.f32 %v1111, 0.70710677
  %v1240 = vmul.f32 %v1112, 0.70710677
  %v1241 = vmul.f32 %v1113, 0.70710677
  %v1242 = vmul.f32 %v1114, 0.70710677
  %v1243 = vmul.f32 %v1115, 0.70710677
  %v1244 = vmul.f32 %v1116, 0.70710677
  %v1245 = vmul.f32 %v1117, 0.70710677
  %v1246 = vmul.f32 %v1118, 0.70710677
  %v1247 = vmul.f32 %v1119, 0.70710677
  %v1248 = vmul.f32 %v1120, 0.70710677
  %v1249 = vmul.f32 %v1121, 0.70710677
  %v1250 = vmul.f32 %v1186, %v1186
  %v1251 = vmin.f32 16.0, %v1250
  %v1252 = vmul.f32 %v1251, 2.1237322e-06
  %v1253 = vadd.f32 %v1252, 0.00028619796
  %v1254 = vmul.f32 %v1251, %v1253
  %v1255 = vadd.f32 %v1254, 0.0036580483
  %v1256 = vmul.f32 %v1251, %v1255
  %v1257 = vadd.f32 %v1256, 0.05243302
  %v1258 = vmul.f32 %v1251, %v1257
  %v1259 = vadd.f32 %v1258, 0.18741608
  %v1260 = vmul.f32 %v1251, %v1259
  %v1261 = vadd.f32 %v1260, 1.1283791
  %v1262 = vmul.f32 %v1186, %v1261
  %v1263 = vmul.f32 %v1251, 3.8918573e-05
  %v1264 = vadd.f32 %v1263, 0.001143296
  %v1265 = vmul.f32 %v1251, %v1264
  %v1266 = vadd.f32 %v1265, 0.014752088
  %v1267 = vmul.f32 %v1251, %v1266
  %v1268 = vadd.f32 %v1267, 0.112945676
  %v1269 = vmul.f32 %v1251, %v1268
  %v1270 = vadd.f32 %v1269, 0.4994258
  %v1271 = vmul.f32 %v1251, %v1270
  %v1272 = vadd.f32 %v1271, 1.0
  %v1273 = vrcp.pop %v1272
  %v1274 = vmul.f32 %v1272, %v1273
  %v1275 = vsub.f32 1.0, %v1274
  %v1276 = vmul.f32 %v1273, %v1275
  %v1277 = vadd.f32 %v1273, %v1276
  %vm1278 = vweird.f32 %v1272
  %vm1279 = vweird.f32 %v1273
  %vm1280 = vmor %vm1278, %vm1279
  %v1281 = vsel %vm1280, %v1273, %v1277
  %v1282 = vand.u32 2147483647, %v1272
  %vm1283 = vcmp.eq.f32.partialorder %v1282, 8.507059e+37
  %v1284 = vand.u32 %v1272, 2147483648
  %v1285 = vor.u32 1.1754944e-38, %v1284
  %v1286 = vsel %vm1283, %v1285, %v1281
  %v1287 = vmul.f32 %v1262, %v1286
  %v1288 = vmin.f32 %v1287, 1.0
  %v1289 = vmax.f32 %v1288, -1.0
  %v1290 = vmul.f32 %v1187, %v1187
  %v1291 = vmin.f32 16.0, %v1290
  %v1292 = vmul.f32 %v1291, 2.1237322e-06
  %v1293 = vadd.f32 %v1292, 0.00028619796
  %v1294 = vmul.f32 %v1291, %v1293
  %v1295 = vadd.f32 %v1294, 0.0036580483
  %v1296 = vmul.f32 %v1291, %v1295
  %v1297 = vadd.f32 %v1296, 0.05243302
  %v1298 = vmul.f32 %v1291, %v1297
  %v1299 = vadd.f32 %v1298, 0.18741608
  %v1300 = vmul.f32 %v1291, %v1299
  %v1301 = vadd.f32 %v1300, 1.1283791
  %v1302 = vmul.f32 %v1187, %v1301
  %v1303 = vmul.f32 %v1291, 3.8918573e-05
  %v1304 = vadd.f32 %v1303, 0.001143296
  %v1305 = vmul.f32 %v1291, %v1304
  %v1306 = vadd.f32 %v1305, 0.014752088
  %v1307 = vmul.f32 %v1291, %v1306
  %v1308 = vadd.f32 %v1307, 0.112945676
  %v1309 = vmul.f32 %v1291, %v1308
  %v1310 = vadd.f32 %v1309, 0.4994258
  %v1311 = vmul.f32 %v1291, %v1310
  %v1312 = vadd.f32 %v1311, 1.0
  %v1313 = vrcp.pop %v1312
  %v1314 = vmul.f32 %v1312, %v1313
  %v1315 = vsub.f32 1.0, %v1314
  %v1316 = vmul.f32 %v1313, %v1315
  %v1317 = vadd.f32 %v1313, %v1316
  %vm1318 = vweird.f32 %v1312
  %vm1319 = vweird.f32 %v1313
  %vm1320 = vmor %vm1318, %vm1319
  %v1321 = vsel %vm1320, %v1313, %v1317
  %v1322 = vand.u32 2147483647, %v1312
  %vm1323 = vcmp.eq.f32.partialorder %v1322, 8.507059e+37
  %v1324 = vand.u32 %v1312, 2147483648
  %v1325 = vor.u32 1.1754944e-38, %v1324
  %v1326 = vsel %vm1323, %v1325, %v1321
  %v1327 = vmul.f32 %v1302, %v1326
  %v1328 = vmin.f32 %v1327, 1.0
  %v1329 = vmax.f32 %v1328, -1.0
  %v1330 = vmul.f32 %v1188, %v1188
  %v1331 = vmin.f32 16.0, %v1330
  %v1332 = vmul.f32 %v1331, 2.1237322e-06
  %v1333 = vadd.f32 %v1332, 0.00028619796
  %v1334 = vmul.f32 %v1331, %v1333
  %v1335 = vadd.f32 %v1334, 0.0036580483
  %v1336 = vmul.f32 %v1331, %v1335
  %v1337 = vadd.f32 %v1336, 0.05243302
  %v1338 = vmul.f32 %v1331, %v1337
  %v1339 = vadd.f32 %v1338, 0.18741608
  %v1340 = vmul.f32 %v1331, %v1339
  %v1341 = vadd.f32 %v1340, 1.1283791
  %v1342 = vmul.f32 %v1188, %v1341
  %v1343 = vmul.f32 %v1331, 3.8918573e-05
  %v1344 = vadd.f32 %v1343, 0.001143296
  %v1345 = vmul.f32 %v1331, %v1344
  %v1346 = vadd.f32 %v1345, 0.014752088
  %v1347 = vmul.f32 %v1331, %v1346
  %v1348 = vadd.f32 %v1347, 0.112945676
  %v1349 = vmul.f32 %v1331, %v1348
  %v1350 = vadd.f32 %v1349, 0.4994258
  %v1351 = vmul.f32 %v1331, %v1350
  %v1352 = vadd.f32 %v1351, 1.0
  %v1353 = vrcp.pop %v1352
  %v1354 = vmul.f32 %v1352, %v1353
  %v1355 = vsub.f32 1.0, %v1354
  %v1356 = vmul.f32 %v1353, %v1355
  %v1357 = vadd.f32 %v1353, %v1356
  %vm1358 = vweird.f32 %v1352
  %vm1359 = vweird.f32 %v1353
  %vm1360 = vmor %vm1358, %vm1359
  %v1361 = vsel %vm1360, %v1353, %v1357
  %v1362 = vand.u32 2147483647, %v1352
  %vm1363 = vcmp.eq.f32.partialorder %v1362, 8.507059e+37
  %v1364 = vand.u32 %v1352, 2147483648
  %v1365 = vor.u32 1.1754944e-38, %v1364
  %v1366 = vsel %vm1363, %v1365, %v1361
  %v1367 = vmul.f32 %v1342, %v1366
  %v1368 = vmin.f32 %v1367, 1.0
  %v1369 = vmax.f32 %v1368, -1.0
  %v1370 = vmul.f32 %v1189, %v1189
  %v1371 = vmin.f32 16.0, %v1370
  %v1372 = vmul.f32 %v1371, 2.1237322e-06
  %v1373 = vadd.f32 %v1372, 0.00028619796
  %v1374 = vmul.f32 %v1371, %v1373
  %v1375 = vadd.f32 %v1374, 0.0036580483
  %v1376 = vmul.f32 %v1371, %v1375
  %v1377 = vadd.f32 %v1376, 0.05243302
  %v1378 = vmul.f32 %v1371, %v1377
  %v1379 = vadd.f32 %v1378, 0.18741608
  %v1380 = vmul.f32 %v1371, %v1379
  %v1381 = vadd.f32 %v1380, 1.1283791
  %v1382 = vmul.f32 %v1189, %v1381
  %v1383 = vmul.f32 %v1371, 3.8918573e-05
  %v1384 = vadd.f32 %v1383, 0.001143296
  %v1385 = vmul.f32 %v1371, %v1384
  %v1386 = vadd.f32 %v1385, 0.014752088
  %v1387 = vmul.f32 %v1371, %v1386
  %v1388 = vadd.f32 %v1387, 0.112945676
  %v1389 = vmul.f32 %v1371, %v1388
  %v1390 = vadd.f32 %v1389, 0.4994258
  %v1391 = vmul.f32 %v1371, %v1390
  %v1392 = vadd.f32 %v1391, 1.0
  %v1393 = vrcp.pop %v1392
  %v1394 = vmul.f32 %v1392, %v1393
  %v1395 = vsub.f32 1.0, %v1394
  %v1396 = vmul.f32 %v1393, %v1395
  %v1397 = vadd.f32 %v1393, %v1396
  %vm1398 = vweird.f32 %v1392
  %vm1399 = vweird.f32 %v1393
  %vm1400 = vmor %vm1398, %vm1399
  %v1401 = vsel %vm1400, %v1393, %v1397
  %v1402 = vand.u32 2147483647, %v1392
  %vm1403 = vcmp.eq.f32.partialorder %v1402, 8.507059e+37
  %v1404 = vand.u32 %v1392, 2147483648
  %v1405 = vor.u32 1.1754944e-38, %v1404
  %v1406 = vsel %vm1403, %v1405, %v1401
  %v1407 = vmul.f32 %v1382, %v1406
  %v1408 = vmin.f32 %v1407, 1.0
  %v1409 = vmax.f32 %v1408, -1.0
  %v1410 = vmul.f32 %v1190, %v1190
  %v1411 = vmin.f32 16.0, %v1410
  %v1412 = vmul.f32 %v1411, 2.1237322e-06
  %v1413 = vadd.f32 %v1412, 0.00028619796
  %v1414 = vmul.f32 %v1411, %v1413
  %v1415 = vadd.f32 %v1414, 0.0036580483
  %v1416 = vmul.f32 %v1411, %v1415
  %v1417 = vadd.f32 %v1416, 0.05243302
  %v1418 = vmul.f32 %v1411, %v1417
  %v1419 = vadd.f32 %v1418, 0.18741608
  %v1420 = vmul.f32 %v1411, %v1419
  %v1421 = vadd.f32 %v1420, 1.1283791
  %v1422 = vmul.f32 %v1190, %v1421
  %v1423 = vmul.f32 %v1411, 3.8918573e-05
  %v1424 = vadd.f32 %v1423, 0.001143296
  %v1425 = vmul.f32 %v1411, %v1424
  %v1426 = vadd.f32 %v1425, 0.014752088
  %v1427 = vmul.f32 %v1411, %v1426
  %v1428 = vadd.f32 %v1427, 0.112945676
  %v1429 = vmul.f32 %v1411, %v1428
  %v1430 = vadd.f32 %v1429, 0.4994258
  %v1431 = vmul.f32 %v1411, %v1430
  %v1432 = vadd.f32 %v1431, 1.0
  %v1433 = vrcp.pop %v1432
  %v1434 = vmul.f32 %v1432, %v1433
  %v1435 = vsub.f32 1.0, %v1434
  %v1436 = vmul.f32 %v1433, %v1435
  %v1437 = vadd.f32 %v1433, %v1436
  %vm1438 = vweird.f32 %v1432
  %vm1439 = vweird.f32 %v1433
  %vm1440 = vmor %vm1438, %vm1439
  %v1441 = vsel %vm1440, %v1433, %v1437
  %v1442 = vand.u32 2147483647, %v1432
  %vm1443 = vcmp.eq.f32.partialorder %v1442, 8.507059e+37
  %v1444 = vand.u32 %v1432, 2147483648
  %v1445 = vor.u32 1.1754944e-38, %v1444
  %v1446 = vsel %vm1443, %v1445, %v1441
  %v1447 = vmul.f32 %v1422, %v1446
  %v1448 = vmin.f32 %v1447, 1.0
  %v1449 = vmax.f32 %v1448, -1.0
  %v1450 = vmul.f32 %v1191, %v1191
  %v1451 = vmin.f32 16.0, %v1450
  %v1452 = vmul.f32 %v1451, 2.1237322e-06
  %v1453 = vadd.f32 %v1452, 0.00028619796
  %v1454 = vmul.f32 %v1451, %v1453
  %v1455 = vadd.f32 %v1454, 0.0036580483
  %v1456 = vmul.f32 %v1451, %v1455
  %v1457 = vadd.f32 %v1456, 0.05243302
  %v1458 = vmul.f32 %v1451, %v1457
  %v1459 = vadd.f32 %v1458, 0.18741608
  %v1460 = vmul.f32 %v1451, %v1459
  %v1461 = vadd.f32 %v1460, 1.1283791
  %v1462 = vmul.f32 %v1191, %v1461
  %v1463 = vmul.f32 %v1451, 3.8918573e-05
  %v1464 = vadd.f32 %v1463, 0.001143296
  %v1465 = vmul.f32 %v1451, %v1464
  %v1466 = vadd.f32 %v1465, 0.014752088
  %v1467 = vmul.f32 %v1451, %v1466
  %v1468 = vadd.f32 %v1467, 0.112945676
  %v1469 = vmul.f32 %v1451, %v1468
  %v1470 = vadd.f32 %v1469, 0.4994258
  %v1471 = vmul.f32 %v1451, %v1470
  %v1472 = vadd.f32 %v1471, 1.0
  %v1473 = vrcp.pop %v1472
  %v1474 = vmul.f32 %v1472, %v1473
  %v1475 = vsub.f32 1.0, %v1474
  %v1476 = vmul.f32 %v1473, %v1475
  %v1477 = vadd.f32 %v1473, %v1476
  %vm1478 = vweird.f32 %v1472
  %vm1479 = vweird.f32 %v1473
  %vm1480 = vmor %vm1478, %vm1479
  %v1481 = vsel %vm1480, %v1473, %v1477
  %v1482 = vand.u32 2147483647, %v1472
  %vm1483 = vcmp.eq.f32.partialorder %v1482, 8.507059e+37
  %v1484 = vand.u32 %v1472, 2147483648
  %v1485 = vor.u32 1.1754944e-38, %v1484
  %v1486 = vsel %vm1483, %v1485, %v1481
  %v1487 = vmul.f32 %v1462, %v1486
  %v1488 = vmin.f32 %v1487, 1.0
  %v1489 = vmax.f32 %v1488, -1.0
  %v1490 = vmul.f32 %v1192, %v1192
  %v1491 = vmin.f32 16.0, %v1490
  %v1492 = vmul.f32 %v1491, 2.1237322e-06
  %v1493 = vadd.f32 %v1492, 0.00028619796
  %v1494 = vmul.f32 %v1491, %v1493
  %v1495 = vadd.f32 %v1494, 0.0036580483
  %v1496 = vmul.f32 %v1491, %v1495
  %v1497 = vadd.f32 %v1496, 0.05243302
  %v1498 = vmul.f32 %v1491, %v1497
  %v1499 = vadd.f32 %v1498, 0.18741608
  %v1500 = vmul.f32 %v1491, %v1499
  %v1501 = vadd.f32 %v1500, 1.1283791
  %v1502 = vmul.f32 %v1192, %v1501
  %v1503 = vmul.f32 %v1491, 3.8918573e-05
  %v1504 = vadd.f32 %v1503, 0.001143296
  %v1505 = vmul.f32 %v1491, %v1504
  %v1506 = vadd.f32 %v1505, 0.014752088
  %v1507 = vmul.f32 %v1491, %v1506
  %v1508 = vadd.f32 %v1507, 0.112945676
  %v1509 = vmul.f32 %v1491, %v1508
  %v1510 = vadd.f32 %v1509, 0.4994258
  %v1511 = vmul.f32 %v1491, %v1510
  %v1512 = vadd.f32 %v1511, 1.0
  %v1513 = vrcp.pop %v1512
  %v1514 = vmul.f32 %v1512, %v1513
  %v1515 = vsub.f32 1.0, %v1514
  %v1516 = vmul.f32 %v1513, %v1515
  %v1517 = vadd.f32 %v1513, %v1516
  %vm1518 = vweird.f32 %v1512
  %vm1519 = vweird.f32 %v1513
  %vm1520 = vmor %vm1518, %vm1519
  %v1521 = vsel %vm1520, %v1513, %v1517
  %v1522 = vand.u32 2147483647, %v1512
  %vm1523 = vcmp.eq.f32.partialorder %v1522, 8.507059e+37
  %v1524 = vand.u32 %v1512, 2147483648
  %v1525 = vor.u32 1.1754944e-38, %v1524
  %v1526 = vsel %vm1523, %v1525, %v1521
  %v1527 = vmul.f32 %v1502, %v1526
  %v1528 = vmin.f32 %v1527, 1.0
  %v1529 = vmax.f32 %v1528, -1.0
  %v1530 = vmul.f32 %v1193, %v1193
  %v1531 = vmin.f32 16.0, %v1530
  %v1532 = vmul.f32 %v1531, 2.1237322e-06
  %v1533 = vadd.f32 %v1532, 0.00028619796
  %v1534 = vmul.f32 %v1531, %v1533
  %v1535 = vadd.f32 %v1534, 0.0036580483
  %v1536 = vmul.f32 %v1531, %v1535
  %v1537 = vadd.f32 %v1536, 0.05243302
  %v1538 = vmul.f32 %v1531, %v1537
  %v1539 = vadd.f32 %v1538, 0.18741608
  %v1540 = vmul.f32 %v1531, %v1539
  %v1541 = vadd.f32 %v1540, 1.1283791
  %v1542 = vmul.f32 %v1193, %v1541
  %v1543 = vmul.f32 %v1531, 3.8918573e-05
  %v1544 = vadd.f32 %v1543, 0.001143296
  %v1545 = vmul.f32 %v1531, %v1544
  %v1546 = vadd.f32 %v1545, 0.014752088
  %v1547 = vmul.f32 %v1531, %v1546
  %v1548 = vadd.f32 %v1547, 0.112945676
  %v1549 = vmul.f32 %v1531, %v1548
  %v1550 = vadd.f32 %v1549, 0.4994258
  %v1551 = vmul.f32 %v1531, %v1550
  %v1552 = vadd.f32 %v1551, 1.0
  %v1553 = vrcp.pop %v1552
  %v1554 = vmul.f32 %v1552, %v1553
  %v1555 = vsub.f32 1.0, %v1554
  %v1556 = vmul.f32 %v1553, %v1555
  %v1557 = vadd.f32 %v1553, %v1556
  %vm1558 = vweird.f32 %v1552
  %vm1559 = vweird.f32 %v1553
  %vm1560 = vmor %vm1558, %vm1559
  %v1561 = vsel %vm1560, %v1553, %v1557
  %v1562 = vand.u32 2147483647, %v1552
  %vm1563 = vcmp.eq.f32.partialorder %v1562, 8.507059e+37
  %v1564 = vand.u32 %v1552, 2147483648
  %v1565 = vor.u32 1.1754944e-38, %v1564
  %v1566 = vsel %vm1563, %v1565, %v1561
  %v1567 = vmul.f32 %v1542, %v1566
  %v1568 = vmin.f32 %v1567, 1.0
  %v1569 = vmax.f32 %v1568, -1.0
  %v1570 = vmul.f32 %v1194, %v1194
  %v1571 = vmin.f32 16.0, %v1570
  %v1572 = vmul.f32 %v1571, 2.1237322e-06
  %v1573 = vadd.f32 %v1572, 0.00028619796
  %v1574 = vmul.f32 %v1571, %v1573
  %v1575 = vadd.f32 %v1574, 0.0036580483
  %v1576 = vmul.f32 %v1571, %v1575
  %v1577 = vadd.f32 %v1576, 0.05243302
  %v1578 = vmul.f32 %v1571, %v1577
  %v1579 = vadd.f32 %v1578, 0.18741608
  %v1580 = vmul.f32 %v1571, %v1579
  %v1581 = vadd.f32 %v1580, 1.1283791
  %v1582 = vmul.f32 %v1194, %v1581
  %v1583 = vmul.f32 %v1571, 3.8918573e-05
  %v1584 = vadd.f32 %v1583, 0.001143296
  %v1585 = vmul.f32 %v1571, %v1584
  %v1586 = vadd.f32 %v1585, 0.014752088
  %v1587 = vmul.f32 %v1571, %v1586
  %v1588 = vadd.f32 %v1587, 0.112945676
  %v1589 = vmul.f32 %v1571, %v1588
  %v1590 = vadd.f32 %v1589, 0.4994258
  %v1591 = vmul.f32 %v1571, %v1590
  %v1592 = vadd.f32 %v1591, 1.0
  %v1593 = vrcp.pop %v1592
  %v1594 = vmul.f32 %v1592, %v1593
  %v1595 = vsub.f32 1.0, %v1594
  %v1596 = vmul.f32 %v1593, %v1595
  %v1597 = vadd.f32 %v1593, %v1596
  %vm1598 = vweird.f32 %v1592
  %vm1599 = vweird.f32 %v1593
  %vm1600 = vmor %vm1598, %vm1599
  %v1601 = vsel %vm1600, %v1593, %v1597
  %v1602 = vand.u32 2147483647, %v1592
  %vm1603 = vcmp.eq.f32.partialorder %v1602, 8.507059e+37
  %v1604 = vand.u32 %v1592, 2147483648
  %v1605 = vor.u32 1.1754944e-38, %v1604
  %v1606 = vsel %vm1603, %v1605, %v1601
  %v1607 = vmul.f32 %v1582, %v1606
  %v1608 = vmin.f32 %v1607, 1.0
  %v1609 = vmax.f32 %v1608, -1.0
  %v1610 = vmul.f32 %v1195, %v1195
  %v1611 = vmin.f32 16.0, %v1610
  %v1612 = vmul.f32 %v1611, 2.1237322e-06
  %v1613 = vadd.f32 %v1612, 0.00028619796
  %v1614 = vmul.f32 %v1611, %v1613
  %v1615 = vadd.f32 %v1614, 0.0036580483
  %v1616 = vmul.f32 %v1611, %v1615
  %v1617 = vadd.f32 %v1616, 0.05243302
  %v1618 = vmul.f32 %v1611, %v1617
  %v1619 = vadd.f32 %v1618, 0.18741608
  %v1620 = vmul.f32 %v1611, %v1619
  %v1621 = vadd.f32 %v1620, 1.1283791
  %v1622 = vmul.f32 %v1195, %v1621
  %v1623 = vmul.f32 %v1611, 3.8918573e-05
  %v1624 = vadd.f32 %v1623, 0.001143296
  %v1625 = vmul.f32 %v1611, %v1624
  %v1626 = vadd.f32 %v1625, 0.014752088
  %v1627 = vmul.f32 %v1611, %v1626
  %v1628 = vadd.f32 %v1627, 0.112945676
  %v1629 = vmul.f32 %v1611, %v1628
  %v1630 = vadd.f32 %v1629, 0.4994258
  %v1631 = vmul.f32 %v1611, %v1630
  %v1632 = vadd.f32 %v1631, 1.0
  %v1633 = vrcp.pop %v1632
  %v1634 = vmul.f32 %v1632, %v1633
  %v1635 = vsub.f32 1.0, %v1634
  %v1636 = vmul.f32 %v1633, %v1635
  %v1637 = vadd.f32 %v1633, %v1636
  %vm1638 = vweird.f32 %v1632
  %vm1639 = vweird.f32 %v1633
  %vm1640 = vmor %vm1638, %vm1639
  %v1641 = vsel %vm1640, %v1633, %v1637
  %v1642 = vand.u32 2147483647, %v1632
  %vm1643 = vcmp.eq.f32.partialorder %v1642, 8.507059e+37
  %v1644 = vand.u32 %v1632, 2147483648
  %v1645 = vor.u32 1.1754944e-38, %v1644
  %v1646 = vsel %vm1643, %v1645, %v1641
  %v1647 = vmul.f32 %v1622, %v1646
  %v1648 = vmin.f32 %v1647, 1.0
  %v1649 = vmax.f32 %v1648, -1.0
  %v1650 = vmul.f32 %v1196, %v1196
  %v1651 = vmin.f32 16.0, %v1650
  %v1652 = vmul.f32 %v1651, 2.1237322e-06
  %v1653 = vadd.f32 %v1652, 0.00028619796
  %v1654 = vmul.f32 %v1651, %v1653
  %v1655 = vadd.f32 %v1654, 0.0036580483
  %v1656 = vmul.f32 %v1651, %v1655
  %v1657 = vadd.f32 %v1656, 0.05243302
  %v1658 = vmul.f32 %v1651, %v1657
  %v1659 = vadd.f32 %v1658, 0.18741608
  %v1660 = vmul.f32 %v1651, %v1659
  %v1661 = vadd.f32 %v1660, 1.1283791
  %v1662 = vmul.f32 %v1196, %v1661
  %v1663 = vmul.f32 %v1651, 3.8918573e-05
  %v1664 = vadd.f32 %v1663, 0.001143296
  %v1665 = vmul.f32 %v1651, %v1664
  %v1666 = vadd.f32 %v1665, 0.014752088
  %v1667 = vmul.f32 %v1651, %v1666
  %v1668 = vadd.f32 %v1667, 0.112945676
  %v1669 = vmul.f32 %v1651, %v1668
  %v1670 = vadd.f32 %v1669, 0.4994258
  %v1671 = vmul.f32 %v1651, %v1670
  %v1672 = vadd.f32 %v1671, 1.0
  %v1673 = vrcp.pop %v1672
  %v1674 = vmul.f32 %v1672, %v1673
  %v1675 = vsub.f32 1.0, %v1674
  %v1676 = vmul.f32 %v1673, %v1675
  %v1677 = vadd.f32 %v1673, %v1676
  %vm1678 = vweird.f32 %v1672
  %vm1679 = vweird.f32 %v1673
  %vm1680 = vmor %vm1678, %vm1679
  %v1681 = vsel %vm1680, %v1673, %v1677
  %v1682 = vand.u32 2147483647, %v1672
  %vm1683 = vcmp.eq.f32.partialorder %v1682, 8.507059e+37
  %v1684 = vand.u32 %v1672, 2147483648
  %v1685 = vor.u32 1.1754944e-38, %v1684
  %v1686 = vsel %vm1683, %v1685, %v1681
  %v1687 = vmul.f32 %v1662, %v1686
  %v1688 = vmin.f32 %v1687, 1.0
  %v1689 = vmax.f32 %v1688, -1.0
  %v1690 = vmul.f32 %v1197, %v1197
  %v1691 = vmin.f32 16.0, %v1690
  %v1692 = vmul.f32 %v1691, 2.1237322e-06
  %v1693 = vadd.f32 %v1692, 0.00028619796
  %v1694 = vmul.f32 %v1691, %v1693
  %v1695 = vadd.f32 %v1694, 0.0036580483
  %v1696 = vmul.f32 %v1691, %v1695
  %v1697 = vadd.f32 %v1696, 0.05243302
  %v1698 = vmul.f32 %v1691, %v1697
  %v1699 = vadd.f32 %v1698, 0.18741608
  %v1700 = vmul.f32 %v1691, %v1699
  %v1701 = vadd.f32 %v1700, 1.1283791
  %v1702 = vmul.f32 %v1197, %v1701
  %v1703 = vmul.f32 %v1691, 3.8918573e-05
  %v1704 = vadd.f32 %v1703, 0.001143296
  %v1705 = vmul.f32 %v1691, %v1704
  %v1706 = vadd.f32 %v1705, 0.014752088
  %v1707 = vmul.f32 %v1691, %v1706
  %v1708 = vadd.f32 %v1707, 0.112945676
  %v1709 = vmul.f32 %v1691, %v1708
  %v1710 = vadd.f32 %v1709, 0.4994258
  %v1711 = vmul.f32 %v1691, %v1710
  %v1712 = vadd.f32 %v1711, 1.0
  %v1713 = vrcp.pop %v1712
  %v1714 = vmul.f32 %v1712, %v1713
  %v1715 = vsub.f32 1.0, %v1714
  %v1716 = vmul.f32 %v1713, %v1715
  %v1717 = vadd.f32 %v1713, %v1716
  %vm1718 = vweird.f32 %v1712
  %vm1719 = vweird.f32 %v1713
  %vm1720 = vmor %vm1718, %vm1719
  %v1721 = vsel %vm1720, %v1713, %v1717
  %v1722 = vand.u32 2147483647, %v1712
  %vm1723 = vcmp.eq.f32.partialorder %v1722, 8.507059e+37
  %v1724 = vand.u32 %v1712, 2147483648
  %v1725 = vor.u32 1.1754944e-38, %v1724
  %v1726 = vsel %vm1723, %v1725, %v1721
  %v1727 = vmul.f32 %v1702, %v1726
  %v1728 = vmin.f32 %v1727, 1.0
  %v1729 = vmax.f32 %v1728, -1.0
  %v1730 = vmul.f32 %v1198, %v1198
  %v1731 = vmin.f32 16.0, %v1730
  %v1732 = vmul.f32 %v1731, 2.1237322e-06
  %v1733 = vadd.f32 %v1732, 0.00028619796
  %v1734 = vmul.f32 %v1731, %v1733
  %v1735 = vadd.f32 %v1734, 0.0036580483
  %v1736 = vmul.f32 %v1731, %v1735
  %v1737 = vadd.f32 %v1736, 0.05243302
  %v1738 = vmul.f32 %v1731, %v1737
  %v1739 = vadd.f32 %v1738, 0.18741608
  %v1740 = vmul.f32 %v1731, %v1739
  %v1741 = vadd.f32 %v1740, 1.1283791
  %v1742 = vmul.f32 %v1198, %v1741
  %v1743 = vmul.f32 %v1731, 3.8918573e-05
  %v1744 = vadd.f32 %v1743, 0.001143296
  %v1745 = vmul.f32 %v1731, %v1744
  %v1746 = vadd.f32 %v1745, 0.014752088
  %v1747 = vmul.f32 %v1731, %v1746
  %v1748 = vadd.f32 %v1747, 0.112945676
  %v1749 = vmul.f32 %v1731, %v1748
  %v1750 = vadd.f32 %v1749, 0.4994258
  %v1751 = vmul.f32 %v1731, %v1750
  %v1752 = vadd.f32 %v1751, 1.0
  %v1753 = vrcp.pop %v1752
  %v1754 = vmul.f32 %v1752, %v1753
  %v1755 = vsub.f32 1.0, %v1754
  %v1756 = vmul.f32 %v1753, %v1755
  %v1757 = vadd.f32 %v1753, %v1756
  %vm1758 = vweird.f32 %v1752
  %vm1759 = vweird.f32 %v1753
  %vm1760 = vmor %vm1758, %vm1759
  %v1761 = vsel %vm1760, %v1753, %v1757
  %v1762 = vand.u32 2147483647, %v1752
  %vm1763 = vcmp.eq.f32.partialorder %v1762, 8.507059e+37
  %v1764 = vand.u32 %v1752, 2147483648
  %v1765 = vor.u32 1.1754944e-38, %v1764
  %v1766 = vsel %vm1763, %v1765, %v1761
  %v1767 = vmul.f32 %v1742, %v1766
  %v1768 = vmin.f32 %v1767, 1.0
  %v1769 = vmax.f32 %v1768, -1.0
  %v1770 = vmul.f32 %v1199, %v1199
  %v1771 = vmin.f32 16.0, %v1770
  %v1772 = vmul.f32 %v1771, 2.1237322e-06
  %v1773 = vadd.f32 %v1772, 0.00028619796
  %v1774 = vmul.f32 %v1771, %v1773
  %v1775 = vadd.f32 %v1774, 0.0036580483
  %v1776 = vmul.f32 %v1771, %v1775
  %v1777 = vadd.f32 %v1776, 0.05243302
  %v1778 = vmul.f32 %v1771, %v1777
  %v1779 = vadd.f32 %v1778, 0.18741608
  %v1780 = vmul.f32 %v1771, %v1779
  %v1781 = vadd.f32 %v1780, 1.1283791
  %v1782 = vmul.f32 %v1199, %v1781
  %v1783 = vmul.f32 %v1771, 3.8918573e-05
  %v1784 = vadd.f32 %v1783, 0.001143296
  %v1785 = vmul.f32 %v1771, %v1784
  %v1786 = vadd.f32 %v1785, 0.014752088
  %v1787 = vmul.f32 %v1771, %v1786
  %v1788 = vadd.f32 %v1787, 0.112945676
  %v1789 = vmul.f32 %v1771, %v1788
  %v1790 = vadd.f32 %v1789, 0.4994258
  %v1791 = vmul.f32 %v1771, %v1790
  %v1792 = vadd.f32 %v1791, 1.0
  %v1793 = vrcp.pop %v1792
  %v1794 = vmul.f32 %v1792, %v1793
  %v1795 = vsub.f32 1.0, %v1794
  %v1796 = vmul.f32 %v1793, %v1795
  %v1797 = vadd.f32 %v1793, %v1796
  %vm1798 = vweird.f32 %v1792
  %vm1799 = vweird.f32 %v1793
  %vm1800 = vmor %vm1798, %vm1799
  %v1801 = vsel %vm1800, %v1793, %v1797
  %v1802 = vand.u32 2147483647, %v1792
  %vm1803 = vcmp.eq.f32.partialorder %v1802, 8.507059e+37
  %v1804 = vand.u32 %v1792, 2147483648
  %v1805 = vor.u32 1.1754944e-38, %v1804
  %v1806 = vsel %vm1803, %v1805, %v1801
  %v1807 = vmul.f32 %v1782, %v1806
  %v1808 = vmin.f32 %v1807, 1.0
  %v1809 = vmax.f32 %v1808, -1.0
  %v1810 = vmul.f32 %v1200, %v1200
  %v1811 = vmin.f32 16.0, %v1810
  %v1812 = vmul.f32 %v1811, 2.1237322e-06
  %v1813 = vadd.f32 %v1812, 0.00028619796
  %v1814 = vmul.f32 %v1811, %v1813
  %v1815 = vadd.f32 %v1814, 0.0036580483
  %v1816 = vmul.f32 %v1811, %v1815
  %v1817 = vadd.f32 %v1816, 0.05243302
  %v1818 = vmul.f32 %v1811, %v1817
  %v1819 = vadd.f32 %v1818, 0.18741608
  %v1820 = vmul.f32 %v1811, %v1819
  %v1821 = vadd.f32 %v1820, 1.1283791
  %v1822 = vmul.f32 %v1200, %v1821
  %v1823 = vmul.f32 %v1811, 3.8918573e-05
  %v1824 = vadd.f32 %v1823, 0.001143296
  %v1825 = vmul.f32 %v1811, %v1824
  %v1826 = vadd.f32 %v1825, 0.014752088
  %v1827 = vmul.f32 %v1811, %v1826
  %v1828 = vadd.f32 %v1827, 0.112945676
  %v1829 = vmul.f32 %v1811, %v1828
  %v1830 = vadd.f32 %v1829, 0.4994258
  %v1831 = vmul.f32 %v1811, %v1830
  %v1832 = vadd.f32 %v1831, 1.0
  %v1833 = vrcp.pop %v1832
  %v1834 = vmul.f32 %v1832, %v1833
  %v1835 = vsub.f32 1.0, %v1834
  %v1836 = vmul.f32 %v1833, %v1835
  %v1837 = vadd.f32 %v1833, %v1836
  %vm1838 = vweird.f32 %v1832
  %vm1839 = vweird.f32 %v1833
  %vm1840 = vmor %vm1838, %vm1839
  %v1841 = vsel %vm1840, %v1833, %v1837
  %v1842 = vand.u32 2147483647, %v1832
  %vm1843 = vcmp.eq.f32.partialorder %v1842, 8.507059e+37
  %v1844 = vand.u32 %v1832, 2147483648
  %v1845 = vor.u32 1.1754944e-38, %v1844
  %v1846 = vsel %vm1843, %v1845, %v1841
  %v1847 = vmul.f32 %v1822, %v1846
  %v1848 = vmin.f32 %v1847, 1.0
  %v1849 = vmax.f32 %v1848, -1.0
  %v1850 = vmul.f32 %v1201, %v1201
  %v1851 = vmin.f32 16.0, %v1850
  %v1852 = vmul.f32 %v1851, 2.1237322e-06
  %v1853 = vadd.f32 %v1852, 0.00028619796
  %v1854 = vmul.f32 %v1851, %v1853
  %v1855 = vadd.f32 %v1854, 0.0036580483
  %v1856 = vmul.f32 %v1851, %v1855
  %v1857 = vadd.f32 %v1856, 0.05243302
  %v1858 = vmul.f32 %v1851, %v1857
  %v1859 = vadd.f32 %v1858, 0.18741608
  %v1860 = vmul.f32 %v1851, %v1859
  %v1861 = vadd.f32 %v1860, 1.1283791
  %v1862 = vmul.f32 %v1201, %v1861
  %v1863 = vmul.f32 %v1851, 3.8918573e-05
  %v1864 = vadd.f32 %v1863, 0.001143296
  %v1865 = vmul.f32 %v1851, %v1864
  %v1866 = vadd.f32 %v1865, 0.014752088
  %v1867 = vmul.f32 %v1851, %v1866
  %v1868 = vadd.f32 %v1867, 0.112945676
  %v1869 = vmul.f32 %v1851, %v1868
  %v1870 = vadd.f32 %v1869, 0.4994258
  %v1871 = vmul.f32 %v1851, %v1870
  %v1872 = vadd.f32 %v1871, 1.0
  %v1873 = vrcp.pop %v1872
  %v1874 = vmul.f32 %v1872, %v1873
  %v1875 = vsub.f32 1.0, %v1874
  %v1876 = vmul.f32 %v1873, %v1875
  %v1877 = vadd.f32 %v1873, %v1876
  %vm1878 = vweird.f32 %v1872
  %vm1879 = vweird.f32 %v1873
  %vm1880 = vmor %vm1878, %vm1879
  %v1881 = vsel %vm1880, %v1873, %v1877
  %v1882 = vand.u32 2147483647, %v1872
  %vm1883 = vcmp.eq.f32.partialorder %v1882, 8.507059e+37
  %v1884 = vand.u32 %v1872, 2147483648
  %v1885 = vor.u32 1.1754944e-38, %v1884
  %v1886 = vsel %vm1883, %v1885, %v1881
  %v1887 = vmul.f32 %v1862, %v1886
  %v1888 = vmin.f32 %v1887, 1.0
  %v1889 = vmax.f32 %v1888, -1.0
  %v1890 = vmul.f32 %v1202, %v1202
  %v1891 = vmin.f32 16.0, %v1890
  %v1892 = vmul.f32 %v1891, 2.1237322e-06
  %v1893 = vadd.f32 %v1892, 0.00028619796
  %v1894 = vmul.f32 %v1891, %v1893
  %v1895 = vadd.f32 %v1894, 0.0036580483
  %v1896 = vmul.f32 %v1891, %v1895
  %v1897 = vadd.f32 %v1896, 0.05243302
  %v1898 = vmul.f32 %v1891, %v1897
  %v1899 = vadd.f32 %v1898, 0.18741608
  %v1900 = vmul.f32 %v1891, %v1899
  %v1901 = vadd.f32 %v1900, 1.1283791
  %v1902 = vmul.f32 %v1202, %v1901
  %v1903 = vmul.f32 %v1891, 3.8918573e-05
  %v1904 = vadd.f32 %v1903, 0.001143296
  %v1905 = vmul.f32 %v1891, %v1904
  %v1906 = vadd.f32 %v1905, 0.014752088
  %v1907 = vmul.f32 %v1891, %v1906
  %v1908 = vadd.f32 %v1907, 0.112945676
  %v1909 = vmul.f32 %v1891, %v1908
  %v1910 = vadd.f32 %v1909, 0.4994258
  %v1911 = vmul.f32 %v1891, %v1910
  %v1912 = vadd.f32 %v1911, 1.0
  %v1913 = vrcp.pop %v1912
  %v1914 = vmul.f32 %v1912, %v1913
  %v1915 = vsub.f32 1.0, %v1914
  %v1916 = vmul.f32 %v1913, %v1915
  %v1917 = vadd.f32 %v1913, %v1916
  %vm1918 = vweird.f32 %v1912
  %vm1919 = vweird.f32 %v1913
  %vm1920 = vmor %vm1918, %vm1919
  %v1921 = vsel %vm1920, %v1913, %v1917
  %v1922 = vand.u32 2147483647, %v1912
  %vm1923 = vcmp.eq.f32.partialorder %v1922, 8.507059e+37
  %v1924 = vand.u32 %v1912, 2147483648
  %v1925 = vor.u32 1.1754944e-38, %v1924
  %v1926 = vsel %vm1923, %v1925, %v1921
  %v1927 = vmul.f32 %v1902, %v1926
  %v1928 = vmin.f32 %v1927, 1.0
  %v1929 = vmax.f32 %v1928, -1.0
  %v1930 = vmul.f32 %v1203, %v1203
  %v1931 = vmin.f32 16.0, %v1930
  %v1932 = vmul.f32 %v1931, 2.1237322e-06
  %v1933 = vadd.f32 %v1932, 0.00028619796
  %v1934 = vmul.f32 %v1931, %v1933
  %v1935 = vadd.f32 %v1934, 0.0036580483
  %v1936 = vmul.f32 %v1931, %v1935
  %v1937 = vadd.f32 %v1936, 0.05243302
  %v1938 = vmul.f32 %v1931, %v1937
  %v1939 = vadd.f32 %v1938, 0.18741608
  %v1940 = vmul.f32 %v1931, %v1939
  %v1941 = vadd.f32 %v1940, 1.1283791
  %v1942 = vmul.f32 %v1203, %v1941
  %v1943 = vmul.f32 %v1931, 3.8918573e-05
  %v1944 = vadd.f32 %v1943, 0.001143296
  %v1945 = vmul.f32 %v1931, %v1944
  %v1946 = vadd.f32 %v1945, 0.014752088
  %v1947 = vmul.f32 %v1931, %v1946
  %v1948 = vadd.f32 %v1947, 0.112945676
  %v1949 = vmul.f32 %v1931, %v1948
  %v1950 = vadd.f32 %v1949, 0.4994258
  %v1951 = vmul.f32 %v1931, %v1950
  %v1952 = vadd.f32 %v1951, 1.0
  %v1953 = vrcp.pop %v1952
  %v1954 = vmul.f32 %v1952, %v1953
  %v1955 = vsub.f32 1.0, %v1954
  %v1956 = vmul.f32 %v1953, %v1955
  %v1957 = vadd.f32 %v1953, %v1956
  %vm1958 = vweird.f32 %v1952
  %vm1959 = vweird.f32 %v1953
  %vm1960 = vmor %vm1958, %vm1959
  %v1961 = vsel %vm1960, %v1953, %v1957
  %v1962 = vand.u32 2147483647, %v1952
  %vm1963 = vcmp.eq.f32.partialorder %v1962, 8.507059e+37
  %v1964 = vand.u32 %v1952, 2147483648
  %v1965 = vor.u32 1.1754944e-38, %v1964
  %v1966 = vsel %vm1963, %v1965, %v1961
  %v1967 = vmul.f32 %v1942, %v1966
  %v1968 = vmin.f32 %v1967, 1.0
  %v1969 = vmax.f32 %v1968, -1.0
  %v1970 = vmul.f32 %v1204, %v1204
  %v1971 = vmin.f32 16.0, %v1970
  %v1972 = vmul.f32 %v1971, 2.1237322e-06
  %v1973 = vadd.f32 %v1972, 0.00028619796
  %v1974 = vmul.f32 %v1971, %v1973
  %v1975 = vadd.f32 %v1974, 0.0036580483
  %v1976 = vmul.f32 %v1971, %v1975
  %v1977 = vadd.f32 %v1976, 0.05243302
  %v1978 = vmul.f32 %v1971, %v1977
  %v1979 = vadd.f32 %v1978, 0.18741608
  %v1980 = vmul.f32 %v1971, %v1979
  %v1981 = vadd.f32 %v1980, 1.1283791
  %v1982 = vmul.f32 %v1204, %v1981
  %v1983 = vmul.f32 %v1971, 3.8918573e-05
  %v1984 = vadd.f32 %v1983, 0.001143296
  %v1985 = vmul.f32 %v1971, %v1984
  %v1986 = vadd.f32 %v1985, 0.014752088
  %v1987 = vmul.f32 %v1971, %v1986
  %v1988 = vadd.f32 %v1987, 0.112945676
  %v1989 = vmul.f32 %v1971, %v1988
  %v1990 = vadd.f32 %v1989, 0.4994258
  %v1991 = vmul.f32 %v1971, %v1990
  %v1992 = vadd.f32 %v1991, 1.0
  %v1993 = vrcp.pop %v1992
  %v1994 = vmul.f32 %v1992, %v1993
  %v1995 = vsub.f32 1.0, %v1994
  %v1996 = vmul.f32 %v1993, %v1995
  %v1997 = vadd.f32 %v1993, %v1996
  %vm1998 = vweird.f32 %v1992
  %vm1999 = vweird.f32 %v1993
  %vm2000 = vmor %vm1998, %vm1999
  %v2001 = vsel %vm2000, %v1993, %v1997
  %v2002 = vand.u32 2147483647, %v1992
  %vm2003 = vcmp.eq.f32.partialorder %v2002, 8.507059e+37
  %v2004 = vand.u32 %v1992, 2147483648
  %v2005 = vor.u32 1.1754944e-38, %v2004
  %v2006 = vsel %vm2003, %v2005, %v2001
  %v2007 = vmul.f32 %v1982, %v2006
  %v2008 = vmin.f32 %v2007, 1.0
  %v2009 = vmax.f32 %v2008, -1.0
  %v2010 = vmul.f32 %v1205, %v1205
  %v2011 = vmin.f32 16.0, %v2010
  %v2012 = vmul.f32 %v2011, 2.1237322e-06
  %v2013 = vadd.f32 %v2012, 0.00028619796
  %v2014 = vmul.f32 %v2011, %v2013
  %v2015 = vadd.f32 %v2014, 0.0036580483
  %v2016 = vmul.f32 %v2011, %v2015
  %v2017 = vadd.f32 %v2016, 0.05243302
  %v2018 = vmul.f32 %v2011, %v2017
  %v2019 = vadd.f32 %v2018, 0.18741608
  %v2020 = vmul.f32 %v2011, %v2019
  %v2021 = vadd.f32 %v2020, 1.1283791
  %v2022 = vmul.f32 %v1205, %v2021
  %v2023 = vmul.f32 %v2011, 3.8918573e-05
  %v2024 = vadd.f32 %v2023, 0.001143296
  %v2025 = vmul.f32 %v2011, %v2024
  %v2026 = vadd.f32 %v2025, 0.014752088
  %v2027 = vmul.f32 %v2011, %v2026
  %v2028 = vadd.f32 %v2027, 0.112945676
  %v2029 = vmul.f32 %v2011, %v2028
  %v2030 = vadd.f32 %v2029, 0.4994258
  %v2031 = vmul.f32 %v2011, %v2030
  %v2032 = vadd.f32 %v2031, 1.0
  %v2033 = vrcp.pop %v2032
  %v2034 = vmul.f32 %v2032, %v2033
  %v2035 = vsub.f32 1.0, %v2034
  %v2036 = vmul.f32 %v2033, %v2035
  %v2037 = vadd.f32 %v2033, %v2036
  %vm2038 = vweird.f32 %v2032
  %vm2039 = vweird.f32 %v2033
  %vm2040 = vmor %vm2038, %vm2039
  %v2041 = vsel %vm2040, %v2033, %v2037
  %v2042 = vand.u32 2147483647, %v2032
  %vm2043 = vcmp.eq.f32.partialorder %v2042, 8.507059e+37
  %v2044 = vand.u32 %v2032, 2147483648
  %v2045 = vor.u32 1.1754944e-38, %v2044
  %v2046 = vsel %vm2043, %v2045, %v2041
  %v2047 = vmul.f32 %v2022, %v2046
  %v2048 = vmin.f32 %v2047, 1.0
  %v2049 = vmax.f32 %v2048, -1.0
  %v2050 = vmul.f32 %v1206, %v1206
  %v2051 = vmin.f32 16.0, %v2050
  %v2052 = vmul.f32 %v2051, 2.1237322e-06
  %v2053 = vadd.f32 %v2052, 0.00028619796
  %v2054 = vmul.f32 %v2051, %v2053
  %v2055 = vadd.f32 %v2054, 0.0036580483
  %v2056 = vmul.f32 %v2051, %v2055
  %v2057 = vadd.f32 %v2056, 0.05243302
  %v2058 = vmul.f32 %v2051, %v2057
  %v2059 = vadd.f32 %v2058, 0.18741608
  %v2060 = vmul.f32 %v2051, %v2059
  %v2061 = vadd.f32 %v2060, 1.1283791
  %v2062 = vmul.f32 %v1206, %v2061
  %v2063 = vmul.f32 %v2051, 3.8918573e-05
  %v2064 = vadd.f32 %v2063, 0.001143296
  %v2065 = vmul.f32 %v2051, %v2064
  %v2066 = vadd.f32 %v2065, 0.014752088
  %v2067 = vmul.f32 %v2051, %v2066
  %v2068 = vadd.f32 %v2067, 0.112945676
  %v2069 = vmul.f32 %v2051, %v2068
  %v2070 = vadd.f32 %v2069, 0.4994258
  %v2071 = vmul.f32 %v2051, %v2070
  %v2072 = vadd.f32 %v2071, 1.0
  %v2073 = vrcp.pop %v2072
  %v2074 = vmul.f32 %v2072, %v2073
  %v2075 = vsub.f32 1.0, %v2074
  %v2076 = vmul.f32 %v2073, %v2075
  %v2077 = vadd.f32 %v2073, %v2076
  %vm2078 = vweird.f32 %v2072
  %vm2079 = vweird.f32 %v2073
  %vm2080 = vmor %vm2078, %vm2079
  %v2081 = vsel %vm2080, %v2073, %v2077
  %v2082 = vand.u32 2147483647, %v2072
  %vm2083 = vcmp.eq.f32.partialorder %v2082, 8.507059e+37
  %v2084 = vand.u32 %v2072, 2147483648
  %v2085 = vor.u32 1.1754944e-38, %v2084
  %v2086 = vsel %vm2083, %v2085, %v2081
  %v2087 = vmul.f32 %v2062, %v2086
  %v2088 = vmin.f32 %v2087, 1.0
  %v2089 = vmax.f32 %v2088, -1.0
  %v2090 = vmul.f32 %v1207, %v1207
  %v2091 = vmin.f32 16.0, %v2090
  %v2092 = vmul.f32 %v2091, 2.1237322e-06
  %v2093 = vadd.f32 %v2092, 0.00028619796
  %v2094 = vmul.f32 %v2091, %v2093
  %v2095 = vadd.f32 %v2094, 0.0036580483
  %v2096 = vmul.f32 %v2091, %v2095
  %v2097 = vadd.f32 %v2096, 0.05243302
  %v2098 = vmul.f32 %v2091, %v2097
  %v2099 = vadd.f32 %v2098, 0.18741608
  %v2100 = vmul.f32 %v2091, %v2099
  %v2101 = vadd.f32 %v2100, 1.1283791
  %v2102 = vmul.f32 %v1207, %v2101
  %v2103 = vmul.f32 %v2091, 3.8918573e-05
  %v2104 = vadd.f32 %v2103, 0.001143296
  %v2105 = vmul.f32 %v2091, %v2104
  %v2106 = vadd.f32 %v2105, 0.014752088
  %v2107 = vmul.f32 %v2091, %v2106
  %v2108 = vadd.f32 %v2107, 0.112945676
  %v2109 = vmul.f32 %v2091, %v2108
  %v2110 = vadd.f32 %v2109, 0.4994258
  %v2111 = vmul.f32 %v2091, %v2110
  %v2112 = vadd.f32 %v2111, 1.0
  %v2113 = vrcp.pop %v2112
  %v2114 = vmul.f32 %v2112, %v2113
  %v2115 = vsub.f32 1.0, %v2114
  %v2116 = vmul.f32 %v2113, %v2115
  %v2117 = vadd.f32 %v2113, %v2116
  %vm2118 = vweird.f32 %v2112
  %vm2119 = vweird.f32 %v2113
  %vm2120 = vmor %vm2118, %vm2119
  %v2121 = vsel %vm2120, %v2113, %v2117
  %v2122 = vand.u32 2147483647, %v2112
  %vm2123 = vcmp.eq.f32.partialorder %v2122, 8.507059e+37
  %v2124 = vand.u32 %v2112, 2147483648
  %v2125 = vor.u32 1.1754944e-38, %v2124
  %v2126 = vsel %vm2123, %v2125, %v2121
  %v2127 = vmul.f32 %v2102, %v2126
  %v2128 = vmin.f32 %v2127, 1.0
  %v2129 = vmax.f32 %v2128, -1.0
  %v2130 = vmul.f32 %v1208, %v1208
  %v2131 = vmin.f32 16.0, %v2130
  %v2132 = vmul.f32 %v2131, 2.1237322e-06
  %v2133 = vadd.f32 %v2132, 0.00028619796
  %v2134 = vmul.f32 %v2131, %v2133
  %v2135 = vadd.f32 %v2134, 0.0036580483
  %v2136 = vmul.f32 %v2131, %v2135
  %v2137 = vadd.f32 %v2136, 0.05243302
  %v2138 = vmul.f32 %v2131, %v2137
  %v2139 = vadd.f32 %v2138, 0.18741608
  %v2140 = vmul.f32 %v2131, %v2139
  %v2141 = vadd.f32 %v2140, 1.1283791
  %v2142 = vmul.f32 %v1208, %v2141
  %v2143 = vmul.f32 %v2131, 3.8918573e-05
  %v2144 = vadd.f32 %v2143, 0.001143296
  %v2145 = vmul.f32 %v2131, %v2144
  %v2146 = vadd.f32 %v2145, 0.014752088
  %v2147 = vmul.f32 %v2131, %v2146
  %v2148 = vadd.f32 %v2147, 0.112945676
  %v2149 = vmul.f32 %v2131, %v2148
  %v2150 = vadd.f32 %v2149, 0.4994258
  %v2151 = vmul.f32 %v2131, %v2150
  %v2152 = vadd.f32 %v2151, 1.0
  %v2153 = vrcp.pop %v2152
  %v2154 = vmul.f32 %v2152, %v2153
  %v2155 = vsub.f32 1.0, %v2154
  %v2156 = vmul.f32 %v2153, %v2155
  %v2157 = vadd.f32 %v2153, %v2156
  %vm2158 = vweird.f32 %v2152
  %vm2159 = vweird.f32 %v2153
  %vm2160 = vmor %vm2158, %vm2159
  %v2161 = vsel %vm2160, %v2153, %v2157
  %v2162 = vand.u32 2147483647, %v2152
  %vm2163 = vcmp.eq.f32.partialorder %v2162, 8.507059e+37
  %v2164 = vand.u32 %v2152, 2147483648
  %v2165 = vor.u32 1.1754944e-38, %v2164
  %v2166 = vsel %vm2163, %v2165, %v2161
  %v2167 = vmul.f32 %v2142, %v2166
  %v2168 = vmin.f32 %v2167, 1.0
  %v2169 = vmax.f32 %v2168, -1.0
  %v2170 = vmul.f32 %v1209, %v1209
  %v2171 = vmin.f32 16.0, %v2170
  %v2172 = vmul.f32 %v2171, 2.1237322e-06
  %v2173 = vadd.f32 %v2172, 0.00028619796
  %v2174 = vmul.f32 %v2171, %v2173
  %v2175 = vadd.f32 %v2174, 0.0036580483
  %v2176 = vmul.f32 %v2171, %v2175
  %v2177 = vadd.f32 %v2176, 0.05243302
  %v2178 = vmul.f32 %v2171, %v2177
  %v2179 = vadd.f32 %v2178, 0.18741608
  %v2180 = vmul.f32 %v2171, %v2179
  %v2181 = vadd.f32 %v2180, 1.1283791
  %v2182 = vmul.f32 %v1209, %v2181
  %v2183 = vmul.f32 %v2171, 3.8918573e-05
  %v2184 = vadd.f32 %v2183, 0.001143296
  %v2185 = vmul.f32 %v2171, %v2184
  %v2186 = vadd.f32 %v2185, 0.014752088
  %v2187 = vmul.f32 %v2171, %v2186
  %v2188 = vadd.f32 %v2187, 0.112945676
  %v2189 = vmul.f32 %v2171, %v2188
  %v2190 = vadd.f32 %v2189, 0.4994258
  %v2191 = vmul.f32 %v2171, %v2190
  %v2192 = vadd.f32 %v2191, 1.0
  %v2193 = vrcp.pop %v2192
  %v2194 = vmul.f32 %v2192, %v2193
  %v2195 = vsub.f32 1.0, %v2194
  %v2196 = vmul.f32 %v2193, %v2195
  %v2197 = vadd.f32 %v2193, %v2196
  %vm2198 = vweird.f32 %v2192
  %vm2199 = vweird.f32 %v2193
  %vm2200 = vmor %vm2198, %vm2199
  %v2201 = vsel %vm2200, %v2193, %v2197
  %v2202 = vand.u32 2147483647, %v2192
  %vm2203 = vcmp.eq.f32.partialorder %v2202, 8.507059e+37
  %v2204 = vand.u32 %v2192, 2147483648
  %v2205 = vor.u32 1.1754944e-38, %v2204
  %v2206 = vsel %vm2203, %v2205, %v2201
  %v2207 = vmul.f32 %v2182, %v2206
  %v2208 = vmin.f32 %v2207, 1.0
  %v2209 = vmax.f32 %v2208, -1.0
  %v2210 = vmul.f32 %v1210, %v1210
  %v2211 = vmin.f32 16.0, %v2210
  %v2212 = vmul.f32 %v2211, 2.1237322e-06
  %v2213 = vadd.f32 %v2212, 0.00028619796
  %v2214 = vmul.f32 %v2211, %v2213
  %v2215 = vadd.f32 %v2214, 0.0036580483
  %v2216 = vmul.f32 %v2211, %v2215
  %v2217 = vadd.f32 %v2216, 0.05243302
  %v2218 = vmul.f32 %v2211, %v2217
  %v2219 = vadd.f32 %v2218, 0.18741608
  %v2220 = vmul.f32 %v2211, %v2219
  %v2221 = vadd.f32 %v2220, 1.1283791
  %v2222 = vmul.f32 %v1210, %v2221
  %v2223 = vmul.f32 %v2211, 3.8918573e-05
  %v2224 = vadd.f32 %v2223, 0.001143296
  %v2225 = vmul.f32 %v2211, %v2224
  %v2226 = vadd.f32 %v2225, 0.014752088
  %v2227 = vmul.f32 %v2211, %v2226
  %v2228 = vadd.f32 %v2227, 0.112945676
  %v2229 = vmul.f32 %v2211, %v2228
  %v2230 = vadd.f32 %v2229, 0.4994258
  %v2231 = vmul.f32 %v2211, %v2230
  %v2232 = vadd.f32 %v2231, 1.0
  %v2233 = vrcp.pop %v2232
  %v2234 = vmul.f32 %v2232, %v2233
  %v2235 = vsub.f32 1.0, %v2234
  %v2236 = vmul.f32 %v2233, %v2235
  %v2237 = vadd.f32 %v2233, %v2236
  %vm2238 = vweird.f32 %v2232
  %vm2239 = vweird.f32 %v2233
  %vm2240 = vmor %vm2238, %vm2239
  %v2241 = vsel %vm2240, %v2233, %v2237
  %v2242 = vand.u32 2147483647, %v2232
  %vm2243 = vcmp.eq.f32.partialorder %v2242, 8.507059e+37
  %v2244 = vand.u32 %v2232, 2147483648
  %v2245 = vor.u32 1.1754944e-38, %v2244
  %v2246 = vsel %vm2243, %v2245, %v2241
  %v2247 = vmul.f32 %v2222, %v2246
  %v2248 = vmin.f32 %v2247, 1.0
  %v2249 = vmax.f32 %v2248, -1.0
  %v2250 = vmul.f32 %v1211, %v1211
  %v2251 = vmin.f32 16.0, %v2250
  %v2252 = vmul.f32 %v2251, 2.1237322e-06
  %v2253 = vadd.f32 %v2252, 0.00028619796
  %v2254 = vmul.f32 %v2251, %v2253
  %v2255 = vadd.f32 %v2254, 0.0036580483
  %v2256 = vmul.f32 %v2251, %v2255
  %v2257 = vadd.f32 %v2256, 0.05243302
  %v2258 = vmul.f32 %v2251, %v2257
  %v2259 = vadd.f32 %v2258, 0.18741608
  %v2260 = vmul.f32 %v2251, %v2259
  %v2261 = vadd.f32 %v2260, 1.1283791
  %v2262 = vmul.f32 %v1211, %v2261
  %v2263 = vmul.f32 %v2251, 3.8918573e-05
  %v2264 = vadd.f32 %v2263, 0.001143296
  %v2265 = vmul.f32 %v2251, %v2264
  %v2266 = vadd.f32 %v2265, 0.014752088
  %v2267 = vmul.f32 %v2251, %v2266
  %v2268 = vadd.f32 %v2267, 0.112945676
  %v2269 = vmul.f32 %v2251, %v2268
  %v2270 = vadd.f32 %v2269, 0.4994258
  %v2271 = vmul.f32 %v2251, %v2270
  %v2272 = vadd.f32 %v2271, 1.0
  %v2273 = vrcp.pop %v2272
  %v2274 = vmul.f32 %v2272, %v2273
  %v2275 = vsub.f32 1.0, %v2274
  %v2276 = vmul.f32 %v2273, %v2275
  %v2277 = vadd.f32 %v2273, %v2276
  %vm2278 = vweird.f32 %v2272
  %vm2279 = vweird.f32 %v2273
  %vm2280 = vmor %vm2278, %vm2279
  %v2281 = vsel %vm2280, %v2273, %v2277
  %v2282 = vand.u32 2147483647, %v2272
  %vm2283 = vcmp.eq.f32.partialorder %v2282, 8.507059e+37
  %v2284 = vand.u32 %v2272, 2147483648
  %v2285 = vor.u32 1.1754944e-38, %v2284
  %v2286 = vsel %vm2283, %v2285, %v2281
  %v2287 = vmul.f32 %v2262, %v2286
  %v2288 = vmin.f32 %v2287, 1.0
  %v2289 = vmax.f32 %v2288, -1.0
  %v2290 = vmul.f32 %v1212, %v1212
  %v2291 = vmin.f32 16.0, %v2290
  %v2292 = vmul.f32 %v2291, 2.1237322e-06
  %v2293 = vadd.f32 %v2292, 0.00028619796
  %v2294 = vmul.f32 %v2291, %v2293
  %v2295 = vadd.f32 %v2294, 0.0036580483
  %v2296 = vmul.f32 %v2291, %v2295
  %v2297 = vadd.f32 %v2296, 0.05243302
  %v2298 = vmul.f32 %v2291, %v2297
  %v2299 = vadd.f32 %v2298, 0.18741608
  %v2300 = vmul.f32 %v2291, %v2299
  %v2301 = vadd.f32 %v2300, 1.1283791
  %v2302 = vmul.f32 %v1212, %v2301
  %v2303 = vmul.f32 %v2291, 3.8918573e-05
  %v2304 = vadd.f32 %v2303, 0.001143296
  %v2305 = vmul.f32 %v2291, %v2304
  %v2306 = vadd.f32 %v2305, 0.014752088
  %v2307 = vmul.f32 %v2291, %v2306
  %v2308 = vadd.f32 %v2307, 0.112945676
  %v2309 = vmul.f32 %v2291, %v2308
  %v2310 = vadd.f32 %v2309, 0.4994258
  %v2311 = vmul.f32 %v2291, %v2310
  %v2312 = vadd.f32 %v2311, 1.0
  %v2313 = vrcp.pop %v2312
  %v2314 = vmul.f32 %v2312, %v2313
  %v2315 = vsub.f32 1.0, %v2314
  %v2316 = vmul.f32 %v2313, %v2315
  %v2317 = vadd.f32 %v2313, %v2316
  %vm2318 = vweird.f32 %v2312
  %vm2319 = vweird.f32 %v2313
  %vm2320 = vmor %vm2318, %vm2319
  %v2321 = vsel %vm2320, %v2313, %v2317
  %v2322 = vand.u32 2147483647, %v2312
  %vm2323 = vcmp.eq.f32.partialorder %v2322, 8.507059e+37
  %v2324 = vand.u32 %v2312, 2147483648
  %v2325 = vor.u32 1.1754944e-38, %v2324
  %v2326 = vsel %vm2323, %v2325, %v2321
  %v2327 = vmul.f32 %v2302, %v2326
  %v2328 = vmin.f32 %v2327, 1.0
  %v2329 = vmax.f32 %v2328, -1.0
  %v2330 = vmul.f32 %v1213, %v1213
  %v2331 = vmin.f32 16.0, %v2330
  %v2332 = vmul.f32 %v2331, 2.1237322e-06
  %v2333 = vadd.f32 %v2332, 0.00028619796
  %v2334 = vmul.f32 %v2331, %v2333
  %v2335 = vadd.f32 %v2334, 0.0036580483
  %v2336 = vmul.f32 %v2331, %v2335
  %v2337 = vadd.f32 %v2336, 0.05243302
  %v2338 = vmul.f32 %v2331, %v2337
  %v2339 = vadd.f32 %v2338, 0.18741608
  %v2340 = vmul.f32 %v2331, %v2339
  %v2341 = vadd.f32 %v2340, 1.1283791
  %v2342 = vmul.f32 %v1213, %v2341
  %v2343 = vmul.f32 %v2331, 3.8918573e-05
  %v2344 = vadd.f32 %v2343, 0.001143296
  %v2345 = vmul.f32 %v2331, %v2344
  %v2346 = vadd.f32 %v2345, 0.014752088
  %v2347 = vmul.f32 %v2331, %v2346
  %v2348 = vadd.f32 %v2347, 0.112945676
  %v2349 = vmul.f32 %v2331, %v2348
  %v2350 = vadd.f32 %v2349, 0.4994258
  %v2351 = vmul.f32 %v2331, %v2350
  %v2352 = vadd.f32 %v2351, 1.0
  %v2353 = vrcp.pop %v2352
  %v2354 = vmul.f32 %v2352, %v2353
  %v2355 = vsub.f32 1.0, %v2354
  %v2356 = vmul.f32 %v2353, %v2355
  %v2357 = vadd.f32 %v2353, %v2356
  %vm2358 = vweird.f32 %v2352
  %vm2359 = vweird.f32 %v2353
  %vm2360 = vmor %vm2358, %vm2359
  %v2361 = vsel %vm2360, %v2353, %v2357
  %v2362 = vand.u32 2147483647, %v2352
  %vm2363 = vcmp.eq.f32.partialorder %v2362, 8.507059e+37
  %v2364 = vand.u32 %v2352, 2147483648
  %v2365 = vor.u32 1.1754944e-38, %v2364
  %v2366 = vsel %vm2363, %v2365, %v2361
  %v2367 = vmul.f32 %v2342, %v2366
  %v2368 = vmin.f32 %v2367, 1.0
  %v2369 = vmax.f32 %v2368, -1.0
  %v2370 = vmul.f32 %v1214, %v1214
  %v2371 = vmin.f32 16.0, %v2370
  %v2372 = vmul.f32 %v2371, 2.1237322e-06
  %v2373 = vadd.f32 %v2372, 0.00028619796
  %v2374 = vmul.f32 %v2371, %v2373
  %v2375 = vadd.f32 %v2374, 0.0036580483
  %v2376 = vmul.f32 %v2371, %v2375
  %v2377 = vadd.f32 %v2376, 0.05243302
  %v2378 = vmul.f32 %v2371, %v2377
  %v2379 = vadd.f32 %v2378, 0.18741608
  %v2380 = vmul.f32 %v2371, %v2379
  %v2381 = vadd.f32 %v2380, 1.1283791
  %v2382 = vmul.f32 %v1214, %v2381
  %v2383 = vmul.f32 %v2371, 3.8918573e-05
  %v2384 = vadd.f32 %v2383, 0.001143296
  %v2385 = vmul.f32 %v2371, %v2384
  %v2386 = vadd.f32 %v2385, 0.014752088
  %v2387 = vmul.f32 %v2371, %v2386
  %v2388 = vadd.f32 %v2387, 0.112945676
  %v2389 = vmul.f32 %v2371, %v2388
  %v2390 = vadd.f32 %v2389, 0.4994258
  %v2391 = vmul.f32 %v2371, %v2390
  %v2392 = vadd.f32 %v2391, 1.0
  %v2393 = vrcp.pop %v2392
  %v2394 = vmul.f32 %v2392, %v2393
  %v2395 = vsub.f32 1.0, %v2394
  %v2396 = vmul.f32 %v2393, %v2395
  %v2397 = vadd.f32 %v2393, %v2396
  %vm2398 = vweird.f32 %v2392
  %vm2399 = vweird.f32 %v2393
  %vm2400 = vmor %vm2398, %vm2399
  %v2401 = vsel %vm2400, %v2393, %v2397
  %v2402 = vand.u32 2147483647, %v2392
  %vm2403 = vcmp.eq.f32.partialorder %v2402, 8.507059e+37
  %v2404 = vand.u32 %v2392, 2147483648
  %v2405 = vor.u32 1.1754944e-38, %v2404
  %v2406 = vsel %vm2403, %v2405, %v2401
  %v2407 = vmul.f32 %v2382, %v2406
  %v2408 = vmin.f32 %v2407, 1.0
  %v2409 = vmax.f32 %v2408, -1.0
  %v2410 = vmul.f32 %v1215, %v1215
  %v2411 = vmin.f32 16.0, %v2410
  %v2412 = vmul.f32 %v2411, 2.1237322e-06
  %v2413 = vadd.f32 %v2412, 0.00028619796
  %v2414 = vmul.f32 %v2411, %v2413
  %v2415 = vadd.f32 %v2414, 0.0036580483
  %v2416 = vmul.f32 %v2411, %v2415
  %v2417 = vadd.f32 %v2416, 0.05243302
  %v2418 = vmul.f32 %v2411, %v2417
  %v2419 = vadd.f32 %v2418, 0.18741608
  %v2420 = vmul.f32 %v2411, %v2419
  %v2421 = vadd.f32 %v2420, 1.1283791
  %v2422 = vmul.f32 %v1215, %v2421
  %v2423 = vmul.f32 %v2411, 3.8918573e-05
  %v2424 = vadd.f32 %v2423, 0.001143296
  %v2425 = vmul.f32 %v2411, %v2424
  %v2426 = vadd.f32 %v2425, 0.014752088
  %v2427 = vmul.f32 %v2411, %v2426
  %v2428 = vadd.f32 %v2427, 0.112945676
  %v2429 = vmul.f32 %v2411, %v2428
  %v2430 = vadd.f32 %v2429, 0.4994258
  %v2431 = vmul.f32 %v2411, %v2430
  %v2432 = vadd.f32 %v2431, 1.0
  %v2433 = vrcp.pop %v2432
  %v2434 = vmul.f32 %v2432, %v2433
  %v2435 = vsub.f32 1.0, %v2434
  %v2436 = vmul.f32 %v2433, %v2435
  %v2437 = vadd.f32 %v2433, %v2436
  %vm2438 = vweird.f32 %v2432
  %vm2439 = vweird.f32 %v2433
  %vm2440 = vmor %vm2438, %vm2439
  %v2441 = vsel %vm2440, %v2433, %v2437
  %v2442 = vand.u32 2147483647, %v2432
  %vm2443 = vcmp.eq.f32.partialorder %v2442, 8.507059e+37
  %v2444 = vand.u32 %v2432, 2147483648
  %v2445 = vor.u32 1.1754944e-38, %v2444
  %v2446 = vsel %vm2443, %v2445, %v2441
  %v2447 = vmul.f32 %v2422, %v2446
  %v2448 = vmin.f32 %v2447, 1.0
  %v2449 = vmax.f32 %v2448, -1.0
  %v2450 = vmul.f32 %v1216, %v1216
  %v2451 = vmin.f32 16.0, %v2450
  %v2452 = vmul.f32 %v2451, 2.1237322e-06
  %v2453 = vadd.f32 %v2452, 0.00028619796
  %v2454 = vmul.f32 %v2451, %v2453
  %v2455 = vadd.f32 %v2454, 0.0036580483
  %v2456 = vmul.f32 %v2451, %v2455
  %v2457 = vadd.f32 %v2456, 0.05243302
  %v2458 = vmul.f32 %v2451, %v2457
  %v2459 = vadd.f32 %v2458, 0.18741608
  %v2460 = vmul.f32 %v2451, %v2459
  %v2461 = vadd.f32 %v2460, 1.1283791
  %v2462 = vmul.f32 %v1216, %v2461
  %v2463 = vmul.f32 %v2451, 3.8918573e-05
  %v2464 = vadd.f32 %v2463, 0.001143296
  %v2465 = vmul.f32 %v2451, %v2464
  %v2466 = vadd.f32 %v2465, 0.014752088
  %v2467 = vmul.f32 %v2451, %v2466
  %v2468 = vadd.f32 %v2467, 0.112945676
  %v2469 = vmul.f32 %v2451, %v2468
  %v2470 = vadd.f32 %v2469, 0.4994258
  %v2471 = vmul.f32 %v2451, %v2470
  %v2472 = vadd.f32 %v2471, 1.0
  %v2473 = vrcp.pop %v2472
  %v2474 = vmul.f32 %v2472, %v2473
  %v2475 = vsub.f32 1.0, %v2474
  %v2476 = vmul.f32 %v2473, %v2475
  %v2477 = vadd.f32 %v2473, %v2476
  %vm2478 = vweird.f32 %v2472
  %vm2479 = vweird.f32 %v2473
  %vm2480 = vmor %vm2478, %vm2479
  %v2481 = vsel %vm2480, %v2473, %v2477
  %v2482 = vand.u32 2147483647, %v2472
  %vm2483 = vcmp.eq.f32.partialorder %v2482, 8.507059e+37
  %v2484 = vand.u32 %v2472, 2147483648
  %v2485 = vor.u32 1.1754944e-38, %v2484
  %v2486 = vsel %vm2483, %v2485, %v2481
  %v2487 = vmul.f32 %v2462, %v2486
  %v2488 = vmin.f32 %v2487, 1.0
  %v2489 = vmax.f32 %v2488, -1.0
  %v2490 = vmul.f32 %v1217, %v1217
  %v2491 = vmin.f32 16.0, %v2490
  %v2492 = vmul.f32 %v2491, 2.1237322e-06
  %v2493 = vadd.f32 %v2492, 0.00028619796
  %v2494 = vmul.f32 %v2491, %v2493
  %v2495 = vadd.f32 %v2494, 0.0036580483
  %v2496 = vmul.f32 %v2491, %v2495
  %v2497 = vadd.f32 %v2496, 0.05243302
  %v2498 = vmul.f32 %v2491, %v2497
  %v2499 = vadd.f32 %v2498, 0.18741608
  %v2500 = vmul.f32 %v2491, %v2499
  %v2501 = vadd.f32 %v2500, 1.1283791
  %v2502 = vmul.f32 %v1217, %v2501
  %v2503 = vmul.f32 %v2491, 3.8918573e-05
  %v2504 = vadd.f32 %v2503, 0.001143296
  %v2505 = vmul.f32 %v2491, %v2504
  %v2506 = vadd.f32 %v2505, 0.014752088
  %v2507 = vmul.f32 %v2491, %v2506
  %v2508 = vadd.f32 %v2507, 0.112945676
  %v2509 = vmul.f32 %v2491, %v2508
  %v2510 = vadd.f32 %v2509, 0.4994258
  %v2511 = vmul.f32 %v2491, %v2510
  %v2512 = vadd.f32 %v2511, 1.0
  %v2513 = vrcp.pop %v2512
  %v2514 = vmul.f32 %v2512, %v2513
  %v2515 = vsub.f32 1.0, %v2514
  %v2516 = vmul.f32 %v2513, %v2515
  %v2517 = vadd.f32 %v2513, %v2516
  %vm2518 = vweird.f32 %v2512
  %vm2519 = vweird.f32 %v2513
  %vm2520 = vmor %vm2518, %vm2519
  %v2521 = vsel %vm2520, %v2513, %v2517
  %v2522 = vand.u32 2147483647, %v2512
  %vm2523 = vcmp.eq.f32.partialorder %v2522, 8.507059e+37
  %v2524 = vand.u32 %v2512, 2147483648
  %v2525 = vor.u32 1.1754944e-38, %v2524
  %v2526 = vsel %vm2523, %v2525, %v2521
  %v2527 = vmul.f32 %v2502, %v2526
  %v2528 = vmin.f32 %v2527, 1.0
  %v2529 = vmax.f32 %v2528, -1.0
  %v2530 = vmul.f32 %v1218, %v1218
  %v2531 = vmin.f32 16.0, %v2530
  %v2532 = vmul.f32 %v2531, 2.1237322e-06
  %v2533 = vadd.f32 %v2532, 0.00028619796
  %v2534 = vmul.f32 %v2531, %v2533
  %v2535 = vadd.f32 %v2534, 0.0036580483
  %v2536 = vmul.f32 %v2531, %v2535
  %v2537 = vadd.f32 %v2536, 0.05243302
  %v2538 = vmul.f32 %v2531, %v2537
  %v2539 = vadd.f32 %v2538, 0.18741608
  %v2540 = vmul.f32 %v2531, %v2539
  %v2541 = vadd.f32 %v2540, 1.1283791
  %v2542 = vmul.f32 %v1218, %v2541
  %v2543 = vmul.f32 %v2531, 3.8918573e-05
  %v2544 = vadd.f32 %v2543, 0.001143296
  %v2545 = vmul.f32 %v2531, %v2544
  %v2546 = vadd.f32 %v2545, 0.014752088
  %v2547 = vmul.f32 %v2531, %v2546
  %v2548 = vadd.f32 %v2547, 0.112945676
  %v2549 = vmul.f32 %v2531, %v2548
  %v2550 = vadd.f32 %v2549, 0.4994258
  %v2551 = vmul.f32 %v2531, %v2550
  %v2552 = vadd.f32 %v2551, 1.0
  %v2553 = vrcp.pop %v2552
  %v2554 = vmul.f32 %v2552, %v2553
  %v2555 = vsub.f32 1.0, %v2554
  %v2556 = vmul.f32 %v2553, %v2555
  %v2557 = vadd.f32 %v2553, %v2556
  %vm2558 = vweird.f32 %v2552
  %vm2559 = vweird.f32 %v2553
  %vm2560 = vmor %vm2558, %vm2559
  %v2561 = vsel %vm2560, %v2553, %v2557
  %v2562 = vand.u32 2147483647, %v2552
  %vm2563 = vcmp.eq.f32.partialorder %v2562, 8.507059e+37
  %v2564 = vand.u32 %v2552, 2147483648
  %v2565 = vor.u32 1.1754944e-38, %v2564
  %v2566 = vsel %vm2563, %v2565, %v2561
  %v2567 = vmul.f32 %v2542, %v2566
  %v2568 = vmin.f32 %v2567, 1.0
  %v2569 = vmax.f32 %v2568, -1.0
  %v2570 = vmul.f32 %v1219, %v1219
  %v2571 = vmin.f32 16.0, %v2570
  %v2572 = vmul.f32 %v2571, 2.1237322e-06
  %v2573 = vadd.f32 %v2572, 0.00028619796
  %v2574 = vmul.f32 %v2571, %v2573
  %v2575 = vadd.f32 %v2574, 0.0036580483
  %v2576 = vmul.f32 %v2571, %v2575
  %v2577 = vadd.f32 %v2576, 0.05243302
  %v2578 = vmul.f32 %v2571, %v2577
  %v2579 = vadd.f32 %v2578, 0.18741608
  %v2580 = vmul.f32 %v2571, %v2579
  %v2581 = vadd.f32 %v2580, 1.1283791
  %v2582 = vmul.f32 %v1219, %v2581
  %v2583 = vmul.f32 %v2571, 3.8918573e-05
  %v2584 = vadd.f32 %v2583, 0.001143296
  %v2585 = vmul.f32 %v2571, %v2584
  %v2586 = vadd.f32 %v2585, 0.014752088
  %v2587 = vmul.f32 %v2571, %v2586
  %v2588 = vadd.f32 %v2587, 0.112945676
  %v2589 = vmul.f32 %v2571, %v2588
  %v2590 = vadd.f32 %v2589, 0.4994258
  %v2591 = vmul.f32 %v2571, %v2590
  %v2592 = vadd.f32 %v2591, 1.0
  %v2593 = vrcp.pop %v2592
  %v2594 = vmul.f32 %v2592, %v2593
  %v2595 = vsub.f32 1.0, %v2594
  %v2596 = vmul.f32 %v2593, %v2595
  %v2597 = vadd.f32 %v2593, %v2596
  %vm2598 = vweird.f32 %v2592
  %vm2599 = vweird.f32 %v2593
  %vm2600 = vmor %vm2598, %vm2599
  %v2601 = vsel %vm2600, %v2593, %v2597
  %v2602 = vand.u32 2147483647, %v2592
  %vm2603 = vcmp.eq.f32.partialorder %v2602, 8.507059e+37
  %v2604 = vand.u32 %v2592, 2147483648
  %v2605 = vor.u32 1.1754944e-38, %v2604
  %v2606 = vsel %vm2603, %v2605, %v2601
  %v2607 = vmul.f32 %v2582, %v2606
  %v2608 = vmin.f32 %v2607, 1.0
  %v2609 = vmax.f32 %v2608, -1.0
  %v2610 = vmul.f32 %v1220, %v1220
  %v2611 = vmin.f32 16.0, %v2610
  %v2612 = vmul.f32 %v2611, 2.1237322e-06
  %v2613 = vadd.f32 %v2612, 0.00028619796
  %v2614 = vmul.f32 %v2611, %v2613
  %v2615 = vadd.f32 %v2614, 0.0036580483
  %v2616 = vmul.f32 %v2611, %v2615
  %v2617 = vadd.f32 %v2616, 0.05243302
  %v2618 = vmul.f32 %v2611, %v2617
  %v2619 = vadd.f32 %v2618, 0.18741608
  %v2620 = vmul.f32 %v2611, %v2619
  %v2621 = vadd.f32 %v2620, 1.1283791
  %v2622 = vmul.f32 %v1220, %v2621
  %v2623 = vmul.f32 %v2611, 3.8918573e-05
  %v2624 = vadd.f32 %v2623, 0.001143296
  %v2625 = vmul.f32 %v2611, %v2624
  %v2626 = vadd.f32 %v2625, 0.014752088
  %v2627 = vmul.f32 %v2611, %v2626
  %v2628 = vadd.f32 %v2627, 0.112945676
  %v2629 = vmul.f32 %v2611, %v2628
  %v2630 = vadd.f32 %v2629, 0.4994258
  %v2631 = vmul.f32 %v2611, %v2630
  %v2632 = vadd.f32 %v2631, 1.0
  %v2633 = vrcp.pop %v2632
  %v2634 = vmul.f32 %v2632, %v2633
  %v2635 = vsub.f32 1.0, %v2634
  %v2636 = vmul.f32 %v2633, %v2635
  %v2637 = vadd.f32 %v2633, %v2636
  %vm2638 = vweird.f32 %v2632
  %vm2639 = vweird.f32 %v2633
  %vm2640 = vmor %vm2638, %vm2639
  %v2641 = vsel %vm2640, %v2633, %v2637
  %v2642 = vand.u32 2147483647, %v2632
  %vm2643 = vcmp.eq.f32.partialorder %v2642, 8.507059e+37
  %v2644 = vand.u32 %v2632, 2147483648
  %v2645 = vor.u32 1.1754944e-38, %v2644
  %v2646 = vsel %vm2643, %v2645, %v2641
  %v2647 = vmul.f32 %v2622, %v2646
  %v2648 = vmin.f32 %v2647, 1.0
  %v2649 = vmax.f32 %v2648, -1.0
  %v2650 = vmul.f32 %v1221, %v1221
  %v2651 = vmin.f32 16.0, %v2650
  %v2652 = vmul.f32 %v2651, 2.1237322e-06
  %v2653 = vadd.f32 %v2652, 0.00028619796
  %v2654 = vmul.f32 %v2651, %v2653
  %v2655 = vadd.f32 %v2654, 0.0036580483
  %v2656 = vmul.f32 %v2651, %v2655
  %v2657 = vadd.f32 %v2656, 0.05243302
  %v2658 = vmul.f32 %v2651, %v2657
  %v2659 = vadd.f32 %v2658, 0.18741608
  %v2660 = vmul.f32 %v2651, %v2659
  %v2661 = vadd.f32 %v2660, 1.1283791
  %v2662 = vmul.f32 %v1221, %v2661
  %v2663 = vmul.f32 %v2651, 3.8918573e-05
  %v2664 = vadd.f32 %v2663, 0.001143296
  %v2665 = vmul.f32 %v2651, %v2664
  %v2666 = vadd.f32 %v2665, 0.014752088
  %v2667 = vmul.f32 %v2651, %v2666
  %v2668 = vadd.f32 %v2667, 0.112945676
  %v2669 = vmul.f32 %v2651, %v2668
  %v2670 = vadd.f32 %v2669, 0.4994258
  %v2671 = vmul.f32 %v2651, %v2670
  %v2672 = vadd.f32 %v2671, 1.0
  %v2673 = vrcp.pop %v2672
  %v2674 = vmul.f32 %v2672, %v2673
  %v2675 = vsub.f32 1.0, %v2674
  %v2676 = vmul.f32 %v2673, %v2675
  %v2677 = vadd.f32 %v2673, %v2676
  %vm2678 = vweird.f32 %v2672
  %vm2679 = vweird.f32 %v2673
  %vm2680 = vmor %vm2678, %vm2679
  %v2681 = vsel %vm2680, %v2673, %v2677
  %v2682 = vand.u32 2147483647, %v2672
  %vm2683 = vcmp.eq.f32.partialorder %v2682, 8.507059e+37
  %v2684 = vand.u32 %v2672, 2147483648
  %v2685 = vor.u32 1.1754944e-38, %v2684
  %v2686 = vsel %vm2683, %v2685, %v2681
  %v2687 = vmul.f32 %v2662, %v2686
  %v2688 = vmin.f32 %v2687, 1.0
  %v2689 = vmax.f32 %v2688, -1.0
  %v2690 = vmul.f32 %v1222, %v1222
  %v2691 = vmin.f32 16.0, %v2690
  %v2692 = vmul.f32 %v2691, 2.1237322e-06
  %v2693 = vadd.f32 %v2692, 0.00028619796
  %v2694 = vmul.f32 %v2691, %v2693
  %v2695 = vadd.f32 %v2694, 0.0036580483
  %v2696 = vmul.f32 %v2691, %v2695
  %v2697 = vadd.f32 %v2696, 0.05243302
  %v2698 = vmul.f32 %v2691, %v2697
  %v2699 = vadd.f32 %v2698, 0.18741608
  %v2700 = vmul.f32 %v2691, %v2699
  %v2701 = vadd.f32 %v2700, 1.1283791
  %v2702 = vmul.f32 %v1222, %v2701
  %v2703 = vmul.f32 %v2691, 3.8918573e-05
  %v2704 = vadd.f32 %v2703, 0.001143296
  %v2705 = vmul.f32 %v2691, %v2704
  %v2706 = vadd.f32 %v2705, 0.014752088
  %v2707 = vmul.f32 %v2691, %v2706
  %v2708 = vadd.f32 %v2707, 0.112945676
  %v2709 = vmul.f32 %v2691, %v2708
  %v2710 = vadd.f32 %v2709, 0.4994258
  %v2711 = vmul.f32 %v2691, %v2710
  %v2712 = vadd.f32 %v2711, 1.0
  %v2713 = vrcp.pop %v2712
  %v2714 = vmul.f32 %v2712, %v2713
  %v2715 = vsub.f32 1.0, %v2714
  %v2716 = vmul.f32 %v2713, %v2715
  %v2717 = vadd.f32 %v2713, %v2716
  %vm2718 = vweird.f32 %v2712
  %vm2719 = vweird.f32 %v2713
  %vm2720 = vmor %vm2718, %vm2719
  %v2721 = vsel %vm2720, %v2713, %v2717
  %v2722 = vand.u32 2147483647, %v2712
  %vm2723 = vcmp.eq.f32.partialorder %v2722, 8.507059e+37
  %v2724 = vand.u32 %v2712, 2147483648
  %v2725 = vor.u32 1.1754944e-38, %v2724
  %v2726 = vsel %vm2723, %v2725, %v2721
  %v2727 = vmul.f32 %v2702, %v2726
  %v2728 = vmin.f32 %v2727, 1.0
  %v2729 = vmax.f32 %v2728, -1.0
  %v2730 = vmul.f32 %v1223, %v1223
  %v2731 = vmin.f32 16.0, %v2730
  %v2732 = vmul.f32 %v2731, 2.1237322e-06
  %v2733 = vadd.f32 %v2732, 0.00028619796
  %v2734 = vmul.f32 %v2731, %v2733
  %v2735 = vadd.f32 %v2734, 0.0036580483
  %v2736 = vmul.f32 %v2731, %v2735
  %v2737 = vadd.f32 %v2736, 0.05243302
  %v2738 = vmul.f32 %v2731, %v2737
  %v2739 = vadd.f32 %v2738, 0.18741608
  %v2740 = vmul.f32 %v2731, %v2739
  %v2741 = vadd.f32 %v2740, 1.1283791
  %v2742 = vmul.f32 %v1223, %v2741
  %v2743 = vmul.f32 %v2731, 3.8918573e-05
  %v2744 = vadd.f32 %v2743, 0.001143296
  %v2745 = vmul.f32 %v2731, %v2744
  %v2746 = vadd.f32 %v2745, 0.014752088
  %v2747 = vmul.f32 %v2731, %v2746
  %v2748 = vadd.f32 %v2747, 0.112945676
  %v2749 = vmul.f32 %v2731, %v2748
  %v2750 = vadd.f32 %v2749, 0.4994258
  %v2751 = vmul.f32 %v2731, %v2750
  %v2752 = vadd.f32 %v2751, 1.0
  %v2753 = vrcp.pop %v2752
  %v2754 = vmul.f32 %v2752, %v2753
  %v2755 = vsub.f32 1.0, %v2754
  %v2756 = vmul.f32 %v2753, %v2755
  %v2757 = vadd.f32 %v2753, %v2756
  %vm2758 = vweird.f32 %v2752
  %vm2759 = vweird.f32 %v2753
  %vm2760 = vmor %vm2758, %vm2759
  %v2761 = vsel %vm2760, %v2753, %v2757
  %v2762 = vand.u32 2147483647, %v2752
  %vm2763 = vcmp.eq.f32.partialorder %v2762, 8.507059e+37
  %v2764 = vand.u32 %v2752, 2147483648
  %v2765 = vor.u32 1.1754944e-38, %v2764
  %v2766 = vsel %vm2763, %v2765, %v2761
  %v2767 = vmul.f32 %v2742, %v2766
  %v2768 = vmin.f32 %v2767, 1.0
  %v2769 = vmax.f32 %v2768, -1.0
  %v2770 = vmul.f32 %v1224, %v1224
  %v2771 = vmin.f32 16.0, %v2770
  %v2772 = vmul.f32 %v2771, 2.1237322e-06
  %v2773 = vadd.f32 %v2772, 0.00028619796
  %v2774 = vmul.f32 %v2771, %v2773
  %v2775 = vadd.f32 %v2774, 0.0036580483
  %v2776 = vmul.f32 %v2771, %v2775
  %v2777 = vadd.f32 %v2776, 0.05243302
  %v2778 = vmul.f32 %v2771, %v2777
  %v2779 = vadd.f32 %v2778, 0.18741608
  %v2780 = vmul.f32 %v2771, %v2779
  %v2781 = vadd.f32 %v2780, 1.1283791
  %v2782 = vmul.f32 %v1224, %v2781
  %v2783 = vmul.f32 %v2771, 3.8918573e-05
  %v2784 = vadd.f32 %v2783, 0.001143296
  %v2785 = vmul.f32 %v2771, %v2784
  %v2786 = vadd.f32 %v2785, 0.014752088
  %v2787 = vmul.f32 %v2771, %v2786
  %v2788 = vadd.f32 %v2787, 0.112945676
  %v2789 = vmul.f32 %v2771, %v2788
  %v2790 = vadd.f32 %v2789, 0.4994258
  %v2791 = vmul.f32 %v2771, %v2790
  %v2792 = vadd.f32 %v2791, 1.0
  %v2793 = vrcp.pop %v2792
  %v2794 = vmul.f32 %v2792, %v2793
  %v2795 = vsub.f32 1.0, %v2794
  %v2796 = vmul.f32 %v2793, %v2795
  %v2797 = vadd.f32 %v2793, %v2796
  %vm2798 = vweird.f32 %v2792
  %vm2799 = vweird.f32 %v2793
  %vm2800 = vmor %vm2798, %vm2799
  %v2801 = vsel %vm2800, %v2793, %v2797
  %v2802 = vand.u32 2147483647, %v2792
  %vm2803 = vcmp.eq.f32.partialorder %v2802, 8.507059e+37
  %v2804 = vand.u32 %v2792, 2147483648
  %v2805 = vor.u32 1.1754944e-38, %v2804
  %v2806 = vsel %vm2803, %v2805, %v2801
  %v2807 = vmul.f32 %v2782, %v2806
  %v2808 = vmin.f32 %v2807, 1.0
  %v2809 = vmax.f32 %v2808, -1.0
  %v2810 = vmul.f32 %v1225, %v1225
  %v2811 = vmin.f32 16.0, %v2810
  %v2812 = vmul.f32 %v2811, 2.1237322e-06
  %v2813 = vadd.f32 %v2812, 0.00028619796
  %v2814 = vmul.f32 %v2811, %v2813
  %v2815 = vadd.f32 %v2814, 0.0036580483
  %v2816 = vmul.f32 %v2811, %v2815
  %v2817 = vadd.f32 %v2816, 0.05243302
  %v2818 = vmul.f32 %v2811, %v2817
  %v2819 = vadd.f32 %v2818, 0.18741608
  %v2820 = vmul.f32 %v2811, %v2819
  %v2821 = vadd.f32 %v2820, 1.1283791
  %v2822 = vmul.f32 %v1225, %v2821
  %v2823 = vmul.f32 %v2811, 3.8918573e-05
  %v2824 = vadd.f32 %v2823, 0.001143296
  %v2825 = vmul.f32 %v2811, %v2824
  %v2826 = vadd.f32 %v2825, 0.014752088
  %v2827 = vmul.f32 %v2811, %v2826
  %v2828 = vadd.f32 %v2827, 0.112945676
  %v2829 = vmul.f32 %v2811, %v2828
  %v2830 = vadd.f32 %v2829, 0.4994258
  %v2831 = vmul.f32 %v2811, %v2830
  %v2832 = vadd.f32 %v2831, 1.0
  %v2833 = vrcp.pop %v2832
  %v2834 = vmul.f32 %v2832, %v2833
  %v2835 = vsub.f32 1.0, %v2834
  %v2836 = vmul.f32 %v2833, %v2835
  %v2837 = vadd.f32 %v2833, %v2836
  %vm2838 = vweird.f32 %v2832
  %vm2839 = vweird.f32 %v2833
  %vm2840 = vmor %vm2838, %vm2839
  %v2841 = vsel %vm2840, %v2833, %v2837
  %v2842 = vand.u32 2147483647, %v2832
  %vm2843 = vcmp.eq.f32.partialorder %v2842, 8.507059e+37
  %v2844 = vand.u32 %v2832, 2147483648
  %v2845 = vor.u32 1.1754944e-38, %v2844
  %v2846 = vsel %vm2843, %v2845, %v2841
  %v2847 = vmul.f32 %v2822, %v2846
  %v2848 = vmin.f32 %v2847, 1.0
  %v2849 = vmax.f32 %v2848, -1.0
  %v2850 = vmul.f32 %v1226, %v1226
  %v2851 = vmin.f32 16.0, %v2850
  %v2852 = vmul.f32 %v2851, 2.1237322e-06
  %v2853 = vadd.f32 %v2852, 0.00028619796
  %v2854 = vmul.f32 %v2851, %v2853
  %v2855 = vadd.f32 %v2854, 0.0036580483
  %v2856 = vmul.f32 %v2851, %v2855
  %v2857 = vadd.f32 %v2856, 0.05243302
  %v2858 = vmul.f32 %v2851, %v2857
  %v2859 = vadd.f32 %v2858, 0.18741608
  %v2860 = vmul.f32 %v2851, %v2859
  %v2861 = vadd.f32 %v2860, 1.1283791
  %v2862 = vmul.f32 %v1226, %v2861
  %v2863 = vmul.f32 %v2851, 3.8918573e-05
  %v2864 = vadd.f32 %v2863, 0.001143296
  %v2865 = vmul.f32 %v2851, %v2864
  %v2866 = vadd.f32 %v2865, 0.014752088
  %v2867 = vmul.f32 %v2851, %v2866
  %v2868 = vadd.f32 %v2867, 0.112945676
  %v2869 = vmul.f32 %v2851, %v2868
  %v2870 = vadd.f32 %v2869, 0.4994258
  %v2871 = vmul.f32 %v2851, %v2870
  %v2872 = vadd.f32 %v2871, 1.0
  %v2873 = vrcp.pop %v2872
  %v2874 = vmul.f32 %v2872, %v2873
  %v2875 = vsub.f32 1.0, %v2874
  %v2876 = vmul.f32 %v2873, %v2875
  %v2877 = vadd.f32 %v2873, %v2876
  %vm2878 = vweird.f32 %v2872
  %vm2879 = vweird.f32 %v2873
  %vm2880 = vmor %vm2878, %vm2879
  %v2881 = vsel %vm2880, %v2873, %v2877
  %v2882 = vand.u32 2147483647, %v2872
  %vm2883 = vcmp.eq.f32.partialorder %v2882, 8.507059e+37
  %v2884 = vand.u32 %v2872, 2147483648
  %v2885 = vor.u32 1.1754944e-38, %v2884
  %v2886 = vsel %vm2883, %v2885, %v2881
  %v2887 = vmul.f32 %v2862, %v2886
  %v2888 = vmin.f32 %v2887, 1.0
  %v2889 = vmax.f32 %v2888, -1.0
  %v2890 = vmul.f32 %v1227, %v1227
  %v2891 = vmin.f32 16.0, %v2890
  %v2892 = vmul.f32 %v2891, 2.1237322e-06
  %v2893 = vadd.f32 %v2892, 0.00028619796
  %v2894 = vmul.f32 %v2891, %v2893
  %v2895 = vadd.f32 %v2894, 0.0036580483
  %v2896 = vmul.f32 %v2891, %v2895
  %v2897 = vadd.f32 %v2896, 0.05243302
  %v2898 = vmul.f32 %v2891, %v2897
  %v2899 = vadd.f32 %v2898, 0.18741608
  %v2900 = vmul.f32 %v2891, %v2899
  %v2901 = vadd.f32 %v2900, 1.1283791
  %v2902 = vmul.f32 %v1227, %v2901
  %v2903 = vmul.f32 %v2891, 3.8918573e-05
  %v2904 = vadd.f32 %v2903, 0.001143296
  %v2905 = vmul.f32 %v2891, %v2904
  %v2906 = vadd.f32 %v2905, 0.014752088
  %v2907 = vmul.f32 %v2891, %v2906
  %v2908 = vadd.f32 %v2907, 0.112945676
  %v2909 = vmul.f32 %v2891, %v2908
  %v2910 = vadd.f32 %v2909, 0.4994258
  %v2911 = vmul.f32 %v2891, %v2910
  %v2912 = vadd.f32 %v2911, 1.0
  %v2913 = vrcp.pop %v2912
  %v2914 = vmul.f32 %v2912, %v2913
  %v2915 = vsub.f32 1.0, %v2914
  %v2916 = vmul.f32 %v2913, %v2915
  %v2917 = vadd.f32 %v2913, %v2916
  %vm2918 = vweird.f32 %v2912
  %vm2919 = vweird.f32 %v2913
  %vm2920 = vmor %vm2918, %vm2919
  %v2921 = vsel %vm2920, %v2913, %v2917
  %v2922 = vand.u32 2147483647, %v2912
  %vm2923 = vcmp.eq.f32.partialorder %v2922, 8.507059e+37
  %v2924 = vand.u32 %v2912, 2147483648
  %v2925 = vor.u32 1.1754944e-38, %v2924
  %v2926 = vsel %vm2923, %v2925, %v2921
  %v2927 = vmul.f32 %v2902, %v2926
  %v2928 = vmin.f32 %v2927, 1.0
  %v2929 = vmax.f32 %v2928, -1.0
  %v2930 = vmul.f32 %v1228, %v1228
  %v2931 = vmin.f32 16.0, %v2930
  %v2932 = vmul.f32 %v2931, 2.1237322e-06
  %v2933 = vadd.f32 %v2932, 0.00028619796
  %v2934 = vmul.f32 %v2931, %v2933
  %v2935 = vadd.f32 %v2934, 0.0036580483
  %v2936 = vmul.f32 %v2931, %v2935
  %v2937 = vadd.f32 %v2936, 0.05243302
  %v2938 = vmul.f32 %v2931, %v2937
  %v2939 = vadd.f32 %v2938, 0.18741608
  %v2940 = vmul.f32 %v2931, %v2939
  %v2941 = vadd.f32 %v2940, 1.1283791
  %v2942 = vmul.f32 %v1228, %v2941
  %v2943 = vmul.f32 %v2931, 3.8918573e-05
  %v2944 = vadd.f32 %v2943, 0.001143296
  %v2945 = vmul.f32 %v2931, %v2944
  %v2946 = vadd.f32 %v2945, 0.014752088
  %v2947 = vmul.f32 %v2931, %v2946
  %v2948 = vadd.f32 %v2947, 0.112945676
  %v2949 = vmul.f32 %v2931, %v2948
  %v2950 = vadd.f32 %v2949, 0.4994258
  %v2951 = vmul.f32 %v2931, %v2950
  %v2952 = vadd.f32 %v2951, 1.0
  %v2953 = vrcp.pop %v2952
  %v2954 = vmul.f32 %v2952, %v2953
  %v2955 = vsub.f32 1.0, %v2954
  %v2956 = vmul.f32 %v2953, %v2955
  %v2957 = vadd.f32 %v2953, %v2956
  %vm2958 = vweird.f32 %v2952
  %vm2959 = vweird.f32 %v2953
  %vm2960 = vmor %vm2958, %vm2959
  %v2961 = vsel %vm2960, %v2953, %v2957
  %v2962 = vand.u32 2147483647, %v2952
  %vm2963 = vcmp.eq.f32.partialorder %v2962, 8.507059e+37
  %v2964 = vand.u32 %v2952, 2147483648
  %v2965 = vor.u32 1.1754944e-38, %v2964
  %v2966 = vsel %vm2963, %v2965, %v2961
  %v2967 = vmul.f32 %v2942, %v2966
  %v2968 = vmin.f32 %v2967, 1.0
  %v2969 = vmax.f32 %v2968, -1.0
  %v2970 = vmul.f32 %v1229, %v1229
  %v2971 = vmin.f32 16.0, %v2970
  %v2972 = vmul.f32 %v2971, 2.1237322e-06
  %v2973 = vadd.f32 %v2972, 0.00028619796
  %v2974 = vmul.f32 %v2971, %v2973
  %v2975 = vadd.f32 %v2974, 0.0036580483
  %v2976 = vmul.f32 %v2971, %v2975
  %v2977 = vadd.f32 %v2976, 0.05243302
  %v2978 = vmul.f32 %v2971, %v2977
  %v2979 = vadd.f32 %v2978, 0.18741608
  %v2980 = vmul.f32 %v2971, %v2979
  %v2981 = vadd.f32 %v2980, 1.1283791
  %v2982 = vmul.f32 %v1229, %v2981
  %v2983 = vmul.f32 %v2971, 3.8918573e-05
  %v2984 = vadd.f32 %v2983, 0.001143296
  %v2985 = vmul.f32 %v2971, %v2984
  %v2986 = vadd.f32 %v2985, 0.014752088
  %v2987 = vmul.f32 %v2971, %v2986
  %v2988 = vadd.f32 %v2987, 0.112945676
  %v2989 = vmul.f32 %v2971, %v2988
  %v2990 = vadd.f32 %v2989, 0.4994258
  %v2991 = vmul.f32 %v2971, %v2990
  %v2992 = vadd.f32 %v2991, 1.0
  %v2993 = vrcp.pop %v2992
  %v2994 = vmul.f32 %v2992, %v2993
  %v2995 = vsub.f32 1.0, %v2994
  %v2996 = vmul.f32 %v2993, %v2995
  %v2997 = vadd.f32 %v2993, %v2996
  %vm2998 = vweird.f32 %v2992
  %vm2999 = vweird.f32 %v2993
  %vm3000 = vmor %vm2998, %vm2999
  %v3001 = vsel %vm3000, %v2993, %v2997
  %v3002 = vand.u32 2147483647, %v2992
  %vm3003 = vcmp.eq.f32.partialorder %v3002, 8.507059e+37
  %v3004 = vand.u32 %v2992, 2147483648
  %v3005 = vor.u32 1.1754944e-38, %v3004
  %v3006 = vsel %vm3003, %v3005, %v3001
  %v3007 = vmul.f32 %v2982, %v3006
  %v3008 = vmin.f32 %v3007, 1.0
  %v3009 = vmax.f32 %v3008, -1.0
  %v3010 = vmul.f32 %v1230, %v1230
  %v3011 = vmin.f32 16.0, %v3010
  %v3012 = vmul.f32 %v3011, 2.1237322e-06
  %v3013 = vadd.f32 %v3012, 0.00028619796
  %v3014 = vmul.f32 %v3011, %v3013
  %v3015 = vadd.f32 %v3014, 0.0036580483
  %v3016 = vmul.f32 %v3011, %v3015
  %v3017 = vadd.f32 %v3016, 0.05243302
  %v3018 = vmul.f32 %v3011, %v3017
  %v3019 = vadd.f32 %v3018, 0.18741608
  %v3020 = vmul.f32 %v3011, %v3019
  %v3021 = vadd.f32 %v3020, 1.1283791
  %v3022 = vmul.f32 %v1230, %v3021
  %v3023 = vmul.f32 %v3011, 3.8918573e-05
  %v3024 = vadd.f32 %v3023, 0.001143296
  %v3025 = vmul.f32 %v3011, %v3024
  %v3026 = vadd.f32 %v3025, 0.014752088
  %v3027 = vmul.f32 %v3011, %v3026
  %v3028 = vadd.f32 %v3027, 0.112945676
  %v3029 = vmul.f32 %v3011, %v3028
  %v3030 = vadd.f32 %v3029, 0.4994258
  %v3031 = vmul.f32 %v3011, %v3030
  %v3032 = vadd.f32 %v3031, 1.0
  %v3033 = vrcp.pop %v3032
  %v3034 = vmul.f32 %v3032, %v3033
  %v3035 = vsub.f32 1.0, %v3034
  %v3036 = vmul.f32 %v3033, %v3035
  %v3037 = vadd.f32 %v3033, %v3036
  %vm3038 = vweird.f32 %v3032
  %vm3039 = vweird.f32 %v3033
  %vm3040 = vmor %vm3038, %vm3039
  %v3041 = vsel %vm3040, %v3033, %v3037
  %v3042 = vand.u32 2147483647, %v3032
  %vm3043 = vcmp.eq.f32.partialorder %v3042, 8.507059e+37
  %v3044 = vand.u32 %v3032, 2147483648
  %v3045 = vor.u32 1.1754944e-38, %v3044
  %v3046 = vsel %vm3043, %v3045, %v3041
  %v3047 = vmul.f32 %v3022, %v3046
  %v3048 = vmin.f32 %v3047, 1.0
  %v3049 = vmax.f32 %v3048, -1.0
  %v3050 = vmul.f32 %v1231, %v1231
  %v3051 = vmin.f32 16.0, %v3050
  %v3052 = vmul.f32 %v3051, 2.1237322e-06
  %v3053 = vadd.f32 %v3052, 0.00028619796
  %v3054 = vmul.f32 %v3051, %v3053
  %v3055 = vadd.f32 %v3054, 0.0036580483
  %v3056 = vmul.f32 %v3051, %v3055
  %v3057 = vadd.f32 %v3056, 0.05243302
  %v3058 = vmul.f32 %v3051, %v3057
  %v3059 = vadd.f32 %v3058, 0.18741608
  %v3060 = vmul.f32 %v3051, %v3059
  %v3061 = vadd.f32 %v3060, 1.1283791
  %v3062 = vmul.f32 %v1231, %v3061
  %v3063 = vmul.f32 %v3051, 3.8918573e-05
  %v3064 = vadd.f32 %v3063, 0.001143296
  %v3065 = vmul.f32 %v3051, %v3064
  %v3066 = vadd.f32 %v3065, 0.014752088
  %v3067 = vmul.f32 %v3051, %v3066
  %v3068 = vadd.f32 %v3067, 0.112945676
  %v3069 = vmul.f32 %v3051, %v3068
  %v3070 = vadd.f32 %v3069, 0.4994258
  %v3071 = vmul.f32 %v3051, %v3070
  %v3072 = vadd.f32 %v3071, 1.0
  %v3073 = vrcp.pop %v3072
  %v3074 = vmul.f32 %v3072, %v3073
  %v3075 = vsub.f32 1.0, %v3074
  %v3076 = vmul.f32 %v3073, %v3075
  %v3077 = vadd.f32 %v3073, %v3076
  %vm3078 = vweird.f32 %v3072
  %vm3079 = vweird.f32 %v3073
  %vm3080 = vmor %vm3078, %vm3079
  %v3081 = vsel %vm3080, %v3073, %v3077
  %v3082 = vand.u32 2147483647, %v3072
  %vm3083 = vcmp.eq.f32.partialorder %v3082, 8.507059e+37
  %v3084 = vand.u32 %v3072, 2147483648
  %v3085 = vor.u32 1.1754944e-38, %v3084
  %v3086 = vsel %vm3083, %v3085, %v3081
  %v3087 = vmul.f32 %v3062, %v3086
  %v3088 = vmin.f32 %v3087, 1.0
  %v3089 = vmax.f32 %v3088, -1.0
  %v3090 = vmul.f32 %v1232, %v1232
  %v3091 = vmin.f32 16.0, %v3090
  %v3092 = vmul.f32 %v3091, 2.1237322e-06
  %v3093 = vadd.f32 %v3092, 0.00028619796
  %v3094 = vmul.f32 %v3091, %v3093
  %v3095 = vadd.f32 %v3094, 0.0036580483
  %v3096 = vmul.f32 %v3091, %v3095
  %v3097 = vadd.f32 %v3096, 0.05243302
  %v3098 = vmul.f32 %v3091, %v3097
  %v3099 = vadd.f32 %v3098, 0.18741608
  %v3100 = vmul.f32 %v3091, %v3099
  %v3101 = vadd.f32 %v3100, 1.1283791
  %v3102 = vmul.f32 %v1232, %v3101
  %v3103 = vmul.f32 %v3091, 3.8918573e-05
  %v3104 = vadd.f32 %v3103, 0.001143296
  %v3105 = vmul.f32 %v3091, %v3104
  %v3106 = vadd.f32 %v3105, 0.014752088
  %v3107 = vmul.f32 %v3091, %v3106
  %v3108 = vadd.f32 %v3107, 0.112945676
  %v3109 = vmul.f32 %v3091, %v3108
  %v3110 = vadd.f32 %v3109, 0.4994258
  %v3111 = vmul.f32 %v3091, %v3110
  %v3112 = vadd.f32 %v3111, 1.0
  %v3113 = vrcp.pop %v3112
  %v3114 = vmul.f32 %v3112, %v3113
  %v3115 = vsub.f32 1.0, %v3114
  %v3116 = vmul.f32 %v3113, %v3115
  %v3117 = vadd.f32 %v3113, %v3116
  %vm3118 = vweird.f32 %v3112
  %vm3119 = vweird.f32 %v3113
  %vm3120 = vmor %vm3118, %vm3119
  %v3121 = vsel %vm3120, %v3113, %v3117
  %v3122 = vand.u32 2147483647, %v3112
  %vm3123 = vcmp.eq.f32.partialorder %v3122, 8.507059e+37
  %v3124 = vand.u32 %v3112, 2147483648
  %v3125 = vor.u32 1.1754944e-38, %v3124
  %v3126 = vsel %vm3123, %v3125, %v3121
  %v3127 = vmul.f32 %v3102, %v3126
  %v3128 = vmin.f32 %v3127, 1.0
  %v3129 = vmax.f32 %v3128, -1.0
  %v3130 = vmul.f32 %v1233, %v1233
  %v3131 = vmin.f32 16.0, %v3130
  %v3132 = vmul.f32 %v3131, 2.1237322e-06
  %v3133 = vadd.f32 %v3132, 0.00028619796
  %v3134 = vmul.f32 %v3131, %v3133
  %v3135 = vadd.f32 %v3134, 0.0036580483
  %v3136 = vmul.f32 %v3131, %v3135
  %v3137 = vadd.f32 %v3136, 0.05243302
  %v3138 = vmul.f32 %v3131, %v3137
  %v3139 = vadd.f32 %v3138, 0.18741608
  %v3140 = vmul.f32 %v3131, %v3139
  %v3141 = vadd.f32 %v3140, 1.1283791
  %v3142 = vmul.f32 %v1233, %v3141
  %v3143 = vmul.f32 %v3131, 3.8918573e-05
  %v3144 = vadd.f32 %v3143, 0.001143296
  %v3145 = vmul.f32 %v3131, %v3144
  %v3146 = vadd.f32 %v3145, 0.014752088
  %v3147 = vmul.f32 %v3131, %v3146
  %v3148 = vadd.f32 %v3147, 0.112945676
  %v3149 = vmul.f32 %v3131, %v3148
  %v3150 = vadd.f32 %v3149, 0.4994258
  %v3151 = vmul.f32 %v3131, %v3150
  %v3152 = vadd.f32 %v3151, 1.0
  %v3153 = vrcp.pop %v3152
  %v3154 = vmul.f32 %v3152, %v3153
  %v3155 = vsub.f32 1.0, %v3154
  %v3156 = vmul.f32 %v3153, %v3155
  %v3157 = vadd.f32 %v3153, %v3156
  %vm3158 = vweird.f32 %v3152
  %vm3159 = vweird.f32 %v3153
  %vm3160 = vmor %vm3158, %vm3159
  %v3161 = vsel %vm3160, %v3153, %v3157
  %v3162 = vand.u32 2147483647, %v3152
  %vm3163 = vcmp.eq.f32.partialorder %v3162, 8.507059e+37
  %v3164 = vand.u32 %v3152, 2147483648
  %v3165 = vor.u32 1.1754944e-38, %v3164
  %v3166 = vsel %vm3163, %v3165, %v3161
  %v3167 = vmul.f32 %v3142, %v3166
  %v3168 = vmin.f32 %v3167, 1.0
  %v3169 = vmax.f32 %v3168, -1.0
  %v3170 = vmul.f32 %v1234, %v1234
  %v3171 = vmin.f32 16.0, %v3170
  %v3172 = vmul.f32 %v3171, 2.1237322e-06
  %v3173 = vadd.f32 %v3172, 0.00028619796
  %v3174 = vmul.f32 %v3171, %v3173
  %v3175 = vadd.f32 %v3174, 0.0036580483
  %v3176 = vmul.f32 %v3171, %v3175
  %v3177 = vadd.f32 %v3176, 0.05243302
  %v3178 = vmul.f32 %v3171, %v3177
  %v3179 = vadd.f32 %v3178, 0.18741608
  %v3180 = vmul.f32 %v3171, %v3179
  %v3181 = vadd.f32 %v3180, 1.1283791
  %v3182 = vmul.f32 %v1234, %v3181
  %v3183 = vmul.f32 %v3171, 3.8918573e-05
  %v3184 = vadd.f32 %v3183, 0.001143296
  %v3185 = vmul.f32 %v3171, %v3184
  %v3186 = vadd.f32 %v3185, 0.014752088
  %v3187 = vmul.f32 %v3171, %v3186
  %v3188 = vadd.f32 %v3187, 0.112945676
  %v3189 = vmul.f32 %v3171, %v3188
  %v3190 = vadd.f32 %v3189, 0.4994258
  %v3191 = vmul.f32 %v3171, %v3190
  %v3192 = vadd.f32 %v3191, 1.0
  %v3193 = vrcp.pop %v3192
  %v3194 = vmul.f32 %v3192, %v3193
  %v3195 = vsub.f32 1.0, %v3194
  %v3196 = vmul.f32 %v3193, %v3195
  %v3197 = vadd.f32 %v3193, %v3196
  %vm3198 = vweird.f32 %v3192
  %vm3199 = vweird.f32 %v3193
  %vm3200 = vmor %vm3198, %vm3199
  %v3201 = vsel %vm3200, %v3193, %v3197
  %v3202 = vand.u32 2147483647, %v3192
  %vm3203 = vcmp.eq.f32.partialorder %v3202, 8.507059e+37
  %v3204 = vand.u32 %v3192, 2147483648
  %v3205 = vor.u32 1.1754944e-38, %v3204
  %v3206 = vsel %vm3203, %v3205, %v3201
  %v3207 = vmul.f32 %v3182, %v3206
  %v3208 = vmin.f32 %v3207, 1.0
  %v3209 = vmax.f32 %v3208, -1.0
  %v3210 = vmul.f32 %v1235, %v1235
  %v3211 = vmin.f32 16.0, %v3210
  %v3212 = vmul.f32 %v3211, 2.1237322e-06
  %v3213 = vadd.f32 %v3212, 0.00028619796
  %v3214 = vmul.f32 %v3211, %v3213
  %v3215 = vadd.f32 %v3214, 0.0036580483
  %v3216 = vmul.f32 %v3211, %v3215
  %v3217 = vadd.f32 %v3216, 0.05243302
  %v3218 = vmul.f32 %v3211, %v3217
  %v3219 = vadd.f32 %v3218, 0.18741608
  %v3220 = vmul.f32 %v3211, %v3219
  %v3221 = vadd.f32 %v3220, 1.1283791
  %v3222 = vmul.f32 %v1235, %v3221
  %v3223 = vmul.f32 %v3211, 3.8918573e-05
  %v3224 = vadd.f32 %v3223, 0.001143296
  %v3225 = vmul.f32 %v3211, %v3224
  %v3226 = vadd.f32 %v3225, 0.014752088
  %v3227 = vmul.f32 %v3211, %v3226
  %v3228 = vadd.f32 %v3227, 0.112945676
  %v3229 = vmul.f32 %v3211, %v3228
  %v3230 = vadd.f32 %v3229, 0.4994258
  %v3231 = vmul.f32 %v3211, %v3230
  %v3232 = vadd.f32 %v3231, 1.0
  %v3233 = vrcp.pop %v3232
  %v3234 = vmul.f32 %v3232, %v3233
  %v3235 = vsub.f32 1.0, %v3234
  %v3236 = vmul.f32 %v3233, %v3235
  %v3237 = vadd.f32 %v3233, %v3236
  %vm3238 = vweird.f32 %v3232
  %vm3239 = vweird.f32 %v3233
  %vm3240 = vmor %vm3238, %vm3239
  %v3241 = vsel %vm3240, %v3233, %v3237
  %v3242 = vand.u32 2147483647, %v3232
  %vm3243 = vcmp.eq.f32.partialorder %v3242, 8.507059e+37
  %v3244 = vand.u32 %v3232, 2147483648
  %v3245 = vor.u32 1.1754944e-38, %v3244
  %v3246 = vsel %vm3243, %v3245, %v3241
  %v3247 = vmul.f32 %v3222, %v3246
  %v3248 = vmin.f32 %v3247, 1.0
  %v3249 = vmax.f32 %v3248, -1.0
  %v3250 = vmul.f32 %v1236, %v1236
  %v3251 = vmin.f32 16.0, %v3250
  %v3252 = vmul.f32 %v3251, 2.1237322e-06
  %v3253 = vadd.f32 %v3252, 0.00028619796
  %v3254 = vmul.f32 %v3251, %v3253
  %v3255 = vadd.f32 %v3254, 0.0036580483
  %v3256 = vmul.f32 %v3251, %v3255
  %v3257 = vadd.f32 %v3256, 0.05243302
  %v3258 = vmul.f32 %v3251, %v3257
  %v3259 = vadd.f32 %v3258, 0.18741608
  %v3260 = vmul.f32 %v3251, %v3259
  %v3261 = vadd.f32 %v3260, 1.1283791
  %v3262 = vmul.f32 %v1236, %v3261
  %v3263 = vmul.f32 %v3251, 3.8918573e-05
  %v3264 = vadd.f32 %v3263, 0.001143296
  %v3265 = vmul.f32 %v3251, %v3264
  %v3266 = vadd.f32 %v3265, 0.014752088
  %v3267 = vmul.f32 %v3251, %v3266
  %v3268 = vadd.f32 %v3267, 0.112945676
  %v3269 = vmul.f32 %v3251, %v3268
  %v3270 = vadd.f32 %v3269, 0.4994258
  %v3271 = vmul.f32 %v3251, %v3270
  %v3272 = vadd.f32 %v3271, 1.0
  %v3273 = vrcp.pop %v3272
  %v3274 = vmul.f32 %v3272, %v3273
  %v3275 = vsub.f32 1.0, %v3274
  %v3276 = vmul.f32 %v3273, %v3275
  %v3277 = vadd.f32 %v3273, %v3276
  %vm3278 = vweird.f32 %v3272
  %vm3279 = vweird.f32 %v3273
  %vm3280 = vmor %vm3278, %vm3279
  %v3281 = vsel %vm3280, %v3273, %v3277
  %v3282 = vand.u32 2147483647, %v3272
  %vm3283 = vcmp.eq.f32.partialorder %v3282, 8.507059e+37
  %v3284 = vand.u32 %v3272, 2147483648
  %v3285 = vor.u32 1.1754944e-38, %v3284
  %v3286 = vsel %vm3283, %v3285, %v3281
  %v3287 = vmul.f32 %v3262, %v3286
  %v3288 = vmin.f32 %v3287, 1.0
  %v3289 = vmax.f32 %v3288, -1.0
  %v3290 = vmul.f32 %v1237, %v1237
  %v3291 = vmin.f32 16.0, %v3290
  %v3292 = vmul.f32 %v3291, 2.1237322e-06
  %v3293 = vadd.f32 %v3292, 0.00028619796
  %v3294 = vmul.f32 %v3291, %v3293
  %v3295 = vadd.f32 %v3294, 0.0036580483
  %v3296 = vmul.f32 %v3291, %v3295
  %v3297 = vadd.f32 %v3296, 0.05243302
  %v3298 = vmul.f32 %v3291, %v3297
  %v3299 = vadd.f32 %v3298, 0.18741608
  %v3300 = vmul.f32 %v3291, %v3299
  %v3301 = vadd.f32 %v3300, 1.1283791
  %v3302 = vmul.f32 %v1237, %v3301
  %v3303 = vmul.f32 %v3291, 3.8918573e-05
  %v3304 = vadd.f32 %v3303, 0.001143296
  %v3305 = vmul.f32 %v3291, %v3304
  %v3306 = vadd.f32 %v3305, 0.014752088
  %v3307 = vmul.f32 %v3291, %v3306
  %v3308 = vadd.f32 %v3307, 0.112945676
  %v3309 = vmul.f32 %v3291, %v3308
  %v3310 = vadd.f32 %v3309, 0.4994258
  %v3311 = vmul.f32 %v3291, %v3310
  %v3312 = vadd.f32 %v3311, 1.0
  %v3313 = vrcp.pop %v3312
  %v3314 = vmul.f32 %v3312, %v3313
  %v3315 = vsub.f32 1.0, %v3314
  %v3316 = vmul.f32 %v3313, %v3315
  %v3317 = vadd.f32 %v3313, %v3316
  %vm3318 = vweird.f32 %v3312
  %vm3319 = vweird.f32 %v3313
  %vm3320 = vmor %vm3318, %vm3319
  %v3321 = vsel %vm3320, %v3313, %v3317
  %v3322 = vand.u32 2147483647, %v3312
  %vm3323 = vcmp.eq.f32.partialorder %v3322, 8.507059e+37
  %v3324 = vand.u32 %v3312, 2147483648
  %v3325 = vor.u32 1.1754944e-38, %v3324
  %v3326 = vsel %vm3323, %v3325, %v3321
  %v3327 = vmul.f32 %v3302, %v3326
  %v3328 = vmin.f32 %v3327, 1.0
  %v3329 = vmax.f32 %v3328, -1.0
  %v3330 = vmul.f32 %v1238, %v1238
  %v3331 = vmin.f32 16.0, %v3330
  %v3332 = vmul.f32 %v3331, 2.1237322e-06
  %v3333 = vadd.f32 %v3332, 0.00028619796
  %v3334 = vmul.f32 %v3331, %v3333
  %v3335 = vadd.f32 %v3334, 0.0036580483
  %v3336 = vmul.f32 %v3331, %v3335
  %v3337 = vadd.f32 %v3336, 0.05243302
  %v3338 = vmul.f32 %v3331, %v3337
  %v3339 = vadd.f32 %v3338, 0.18741608
  %v3340 = vmul.f32 %v3331, %v3339
  %v3341 = vadd.f32 %v3340, 1.1283791
  %v3342 = vmul.f32 %v1238, %v3341
  %v3343 = vmul.f32 %v3331, 3.8918573e-05
  %v3344 = vadd.f32 %v3343, 0.001143296
  %v3345 = vmul.f32 %v3331, %v3344
  %v3346 = vadd.f32 %v3345, 0.014752088
  %v3347 = vmul.f32 %v3331, %v3346
  %v3348 = vadd.f32 %v3347, 0.112945676
  %v3349 = vmul.f32 %v3331, %v3348
  %v3350 = vadd.f32 %v3349, 0.4994258
  %v3351 = vmul.f32 %v3331, %v3350
  %v3352 = vadd.f32 %v3351, 1.0
  %v3353 = vrcp.pop %v3352
  %v3354 = vmul.f32 %v3352, %v3353
  %v3355 = vsub.f32 1.0, %v3354
  %v3356 = vmul.f32 %v3353, %v3355
  %v3357 = vadd.f32 %v3353, %v3356
  %vm3358 = vweird.f32 %v3352
  %vm3359 = vweird.f32 %v3353
  %vm3360 = vmor %vm3358, %vm3359
  %v3361 = vsel %vm3360, %v3353, %v3357
  %v3362 = vand.u32 2147483647, %v3352
  %vm3363 = vcmp.eq.f32.partialorder %v3362, 8.507059e+37
  %v3364 = vand.u32 %v3352, 2147483648
  %v3365 = vor.u32 1.1754944e-38, %v3364
  %v3366 = vsel %vm3363, %v3365, %v3361
  %v3367 = vmul.f32 %v3342, %v3366
  %v3368 = vmin.f32 %v3367, 1.0
  %v3369 = vmax.f32 %v3368, -1.0
  %v3370 = vmul.f32 %v1239, %v1239
  %v3371 = vmin.f32 16.0, %v3370
  %v3372 = vmul.f32 %v3371, 2.1237322e-06
  %v3373 = vadd.f32 %v3372, 0.00028619796
  %v3374 = vmul.f32 %v3371, %v3373
  %v3375 = vadd.f32 %v3374, 0.0036580483
  %v3376 = vmul.f32 %v3371, %v3375
  %v3377 = vadd.f32 %v3376, 0.05243302
  %v3378 = vmul.f32 %v3371, %v3377
  %v3379 = vadd.f32 %v3378, 0.18741608
  %v3380 = vmul.f32 %v3371, %v3379
  %v3381 = vadd.f32 %v3380, 1.1283791
  %v3382 = vmul.f32 %v1239, %v3381
  %v3383 = vmul.f32 %v3371, 3.8918573e-05
  %v3384 = vadd.f32 %v3383, 0.001143296
  %v3385 = vmul.f32 %v3371, %v3384
  %v3386 = vadd.f32 %v3385, 0.014752088
  %v3387 = vmul.f32 %v3371, %v3386
  %v3388 = vadd.f32 %v3387, 0.112945676
  %v3389 = vmul.f32 %v3371, %v3388
  %v3390 = vadd.f32 %v3389, 0.4994258
  %v3391 = vmul.f32 %v3371, %v3390
  %v3392 = vadd.f32 %v3391, 1.0
  %v3393 = vrcp.pop %v3392
  %v3394 = vmul.f32 %v3392, %v3393
  %v3395 = vsub.f32 1.0, %v3394
  %v3396 = vmul.f32 %v3393, %v3395
  %v3397 = vadd.f32 %v3393, %v3396
  %vm3398 = vweird.f32 %v3392
  %vm3399 = vweird.f32 %v3393
  %vm3400 = vmor %vm3398, %vm3399
  %v3401 = vsel %vm3400, %v3393, %v3397
  %v3402 = vand.u32 2147483647, %v3392
  %vm3403 = vcmp.eq.f32.partialorder %v3402, 8.507059e+37
  %v3404 = vand.u32 %v3392, 2147483648
  %v3405 = vor.u32 1.1754944e-38, %v3404
  %v3406 = vsel %vm3403, %v3405, %v3401
  %v3407 = vmul.f32 %v3382, %v3406
  %v3408 = vmin.f32 %v3407, 1.0
  %v3409 = vmax.f32 %v3408, -1.0
  %v3410 = vmul.f32 %v1240, %v1240
  %v3411 = vmin.f32 16.0, %v3410
  %v3412 = vmul.f32 %v3411, 2.1237322e-06
  %v3413 = vadd.f32 %v3412, 0.00028619796
  %v3414 = vmul.f32 %v3411, %v3413
  %v3415 = vadd.f32 %v3414, 0.0036580483
  %v3416 = vmul.f32 %v3411, %v3415
  %v3417 = vadd.f32 %v3416, 0.05243302
  %v3418 = vmul.f32 %v3411, %v3417
  %v3419 = vadd.f32 %v3418, 0.18741608
  %v3420 = vmul.f32 %v3411, %v3419
  %v3421 = vadd.f32 %v3420, 1.1283791
  %v3422 = vmul.f32 %v1240, %v3421
  %v3423 = vmul.f32 %v3411, 3.8918573e-05
  %v3424 = vadd.f32 %v3423, 0.001143296
  %v3425 = vmul.f32 %v3411, %v3424
  %v3426 = vadd.f32 %v3425, 0.014752088
  %v3427 = vmul.f32 %v3411, %v3426
  %v3428 = vadd.f32 %v3427, 0.112945676
  %v3429 = vmul.f32 %v3411, %v3428
  %v3430 = vadd.f32 %v3429, 0.4994258
  %v3431 = vmul.f32 %v3411, %v3430
  %v3432 = vadd.f32 %v3431, 1.0
  %v3433 = vrcp.pop %v3432
  %v3434 = vmul.f32 %v3432, %v3433
  %v3435 = vsub.f32 1.0, %v3434
  %v3436 = vmul.f32 %v3433, %v3435
  %v3437 = vadd.f32 %v3433, %v3436
  %vm3438 = vweird.f32 %v3432
  %vm3439 = vweird.f32 %v3433
  %vm3440 = vmor %vm3438, %vm3439
  %v3441 = vsel %vm3440, %v3433, %v3437
  %v3442 = vand.u32 2147483647, %v3432
  %vm3443 = vcmp.eq.f32.partialorder %v3442, 8.507059e+37
  %v3444 = vand.u32 %v3432, 2147483648
  %v3445 = vor.u32 1.1754944e-38, %v3444
  %v3446 = vsel %vm3443, %v3445, %v3441
  %v3447 = vmul.f32 %v3422, %v3446
  %v3448 = vmin.f32 %v3447, 1.0
  %v3449 = vmax.f32 %v3448, -1.0
  %v3450 = vmul.f32 %v1241, %v1241
  %v3451 = vmin.f32 16.0, %v3450
  %v3452 = vmul.f32 %v3451, 2.1237322e-06
  %v3453 = vadd.f32 %v3452, 0.00028619796
  %v3454 = vmul.f32 %v3451, %v3453
  %v3455 = vadd.f32 %v3454, 0.0036580483
  %v3456 = vmul.f32 %v3451, %v3455
  %v3457 = vadd.f32 %v3456, 0.05243302
  %v3458 = vmul.f32 %v3451, %v3457
  %v3459 = vadd.f32 %v3458, 0.18741608
  %v3460 = vmul.f32 %v3451, %v3459
  %v3461 = vadd.f32 %v3460, 1.1283791
  %v3462 = vmul.f32 %v1241, %v3461
  %v3463 = vmul.f32 %v3451, 3.8918573e-05
  %v3464 = vadd.f32 %v3463, 0.001143296
  %v3465 = vmul.f32 %v3451, %v3464
  %v3466 = vadd.f32 %v3465, 0.014752088
  %v3467 = vmul.f32 %v3451, %v3466
  %v3468 = vadd.f32 %v3467, 0.112945676
  %v3469 = vmul.f32 %v3451, %v3468
  %v3470 = vadd.f32 %v3469, 0.4994258
  %v3471 = vmul.f32 %v3451, %v3470
  %v3472 = vadd.f32 %v3471, 1.0
  %v3473 = vrcp.pop %v3472
  %v3474 = vmul.f32 %v3472, %v3473
  %v3475 = vsub.f32 1.0, %v3474
  %v3476 = vmul.f32 %v3473, %v3475
  %v3477 = vadd.f32 %v3473, %v3476
  %vm3478 = vweird.f32 %v3472
  %vm3479 = vweird.f32 %v3473
  %vm3480 = vmor %vm3478, %vm3479
  %v3481 = vsel %vm3480, %v3473, %v3477
  %v3482 = vand.u32 2147483647, %v3472
  %vm3483 = vcmp.eq.f32.partialorder %v3482, 8.507059e+37
  %v3484 = vand.u32 %v3472, 2147483648
  %v3485 = vor.u32 1.1754944e-38, %v3484
  %v3486 = vsel %vm3483, %v3485, %v3481
  %v3487 = vmul.f32 %v3462, %v3486
  %v3488 = vmin.f32 %v3487, 1.0
  %v3489 = vmax.f32 %v3488, -1.0
  %v3490 = vmul.f32 %v1242, %v1242
  %v3491 = vmin.f32 16.0, %v3490
  %v3492 = vmul.f32 %v3491, 2.1237322e-06
  %v3493 = vadd.f32 %v3492, 0.00028619796
  %v3494 = vmul.f32 %v3491, %v3493
  %v3495 = vadd.f32 %v3494, 0.0036580483
  %v3496 = vmul.f32 %v3491, %v3495
  %v3497 = vadd.f32 %v3496, 0.05243302
  %v3498 = vmul.f32 %v3491, %v3497
  %v3499 = vadd.f32 %v3498, 0.18741608
  %v3500 = vmul.f32 %v3491, %v3499
  %v3501 = vadd.f32 %v3500, 1.1283791
  %v3502 = vmul.f32 %v1242, %v3501
  %v3503 = vmul.f32 %v3491, 3.8918573e-05
  %v3504 = vadd.f32 %v3503, 0.001143296
  %v3505 = vmul.f32 %v3491, %v3504
  %v3506 = vadd.f32 %v3505, 0.014752088
  %v3507 = vmul.f32 %v3491, %v3506
  %v3508 = vadd.f32 %v3507, 0.112945676
  %v3509 = vmul.f32 %v3491, %v3508
  %v3510 = vadd.f32 %v3509, 0.4994258
  %v3511 = vmul.f32 %v3491, %v3510
  %v3512 = vadd.f32 %v3511, 1.0
  %v3513 = vrcp.pop %v3512
  %v3514 = vmul.f32 %v3512, %v3513
  %v3515 = vsub.f32 1.0, %v3514
  %v3516 = vmul.f32 %v3513, %v3515
  %v3517 = vadd.f32 %v3513, %v3516
  %vm3518 = vweird.f32 %v3512
  %vm3519 = vweird.f32 %v3513
  %vm3520 = vmor %vm3518, %vm3519
  %v3521 = vsel %vm3520, %v3513, %v3517
  %v3522 = vand.u32 2147483647, %v3512
  %vm3523 = vcmp.eq.f32.partialorder %v3522, 8.507059e+37
  %v3524 = vand.u32 %v3512, 2147483648
  %v3525 = vor.u32 1.1754944e-38, %v3524
  %v3526 = vsel %vm3523, %v3525, %v3521
  %v3527 = vmul.f32 %v3502, %v3526
  %v3528 = vmin.f32 %v3527, 1.0
  %v3529 = vmax.f32 %v3528, -1.0
  %v3530 = vmul.f32 %v1243, %v1243
  %v3531 = vmin.f32 16.0, %v3530
  %v3532 = vmul.f32 %v3531, 2.1237322e-06
  %v3533 = vadd.f32 %v3532, 0.00028619796
  %v3534 = vmul.f32 %v3531, %v3533
  %v3535 = vadd.f32 %v3534, 0.0036580483
  %v3536 = vmul.f32 %v3531, %v3535
  %v3537 = vadd.f32 %v3536, 0.05243302
  %v3538 = vmul.f32 %v3531, %v3537
  %v3539 = vadd.f32 %v3538, 0.18741608
  %v3540 = vmul.f32 %v3531, %v3539
  %v3541 = vadd.f32 %v3540, 1.1283791
  %v3542 = vmul.f32 %v1243, %v3541
  %v3543 = vmul.f32 %v3531, 3.8918573e-05
  %v3544 = vadd.f32 %v3543, 0.001143296
  %v3545 = vmul.f32 %v3531, %v3544
  %v3546 = vadd.f32 %v3545, 0.014752088
  %v3547 = vmul.f32 %v3531, %v3546
  %v3548 = vadd.f32 %v3547, 0.112945676
  %v3549 = vmul.f32 %v3531, %v3548
  %v3550 = vadd.f32 %v3549, 0.4994258
  %v3551 = vmul.f32 %v3531, %v3550
  %v3552 = vadd.f32 %v3551, 1.0
  %v3553 = vrcp.pop %v3552
  %v3554 = vmul.f32 %v3552, %v3553
  %v3555 = vsub.f32 1.0, %v3554
  %v3556 = vmul.f32 %v3553, %v3555
  %v3557 = vadd.f32 %v3553, %v3556
  %vm3558 = vweird.f32 %v3552
  %vm3559 = vweird.f32 %v3553
  %vm3560 = vmor %vm3558, %vm3559
  %v3561 = vsel %vm3560, %v3553, %v3557
  %v3562 = vand.u32 2147483647, %v3552
  %vm3563 = vcmp.eq.f32.partialorder %v3562, 8.507059e+37
  %v3564 = vand.u32 %v3552, 2147483648
  %v3565 = vor.u32 1.1754944e-38, %v3564
  %v3566 = vsel %vm3563, %v3565, %v3561
  %v3567 = vmul.f32 %v3542, %v3566
  %v3568 = vmin.f32 %v3567, 1.0
  %v3569 = vmax.f32 %v3568, -1.0
  %v3570 = vmul.f32 %v1244, %v1244
  %v3571 = vmin.f32 16.0, %v3570
  %v3572 = vmul.f32 %v3571, 2.1237322e-06
  %v3573 = vadd.f32 %v3572, 0.00028619796
  %v3574 = vmul.f32 %v3571, %v3573
  %v3575 = vadd.f32 %v3574, 0.0036580483
  %v3576 = vmul.f32 %v3571, %v3575
  %v3577 = vadd.f32 %v3576, 0.05243302
  %v3578 = vmul.f32 %v3571, %v3577
  %v3579 = vadd.f32 %v3578, 0.18741608
  %v3580 = vmul.f32 %v3571, %v3579
  %v3581 = vadd.f32 %v3580, 1.1283791
  %v3582 = vmul.f32 %v1244, %v3581
  %v3583 = vmul.f32 %v3571, 3.8918573e-05
  %v3584 = vadd.f32 %v3583, 0.001143296
  %v3585 = vmul.f32 %v3571, %v3584
  %v3586 = vadd.f32 %v3585, 0.014752088
  %v3587 = vmul.f32 %v3571, %v3586
  %v3588 = vadd.f32 %v3587, 0.112945676
  %v3589 = vmul.f32 %v3571, %v3588
  %v3590 = vadd.f32 %v3589, 0.4994258
  %v3591 = vmul.f32 %v3571, %v3590
  %v3592 = vadd.f32 %v3591, 1.0
  %v3593 = vrcp.pop %v3592
  %v3594 = vmul.f32 %v3592, %v3593
  %v3595 = vsub.f32 1.0, %v3594
  %v3596 = vmul.f32 %v3593, %v3595
  %v3597 = vadd.f32 %v3593, %v3596
  %vm3598 = vweird.f32 %v3592
  %vm3599 = vweird.f32 %v3593
  %vm3600 = vmor %vm3598, %vm3599
  %v3601 = vsel %vm3600, %v3593, %v3597
  %v3602 = vand.u32 2147483647, %v3592
  %vm3603 = vcmp.eq.f32.partialorder %v3602, 8.507059e+37
  %v3604 = vand.u32 %v3592, 2147483648
  %v3605 = vor.u32 1.1754944e-38, %v3604
  %v3606 = vsel %vm3603, %v3605, %v3601
  %v3607 = vmul.f32 %v3582, %v3606
  %v3608 = vmin.f32 %v3607, 1.0
  %v3609 = vmax.f32 %v3608, -1.0
  %v3610 = vmul.f32 %v1245, %v1245
  %v3611 = vmin.f32 16.0, %v3610
  %v3612 = vmul.f32 %v3611, 2.1237322e-06
  %v3613 = vadd.f32 %v3612, 0.00028619796
  %v3614 = vmul.f32 %v3611, %v3613
  %v3615 = vadd.f32 %v3614, 0.0036580483
  %v3616 = vmul.f32 %v3611, %v3615
  %v3617 = vadd.f32 %v3616, 0.05243302
  %v3618 = vmul.f32 %v3611, %v3617
  %v3619 = vadd.f32 %v3618, 0.18741608
  %v3620 = vmul.f32 %v3611, %v3619
  %v3621 = vadd.f32 %v3620, 1.1283791
  %v3622 = vmul.f32 %v1245, %v3621
  %v3623 = vmul.f32 %v3611, 3.8918573e-05
  %v3624 = vadd.f32 %v3623, 0.001143296
  %v3625 = vmul.f32 %v3611, %v3624
  %v3626 = vadd.f32 %v3625, 0.014752088
  %v3627 = vmul.f32 %v3611, %v3626
  %v3628 = vadd.f32 %v3627, 0.112945676
  %v3629 = vmul.f32 %v3611, %v3628
  %v3630 = vadd.f32 %v3629, 0.4994258
  %v3631 = vmul.f32 %v3611, %v3630
  %v3632 = vadd.f32 %v3631, 1.0
  %v3633 = vrcp.pop %v3632
  %v3634 = vmul.f32 %v3632, %v3633
  %v3635 = vsub.f32 1.0, %v3634
  %v3636 = vmul.f32 %v3633, %v3635
  %v3637 = vadd.f32 %v3633, %v3636
  %vm3638 = vweird.f32 %v3632
  %vm3639 = vweird.f32 %v3633
  %vm3640 = vmor %vm3638, %vm3639
  %v3641 = vsel %vm3640, %v3633, %v3637
  %v3642 = vand.u32 2147483647, %v3632
  %vm3643 = vcmp.eq.f32.partialorder %v3642, 8.507059e+37
  %v3644 = vand.u32 %v3632, 2147483648
  %v3645 = vor.u32 1.1754944e-38, %v3644
  %v3646 = vsel %vm3643, %v3645, %v3641
  %v3647 = vmul.f32 %v3622, %v3646
  %v3648 = vmin.f32 %v3647, 1.0
  %v3649 = vmax.f32 %v3648, -1.0
  %v3650 = vmul.f32 %v1246, %v1246
  %v3651 = vmin.f32 16.0, %v3650
  %v3652 = vmul.f32 %v3651, 2.1237322e-06
  %v3653 = vadd.f32 %v3652, 0.00028619796
  %v3654 = vmul.f32 %v3651, %v3653
  %v3655 = vadd.f32 %v3654, 0.0036580483
  %v3656 = vmul.f32 %v3651, %v3655
  %v3657 = vadd.f32 %v3656, 0.05243302
  %v3658 = vmul.f32 %v3651, %v3657
  %v3659 = vadd.f32 %v3658, 0.18741608
  %v3660 = vmul.f32 %v3651, %v3659
  %v3661 = vadd.f32 %v3660, 1.1283791
  %v3662 = vmul.f32 %v1246, %v3661
  %v3663 = vmul.f32 %v3651, 3.8918573e-05
  %v3664 = vadd.f32 %v3663, 0.001143296
  %v3665 = vmul.f32 %v3651, %v3664
  %v3666 = vadd.f32 %v3665, 0.014752088
  %v3667 = vmul.f32 %v3651, %v3666
  %v3668 = vadd.f32 %v3667, 0.112945676
  %v3669 = vmul.f32 %v3651, %v3668
  %v3670 = vadd.f32 %v3669, 0.4994258
  %v3671 = vmul.f32 %v3651, %v3670
  %v3672 = vadd.f32 %v3671, 1.0
  %v3673 = vrcp.pop %v3672
  %v3674 = vmul.f32 %v3672, %v3673
  %v3675 = vsub.f32 1.0, %v3674
  %v3676 = vmul.f32 %v3673, %v3675
  %v3677 = vadd.f32 %v3673, %v3676
  %vm3678 = vweird.f32 %v3672
  %vm3679 = vweird.f32 %v3673
  %vm3680 = vmor %vm3678, %vm3679
  %v3681 = vsel %vm3680, %v3673, %v3677
  %v3682 = vand.u32 2147483647, %v3672
  %vm3683 = vcmp.eq.f32.partialorder %v3682, 8.507059e+37
  %v3684 = vand.u32 %v3672, 2147483648
  %v3685 = vor.u32 1.1754944e-38, %v3684
  %v3686 = vsel %vm3683, %v3685, %v3681
  %v3687 = vmul.f32 %v3662, %v3686
  %v3688 = vmin.f32 %v3687, 1.0
  %v3689 = vmax.f32 %v3688, -1.0
  %v3690 = vmul.f32 %v1247, %v1247
  %v3691 = vmin.f32 16.0, %v3690
  %v3692 = vmul.f32 %v3691, 2.1237322e-06
  %v3693 = vadd.f32 %v3692, 0.00028619796
  %v3694 = vmul.f32 %v3691, %v3693
  %v3695 = vadd.f32 %v3694, 0.0036580483
  %v3696 = vmul.f32 %v3691, %v3695
  %v3697 = vadd.f32 %v3696, 0.05243302
  %v3698 = vmul.f32 %v3691, %v3697
  %v3699 = vadd.f32 %v3698, 0.18741608
  %v3700 = vmul.f32 %v3691, %v3699
  %v3701 = vadd.f32 %v3700, 1.1283791
  %v3702 = vmul.f32 %v1247, %v3701
  %v3703 = vmul.f32 %v3691, 3.8918573e-05
  %v3704 = vadd.f32 %v3703, 0.001143296
  %v3705 = vmul.f32 %v3691, %v3704
  %v3706 = vadd.f32 %v3705, 0.014752088
  %v3707 = vmul.f32 %v3691, %v3706
  %v3708 = vadd.f32 %v3707, 0.112945676
  %v3709 = vmul.f32 %v3691, %v3708
  %v3710 = vadd.f32 %v3709, 0.4994258
  %v3711 = vmul.f32 %v3691, %v3710
  %v3712 = vadd.f32 %v3711, 1.0
  %v3713 = vrcp.pop %v3712
  %v3714 = vmul.f32 %v3712, %v3713
  %v3715 = vsub.f32 1.0, %v3714
  %v3716 = vmul.f32 %v3713, %v3715
  %v3717 = vadd.f32 %v3713, %v3716
  %vm3718 = vweird.f32 %v3712
  %vm3719 = vweird.f32 %v3713
  %vm3720 = vmor %vm3718, %vm3719
  %v3721 = vsel %vm3720, %v3713, %v3717
  %v3722 = vand.u32 2147483647, %v3712
  %vm3723 = vcmp.eq.f32.partialorder %v3722, 8.507059e+37
  %v3724 = vand.u32 %v3712, 2147483648
  %v3725 = vor.u32 1.1754944e-38, %v3724
  %v3726 = vsel %vm3723, %v3725, %v3721
  %v3727 = vmul.f32 %v3702, %v3726
  %v3728 = vmin.f32 %v3727, 1.0
  %v3729 = vmax.f32 %v3728, -1.0
  %v3730 = vmul.f32 %v1248, %v1248
  %v3731 = vmin.f32 16.0, %v3730
  %v3732 = vmul.f32 %v3731, 2.1237322e-06
  %v3733 = vadd.f32 %v3732, 0.00028619796
  %v3734 = vmul.f32 %v3731, %v3733
  %v3735 = vadd.f32 %v3734, 0.0036580483
  %v3736 = vmul.f32 %v3731, %v3735
  %v3737 = vadd.f32 %v3736, 0.05243302
  %v3738 = vmul.f32 %v3731, %v3737
  %v3739 = vadd.f32 %v3738, 0.18741608
  %v3740 = vmul.f32 %v3731, %v3739
  %v3741 = vadd.f32 %v3740, 1.1283791
  %v3742 = vmul.f32 %v1248, %v3741
  %v3743 = vmul.f32 %v3731, 3.8918573e-05
  %v3744 = vadd.f32 %v3743, 0.001143296
  %v3745 = vmul.f32 %v3731, %v3744
  %v3746 = vadd.f32 %v3745, 0.014752088
  %v3747 = vmul.f32 %v3731, %v3746
  %v3748 = vadd.f32 %v3747, 0.112945676
  %v3749 = vmul.f32 %v3731, %v3748
  %v3750 = vadd.f32 %v3749, 0.4994258
  %v3751 = vmul.f32 %v3731, %v3750
  %v3752 = vadd.f32 %v3751, 1.0
  %v3753 = vrcp.pop %v3752
  %v3754 = vmul.f32 %v3752, %v3753
  %v3755 = vsub.f32 1.0, %v3754
  %v3756 = vmul.f32 %v3753, %v3755
  %v3757 = vadd.f32 %v3753, %v3756
  %vm3758 = vweird.f32 %v3752
  %vm3759 = vweird.f32 %v3753
  %vm3760 = vmor %vm3758, %vm3759
  %v3761 = vsel %vm3760, %v3753, %v3757
  %v3762 = vand.u32 2147483647, %v3752
  %vm3763 = vcmp.eq.f32.partialorder %v3762, 8.507059e+37
  %v3764 = vand.u32 %v3752, 2147483648
  %v3765 = vor.u32 1.1754944e-38, %v3764
  %v3766 = vsel %vm3763, %v3765, %v3761
  %v3767 = vmul.f32 %v3742, %v3766
  %v3768 = vmin.f32 %v3767, 1.0
  %v3769 = vmax.f32 %v3768, -1.0
  %v3770 = vmul.f32 %v1249, %v1249
  %v3771 = vmin.f32 16.0, %v3770
  %v3772 = vmul.f32 %v3771, 2.1237322e-06
  %v3773 = vadd.f32 %v3772, 0.00028619796
  %v3774 = vmul.f32 %v3771, %v3773
  %v3775 = vadd.f32 %v3774, 0.0036580483
  %v3776 = vmul.f32 %v3771, %v3775
  %v3777 = vadd.f32 %v3776, 0.05243302
  %v3778 = vmul.f32 %v3771, %v3777
  %v3779 = vadd.f32 %v3778, 0.18741608
  %v3780 = vmul.f32 %v3771, %v3779
  %v3781 = vadd.f32 %v3780, 1.1283791
  %v3782 = vmul.f32 %v1249, %v3781
  %v3783 = vmul.f32 %v3771, 3.8918573e-05
  %v3784 = vadd.f32 %v3783, 0.001143296
  %v3785 = vmul.f32 %v3771, %v3784
  %v3786 = vadd.f32 %v3785, 0.014752088
  %v3787 = vmul.f32 %v3771, %v3786
  %v3788 = vadd.f32 %v3787, 0.112945676
  %v3789 = vmul.f32 %v3771, %v3788
  %v3790 = vadd.f32 %v3789, 0.4994258
  %v3791 = vmul.f32 %v3771, %v3790
  %v3792 = vadd.f32 %v3791, 1.0
  %v3793 = vrcp.pop %v3792
  %v3794 = vmul.f32 %v3792, %v3793
  %v3795 = vsub.f32 1.0, %v3794
  %v3796 = vmul.f32 %v3793, %v3795
  %v3797 = vadd.f32 %v3793, %v3796
  %vm3798 = vweird.f32 %v3792
  %vm3799 = vweird.f32 %v3793
  %vm3800 = vmor %vm3798, %vm3799
  %v3801 = vsel %vm3800, %v3793, %v3797
  %v3802 = vand.u32 2147483647, %v3792
  %vm3803 = vcmp.eq.f32.partialorder %v3802, 8.507059e+37
  %v3804 = vand.u32 %v3792, 2147483648
  %v3805 = vor.u32 1.1754944e-38, %v3804
  %v3806 = vsel %vm3803, %v3805, %v3801
  %v3807 = vmul.f32 %v3782, %v3806
  %v3808 = vmin.f32 %v3807, 1.0
  %v3809 = vmax.f32 %v3808, -1.0
  %v3810 = vadd.f32 %v1289, 1.0
  %v3811 = vadd.f32 %v1329, 1.0
  %v3812 = vadd.f32 %v1369, 1.0
  %v3813 = vadd.f32 %v1409, 1.0
  %v3814 = vadd.f32 %v1449, 1.0
  %v3815 = vadd.f32 %v1489, 1.0
  %v3816 = vadd.f32 %v1529, 1.0
  %v3817 = vadd.f32 %v1569, 1.0
  %v3818 = vadd.f32 %v1609, 1.0
  %v3819 = vadd.f32 %v1649, 1.0
  %v3820 = vadd.f32 %v1689, 1.0
  %v3821 = vadd.f32 %v1729, 1.0
  %v3822 = vadd.f32 %v1769, 1.0
  %v3823 = vadd.f32 %v1809, 1.0
  %v3824 = vadd.f32 %v1849, 1.0
  %v3825 = vadd.f32 %v1889, 1.0
  %v3826 = vadd.f32 %v1929, 1.0
  %v3827 = vadd.f32 %v1969, 1.0
  %v3828 = vadd.f32 %v2009, 1.0
  %v3829 = vadd.f32 %v2049, 1.0
  %v3830 = vadd.f32 %v2089, 1.0
  %v3831 = vadd.f32 %v2129, 1.0
  %v3832 = vadd.f32 %v2169, 1.0
  %v3833 = vadd.f32 %v2209, 1.0
  %v3834 = vadd.f32 %v2249, 1.0
  %v3835 = vadd.f32 %v2289, 1.0
  %v3836 = vadd.f32 %v2329, 1.0
  %v3837 = vadd.f32 %v2369, 1.0
  %v3838 = vadd.f32 %v2409, 1.0
  %v3839 = vadd.f32 %v2449, 1.0
  %v3840 = vadd.f32 %v2489, 1.0
  %v3841 = vadd.f32 %v2529, 1.0
  %v3842 = vadd.f32 %v2569, 1.0
  %v3843 = vadd.f32 %v2609, 1.0
  %v3844 = vadd.f32 %v2649, 1.0
  %v3845 = vadd.f32 %v2689, 1.0
  %v3846 = vadd.f32 %v2729, 1.0
  %v3847 = vadd.f32 %v2769, 1.0
  %v3848 = vadd.f32 %v2809, 1.0
  %v3849 = vadd.f32 %v2849, 1.0
  %v3850 = vadd.f32 %v2889, 1.0
  %v3851 = vadd.f32 %v2929, 1.0
  %v3852 = vadd.f32 %v2969, 1.0
  %v3853 = vadd.f32 %v3009, 1.0
  %v3854 = vadd.f32 %v3049, 1.0
  %v3855 = vadd.f32 %v3089, 1.0
  %v3856 = vadd.f32 %v3129, 1.0
  %v3857 = vadd.f32 %v3169, 1.0
  %v3858 = vadd.f32 %v3209, 1.0
  %v3859 = vadd.f32 %v3249, 1.0
  %v3860 = vadd.f32 %v3289, 1.0
  %v3861 = vadd.f32 %v3329, 1.0
  %v3862 = vadd.f32 %v3369, 1.0
  %v3863 = vadd.f32 %v3409, 1.0
  %v3864 = vadd.f32 %v3449, 1.0
  %v3865 = vadd.f32 %v3489, 1.0
  %v3866 = vadd.f32 %v3529, 1.0
  %v3867 = vadd.f32 %v3569, 1.0
  %v3868 = vadd.f32 %v3609, 1.0
  %v3869 = vadd.f32 %v3649, 1.0
  %v3870 = vadd.f32 %v3689, 1.0
  %v3871 = vadd.f32 %v3729, 1.0
  %v3872 = vadd.f32 %v3769, 1.0
  %v3873 = vadd.f32 %v3809, 1.0
  %v3874 = vmul.f32 %v1122, %v3810
  %v3875 = vmul.f32 %v1123, %v3811
  %v3876 = vmul.f32 %v1124, %v3812
  %v3877 = vmul.f32 %v1125, %v3813
  %v3878 = vmul.f32 %v1126, %v3814
  %v3879 = vmul.f32 %v1127, %v3815
  %v3880 = vmul.f32 %v1128, %v3816
  %v3881 = vmul.f32 %v1129, %v3817
  %v3882 = vmul.f32 %v1130, %v3818
  %v3883 = vmul.f32 %v1131, %v3819
  %v3884 = vmul.f32 %v1132, %v3820
  %v3885 = vmul.f32 %v1133, %v3821
  %v3886 = vmul.f32 %v1134, %v3822
  %v3887 = vmul.f32 %v1135, %v3823
  %v3888 = vmul.f32 %v1136, %v3824
  %v3889 = vmul.f32 %v1137, %v3825
  %v3890 = vmul.f32 %v1138, %v3826
  %v3891 = vmul.f32 %v1139, %v3827
  %v3892 = vmul.f32 %v1140, %v3828
  %v3893 = vmul.f32 %v1141, %v3829
  %v3894 = vmul.f32 %v1142, %v3830
  %v3895 = vmul.f32 %v1143, %v3831
  %v3896 = vmul.f32 %v1144, %v3832
  %v3897 = vmul.f32 %v1145, %v3833
  %v3898 = vmul.f32 %v1146, %v3834
  %v3899 = vmul.f32 %v1147, %v3835
  %v3900 = vmul.f32 %v1148, %v3836
  %v3901 = vmul.f32 %v1149, %v3837
  %v3902 = vmul.f32 %v1150, %v3838
  %v3903 = vmul.f32 %v1151, %v3839
  %v3904 = vmul.f32 %v1152, %v3840
  %v3905 = vmul.f32 %v1153, %v3841
  %v3906 = vmul.f32 %v1154, %v3842
  %v3907 = vmul.f32 %v1155, %v3843
  %v3908 = vmul.f32 %v1156, %v3844
  %v3909 = vmul.f32 %v1157, %v3845
  %v3910 = vmul.f32 %v1158, %v3846
  %v3911 = vmul.f32 %v1159, %v3847
  %v3912 = vmul.f32 %v1160, %v3848
  %v3913 = vmul.f32 %v1161, %v3849
  %v3914 = vmul.f32 %v1162, %v3850
  %v3915 = vmul.f32 %v1163, %v3851
  %v3916 = vmul.f32 %v1164, %v3852
  %v3917 = vmul.f32 %v1165, %v3853
  %v3918 = vmul.f32 %v1166, %v3854
  %v3919 = vmul.f32 %v1167, %v3855
  %v3920 = vmul.f32 %v1168, %v3856
  %v3921 = vmul.f32 %v1169, %v3857
  %v3922 = vmul.f32 %v1170, %v3858
  %v3923 = vmul.f32 %v1171, %v3859
  %v3924 = vmul.f32 %v1172, %v3860
  %v3925 = vmul.f32 %v1173, %v3861
  %v3926 = vmul.f32 %v1174, %v3862
  %v3927 = vmul.f32 %v1175, %v3863
  %v3928 = vmul.f32 %v1176, %v3864
  %v3929 = vmul.f32 %v1177, %v3865
  %v3930 = vmul.f32 %v1178, %v3866
  %v3931 = vmul.f32 %v1179, %v3867
  %v3932 = vmul.f32 %v1180, %v3868
  %v3933 = vmul.f32 %v1181, %v3869
  %v3934 = vmul.f32 %v1182, %v3870
  %v3935 = vmul.f32 %v1183, %v3871
  %v3936 = vmul.f32 %v1184, %v3872
  %v3937 = vmul.f32 %v1185, %v3873
  %3938 = vst.msk [vmem:[#allocation2] sm:$0xff] %vm513, 0.0
  %3939 = vst.msk [vmem:[#allocation2 + $0x8] sm:$0xff] %vm513, 0.0
  %3940 = vst.msk [vmem:[#allocation2 + $0x120] sm:$0xff] %vm513, 0.0
  %3941 = vst.msk [vmem:[#allocation2 + $0x128] sm:$0xff] %vm513, 0.0
  %s3942 = scalar_lea.vmem [#allocation2], 272
  %3943 = vst.msk [vmem:[%s3942] sm:$0xff] %vm513, 0.0
  %3944 = vst.msk [vmem:[%s3942 + $0x8] sm:$0xff] %vm513, 0.0
  %3945 = vst.msk [vmem:[%s3942 + $0x120] sm:$0xff] %vm513, 0.0
  %3946 = vst.msk [vmem:[%s3942 + $0x128] sm:$0xff] %vm513, 0.0
  %s3947 = scalar_lea.vmem [#allocation2], 16
  %3948 = vst.msk [vmem:[%s3947] sm:$0xff] %vm513, %v3874
  %3949 = vst.msk [vmem:[%s3947 + $0x8] sm:$0xff] %vm513, %v3875
  %3950 = vst.msk [vmem:[%s3947 + $0x10] sm:$0xff] %vm513, %v3876
  %3951 = vst.msk [vmem:[%s3947 + $0x18] sm:$0xff] %vm513, %v3877
  %3952 = vst.msk [vmem:[%s3947 + $0x20] sm:$0xff] %vm513, %v3878
  %3953 = vst.msk [vmem:[%s3947 + $0x28] sm:$0xff] %vm513, %v3879
  %3954 = vst.msk [vmem:[%s3947 + $0x30] sm:$0xff] %vm513, %v3880
  %3955 = vst.msk [vmem:[%s3947 + $0x38] sm:$0xff] %vm513, %v3881
  %3956 = vst.msk [vmem:[%s3947 + $0x40] sm:$0xff] %vm513, %v3882
  %3957 = vst.msk [vmem:[%s3947 + $0x48] sm:$0xff] %vm513, %v3883
  %3958 = vst.msk [vmem:[%s3947 + $0x50] sm:$0xff] %vm513, %v3884
  %3959 = vst.msk [vmem:[%s3947 + $0x58] sm:$0xff] %vm513, %v3885
  %3960 = vst.msk [vmem:[%s3947 + $0x60] sm:$0xff] %vm513, %v3886
  %3961 = vst.msk [vmem:[%s3947 + $0x68] sm:$0xff] %vm513, %v3887
  %3962 = vst.msk [vmem:[%s3947 + $0x70] sm:$0xff] %vm513, %v3888
  %3963 = vst.msk [vmem:[%s3947 + $0x78] sm:$0xff] %vm513, %v3889
  %3964 = vst.msk [vmem:[%s3947 + $0x80] sm:$0xff] %vm513, %v3890
  %3965 = vst.msk [vmem:[%s3947 + $0x88] sm:$0xff] %vm513, %v3891
  %3966 = vst.msk [vmem:[%s3947 + $0x90] sm:$0xff] %vm513, %v3892
  %3967 = vst.msk [vmem:[%s3947 + $0x98] sm:$0xff] %vm513, %v3893
  %3968 = vst.msk [vmem:[%s3947 + $0xa0] sm:$0xff] %vm513, %v3894
  %3969 = vst.msk [vmem:[%s3947 + $0xa8] sm:$0xff] %vm513, %v3895
  %3970 = vst.msk [vmem:[%s3947 + $0xb0] sm:$0xff] %vm513, %v3896
  %3971 = vst.msk [vmem:[%s3947 + $0xb8] sm:$0xff] %vm513, %v3897
  %3972 = vst.msk [vmem:[%s3947 + $0xc0] sm:$0xff] %vm513, %v3898
  %3973 = vst.msk [vmem:[%s3947 + $0xc8] sm:$0xff] %vm513, %v3899
  %3974 = vst.msk [vmem:[%s3947 + $0xd0] sm:$0xff] %vm513, %v3900
  %3975 = vst.msk [vmem:[%s3947 + $0xd8] sm:$0xff] %vm513, %v3901
  %3976 = vst.msk [vmem:[%s3947 + $0xe0] sm:$0xff] %vm513, %v3902
  %3977 = vst.msk [vmem:[%s3947 + $0xe8] sm:$0xff] %vm513, %v3903
  %3978 = vst.msk [vmem:[%s3947 + $0xf0] sm:$0xff] %vm513, %v3904
  %3979 = vst.msk [vmem:[%s3947 + $0xf8] sm:$0xff] %vm513, %v3905
  %3980 = vst.msk [vmem:[%s3947 + $0x120] sm:$0xff] %vm513, %v3906
  %3981 = vst.msk [vmem:[%s3947 + $0x128] sm:$0xff] %vm513, %v3907
  %3982 = vst.msk [vmem:[%s3947 + $0x130] sm:$0xff] %vm513, %v3908
  %3983 = vst.msk [vmem:[%s3947 + $0x138] sm:$0xff] %vm513, %v3909
  %3984 = vst.msk [vmem:[%s3947 + $0x140] sm:$0xff] %vm513, %v3910
  %3985 = vst.msk [vmem:[%s3947 + $0x148] sm:$0xff] %vm513, %v3911
  %3986 = vst.msk [vmem:[%s3947 + $0x150] sm:$0xff] %vm513, %v3912
  %3987 = vst.msk [vmem:[%s3947 + $0x158] sm:$0xff] %vm513, %v3913
  %3988 = vst.msk [vmem:[%s3947 + $0x160] sm:$0xff] %vm513, %v3914
  %3989 = vst.msk [vmem:[%s3947 + $0x168] sm:$0xff] %vm513, %v3915
  %3990 = vst.msk [vmem:[%s3947 + $0x170] sm:$0xff] %vm513, %v3916
  %3991 = vst.msk [vmem:[%s3947 + $0x178] sm:$0xff] %vm513, %v3917
  %3992 = vst.msk [vmem:[%s3947 + $0x180] sm:$0xff] %vm513, %v3918
  %3993 = vst.msk [vmem:[%s3947 + $0x188] sm:$0xff] %vm513, %v3919
  %3994 = vst.msk [vmem:[%s3947 + $0x190] sm:$0xff] %vm513, %v3920
  %3995 = vst.msk [vmem:[%s3947 + $0x198] sm:$0xff] %vm513, %v3921
  %3996 = vst.msk [vmem:[%s3947 + $0x1a0] sm:$0xff] %vm513, %v3922
  %3997 = vst.msk [vmem:[%s3947 + $0x1a8] sm:$0xff] %vm513, %v3923
  %3998 = vst.msk [vmem:[%s3947 + $0x1b0] sm:$0xff] %vm513, %v3924
  %3999 = vst.msk [vmem:[%s3947 + $0x1b8] sm:$0xff] %vm513, %v3925
  %4000 = vst.msk [vmem:[%s3947 + $0x1c0] sm:$0xff] %vm513, %v3926
  %4001 = vst.msk [vmem:[%s3947 + $0x1c8] sm:$0xff] %vm513, %v3927
  %4002 = vst.msk [vmem:[%s3947 + $0x1d0] sm:$0xff] %vm513, %v3928
  %4003 = vst.msk [vmem:[%s3947 + $0x1d8] sm:$0xff] %vm513, %v3929
  %4004 = vst.msk [vmem:[%s3947 + $0x1e0] sm:$0xff] %vm513, %v3930
  %4005 = vst.msk [vmem:[%s3947 + $0x1e8] sm:$0xff] %vm513, %v3931
  %4006 = vst.msk [vmem:[%s3947 + $0x1f0] sm:$0xff] %vm513, %v3932
  %4007 = vst.msk [vmem:[%s3947 + $0x1f8] sm:$0xff] %vm513, %v3933
  %4008 = vst.msk [vmem:[%s3947 + $0x200] sm:$0xff] %vm513, %v3934
  %4009 = vst.msk [vmem:[%s3947 + $0x208] sm:$0xff] %vm513, %v3935
  %4010 = vst.msk [vmem:[%s3947 + $0x210] sm:$0xff] %vm513, %v3936
  %4011 = vst.msk [vmem:[%s3947 + $0x218] sm:$0xff] %vm513, %v3937
  %v4012 = vld [vmem:[#allocation2] sm:$0xff]
  %v4013 = vld [vmem:[#allocation2 + $0x8] sm:$0xff]
  %v4014 = vld [vmem:[#allocation2 + $0x10] sm:$0xff]
  %v4015 = vld [vmem:[#allocation2 + $0x18] sm:$0xff]
  %v4016 = vld [vmem:[#allocation2 + $0x20] sm:$0xff]
  %v4017 = vld [vmem:[#allocation2 + $0x28] sm:$0xff]
  %v4018 = vld [vmem:[#allocation2 + $0x30] sm:$0xff]
  %v4019 = vld [vmem:[#allocation2 + $0x38] sm:$0xff]
  %v4020 = vld [vmem:[#allocation2 + $0x40] sm:$0xff]
  %v4021 = vld [vmem:[#allocation2 + $0x48] sm:$0xff]
  %v4022 = vld [vmem:[#allocation2 + $0x50] sm:$0xff]
  %v4023 = vld [vmem:[#allocation2 + $0x58] sm:$0xff]
  %v4024 = vld [vmem:[#allocation2 + $0x60] sm:$0xff]
  %v4025 = vld [vmem:[#allocation2 + $0x68] sm:$0xff]
  %v4026 = vld [vmem:[#allocation2 + $0x70] sm:$0xff]
  %v4027 = vld [vmem:[#allocation2 + $0x78] sm:$0xff]
  %v4028 = vld [vmem:[#allocation2 + $0x80] sm:$0xff]
  %v4029 = vld [vmem:[#allocation2 + $0x88] sm:$0xff]
  %v4030 = vld [vmem:[#allocation2 + $0x90] sm:$0xff]
  %v4031 = vld [vmem:[#allocation2 + $0x98] sm:$0xff]
  %v4032 = vld [vmem:[#allocation2 + $0xa0] sm:$0xff]
  %v4033 = vld [vmem:[#allocation2 + $0xa8] sm:$0xff]
  %v4034 = vld [vmem:[#allocation2 + $0xb0] sm:$0xff]
  %v4035 = vld [vmem:[#allocation2 + $0xb8] sm:$0xff]
  %v4036 = vld [vmem:[#allocation2 + $0xc0] sm:$0xff]
  %v4037 = vld [vmem:[#allocation2 + $0xc8] sm:$0xff]
  %v4038 = vld [vmem:[#allocation2 + $0xd0] sm:$0xff]
  %v4039 = vld [vmem:[#allocation2 + $0xd8] sm:$0xff]
  %v4040 = vld [vmem:[#allocation2 + $0xe0] sm:$0xff]
  %v4041 = vld [vmem:[#allocation2 + $0xe8] sm:$0xff]
  %v4042 = vld [vmem:[#allocation2 + $0xf0] sm:$0xff]
  %v4043 = vld [vmem:[#allocation2 + $0xf8] sm:$0xff]
  %v4044 = vld [vmem:[#allocation2 + $0x120] sm:$0xff]
  %v4045 = vld [vmem:[#allocation2 + $0x128] sm:$0xff]
  %v4046 = vld [vmem:[#allocation2 + $0x130] sm:$0xff]
  %v4047 = vld [vmem:[#allocation2 + $0x138] sm:$0xff]
  %v4048 = vld [vmem:[#allocation2 + $0x140] sm:$0xff]
  %v4049 = vld [vmem:[#allocation2 + $0x148] sm:$0xff]
  %v4050 = vld [vmem:[#allocation2 + $0x150] sm:$0xff]
  %v4051 = vld [vmem:[#allocation2 + $0x158] sm:$0xff]
  %v4052 = vld [vmem:[#allocation2 + $0x160] sm:$0xff]
  %v4053 = vld [vmem:[#allocation2 + $0x168] sm:$0xff]
  %v4054 = vld [vmem:[#allocation2 + $0x170] sm:$0xff]
  %v4055 = vld [vmem:[#allocation2 + $0x178] sm:$0xff]
  %v4056 = vld [vmem:[#allocation2 + $0x180] sm:$0xff]
  %v4057 = vld [vmem:[#allocation2 + $0x188] sm:$0xff]
  %v4058 = vld [vmem:[#allocation2 + $0x190] sm:$0xff]
  %v4059 = vld [vmem:[#allocation2 + $0x198] sm:$0xff]
  %v4060 = vld [vmem:[#allocation2 + $0x1a0] sm:$0xff]
  %v4061 = vld [vmem:[#allocation2 + $0x1a8] sm:$0xff]
  %v4062 = vld [vmem:[#allocation2 + $0x1b0] sm:$0xff]
  %v4063 = vld [vmem:[#allocation2 + $0x1b8] sm:$0xff]
  %v4064 = vld [vmem:[#allocation2 + $0x1c0] sm:$0xff]
  %v4065 = vld [vmem:[#allocation2 + $0x1c8] sm:$0xff]
  %v4066 = vld [vmem:[#allocation2 + $0x1d0] sm:$0xff]
  %v4067 = vld [vmem:[#allocation2 + $0x1d8] sm:$0xff]
  %v4068 = vld [vmem:[#allocation2 + $0x1e0] sm:$0xff]
  %v4069 = vld [vmem:[#allocation2 + $0x1e8] sm:$0xff]
  %v4070 = vld [vmem:[#allocation2 + $0x1f0] sm:$0xff]
  %v4071 = vld [vmem:[#allocation2 + $0x1f8] sm:$0xff]
  %v4072 = vld [vmem:[#allocation2 + $0x200] sm:$0xff]
  %v4073 = vld [vmem:[#allocation2 + $0x208] sm:$0xff]
  %v4074 = vld [vmem:[#allocation2 + $0x210] sm:$0xff]
  %v4075 = vld [vmem:[#allocation2 + $0x218] sm:$0xff]
  %v4076 = vld [vmem:[%s5] sm:$0xff]
  %s4077 = scalar_lea.vmem %s5, 8
  %v4078 = vld [vmem:[%s4077] sm:$0xff]
  %s4079 = scalar_lea.vmem %s5, 16
  %v4080 = vld [vmem:[%s4079] sm:$0xff]
  %v4081 = vld [vmem:[%s3947] sm:$0xff]
  %v4082 = vld [vmem:[%s3947 + $0x8] sm:$0xff]
  %v4083 = vld [vmem:[%s3947 + $0x10] sm:$0xff]
  %v4084 = vld [vmem:[%s3947 + $0x18] sm:$0xff]
  %v4085 = vld [vmem:[%s3947 + $0x20] sm:$0xff]
  %v4086 = vld [vmem:[%s3947 + $0x28] sm:$0xff]
  %v4087 = vld [vmem:[%s3947 + $0x30] sm:$0xff]
  %v4088 = vld [vmem:[%s3947 + $0x38] sm:$0xff]
  %v4089 = vld [vmem:[%s3947 + $0x40] sm:$0xff]
  %v4090 = vld [vmem:[%s3947 + $0x48] sm:$0xff]
  %v4091 = vld [vmem:[%s3947 + $0x50] sm:$0xff]
  %v4092 = vld [vmem:[%s3947 + $0x58] sm:$0xff]
  %v4093 = vld [vmem:[%s3947 + $0x60] sm:$0xff]
  %v4094 = vld [vmem:[%s3947 + $0x68] sm:$0xff]
  %v4095 = vld [vmem:[%s3947 + $0x70] sm:$0xff]
  %v4096 = vld [vmem:[%s3947 + $0x78] sm:$0xff]
  %v4097 = vld [vmem:[%s3947 + $0x80] sm:$0xff]
  %v4098 = vld [vmem:[%s3947 + $0x88] sm:$0xff]
  %v4099 = vld [vmem:[%s3947 + $0x90] sm:$0xff]
  %v4100 = vld [vmem:[%s3947 + $0x98] sm:$0xff]
  %v4101 = vld [vmem:[%s3947 + $0xa0] sm:$0xff]
  %v4102 = vld [vmem:[%s3947 + $0xa8] sm:$0xff]
  %v4103 = vld [vmem:[%s3947 + $0xb0] sm:$0xff]
  %v4104 = vld [vmem:[%s3947 + $0xb8] sm:$0xff]
  %v4105 = vld [vmem:[%s3947 + $0xc0] sm:$0xff]
  %v4106 = vld [vmem:[%s3947 + $0xc8] sm:$0xff]
  %v4107 = vld [vmem:[%s3947 + $0xd0] sm:$0xff]
  %v4108 = vld [vmem:[%s3947 + $0xd8] sm:$0xff]
  %v4109 = vld [vmem:[%s3947 + $0xe0] sm:$0xff]
  %v4110 = vld [vmem:[%s3947 + $0xe8] sm:$0xff]
  %v4111 = vld [vmem:[%s3947 + $0xf0] sm:$0xff]
  %v4112 = vld [vmem:[%s3947 + $0xf8] sm:$0xff]
  %v4113 = vld [vmem:[%s3947 + $0x120] sm:$0xff]
  %v4114 = vld [vmem:[%s3947 + $0x128] sm:$0xff]
  %v4115 = vld [vmem:[%s3947 + $0x130] sm:$0xff]
  %v4116 = vld [vmem:[%s3947 + $0x138] sm:$0xff]
  %v4117 = vld [vmem:[%s3947 + $0x140] sm:$0xff]
  %v4118 = vld [vmem:[%s3947 + $0x148] sm:$0xff]
  %v4119 = vld [vmem:[%s3947 + $0x150] sm:$0xff]
  %v4120 = vld [vmem:[%s3947 + $0x158] sm:$0xff]
  %v4121 = vld [vmem:[%s3947 + $0x160] sm:$0xff]
  %v4122 = vld [vmem:[%s3947 + $0x168] sm:$0xff]
  %v4123 = vld [vmem:[%s3947 + $0x170] sm:$0xff]
  %v4124 = vld [vmem:[%s3947 + $0x178] sm:$0xff]
  %v4125 = vld [vmem:[%s3947 + $0x180] sm:$0xff]
  %v4126 = vld [vmem:[%s3947 + $0x188] sm:$0xff]
  %v4127 = vld [vmem:[%s3947 + $0x190] sm:$0xff]
  %v4128 = vld [vmem:[%s3947 + $0x198] sm:$0xff]
  %v4129 = vld [vmem:[%s3947 + $0x1a0] sm:$0xff]
  %v4130 = vld [vmem:[%s3947 + $0x1a8] sm:$0xff]
  %v4131 = vld [vmem:[%s3947 + $0x1b0] sm:$0xff]
  %v4132 = vld [vmem:[%s3947 + $0x1b8] sm:$0xff]
  %v4133 = vld [vmem:[%s3947 + $0x1c0] sm:$0xff]
  %v4134 = vld [vmem:[%s3947 + $0x1c8] sm:$0xff]
  %v4135 = vld [vmem:[%s3947 + $0x1d0] sm:$0xff]
  %v4136 = vld [vmem:[%s3947 + $0x1d8] sm:$0xff]
  %v4137 = vld [vmem:[%s3947 + $0x1e0] sm:$0xff]
  %v4138 = vld [vmem:[%s3947 + $0x1e8] sm:$0xff]
  %v4139 = vld [vmem:[%s3947 + $0x1f0] sm:$0xff]
  %v4140 = vld [vmem:[%s3947 + $0x1f8] sm:$0xff]
  %v4141 = vld [vmem:[%s3947 + $0x200] sm:$0xff]
  %v4142 = vld [vmem:[%s3947 + $0x208] sm:$0xff]
  %v4143 = vld [vmem:[%s3947 + $0x210] sm:$0xff]
  %v4144 = vld [vmem:[%s3947 + $0x218] sm:$0xff]
  %s4145 = scalar_lea.vmem %s5, 24
  %v4146 = vld [vmem:[%s4145] sm:$0xff]
  %v4148 = vsel %vm513, %v4081, 0
  %v4151 = vsel %vm513, %v4082, 0
  %v4154 = vsel %vm513, %v4083, 0
  %v4157 = vsel %vm513, %v4084, 0
  %v4160 = vsel %vm513, %v4085, 0
  %v4163 = vsel %vm513, %v4086, 0
  %v4166 = vsel %vm513, %v4087, 0
  %v4169 = vsel %vm513, %v4088, 0
  %v4172 = vsel %vm513, %v4089, 0
  %v4175 = vsel %vm513, %v4090, 0
  %v4178 = vsel %vm513, %v4091, 0
  %v4181 = vsel %vm513, %v4092, 0
  %v4184 = vsel %vm513, %v4093, 0
  %v4187 = vsel %vm513, %v4094, 0
  %v4190 = vsel %vm513, %v4095, 0
  %v4193 = vsel %vm513, %v4096, 0
  %v4196 = vsel %vm513, %v4097, 0
  %v4199 = vsel %vm513, %v4098, 0
  %v4202 = vsel %vm513, %v4099, 0
  %v4205 = vsel %vm513, %v4100, 0
  %v4208 = vsel %vm513, %v4101, 0
  %v4211 = vsel %vm513, %v4102, 0
  %v4214 = vsel %vm513, %v4103, 0
  %v4217 = vsel %vm513, %v4104, 0
  %v4220 = vsel %vm513, %v4105, 0
  %v4223 = vsel %vm513, %v4106, 0
  %v4226 = vsel %vm513, %v4107, 0
  %v4229 = vsel %vm513, %v4108, 0
  %v4232 = vsel %vm513, %v4109, 0
  %v4235 = vsel %vm513, %v4110, 0
  %v4238 = vsel %vm513, %v4111, 0
  %v4241 = vsel %vm513, %v4112, 0
  %v4244 = vsel %vm513, %v4113, 0
  %v4247 = vsel %vm513, %v4114, 0
  %v4250 = vsel %vm513, %v4115, 0
  %v4253 = vsel %vm513, %v4116, 0
  %v4256 = vsel %vm513, %v4117, 0
  %v4259 = vsel %vm513, %v4118, 0
  %v4262 = vsel %vm513, %v4119, 0
  %v4265 = vsel %vm513, %v4120, 0
  %v4268 = vsel %vm513, %v4121, 0
  %v4271 = vsel %vm513, %v4122, 0
  %v4274 = vsel %vm513, %v4123, 0
  %v4277 = vsel %vm513, %v4124, 0
  %v4280 = vsel %vm513, %v4125, 0
  %v4283 = vsel %vm513, %v4126, 0
  %v4286 = vsel %vm513, %v4127, 0
  %v4289 = vsel %vm513, %v4128, 0
  %v4292 = vsel %vm513, %v4129, 0
  %v4295 = vsel %vm513, %v4130, 0
  %v4298 = vsel %vm513, %v4131, 0
  %v4301 = vsel %vm513, %v4132, 0
  %v4304 = vsel %vm513, %v4133, 0
  %v4307 = vsel %vm513, %v4134, 0
  %v4310 = vsel %vm513, %v4135, 0
  %v4313 = vsel %vm513, %v4136, 0
  %v4316 = vsel %vm513, %v4137, 0
  %v4319 = vsel %vm513, %v4138, 0
  %v4322 = vsel %vm513, %v4139, 0
  %v4325 = vsel %vm513, %v4140, 0
  %v4328 = vsel %vm513, %v4141, 0
  %v4331 = vsel %vm513, %v4142, 0
  %v4334 = vsel %vm513, %v4143, 0
  %v4337 = vsel %vm513, %v4144, 0
  %4339 = vmatpush.msra.mxu0 0.0
  %4340 = vmatpush.msra.mxu0 0.0
  %4341 = vmatpush.msra.mxu0 0.0
  %4342 = vmatpush.msra.mxu0 0.0
  %4343 = vmatpush.msra.mxu0 0.0
  %4344 = vmatpush.msra.mxu0 0.0
  %4345 = vmatpush.msra.mxu0 0.0
  %4346 = vmatpush.msra.mxu0 0.0
  %4347 = vmatpush.msra.mxu0 0.0
  %4348 = vmatpush.msra.mxu0 0.0
  %4349 = vmatpush.msra.mxu0 0.0
  %4350 = vmatpush.msra.mxu0 0.0
  %4351 = vmatpush.msra.mxu0 0.0
  %4352 = vmatpush.msra.mxu0 0.0
  %4353 = vmatpush.msra.mxu0 0.0
  %4354 = vmatpush.msra.mxu0 %v4146
  %4355 = vmatmul.f32.gmra.mxu0 %v4148
  %v4356 = vpop.f32.mrf.mxu0
  %v4357 = vadd.f32 0.0, %v4356
  %4358 = vmatmul.f32.gmra.mxu0 %v4151
  %v4359 = vpop.f32.mrf.mxu0
  %v4360 = vadd.f32 0.0, %v4359
  %4361 = vmatmul.f32.gmra.mxu0 %v4154
  %v4362 = vpop.f32.mrf.mxu0
  %v4363 = vadd.f32 0.0, %v4362
  %4364 = vmatmul.f32.gmra.mxu0 %v4157
  %v4365 = vpop.f32.mrf.mxu0
  %v4366 = vadd.f32 0.0, %v4365
  %4367 = vmatmul.f32.gmra.mxu0 %v4160
  %v4368 = vpop.f32.mrf.mxu0
  %v4369 = vadd.f32 0.0, %v4368
  %4370 = vmatmul.f32.gmra.mxu0 %v4163
  %v4371 = vpop.f32.mrf.mxu0
  %v4372 = vadd.f32 0.0, %v4371
  %4373 = vmatmul.f32.gmra.mxu0 %v4166
  %v4374 = vpop.f32.mrf.mxu0
  %v4375 = vadd.f32 0.0, %v4374
  %4376 = vmatmul.f32.gmra.mxu0 %v4169
  %v4377 = vpop.f32.mrf.mxu0
  %v4378 = vadd.f32 0.0, %v4377
  %4379 = vmatmul.f32.gmra.mxu0 %v4172
  %v4380 = vpop.f32.mrf.mxu0
  %v4381 = vadd.f32 0.0, %v4380
  %4382 = vmatmul.f32.gmra.mxu0 %v4175
  %v4383 = vpop.f32.mrf.mxu0
  %v4384 = vadd.f32 0.0, %v4383
  %4385 = vmatmul.f32.gmra.mxu0 %v4178
  %v4386 = vpop.f32.mrf.mxu0
  %v4387 = vadd.f32 0.0, %v4386
  %4388 = vmatmul.f32.gmra.mxu0 %v4181
  %v4389 = vpop.f32.mrf.mxu0
  %v4390 = vadd.f32 0.0, %v4389
  %4391 = vmatmul.f32.gmra.mxu0 %v4184
  %v4392 = vpop.f32.mrf.mxu0
  %v4393 = vadd.f32 0.0, %v4392
  %4394 = vmatmul.f32.gmra.mxu0 %v4187
  %v4395 = vpop.f32.mrf.mxu0
  %v4396 = vadd.f32 0.0, %v4395
  %4397 = vmatmul.f32.gmra.mxu0 %v4190
  %v4398 = vpop.f32.mrf.mxu0
  %v4399 = vadd.f32 0.0, %v4398
  %4400 = vmatmul.f32.gmra.mxu0 %v4193
  %v4401 = vpop.f32.mrf.mxu0
  %v4402 = vadd.f32 0.0, %v4401
  %4403 = vmatmul.f32.gmra.mxu0 %v4196
  %v4404 = vpop.f32.mrf.mxu0
  %v4405 = vadd.f32 0.0, %v4404
  %4406 = vmatmul.f32.gmra.mxu0 %v4199
  %v4407 = vpop.f32.mrf.mxu0
  %v4408 = vadd.f32 0.0, %v4407
  %4409 = vmatmul.f32.gmra.mxu0 %v4202
  %v4410 = vpop.f32.mrf.mxu0
  %v4411 = vadd.f32 0.0, %v4410
  %4412 = vmatmul.f32.gmra.mxu0 %v4205
  %v4413 = vpop.f32.mrf.mxu0
  %v4414 = vadd.f32 0.0, %v4413
  %4415 = vmatmul.f32.gmra.mxu0 %v4208
  %v4416 = vpop.f32.mrf.mxu0
  %v4417 = vadd.f32 0.0, %v4416
  %4418 = vmatmul.f32.gmra.mxu0 %v4211
  %v4419 = vpop.f32.mrf.mxu0
  %v4420 = vadd.f32 0.0, %v4419
  %4421 = vmatmul.f32.gmra.mxu0 %v4214
  %v4422 = vpop.f32.mrf.mxu0
  %v4423 = vadd.f32 0.0, %v4422
  %4424 = vmatmul.f32.gmra.mxu0 %v4217
  %v4425 = vpop.f32.mrf.mxu0
  %v4426 = vadd.f32 0.0, %v4425
  %4427 = vmatmul.f32.gmra.mxu0 %v4220
  %v4428 = vpop.f32.mrf.mxu0
  %v4429 = vadd.f32 0.0, %v4428
  %4430 = vmatmul.f32.gmra.mxu0 %v4223
  %v4431 = vpop.f32.mrf.mxu0
  %v4432 = vadd.f32 0.0, %v4431
  %4433 = vmatmul.f32.gmra.mxu0 %v4226
  %v4434 = vpop.f32.mrf.mxu0
  %v4435 = vadd.f32 0.0, %v4434
  %4436 = vmatmul.f32.gmra.mxu0 %v4229
  %v4437 = vpop.f32.mrf.mxu0
  %v4438 = vadd.f32 0.0, %v4437
  %4439 = vmatmul.f32.gmra.mxu0 %v4232
  %v4440 = vpop.f32.mrf.mxu0
  %v4441 = vadd.f32 0.0, %v4440
  %4442 = vmatmul.f32.gmra.mxu0 %v4235
  %v4443 = vpop.f32.mrf.mxu0
  %v4444 = vadd.f32 0.0, %v4443
  %4445 = vmatmul.f32.gmra.mxu0 %v4238
  %v4446 = vpop.f32.mrf.mxu0
  %v4447 = vadd.f32 0.0, %v4446
  %4448 = vmatmul.f32.gmra.mxu0 %v4241
  %v4449 = vpop.f32.mrf.mxu0
  %v4450 = vadd.f32 0.0, %v4449
  %4451 = vmatmul.f32.gmra.mxu0 %v4244
  %v4452 = vpop.f32.mrf.mxu0
  %v4453 = vadd.f32 0.0, %v4452
  %4454 = vmatmul.f32.gmra.mxu0 %v4247
  %v4455 = vpop.f32.mrf.mxu0
  %v4456 = vadd.f32 0.0, %v4455
  %4457 = vmatmul.f32.gmra.mxu0 %v4250
  %v4458 = vpop.f32.mrf.mxu0
  %v4459 = vadd.f32 0.0, %v4458
  %4460 = vmatmul.f32.gmra.mxu0 %v4253
  %v4461 = vpop.f32.mrf.mxu0
  %v4462 = vadd.f32 0.0, %v4461
  %4463 = vmatmul.f32.gmra.mxu0 %v4256
  %v4464 = vpop.f32.mrf.mxu0
  %v4465 = vadd.f32 0.0, %v4464
  %4466 = vmatmul.f32.gmra.mxu0 %v4259
  %v4467 = vpop.f32.mrf.mxu0
  %v4468 = vadd.f32 0.0, %v4467
  %4469 = vmatmul.f32.gmra.mxu0 %v4262
  %v4470 = vpop.f32.mrf.mxu0
  %v4471 = vadd.f32 0.0, %v4470
  %4472 = vmatmul.f32.gmra.mxu0 %v4265
  %v4473 = vpop.f32.mrf.mxu0
  %v4474 = vadd.f32 0.0, %v4473
  %4475 = vmatmul.f32.gmra.mxu0 %v4268
  %v4476 = vpop.f32.mrf.mxu0
  %v4477 = vadd.f32 0.0, %v4476
  %4478 = vmatmul.f32.gmra.mxu0 %v4271
  %v4479 = vpop.f32.mrf.mxu0
  %v4480 = vadd.f32 0.0, %v4479
  %4481 = vmatmul.f32.gmra.mxu0 %v4274
  %v4482 = vpop.f32.mrf.mxu0
  %v4483 = vadd.f32 0.0, %v4482
  %4484 = vmatmul.f32.gmra.mxu0 %v4277
  %v4485 = vpop.f32.mrf.mxu0
  %v4486 = vadd.f32 0.0, %v4485
  %4487 = vmatmul.f32.gmra.mxu0 %v4280
  %v4488 = vpop.f32.mrf.mxu0
  %v4489 = vadd.f32 0.0, %v4488
  %4490 = vmatmul.f32.gmra.mxu0 %v4283
  %v4491 = vpop.f32.mrf.mxu0
  %v4492 = vadd.f32 0.0, %v4491
  %4493 = vmatmul.f32.gmra.mxu0 %v4286
  %v4494 = vpop.f32.mrf.mxu0
  %v4495 = vadd.f32 0.0, %v4494
  %4496 = vmatmul.f32.gmra.mxu0 %v4289
  %v4497 = vpop.f32.mrf.mxu0
  %v4498 = vadd.f32 0.0, %v4497
  %4499 = vmatmul.f32.gmra.mxu0 %v4292
  %v4500 = vpop.f32.mrf.mxu0
  %v4501 = vadd.f32 0.0, %v4500
  %4502 = vmatmul.f32.gmra.mxu0 %v4295
  %v4503 = vpop.f32.mrf.mxu0
  %v4504 = vadd.f32 0.0, %v4503
  %4505 = vmatmul.f32.gmra.mxu0 %v4298
  %v4506 = vpop.f32.mrf.mxu0
  %v4507 = vadd.f32 0.0, %v4506
  %4508 = vmatmul.f32.gmra.mxu0 %v4301
  %v4509 = vpop.f32.mrf.mxu0
  %v4510 = vadd.f32 0.0, %v4509
  %4511 = vmatmul.f32.gmra.mxu0 %v4304
  %v4512 = vpop.f32.mrf.mxu0
  %v4513 = vadd.f32 0.0, %v4512
  %4514 = vmatmul.f32.gmra.mxu0 %v4307
  %v4515 = vpop.f32.mrf.mxu0
  %v4516 = vadd.f32 0.0, %v4515
  %4517 = vmatmul.f32.gmra.mxu0 %v4310
  %v4518 = vpop.f32.mrf.mxu0
  %v4519 = vadd.f32 0.0, %v4518
  %4520 = vmatmul.f32.gmra.mxu0 %v4313
  %v4521 = vpop.f32.mrf.mxu0
  %v4522 = vadd.f32 0.0, %v4521
  %4523 = vmatmul.f32.gmra.mxu0 %v4316
  %v4524 = vpop.f32.mrf.mxu0
  %v4525 = vadd.f32 0.0, %v4524
  %4526 = vmatmul.f32.gmra.mxu0 %v4319
  %v4527 = vpop.f32.mrf.mxu0
  %v4528 = vadd.f32 0.0, %v4527
  %4529 = vmatmul.f32.gmra.mxu0 %v4322
  %v4530 = vpop.f32.mrf.mxu0
  %v4531 = vadd.f32 0.0, %v4530
  %4532 = vmatmul.f32.gmra.mxu0 %v4325
  %v4533 = vpop.f32.mrf.mxu0
  %v4534 = vadd.f32 0.0, %v4533
  %4535 = vmatmul.f32.gmra.mxu0 %v4328
  %v4536 = vpop.f32.mrf.mxu0
  %v4537 = vadd.f32 0.0, %v4536
  %4538 = vmatmul.f32.gmra.mxu0 %v4331
  %v4539 = vpop.f32.mrf.mxu0
  %v4540 = vadd.f32 0.0, %v4539
  %4541 = vmatmul.f32.gmra.mxu0 %v4334
  %v4542 = vpop.f32.mrf.mxu0
  %v4543 = vadd.f32 0.0, %v4542
  %4544 = vmatmul.f32.gmra.mxu0 %v4337
  %v4545 = vpop.f32.mrf.mxu0
  %v4546 = vadd.f32 0.0, %v4545
  %4547 = vdwg.mxu0
  %v4549 = vsel %vm513, %v4012, 0
  %v4552 = vsel %vm513, %v4013, 0
  %v4555 = vsel %vm513, %v4014, 0
  %v4558 = vsel %vm513, %v4015, 0
  %v4561 = vsel %vm513, %v4016, 0
  %v4564 = vsel %vm513, %v4017, 0
  %v4567 = vsel %vm513, %v4018, 0
  %v4570 = vsel %vm513, %v4019, 0
  %v4573 = vsel %vm513, %v4020, 0
  %v4576 = vsel %vm513, %v4021, 0
  %v4579 = vsel %vm513, %v4022, 0
  %v4582 = vsel %vm513, %v4023, 0
  %v4585 = vsel %vm513, %v4024, 0
  %v4588 = vsel %vm513, %v4025, 0
  %v4591 = vsel %vm513, %v4026, 0
  %v4594 = vsel %vm513, %v4027, 0
  %v4597 = vsel %vm513, %v4028, 0
  %v4600 = vsel %vm513, %v4029, 0
  %v4603 = vsel %vm513, %v4030, 0
  %v4606 = vsel %vm513, %v4031, 0
  %v4609 = vsel %vm513, %v4032, 0
  %v4612 = vsel %vm513, %v4033, 0
  %v4615 = vsel %vm513, %v4034, 0
  %v4618 = vsel %vm513, %v4035, 0
  %v4621 = vsel %vm513, %v4036, 0
  %v4624 = vsel %vm513, %v4037, 0
  %v4627 = vsel %vm513, %v4038, 0
  %v4630 = vsel %vm513, %v4039, 0
  %v4633 = vsel %vm513, %v4040, 0
  %v4636 = vsel %vm513, %v4041, 0
  %v4639 = vsel %vm513, %v4042, 0
  %v4642 = vsel %vm513, %v4043, 0
  %v4645 = vsel %vm513, %v4044, 0
  %v4648 = vsel %vm513, %v4045, 0
  %v4651 = vsel %vm513, %v4046, 0
  %v4654 = vsel %vm513, %v4047, 0
  %v4657 = vsel %vm513, %v4048, 0
  %v4660 = vsel %vm513, %v4049, 0
  %v4663 = vsel %vm513, %v4050, 0
  %v4666 = vsel %vm513, %v4051, 0
  %v4669 = vsel %vm513, %v4052, 0
  %v4672 = vsel %vm513, %v4053, 0
  %v4675 = vsel %vm513, %v4054, 0
  %v4678 = vsel %vm513, %v4055, 0
  %v4681 = vsel %vm513, %v4056, 0
  %v4684 = vsel %vm513, %v4057, 0
  %v4687 = vsel %vm513, %v4058, 0
  %v4690 = vsel %vm513, %v4059, 0
  %v4693 = vsel %vm513, %v4060, 0
  %v4696 = vsel %vm513, %v4061, 0
  %v4699 = vsel %vm513, %v4062, 0
  %v4702 = vsel %vm513, %v4063, 0
  %v4705 = vsel %vm513, %v4064, 0
  %v4708 = vsel %vm513, %v4065, 0
  %v4711 = vsel %vm513, %v4066, 0
  %v4714 = vsel %vm513, %v4067, 0
  %v4717 = vsel %vm513, %v4068, 0
  %v4720 = vsel %vm513, %v4069, 0
  %v4723 = vsel %vm513, %v4070, 0
  %v4726 = vsel %vm513, %v4071, 0
  %v4729 = vsel %vm513, %v4072, 0
  %v4732 = vsel %vm513, %v4073, 0
  %v4735 = vsel %vm513, %v4074, 0
  %v4738 = vsel %vm513, %v4075, 0
  %4740 = vmatpush.msra.mxu0 0.0
  %4741 = vmatpush.msra.mxu0 0.0
  %4742 = vmatpush.msra.mxu0 0.0
  %4743 = vmatpush.msra.mxu0 0.0
  %4744 = vmatpush.msra.mxu0 0.0
  %4745 = vmatpush.msra.mxu0 0.0
  %4746 = vmatpush.msra.mxu0 0.0
  %4747 = vmatpush.msra.mxu0 0.0
  %4748 = vmatpush.msra.mxu0 0.0
  %4749 = vmatpush.msra.mxu0 0.0
  %4750 = vmatpush.msra.mxu0 0.0
  %4751 = vmatpush.msra.mxu0 0.0
  %4752 = vmatpush.msra.mxu0 0.0
  %4753 = vmatpush.msra.mxu0 0.0
  %4754 = vmatpush.msra.mxu0 0.0
  %4755 = vmatpush.msra.mxu0 %v4076
  %4756 = vmatmul.f32.gmra.mxu0 %v4549
  %v4757 = vpop.f32.mrf.mxu0
  %v4758 = vadd.f32 %v4357, %v4757
  %4759 = vmatmul.f32.gmra.mxu0 %v4552
  %v4760 = vpop.f32.mrf.mxu0
  %v4761 = vadd.f32 %v4360, %v4760
  %4762 = vmatmul.f32.gmra.mxu0 %v4555
  %v4763 = vpop.f32.mrf.mxu0
  %v4764 = vadd.f32 %v4363, %v4763
  %4765 = vmatmul.f32.gmra.mxu0 %v4558
  %v4766 = vpop.f32.mrf.mxu0
  %v4767 = vadd.f32 %v4366, %v4766
  %4768 = vmatmul.f32.gmra.mxu0 %v4561
  %v4769 = vpop.f32.mrf.mxu0
  %v4770 = vadd.f32 %v4369, %v4769
  %4771 = vmatmul.f32.gmra.mxu0 %v4564
  %v4772 = vpop.f32.mrf.mxu0
  %v4773 = vadd.f32 %v4372, %v4772
  %4774 = vmatmul.f32.gmra.mxu0 %v4567
  %v4775 = vpop.f32.mrf.mxu0
  %v4776 = vadd.f32 %v4375, %v4775
  %4777 = vmatmul.f32.gmra.mxu0 %v4570
  %v4778 = vpop.f32.mrf.mxu0
  %v4779 = vadd.f32 %v4378, %v4778
  %4780 = vmatmul.f32.gmra.mxu0 %v4573
  %v4781 = vpop.f32.mrf.mxu0
  %v4782 = vadd.f32 %v4381, %v4781
  %4783 = vmatmul.f32.gmra.mxu0 %v4576
  %v4784 = vpop.f32.mrf.mxu0
  %v4785 = vadd.f32 %v4384, %v4784
  %4786 = vmatmul.f32.gmra.mxu0 %v4579
  %v4787 = vpop.f32.mrf.mxu0
  %v4788 = vadd.f32 %v4387, %v4787
  %4789 = vmatmul.f32.gmra.mxu0 %v4582
  %v4790 = vpop.f32.mrf.mxu0
  %v4791 = vadd.f32 %v4390, %v4790
  %4792 = vmatmul.f32.gmra.mxu0 %v4585
  %v4793 = vpop.f32.mrf.mxu0
  %v4794 = vadd.f32 %v4393, %v4793
  %4795 = vmatmul.f32.gmra.mxu0 %v4588
  %v4796 = vpop.f32.mrf.mxu0
  %v4797 = vadd.f32 %v4396, %v4796
  %4798 = vmatmul.f32.gmra.mxu0 %v4591
  %v4799 = vpop.f32.mrf.mxu0
  %v4800 = vadd.f32 %v4399, %v4799
  %4801 = vmatmul.f32.gmra.mxu0 %v4594
  %v4802 = vpop.f32.mrf.mxu0
  %v4803 = vadd.f32 %v4402, %v4802
  %4804 = vmatmul.f32.gmra.mxu0 %v4597
  %v4805 = vpop.f32.mrf.mxu0
  %v4806 = vadd.f32 %v4405, %v4805
  %4807 = vmatmul.f32.gmra.mxu0 %v4600
  %v4808 = vpop.f32.mrf.mxu0
  %v4809 = vadd.f32 %v4408, %v4808
  %4810 = vmatmul.f32.gmra.mxu0 %v4603
  %v4811 = vpop.f32.mrf.mxu0
  %v4812 = vadd.f32 %v4411, %v4811
  %4813 = vmatmul.f32.gmra.mxu0 %v4606
  %v4814 = vpop.f32.mrf.mxu0
  %v4815 = vadd.f32 %v4414, %v4814
  %4816 = vmatmul.f32.gmra.mxu0 %v4609
  %v4817 = vpop.f32.mrf.mxu0
  %v4818 = vadd.f32 %v4417, %v4817
  %4819 = vmatmul.f32.gmra.mxu0 %v4612
  %v4820 = vpop.f32.mrf.mxu0
  %v4821 = vadd.f32 %v4420, %v4820
  %4822 = vmatmul.f32.gmra.mxu0 %v4615
  %v4823 = vpop.f32.mrf.mxu0
  %v4824 = vadd.f32 %v4423, %v4823
  %4825 = vmatmul.f32.gmra.mxu0 %v4618
  %v4826 = vpop.f32.mrf.mxu0
  %v4827 = vadd.f32 %v4426, %v4826
  %4828 = vmatmul.f32.gmra.mxu0 %v4621
  %v4829 = vpop.f32.mrf.mxu0
  %v4830 = vadd.f32 %v4429, %v4829
  %4831 = vmatmul.f32.gmra.mxu0 %v4624
  %v4832 = vpop.f32.mrf.mxu0
  %v4833 = vadd.f32 %v4432, %v4832
  %4834 = vmatmul.f32.gmra.mxu0 %v4627
  %v4835 = vpop.f32.mrf.mxu0
  %v4836 = vadd.f32 %v4435, %v4835
  %4837 = vmatmul.f32.gmra.mxu0 %v4630
  %v4838 = vpop.f32.mrf.mxu0
  %v4839 = vadd.f32 %v4438, %v4838
  %4840 = vmatmul.f32.gmra.mxu0 %v4633
  %v4841 = vpop.f32.mrf.mxu0
  %v4842 = vadd.f32 %v4441, %v4841
  %4843 = vmatmul.f32.gmra.mxu0 %v4636
  %v4844 = vpop.f32.mrf.mxu0
  %v4845 = vadd.f32 %v4444, %v4844
  %4846 = vmatmul.f32.gmra.mxu0 %v4639
  %v4847 = vpop.f32.mrf.mxu0
  %v4848 = vadd.f32 %v4447, %v4847
  %4849 = vmatmul.f32.gmra.mxu0 %v4642
  %v4850 = vpop.f32.mrf.mxu0
  %v4851 = vadd.f32 %v4450, %v4850
  %4852 = vmatmul.f32.gmra.mxu0 %v4645
  %v4853 = vpop.f32.mrf.mxu0
  %v4854 = vadd.f32 %v4453, %v4853
  %4855 = vmatmul.f32.gmra.mxu0 %v4648
  %v4856 = vpop.f32.mrf.mxu0
  %v4857 = vadd.f32 %v4456, %v4856
  %4858 = vmatmul.f32.gmra.mxu0 %v4651
  %v4859 = vpop.f32.mrf.mxu0
  %v4860 = vadd.f32 %v4459, %v4859
  %4861 = vmatmul.f32.gmra.mxu0 %v4654
  %v4862 = vpop.f32.mrf.mxu0
  %v4863 = vadd.f32 %v4462, %v4862
  %4864 = vmatmul.f32.gmra.mxu0 %v4657
  %v4865 = vpop.f32.mrf.mxu0
  %v4866 = vadd.f32 %v4465, %v4865
  %4867 = vmatmul.f32.gmra.mxu0 %v4660
  %v4868 = vpop.f32.mrf.mxu0
  %v4869 = vadd.f32 %v4468, %v4868
  %4870 = vmatmul.f32.gmra.mxu0 %v4663
  %v4871 = vpop.f32.mrf.mxu0
  %v4872 = vadd.f32 %v4471, %v4871
  %4873 = vmatmul.f32.gmra.mxu0 %v4666
  %v4874 = vpop.f32.mrf.mxu0
  %v4875 = vadd.f32 %v4474, %v4874
  %4876 = vmatmul.f32.gmra.mxu0 %v4669
  %v4877 = vpop.f32.mrf.mxu0
  %v4878 = vadd.f32 %v4477, %v4877
  %4879 = vmatmul.f32.gmra.mxu0 %v4672
  %v4880 = vpop.f32.mrf.mxu0
  %v4881 = vadd.f32 %v4480, %v4880
  %4882 = vmatmul.f32.gmra.mxu0 %v4675
  %v4883 = vpop.f32.mrf.mxu0
  %v4884 = vadd.f32 %v4483, %v4883
  %4885 = vmatmul.f32.gmra.mxu0 %v4678
  %v4886 = vpop.f32.mrf.mxu0
  %v4887 = vadd.f32 %v4486, %v4886
  %4888 = vmatmul.f32.gmra.mxu0 %v4681
  %v4889 = vpop.f32.mrf.mxu0
  %v4890 = vadd.f32 %v4489, %v4889
  %4891 = vmatmul.f32.gmra.mxu0 %v4684
  %v4892 = vpop.f32.mrf.mxu0
  %v4893 = vadd.f32 %v4492, %v4892
  %4894 = vmatmul.f32.gmra.mxu0 %v4687
  %v4895 = vpop.f32.mrf.mxu0
  %v4896 = vadd.f32 %v4495, %v4895
  %4897 = vmatmul.f32.gmra.mxu0 %v4690
  %v4898 = vpop.f32.mrf.mxu0
  %v4899 = vadd.f32 %v4498, %v4898
  %4900 = vmatmul.f32.gmra.mxu0 %v4693
  %v4901 = vpop.f32.mrf.mxu0
  %v4902 = vadd.f32 %v4501, %v4901
  %4903 = vmatmul.f32.gmra.mxu0 %v4696
  %v4904 = vpop.f32.mrf.mxu0
  %v4905 = vadd.f32 %v4504, %v4904
  %4906 = vmatmul.f32.gmra.mxu0 %v4699
  %v4907 = vpop.f32.mrf.mxu0
  %v4908 = vadd.f32 %v4507, %v4907
  %4909 = vmatmul.f32.gmra.mxu0 %v4702
  %v4910 = vpop.f32.mrf.mxu0
  %v4911 = vadd.f32 %v4510, %v4910
  %4912 = vmatmul.f32.gmra.mxu0 %v4705
  %v4913 = vpop.f32.mrf.mxu0
  %v4914 = vadd.f32 %v4513, %v4913
  %4915 = vmatmul.f32.gmra.mxu0 %v4708
  %v4916 = vpop.f32.mrf.mxu0
  %v4917 = vadd.f32 %v4516, %v4916
  %4918 = vmatmul.f32.gmra.mxu0 %v4711
  %v4919 = vpop.f32.mrf.mxu0
  %v4920 = vadd.f32 %v4519, %v4919
  %4921 = vmatmul.f32.gmra.mxu0 %v4714
  %v4922 = vpop.f32.mrf.mxu0
  %v4923 = vadd.f32 %v4522, %v4922
  %4924 = vmatmul.f32.gmra.mxu0 %v4717
  %v4925 = vpop.f32.mrf.mxu0
  %v4926 = vadd.f32 %v4525, %v4925
  %4927 = vmatmul.f32.gmra.mxu0 %v4720
  %v4928 = vpop.f32.mrf.mxu0
  %v4929 = vadd.f32 %v4528, %v4928
  %4930 = vmatmul.f32.gmra.mxu0 %v4723
  %v4931 = vpop.f32.mrf.mxu0
  %v4932 = vadd.f32 %v4531, %v4931
  %4933 = vmatmul.f32.gmra.mxu0 %v4726
  %v4934 = vpop.f32.mrf.mxu0
  %v4935 = vadd.f32 %v4534, %v4934
  %4936 = vmatmul.f32.gmra.mxu0 %v4729
  %v4937 = vpop.f32.mrf.mxu0
  %v4938 = vadd.f32 %v4537, %v4937
  %4939 = vmatmul.f32.gmra.mxu0 %v4732
  %v4940 = vpop.f32.mrf.mxu0
  %v4941 = vadd.f32 %v4540, %v4940
  %4942 = vmatmul.f32.gmra.mxu0 %v4735
  %v4943 = vpop.f32.mrf.mxu0
  %v4944 = vadd.f32 %v4543, %v4943
  %4945 = vmatmul.f32.gmra.mxu0 %v4738
  %v4946 = vpop.f32.mrf.mxu0
  %v4947 = vadd.f32 %v4546, %v4946
  %4948 = vdwg.mxu0
  %s4949 = scalar_lea.vmem %s5, 32
  %v4950 = vld [vmem:[%s4949] sm:$0xff]
  %4951 = vmatpush.msra.mxu0 0.0
  %4952 = vmatpush.msra.mxu0 0.0
  %4953 = vmatpush.msra.mxu0 0.0
  %4954 = vmatpush.msra.mxu0 0.0
  %4955 = vmatpush.msra.mxu0 0.0
  %4956 = vmatpush.msra.mxu0 0.0
  %4957 = vmatpush.msra.mxu0 0.0
  %4958 = vmatpush.msra.mxu0 0.0
  %4959 = vmatpush.msra.mxu0 0.0
  %4960 = vmatpush.msra.mxu0 0.0
  %4961 = vmatpush.msra.mxu0 0.0
  %4962 = vmatpush.msra.mxu0 0.0
  %4963 = vmatpush.msra.mxu0 0.0
  %4964 = vmatpush.msra.mxu0 0.0
  %4965 = vmatpush.msra.mxu0 0.0
  %4966 = vmatpush.msra.mxu0 %v4950
  %4967 = vmatmul.f32.gmra.mxu0 %v4148
  %v4968 = vpop.f32.mrf.mxu0
  %v4969 = vadd.f32 0.0, %v4968
  %4970 = vmatmul.f32.gmra.mxu0 %v4151
  %v4971 = vpop.f32.mrf.mxu0
  %v4972 = vadd.f32 0.0, %v4971
  %4973 = vmatmul.f32.gmra.mxu0 %v4154
  %v4974 = vpop.f32.mrf.mxu0
  %v4975 = vadd.f32 0.0, %v4974
  %4976 = vmatmul.f32.gmra.mxu0 %v4157
  %v4977 = vpop.f32.mrf.mxu0
  %v4978 = vadd.f32 0.0, %v4977
  %4979 = vmatmul.f32.gmra.mxu0 %v4160
  %v4980 = vpop.f32.mrf.mxu0
  %v4981 = vadd.f32 0.0, %v4980
  %4982 = vmatmul.f32.gmra.mxu0 %v4163
  %v4983 = vpop.f32.mrf.mxu0
  %v4984 = vadd.f32 0.0, %v4983
  %4985 = vmatmul.f32.gmra.mxu0 %v4166
  %v4986 = vpop.f32.mrf.mxu0
  %v4987 = vadd.f32 0.0, %v4986
  %4988 = vmatmul.f32.gmra.mxu0 %v4169
  %v4989 = vpop.f32.mrf.mxu0
  %v4990 = vadd.f32 0.0, %v4989
  %4991 = vmatmul.f32.gmra.mxu0 %v4172
  %v4992 = vpop.f32.mrf.mxu0
  %v4993 = vadd.f32 0.0, %v4992
  %4994 = vmatmul.f32.gmra.mxu0 %v4175
  %v4995 = vpop.f32.mrf.mxu0
  %v4996 = vadd.f32 0.0, %v4995
  %4997 = vmatmul.f32.gmra.mxu0 %v4178
  %v4998 = vpop.f32.mrf.mxu0
  %v4999 = vadd.f32 0.0, %v4998
  %5000 = vmatmul.f32.gmra.mxu0 %v4181
  %v5001 = vpop.f32.mrf.mxu0
  %v5002 = vadd.f32 0.0, %v5001
  %5003 = vmatmul.f32.gmra.mxu0 %v4184
  %v5004 = vpop.f32.mrf.mxu0
  %v5005 = vadd.f32 0.0, %v5004
  %5006 = vmatmul.f32.gmra.mxu0 %v4187
  %v5007 = vpop.f32.mrf.mxu0
  %v5008 = vadd.f32 0.0, %v5007
  %5009 = vmatmul.f32.gmra.mxu0 %v4190
  %v5010 = vpop.f32.mrf.mxu0
  %v5011 = vadd.f32 0.0, %v5010
  %5012 = vmatmul.f32.gmra.mxu0 %v4193
  %v5013 = vpop.f32.mrf.mxu0
  %v5014 = vadd.f32 0.0, %v5013
  %5015 = vmatmul.f32.gmra.mxu0 %v4196
  %v5016 = vpop.f32.mrf.mxu0
  %v5017 = vadd.f32 0.0, %v5016
  %5018 = vmatmul.f32.gmra.mxu0 %v4199
  %v5019 = vpop.f32.mrf.mxu0
  %v5020 = vadd.f32 0.0, %v5019
  %5021 = vmatmul.f32.gmra.mxu0 %v4202
  %v5022 = vpop.f32.mrf.mxu0
  %v5023 = vadd.f32 0.0, %v5022
  %5024 = vmatmul.f32.gmra.mxu0 %v4205
  %v5025 = vpop.f32.mrf.mxu0
  %v5026 = vadd.f32 0.0, %v5025
  %5027 = vmatmul.f32.gmra.mxu0 %v4208
  %v5028 = vpop.f32.mrf.mxu0
  %v5029 = vadd.f32 0.0, %v5028
  %5030 = vmatmul.f32.gmra.mxu0 %v4211
  %v5031 = vpop.f32.mrf.mxu0
  %v5032 = vadd.f32 0.0, %v5031
  %5033 = vmatmul.f32.gmra.mxu0 %v4214
  %v5034 = vpop.f32.mrf.mxu0
  %v5035 = vadd.f32 0.0, %v5034
  %5036 = vmatmul.f32.gmra.mxu0 %v4217
  %v5037 = vpop.f32.mrf.mxu0
  %v5038 = vadd.f32 0.0, %v5037
  %5039 = vmatmul.f32.gmra.mxu0 %v4220
  %v5040 = vpop.f32.mrf.mxu0
  %v5041 = vadd.f32 0.0, %v5040
  %5042 = vmatmul.f32.gmra.mxu0 %v4223
  %v5043 = vpop.f32.mrf.mxu0
  %v5044 = vadd.f32 0.0, %v5043
  %5045 = vmatmul.f32.gmra.mxu0 %v4226
  %v5046 = vpop.f32.mrf.mxu0
  %v5047 = vadd.f32 0.0, %v5046
  %5048 = vmatmul.f32.gmra.mxu0 %v4229
  %v5049 = vpop.f32.mrf.mxu0
  %v5050 = vadd.f32 0.0, %v5049
  %5051 = vmatmul.f32.gmra.mxu0 %v4232
  %v5052 = vpop.f32.mrf.mxu0
  %v5053 = vadd.f32 0.0, %v5052
  %5054 = vmatmul.f32.gmra.mxu0 %v4235
  %v5055 = vpop.f32.mrf.mxu0
  %v5056 = vadd.f32 0.0, %v5055
  %5057 = vmatmul.f32.gmra.mxu0 %v4238
  %v5058 = vpop.f32.mrf.mxu0
  %v5059 = vadd.f32 0.0, %v5058
  %5060 = vmatmul.f32.gmra.mxu0 %v4241
  %v5061 = vpop.f32.mrf.mxu0
  %v5062 = vadd.f32 0.0, %v5061
  %5063 = vmatmul.f32.gmra.mxu0 %v4244
  %v5064 = vpop.f32.mrf.mxu0
  %v5065 = vadd.f32 0.0, %v5064
  %5066 = vmatmul.f32.gmra.mxu0 %v4247
  %v5067 = vpop.f32.mrf.mxu0
  %v5068 = vadd.f32 0.0, %v5067
  %5069 = vmatmul.f32.gmra.mxu0 %v4250
  %v5070 = vpop.f32.mrf.mxu0
  %v5071 = vadd.f32 0.0, %v5070
  %5072 = vmatmul.f32.gmra.mxu0 %v4253
  %v5073 = vpop.f32.mrf.mxu0
  %v5074 = vadd.f32 0.0, %v5073
  %5075 = vmatmul.f32.gmra.mxu0 %v4256
  %v5076 = vpop.f32.mrf.mxu0
  %v5077 = vadd.f32 0.0, %v5076
  %5078 = vmatmul.f32.gmra.mxu0 %v4259
  %v5079 = vpop.f32.mrf.mxu0
  %v5080 = vadd.f32 0.0, %v5079
  %5081 = vmatmul.f32.gmra.mxu0 %v4262
  %v5082 = vpop.f32.mrf.mxu0
  %v5083 = vadd.f32 0.0, %v5082
  %5084 = vmatmul.f32.gmra.mxu0 %v4265
  %v5085 = vpop.f32.mrf.mxu0
  %v5086 = vadd.f32 0.0, %v5085
  %5087 = vmatmul.f32.gmra.mxu0 %v4268
  %v5088 = vpop.f32.mrf.mxu0
  %v5089 = vadd.f32 0.0, %v5088
  %5090 = vmatmul.f32.gmra.mxu0 %v4271
  %v5091 = vpop.f32.mrf.mxu0
  %v5092 = vadd.f32 0.0, %v5091
  %5093 = vmatmul.f32.gmra.mxu0 %v4274
  %v5094 = vpop.f32.mrf.mxu0
  %v5095 = vadd.f32 0.0, %v5094
  %5096 = vmatmul.f32.gmra.mxu0 %v4277
  %v5097 = vpop.f32.mrf.mxu0
  %v5098 = vadd.f32 0.0, %v5097
  %5099 = vmatmul.f32.gmra.mxu0 %v4280
  %v5100 = vpop.f32.mrf.mxu0
  %v5101 = vadd.f32 0.0, %v5100
  %5102 = vmatmul.f32.gmra.mxu0 %v4283
  %v5103 = vpop.f32.mrf.mxu0
  %v5104 = vadd.f32 0.0, %v5103
  %5105 = vmatmul.f32.gmra.mxu0 %v4286
  %v5106 = vpop.f32.mrf.mxu0
  %v5107 = vadd.f32 0.0, %v5106
  %5108 = vmatmul.f32.gmra.mxu0 %v4289
  %v5109 = vpop.f32.mrf.mxu0
  %v5110 = vadd.f32 0.0, %v5109
  %5111 = vmatmul.f32.gmra.mxu0 %v4292
  %v5112 = vpop.f32.mrf.mxu0
  %v5113 = vadd.f32 0.0, %v5112
  %5114 = vmatmul.f32.gmra.mxu0 %v4295
  %v5115 = vpop.f32.mrf.mxu0
  %v5116 = vadd.f32 0.0, %v5115
  %5117 = vmatmul.f32.gmra.mxu0 %v4298
  %v5118 = vpop.f32.mrf.mxu0
  %v5119 = vadd.f32 0.0, %v5118
  %5120 = vmatmul.f32.gmra.mxu0 %v4301
  %v5121 = vpop.f32.mrf.mxu0
  %v5122 = vadd.f32 0.0, %v5121
  %5123 = vmatmul.f32.gmra.mxu0 %v4304
  %v5124 = vpop.f32.mrf.mxu0
  %v5125 = vadd.f32 0.0, %v5124
  %5126 = vmatmul.f32.gmra.mxu0 %v4307
  %v5127 = vpop.f32.mrf.mxu0
  %v5128 = vadd.f32 0.0, %v5127
  %5129 = vmatmul.f32.gmra.mxu0 %v4310
  %v5130 = vpop.f32.mrf.mxu0
  %v5131 = vadd.f32 0.0, %v5130
  %5132 = vmatmul.f32.gmra.mxu0 %v4313
  %v5133 = vpop.f32.mrf.mxu0
  %v5134 = vadd.f32 0.0, %v5133
  %5135 = vmatmul.f32.gmra.mxu0 %v4316
  %v5136 = vpop.f32.mrf.mxu0
  %v5137 = vadd.f32 0.0, %v5136
  %5138 = vmatmul.f32.gmra.mxu0 %v4319
  %v5139 = vpop.f32.mrf.mxu0
  %v5140 = vadd.f32 0.0, %v5139
  %5141 = vmatmul.f32.gmra.mxu0 %v4322
  %v5142 = vpop.f32.mrf.mxu0
  %v5143 = vadd.f32 0.0, %v5142
  %5144 = vmatmul.f32.gmra.mxu0 %v4325
  %v5145 = vpop.f32.mrf.mxu0
  %v5146 = vadd.f32 0.0, %v5145
  %5147 = vmatmul.f32.gmra.mxu0 %v4328
  %v5148 = vpop.f32.mrf.mxu0
  %v5149 = vadd.f32 0.0, %v5148
  %5150 = vmatmul.f32.gmra.mxu0 %v4331
  %v5151 = vpop.f32.mrf.mxu0
  %v5152 = vadd.f32 0.0, %v5151
  %5153 = vmatmul.f32.gmra.mxu0 %v4334
  %v5154 = vpop.f32.mrf.mxu0
  %v5155 = vadd.f32 0.0, %v5154
  %5156 = vmatmul.f32.gmra.mxu0 %v4337
  %v5157 = vpop.f32.mrf.mxu0
  %v5158 = vadd.f32 0.0, %v5157
  %5159 = vdwg.mxu0
  %5160 = vmatpush.msra.mxu0 0.0
  %5161 = vmatpush.msra.mxu0 0.0
  %5162 = vmatpush.msra.mxu0 0.0
  %5163 = vmatpush.msra.mxu0 0.0
  %5164 = vmatpush.msra.mxu0 0.0
  %5165 = vmatpush.msra.mxu0 0.0
  %5166 = vmatpush.msra.mxu0 0.0
  %5167 = vmatpush.msra.mxu0 0.0
  %5168 = vmatpush.msra.mxu0 0.0
  %5169 = vmatpush.msra.mxu0 0.0
  %5170 = vmatpush.msra.mxu0 0.0
  %5171 = vmatpush.msra.mxu0 0.0
  %5172 = vmatpush.msra.mxu0 0.0
  %5173 = vmatpush.msra.mxu0 0.0
  %5174 = vmatpush.msra.mxu0 0.0
  %5175 = vmatpush.msra.mxu0 %v4078
  %5176 = vmatmul.f32.gmra.mxu0 %v4549
  %v5177 = vpop.f32.mrf.mxu0
  %v5178 = vadd.f32 %v4969, %v5177
  %5179 = vmatmul.f32.gmra.mxu0 %v4552
  %v5180 = vpop.f32.mrf.mxu0
  %v5181 = vadd.f32 %v4972, %v5180
  %5182 = vmatmul.f32.gmra.mxu0 %v4555
  %v5183 = vpop.f32.mrf.mxu0
  %v5184 = vadd.f32 %v4975, %v5183
  %5185 = vmatmul.f32.gmra.mxu0 %v4558
  %v5186 = vpop.f32.mrf.mxu0
  %v5187 = vadd.f32 %v4978, %v5186
  %5188 = vmatmul.f32.gmra.mxu0 %v4561
  %v5189 = vpop.f32.mrf.mxu0
  %v5190 = vadd.f32 %v4981, %v5189
  %5191 = vmatmul.f32.gmra.mxu0 %v4564
  %v5192 = vpop.f32.mrf.mxu0
  %v5193 = vadd.f32 %v4984, %v5192
  %5194 = vmatmul.f32.gmra.mxu0 %v4567
  %v5195 = vpop.f32.mrf.mxu0
  %v5196 = vadd.f32 %v4987, %v5195
  %5197 = vmatmul.f32.gmra.mxu0 %v4570
  %v5198 = vpop.f32.mrf.mxu0
  %v5199 = vadd.f32 %v4990, %v5198
  %5200 = vmatmul.f32.gmra.mxu0 %v4573
  %v5201 = vpop.f32.mrf.mxu0
  %v5202 = vadd.f32 %v4993, %v5201
  %5203 = vmatmul.f32.gmra.mxu0 %v4576
  %v5204 = vpop.f32.mrf.mxu0
  %v5205 = vadd.f32 %v4996, %v5204
  %5206 = vmatmul.f32.gmra.mxu0 %v4579
  %v5207 = vpop.f32.mrf.mxu0
  %v5208 = vadd.f32 %v4999, %v5207
  %5209 = vmatmul.f32.gmra.mxu0 %v4582
  %v5210 = vpop.f32.mrf.mxu0
  %v5211 = vadd.f32 %v5002, %v5210
  %5212 = vmatmul.f32.gmra.mxu0 %v4585
  %v5213 = vpop.f32.mrf.mxu0
  %v5214 = vadd.f32 %v5005, %v5213
  %5215 = vmatmul.f32.gmra.mxu0 %v4588
  %v5216 = vpop.f32.mrf.mxu0
  %v5217 = vadd.f32 %v5008, %v5216
  %5218 = vmatmul.f32.gmra.mxu0 %v4591
  %v5219 = vpop.f32.mrf.mxu0
  %v5220 = vadd.f32 %v5011, %v5219
  %5221 = vmatmul.f32.gmra.mxu0 %v4594
  %v5222 = vpop.f32.mrf.mxu0
  %v5223 = vadd.f32 %v5014, %v5222
  %5224 = vmatmul.f32.gmra.mxu0 %v4597
  %v5225 = vpop.f32.mrf.mxu0
  %v5226 = vadd.f32 %v5017, %v5225
  %5227 = vmatmul.f32.gmra.mxu0 %v4600
  %v5228 = vpop.f32.mrf.mxu0
  %v5229 = vadd.f32 %v5020, %v5228
  %5230 = vmatmul.f32.gmra.mxu0 %v4603
  %v5231 = vpop.f32.mrf.mxu0
  %v5232 = vadd.f32 %v5023, %v5231
  %5233 = vmatmul.f32.gmra.mxu0 %v4606
  %v5234 = vpop.f32.mrf.mxu0
  %v5235 = vadd.f32 %v5026, %v5234
  %5236 = vmatmul.f32.gmra.mxu0 %v4609
  %v5237 = vpop.f32.mrf.mxu0
  %v5238 = vadd.f32 %v5029, %v5237
  %5239 = vmatmul.f32.gmra.mxu0 %v4612
  %v5240 = vpop.f32.mrf.mxu0
  %v5241 = vadd.f32 %v5032, %v5240
  %5242 = vmatmul.f32.gmra.mxu0 %v4615
  %v5243 = vpop.f32.mrf.mxu0
  %v5244 = vadd.f32 %v5035, %v5243
  %5245 = vmatmul.f32.gmra.mxu0 %v4618
  %v5246 = vpop.f32.mrf.mxu0
  %v5247 = vadd.f32 %v5038, %v5246
  %5248 = vmatmul.f32.gmra.mxu0 %v4621
  %v5249 = vpop.f32.mrf.mxu0
  %v5250 = vadd.f32 %v5041, %v5249
  %5251 = vmatmul.f32.gmra.mxu0 %v4624
  %v5252 = vpop.f32.mrf.mxu0
  %v5253 = vadd.f32 %v5044, %v5252
  %5254 = vmatmul.f32.gmra.mxu0 %v4627
  %v5255 = vpop.f32.mrf.mxu0
  %v5256 = vadd.f32 %v5047, %v5255
  %5257 = vmatmul.f32.gmra.mxu0 %v4630
  %v5258 = vpop.f32.mrf.mxu0
  %v5259 = vadd.f32 %v5050, %v5258
  %5260 = vmatmul.f32.gmra.mxu0 %v4633
  %v5261 = vpop.f32.mrf.mxu0
  %v5262 = vadd.f32 %v5053, %v5261
  %5263 = vmatmul.f32.gmra.mxu0 %v4636
  %v5264 = vpop.f32.mrf.mxu0
  %v5265 = vadd.f32 %v5056, %v5264
  %5266 = vmatmul.f32.gmra.mxu0 %v4639
  %v5267 = vpop.f32.mrf.mxu0
  %v5268 = vadd.f32 %v5059, %v5267
  %5269 = vmatmul.f32.gmra.mxu0 %v4642
  %v5270 = vpop.f32.mrf.mxu0
  %v5271 = vadd.f32 %v5062, %v5270
  %5272 = vmatmul.f32.gmra.mxu0 %v4645
  %v5273 = vpop.f32.mrf.mxu0
  %v5274 = vadd.f32 %v5065, %v5273
  %5275 = vmatmul.f32.gmra.mxu0 %v4648
  %v5276 = vpop.f32.mrf.mxu0
  %v5277 = vadd.f32 %v5068, %v5276
  %5278 = vmatmul.f32.gmra.mxu0 %v4651
  %v5279 = vpop.f32.mrf.mxu0
  %v5280 = vadd.f32 %v5071, %v5279
  %5281 = vmatmul.f32.gmra.mxu0 %v4654
  %v5282 = vpop.f32.mrf.mxu0
  %v5283 = vadd.f32 %v5074, %v5282
  %5284 = vmatmul.f32.gmra.mxu0 %v4657
  %v5285 = vpop.f32.mrf.mxu0
  %v5286 = vadd.f32 %v5077, %v5285
  %5287 = vmatmul.f32.gmra.mxu0 %v4660
  %v5288 = vpop.f32.mrf.mxu0
  %v5289 = vadd.f32 %v5080, %v5288
  %5290 = vmatmul.f32.gmra.mxu0 %v4663
  %v5291 = vpop.f32.mrf.mxu0
  %v5292 = vadd.f32 %v5083, %v5291
  %5293 = vmatmul.f32.gmra.mxu0 %v4666
  %v5294 = vpop.f32.mrf.mxu0
  %v5295 = vadd.f32 %v5086, %v5294
  %5296 = vmatmul.f32.gmra.mxu0 %v4669
  %v5297 = vpop.f32.mrf.mxu0
  %v5298 = vadd.f32 %v5089, %v5297
  %5299 = vmatmul.f32.gmra.mxu0 %v4672
  %v5300 = vpop.f32.mrf.mxu0
  %v5301 = vadd.f32 %v5092, %v5300
  %5302 = vmatmul.f32.gmra.mxu0 %v4675
  %v5303 = vpop.f32.mrf.mxu0
  %v5304 = vadd.f32 %v5095, %v5303
  %5305 = vmatmul.f32.gmra.mxu0 %v4678
  %v5306 = vpop.f32.mrf.mxu0
  %v5307 = vadd.f32 %v5098, %v5306
  %5308 = vmatmul.f32.gmra.mxu0 %v4681
  %v5309 = vpop.f32.mrf.mxu0
  %v5310 = vadd.f32 %v5101, %v5309
  %5311 = vmatmul.f32.gmra.mxu0 %v4684
  %v5312 = vpop.f32.mrf.mxu0
  %v5313 = vadd.f32 %v5104, %v5312
  %5314 = vmatmul.f32.gmra.mxu0 %v4687
  %v5315 = vpop.f32.mrf.mxu0
  %v5316 = vadd.f32 %v5107, %v5315
  %5317 = vmatmul.f32.gmra.mxu0 %v4690
  %v5318 = vpop.f32.mrf.mxu0
  %v5319 = vadd.f32 %v5110, %v5318
  %5320 = vmatmul.f32.gmra.mxu0 %v4693
  %v5321 = vpop.f32.mrf.mxu0
  %v5322 = vadd.f32 %v5113, %v5321
  %5323 = vmatmul.f32.gmra.mxu0 %v4696
  %v5324 = vpop.f32.mrf.mxu0
  %v5325 = vadd.f32 %v5116, %v5324
  %5326 = vmatmul.f32.gmra.mxu0 %v4699
  %v5327 = vpop.f32.mrf.mxu0
  %v5328 = vadd.f32 %v5119, %v5327
  %5329 = vmatmul.f32.gmra.mxu0 %v4702
  %v5330 = vpop.f32.mrf.mxu0
  %v5331 = vadd.f32 %v5122, %v5330
  %5332 = vmatmul.f32.gmra.mxu0 %v4705
  %v5333 = vpop.f32.mrf.mxu0
  %v5334 = vadd.f32 %v5125, %v5333
  %5335 = vmatmul.f32.gmra.mxu0 %v4708
  %v5336 = vpop.f32.mrf.mxu0
  %v5337 = vadd.f32 %v5128, %v5336
  %5338 = vmatmul.f32.gmra.mxu0 %v4711
  %v5339 = vpop.f32.mrf.mxu0
  %v5340 = vadd.f32 %v5131, %v5339
  %5341 = vmatmul.f32.gmra.mxu0 %v4714
  %v5342 = vpop.f32.mrf.mxu0
  %v5343 = vadd.f32 %v5134, %v5342
  %5344 = vmatmul.f32.gmra.mxu0 %v4717
  %v5345 = vpop.f32.mrf.mxu0
  %v5346 = vadd.f32 %v5137, %v5345
  %5347 = vmatmul.f32.gmra.mxu0 %v4720
  %v5348 = vpop.f32.mrf.mxu0
  %v5349 = vadd.f32 %v5140, %v5348
  %5350 = vmatmul.f32.gmra.mxu0 %v4723
  %v5351 = vpop.f32.mrf.mxu0
  %v5352 = vadd.f32 %v5143, %v5351
  %5353 = vmatmul.f32.gmra.mxu0 %v4726
  %v5354 = vpop.f32.mrf.mxu0
  %v5355 = vadd.f32 %v5146, %v5354
  %5356 = vmatmul.f32.gmra.mxu0 %v4729
  %v5357 = vpop.f32.mrf.mxu0
  %v5358 = vadd.f32 %v5149, %v5357
  %5359 = vmatmul.f32.gmra.mxu0 %v4732
  %v5360 = vpop.f32.mrf.mxu0
  %v5361 = vadd.f32 %v5152, %v5360
  %5362 = vmatmul.f32.gmra.mxu0 %v4735
  %v5363 = vpop.f32.mrf.mxu0
  %v5364 = vadd.f32 %v5155, %v5363
  %5365 = vmatmul.f32.gmra.mxu0 %v4738
  %v5366 = vpop.f32.mrf.mxu0
  %v5367 = vadd.f32 %v5158, %v5366
  %5368 = vdwg.mxu0
  %s5369 = scalar_lea.vmem %s5, 40
  %v5370 = vld [vmem:[%s5369] sm:$0xff]
  %5371 = vmatpush.msra.mxu0 0.0
  %5372 = vmatpush.msra.mxu0 0.0
  %5373 = vmatpush.msra.mxu0 0.0
  %5374 = vmatpush.msra.mxu0 0.0
  %5375 = vmatpush.msra.mxu0 0.0
  %5376 = vmatpush.msra.mxu0 0.0
  %5377 = vmatpush.msra.mxu0 0.0
  %5378 = vmatpush.msra.mxu0 0.0
  %5379 = vmatpush.msra.mxu0 0.0
  %5380 = vmatpush.msra.mxu0 0.0
  %5381 = vmatpush.msra.mxu0 0.0
  %5382 = vmatpush.msra.mxu0 0.0
  %5383 = vmatpush.msra.mxu0 0.0
  %5384 = vmatpush.msra.mxu0 0.0
  %5385 = vmatpush.msra.mxu0 0.0
  %5386 = vmatpush.msra.mxu0 %v5370
  %5387 = vmatmul.f32.gmra.mxu0 %v4148
  %v5388 = vpop.f32.mrf.mxu0
  %v5389 = vadd.f32 0.0, %v5388
  %5390 = vmatmul.f32.gmra.mxu0 %v4151
  %v5391 = vpop.f32.mrf.mxu0
  %v5392 = vadd.f32 0.0, %v5391
  %5393 = vmatmul.f32.gmra.mxu0 %v4154
  %v5394 = vpop.f32.mrf.mxu0
  %v5395 = vadd.f32 0.0, %v5394
  %5396 = vmatmul.f32.gmra.mxu0 %v4157
  %v5397 = vpop.f32.mrf.mxu0
  %v5398 = vadd.f32 0.0, %v5397
  %5399 = vmatmul.f32.gmra.mxu0 %v4160
  %v5400 = vpop.f32.mrf.mxu0
  %v5401 = vadd.f32 0.0, %v5400
  %5402 = vmatmul.f32.gmra.mxu0 %v4163
  %v5403 = vpop.f32.mrf.mxu0
  %v5404 = vadd.f32 0.0, %v5403
  %5405 = vmatmul.f32.gmra.mxu0 %v4166
  %v5406 = vpop.f32.mrf.mxu0
  %v5407 = vadd.f32 0.0, %v5406
  %5408 = vmatmul.f32.gmra.mxu0 %v4169
  %v5409 = vpop.f32.mrf.mxu0
  %v5410 = vadd.f32 0.0, %v5409
  %5411 = vmatmul.f32.gmra.mxu0 %v4172
  %v5412 = vpop.f32.mrf.mxu0
  %v5413 = vadd.f32 0.0, %v5412
  %5414 = vmatmul.f32.gmra.mxu0 %v4175
  %v5415 = vpop.f32.mrf.mxu0
  %v5416 = vadd.f32 0.0, %v5415
  %5417 = vmatmul.f32.gmra.mxu0 %v4178
  %v5418 = vpop.f32.mrf.mxu0
  %v5419 = vadd.f32 0.0, %v5418
  %5420 = vmatmul.f32.gmra.mxu0 %v4181
  %v5421 = vpop.f32.mrf.mxu0
  %v5422 = vadd.f32 0.0, %v5421
  %5423 = vmatmul.f32.gmra.mxu0 %v4184
  %v5424 = vpop.f32.mrf.mxu0
  %v5425 = vadd.f32 0.0, %v5424
  %5426 = vmatmul.f32.gmra.mxu0 %v4187
  %v5427 = vpop.f32.mrf.mxu0
  %v5428 = vadd.f32 0.0, %v5427
  %5429 = vmatmul.f32.gmra.mxu0 %v4190
  %v5430 = vpop.f32.mrf.mxu0
  %v5431 = vadd.f32 0.0, %v5430
  %5432 = vmatmul.f32.gmra.mxu0 %v4193
  %v5433 = vpop.f32.mrf.mxu0
  %v5434 = vadd.f32 0.0, %v5433
  %5435 = vmatmul.f32.gmra.mxu0 %v4196
  %v5436 = vpop.f32.mrf.mxu0
  %v5437 = vadd.f32 0.0, %v5436
  %5438 = vmatmul.f32.gmra.mxu0 %v4199
  %v5439 = vpop.f32.mrf.mxu0
  %v5440 = vadd.f32 0.0, %v5439
  %5441 = vmatmul.f32.gmra.mxu0 %v4202
  %v5442 = vpop.f32.mrf.mxu0
  %v5443 = vadd.f32 0.0, %v5442
  %5444 = vmatmul.f32.gmra.mxu0 %v4205
  %v5445 = vpop.f32.mrf.mxu0
  %v5446 = vadd.f32 0.0, %v5445
  %5447 = vmatmul.f32.gmra.mxu0 %v4208
  %v5448 = vpop.f32.mrf.mxu0
  %v5449 = vadd.f32 0.0, %v5448
  %5450 = vmatmul.f32.gmra.mxu0 %v4211
  %v5451 = vpop.f32.mrf.mxu0
  %v5452 = vadd.f32 0.0, %v5451
  %5453 = vmatmul.f32.gmra.mxu0 %v4214
  %v5454 = vpop.f32.mrf.mxu0
  %v5455 = vadd.f32 0.0, %v5454
  %5456 = vmatmul.f32.gmra.mxu0 %v4217
  %v5457 = vpop.f32.mrf.mxu0
  %v5458 = vadd.f32 0.0, %v5457
  %5459 = vmatmul.f32.gmra.mxu0 %v4220
  %v5460 = vpop.f32.mrf.mxu0
  %v5461 = vadd.f32 0.0, %v5460
  %5462 = vmatmul.f32.gmra.mxu0 %v4223
  %v5463 = vpop.f32.mrf.mxu0
  %v5464 = vadd.f32 0.0, %v5463
  %5465 = vmatmul.f32.gmra.mxu0 %v4226
  %v5466 = vpop.f32.mrf.mxu0
  %v5467 = vadd.f32 0.0, %v5466
  %5468 = vmatmul.f32.gmra.mxu0 %v4229
  %v5469 = vpop.f32.mrf.mxu0
  %v5470 = vadd.f32 0.0, %v5469
  %5471 = vmatmul.f32.gmra.mxu0 %v4232
  %v5472 = vpop.f32.mrf.mxu0
  %v5473 = vadd.f32 0.0, %v5472
  %5474 = vmatmul.f32.gmra.mxu0 %v4235
  %v5475 = vpop.f32.mrf.mxu0
  %v5476 = vadd.f32 0.0, %v5475
  %5477 = vmatmul.f32.gmra.mxu0 %v4238
  %v5478 = vpop.f32.mrf.mxu0
  %v5479 = vadd.f32 0.0, %v5478
  %5480 = vmatmul.f32.gmra.mxu0 %v4241
  %v5481 = vpop.f32.mrf.mxu0
  %v5482 = vadd.f32 0.0, %v5481
  %5483 = vmatmul.f32.gmra.mxu0 %v4244
  %v5484 = vpop.f32.mrf.mxu0
  %v5485 = vadd.f32 0.0, %v5484
  %5486 = vmatmul.f32.gmra.mxu0 %v4247
  %v5487 = vpop.f32.mrf.mxu0
  %v5488 = vadd.f32 0.0, %v5487
  %5489 = vmatmul.f32.gmra.mxu0 %v4250
  %v5490 = vpop.f32.mrf.mxu0
  %v5491 = vadd.f32 0.0, %v5490
  %5492 = vmatmul.f32.gmra.mxu0 %v4253
  %v5493 = vpop.f32.mrf.mxu0
  %v5494 = vadd.f32 0.0, %v5493
  %5495 = vmatmul.f32.gmra.mxu0 %v4256
  %v5496 = vpop.f32.mrf.mxu0
  %v5497 = vadd.f32 0.0, %v5496
  %5498 = vmatmul.f32.gmra.mxu0 %v4259
  %v5499 = vpop.f32.mrf.mxu0
  %v5500 = vadd.f32 0.0, %v5499
  %5501 = vmatmul.f32.gmra.mxu0 %v4262
  %v5502 = vpop.f32.mrf.mxu0
  %v5503 = vadd.f32 0.0, %v5502
  %5504 = vmatmul.f32.gmra.mxu0 %v4265
  %v5505 = vpop.f32.mrf.mxu0
  %v5506 = vadd.f32 0.0, %v5505
  %5507 = vmatmul.f32.gmra.mxu0 %v4268
  %v5508 = vpop.f32.mrf.mxu0
  %v5509 = vadd.f32 0.0, %v5508
  %5510 = vmatmul.f32.gmra.mxu0 %v4271
  %v5511 = vpop.f32.mrf.mxu0
  %v5512 = vadd.f32 0.0, %v5511
  %5513 = vmatmul.f32.gmra.mxu0 %v4274
  %v5514 = vpop.f32.mrf.mxu0
  %v5515 = vadd.f32 0.0, %v5514
  %5516 = vmatmul.f32.gmra.mxu0 %v4277
  %v5517 = vpop.f32.mrf.mxu0
  %v5518 = vadd.f32 0.0, %v5517
  %5519 = vmatmul.f32.gmra.mxu0 %v4280
  %v5520 = vpop.f32.mrf.mxu0
  %v5521 = vadd.f32 0.0, %v5520
  %5522 = vmatmul.f32.gmra.mxu0 %v4283
  %v5523 = vpop.f32.mrf.mxu0
  %v5524 = vadd.f32 0.0, %v5523
  %5525 = vmatmul.f32.gmra.mxu0 %v4286
  %v5526 = vpop.f32.mrf.mxu0
  %v5527 = vadd.f32 0.0, %v5526
  %5528 = vmatmul.f32.gmra.mxu0 %v4289
  %v5529 = vpop.f32.mrf.mxu0
  %v5530 = vadd.f32 0.0, %v5529
  %5531 = vmatmul.f32.gmra.mxu0 %v4292
  %v5532 = vpop.f32.mrf.mxu0
  %v5533 = vadd.f32 0.0, %v5532
  %5534 = vmatmul.f32.gmra.mxu0 %v4295
  %v5535 = vpop.f32.mrf.mxu0
  %v5536 = vadd.f32 0.0, %v5535
  %5537 = vmatmul.f32.gmra.mxu0 %v4298
  %v5538 = vpop.f32.mrf.mxu0
  %v5539 = vadd.f32 0.0, %v5538
  %5540 = vmatmul.f32.gmra.mxu0 %v4301
  %v5541 = vpop.f32.mrf.mxu0
  %v5542 = vadd.f32 0.0, %v5541
  %5543 = vmatmul.f32.gmra.mxu0 %v4304
  %v5544 = vpop.f32.mrf.mxu0
  %v5545 = vadd.f32 0.0, %v5544
  %5546 = vmatmul.f32.gmra.mxu0 %v4307
  %v5547 = vpop.f32.mrf.mxu0
  %v5548 = vadd.f32 0.0, %v5547
  %5549 = vmatmul.f32.gmra.mxu0 %v4310
  %v5550 = vpop.f32.mrf.mxu0
  %v5551 = vadd.f32 0.0, %v5550
  %5552 = vmatmul.f32.gmra.mxu0 %v4313
  %v5553 = vpop.f32.mrf.mxu0
  %v5554 = vadd.f32 0.0, %v5553
  %5555 = vmatmul.f32.gmra.mxu0 %v4316
  %v5556 = vpop.f32.mrf.mxu0
  %v5557 = vadd.f32 0.0, %v5556
  %5558 = vmatmul.f32.gmra.mxu0 %v4319
  %v5559 = vpop.f32.mrf.mxu0
  %v5560 = vadd.f32 0.0, %v5559
  %5561 = vmatmul.f32.gmra.mxu0 %v4322
  %v5562 = vpop.f32.mrf.mxu0
  %v5563 = vadd.f32 0.0, %v5562
  %5564 = vmatmul.f32.gmra.mxu0 %v4325
  %v5565 = vpop.f32.mrf.mxu0
  %v5566 = vadd.f32 0.0, %v5565
  %5567 = vmatmul.f32.gmra.mxu0 %v4328
  %v5568 = vpop.f32.mrf.mxu0
  %v5569 = vadd.f32 0.0, %v5568
  %5570 = vmatmul.f32.gmra.mxu0 %v4331
  %v5571 = vpop.f32.mrf.mxu0
  %v5572 = vadd.f32 0.0, %v5571
  %5573 = vmatmul.f32.gmra.mxu0 %v4334
  %v5574 = vpop.f32.mrf.mxu0
  %v5575 = vadd.f32 0.0, %v5574
  %5576 = vmatmul.f32.gmra.mxu0 %v4337
  %v5577 = vpop.f32.mrf.mxu0
  %v5578 = vadd.f32 0.0, %v5577
  %5579 = vdwg.mxu0
  %5580 = vmatpush.msra.mxu0 0.0
  %5581 = vmatpush.msra.mxu0 0.0
  %5582 = vmatpush.msra.mxu0 0.0
  %5583 = vmatpush.msra.mxu0 0.0
  %5584 = vmatpush.msra.mxu0 0.0
  %5585 = vmatpush.msra.mxu0 0.0
  %5586 = vmatpush.msra.mxu0 0.0
  %5587 = vmatpush.msra.mxu0 0.0
  %5588 = vmatpush.msra.mxu0 0.0
  %5589 = vmatpush.msra.mxu0 0.0
  %5590 = vmatpush.msra.mxu0 0.0
  %5591 = vmatpush.msra.mxu0 0.0
  %5592 = vmatpush.msra.mxu0 0.0
  %5593 = vmatpush.msra.mxu0 0.0
  %5594 = vmatpush.msra.mxu0 0.0
  %5595 = vmatpush.msra.mxu0 %v4080
  %5596 = vmatmul.f32.gmra.mxu0 %v4549
  %v5597 = vpop.f32.mrf.mxu0
  %v5598 = vadd.f32 %v5389, %v5597
  %5599 = vmatmul.f32.gmra.mxu0 %v4552
  %v5600 = vpop.f32.mrf.mxu0
  %v5601 = vadd.f32 %v5392, %v5600
  %5602 = vmatmul.f32.gmra.mxu0 %v4555
  %v5603 = vpop.f32.mrf.mxu0
  %v5604 = vadd.f32 %v5395, %v5603
  %5605 = vmatmul.f32.gmra.mxu0 %v4558
  %v5606 = vpop.f32.mrf.mxu0
  %v5607 = vadd.f32 %v5398, %v5606
  %5608 = vmatmul.f32.gmra.mxu0 %v4561
  %v5609 = vpop.f32.mrf.mxu0
  %v5610 = vadd.f32 %v5401, %v5609
  %5611 = vmatmul.f32.gmra.mxu0 %v4564
  %v5612 = vpop.f32.mrf.mxu0
  %v5613 = vadd.f32 %v5404, %v5612
  %5614 = vmatmul.f32.gmra.mxu0 %v4567
  %v5615 = vpop.f32.mrf.mxu0
  %v5616 = vadd.f32 %v5407, %v5615
  %5617 = vmatmul.f32.gmra.mxu0 %v4570
  %v5618 = vpop.f32.mrf.mxu0
  %v5619 = vadd.f32 %v5410, %v5618
  %5620 = vmatmul.f32.gmra.mxu0 %v4573
  %v5621 = vpop.f32.mrf.mxu0
  %v5622 = vadd.f32 %v5413, %v5621
  %5623 = vmatmul.f32.gmra.mxu0 %v4576
  %v5624 = vpop.f32.mrf.mxu0
  %v5625 = vadd.f32 %v5416, %v5624
  %5626 = vmatmul.f32.gmra.mxu0 %v4579
  %v5627 = vpop.f32.mrf.mxu0
  %v5628 = vadd.f32 %v5419, %v5627
  %5629 = vmatmul.f32.gmra.mxu0 %v4582
  %v5630 = vpop.f32.mrf.mxu0
  %v5631 = vadd.f32 %v5422, %v5630
  %5632 = vmatmul.f32.gmra.mxu0 %v4585
  %v5633 = vpop.f32.mrf.mxu0
  %v5634 = vadd.f32 %v5425, %v5633
  %5635 = vmatmul.f32.gmra.mxu0 %v4588
  %v5636 = vpop.f32.mrf.mxu0
  %v5637 = vadd.f32 %v5428, %v5636
  %5638 = vmatmul.f32.gmra.mxu0 %v4591
  %v5639 = vpop.f32.mrf.mxu0
  %v5640 = vadd.f32 %v5431, %v5639
  %5641 = vmatmul.f32.gmra.mxu0 %v4594
  %v5642 = vpop.f32.mrf.mxu0
  %v5643 = vadd.f32 %v5434, %v5642
  %5644 = vmatmul.f32.gmra.mxu0 %v4597
  %v5645 = vpop.f32.mrf.mxu0
  %v5646 = vadd.f32 %v5437, %v5645
  %5647 = vmatmul.f32.gmra.mxu0 %v4600
  %v5648 = vpop.f32.mrf.mxu0
  %v5649 = vadd.f32 %v5440, %v5648
  %5650 = vmatmul.f32.gmra.mxu0 %v4603
  %v5651 = vpop.f32.mrf.mxu0
  %v5652 = vadd.f32 %v5443, %v5651
  %5653 = vmatmul.f32.gmra.mxu0 %v4606
  %v5654 = vpop.f32.mrf.mxu0
  %v5655 = vadd.f32 %v5446, %v5654
  %5656 = vmatmul.f32.gmra.mxu0 %v4609
  %v5657 = vpop.f32.mrf.mxu0
  %v5658 = vadd.f32 %v5449, %v5657
  %5659 = vmatmul.f32.gmra.mxu0 %v4612
  %v5660 = vpop.f32.mrf.mxu0
  %v5661 = vadd.f32 %v5452, %v5660
  %5662 = vmatmul.f32.gmra.mxu0 %v4615
  %v5663 = vpop.f32.mrf.mxu0
  %v5664 = vadd.f32 %v5455, %v5663
  %5665 = vmatmul.f32.gmra.mxu0 %v4618
  %v5666 = vpop.f32.mrf.mxu0
  %v5667 = vadd.f32 %v5458, %v5666
  %5668 = vmatmul.f32.gmra.mxu0 %v4621
  %v5669 = vpop.f32.mrf.mxu0
  %v5670 = vadd.f32 %v5461, %v5669
  %5671 = vmatmul.f32.gmra.mxu0 %v4624
  %v5672 = vpop.f32.mrf.mxu0
  %v5673 = vadd.f32 %v5464, %v5672
  %5674 = vmatmul.f32.gmra.mxu0 %v4627
  %v5675 = vpop.f32.mrf.mxu0
  %v5676 = vadd.f32 %v5467, %v5675
  %5677 = vmatmul.f32.gmra.mxu0 %v4630
  %v5678 = vpop.f32.mrf.mxu0
  %v5679 = vadd.f32 %v5470, %v5678
  %5680 = vmatmul.f32.gmra.mxu0 %v4633
  %v5681 = vpop.f32.mrf.mxu0
  %v5682 = vadd.f32 %v5473, %v5681
  %5683 = vmatmul.f32.gmra.mxu0 %v4636
  %v5684 = vpop.f32.mrf.mxu0
  %v5685 = vadd.f32 %v5476, %v5684
  %5686 = vmatmul.f32.gmra.mxu0 %v4639
  %v5687 = vpop.f32.mrf.mxu0
  %v5688 = vadd.f32 %v5479, %v5687
  %5689 = vmatmul.f32.gmra.mxu0 %v4642
  %v5690 = vpop.f32.mrf.mxu0
  %v5691 = vadd.f32 %v5482, %v5690
  %5692 = vmatmul.f32.gmra.mxu0 %v4645
  %v5693 = vpop.f32.mrf.mxu0
  %v5694 = vadd.f32 %v5485, %v5693
  %5695 = vmatmul.f32.gmra.mxu0 %v4648
  %v5696 = vpop.f32.mrf.mxu0
  %v5697 = vadd.f32 %v5488, %v5696
  %5698 = vmatmul.f32.gmra.mxu0 %v4651
  %v5699 = vpop.f32.mrf.mxu0
  %v5700 = vadd.f32 %v5491, %v5699
  %5701 = vmatmul.f32.gmra.mxu0 %v4654
  %v5702 = vpop.f32.mrf.mxu0
  %v5703 = vadd.f32 %v5494, %v5702
  %5704 = vmatmul.f32.gmra.mxu0 %v4657
  %v5705 = vpop.f32.mrf.mxu0
  %v5706 = vadd.f32 %v5497, %v5705
  %5707 = vmatmul.f32.gmra.mxu0 %v4660
  %v5708 = vpop.f32.mrf.mxu0
  %v5709 = vadd.f32 %v5500, %v5708
  %5710 = vmatmul.f32.gmra.mxu0 %v4663
  %v5711 = vpop.f32.mrf.mxu0
  %v5712 = vadd.f32 %v5503, %v5711
  %5713 = vmatmul.f32.gmra.mxu0 %v4666
  %v5714 = vpop.f32.mrf.mxu0
  %v5715 = vadd.f32 %v5506, %v5714
  %5716 = vmatmul.f32.gmra.mxu0 %v4669
  %v5717 = vpop.f32.mrf.mxu0
  %v5718 = vadd.f32 %v5509, %v5717
  %5719 = vmatmul.f32.gmra.mxu0 %v4672
  %v5720 = vpop.f32.mrf.mxu0
  %v5721 = vadd.f32 %v5512, %v5720
  %5722 = vmatmul.f32.gmra.mxu0 %v4675
  %v5723 = vpop.f32.mrf.mxu0
  %v5724 = vadd.f32 %v5515, %v5723
  %5725 = vmatmul.f32.gmra.mxu0 %v4678
  %v5726 = vpop.f32.mrf.mxu0
  %v5727 = vadd.f32 %v5518, %v5726
  %5728 = vmatmul.f32.gmra.mxu0 %v4681
  %v5729 = vpop.f32.mrf.mxu0
  %v5730 = vadd.f32 %v5521, %v5729
  %5731 = vmatmul.f32.gmra.mxu0 %v4684
  %v5732 = vpop.f32.mrf.mxu0
  %v5733 = vadd.f32 %v5524, %v5732
  %5734 = vmatmul.f32.gmra.mxu0 %v4687
  %v5735 = vpop.f32.mrf.mxu0
  %v5736 = vadd.f32 %v5527, %v5735
  %5737 = vmatmul.f32.gmra.mxu0 %v4690
  %v5738 = vpop.f32.mrf.mxu0
  %v5739 = vadd.f32 %v5530, %v5738
  %5740 = vmatmul.f32.gmra.mxu0 %v4693
  %v5741 = vpop.f32.mrf.mxu0
  %v5742 = vadd.f32 %v5533, %v5741
  %5743 = vmatmul.f32.gmra.mxu0 %v4696
  %v5744 = vpop.f32.mrf.mxu0
  %v5745 = vadd.f32 %v5536, %v5744
  %5746 = vmatmul.f32.gmra.mxu0 %v4699
  %v5747 = vpop.f32.mrf.mxu0
  %v5748 = vadd.f32 %v5539, %v5747
  %5749 = vmatmul.f32.gmra.mxu0 %v4702
  %v5750 = vpop.f32.mrf.mxu0
  %v5751 = vadd.f32 %v5542, %v5750
  %5752 = vmatmul.f32.gmra.mxu0 %v4705
  %v5753 = vpop.f32.mrf.mxu0
  %v5754 = vadd.f32 %v5545, %v5753
  %5755 = vmatmul.f32.gmra.mxu0 %v4708
  %v5756 = vpop.f32.mrf.mxu0
  %v5757 = vadd.f32 %v5548, %v5756
  %5758 = vmatmul.f32.gmra.mxu0 %v4711
  %v5759 = vpop.f32.mrf.mxu0
  %v5760 = vadd.f32 %v5551, %v5759
  %5761 = vmatmul.f32.gmra.mxu0 %v4714
  %v5762 = vpop.f32.mrf.mxu0
  %v5763 = vadd.f32 %v5554, %v5762
  %5764 = vmatmul.f32.gmra.mxu0 %v4717
  %v5765 = vpop.f32.mrf.mxu0
  %v5766 = vadd.f32 %v5557, %v5765
  %5767 = vmatmul.f32.gmra.mxu0 %v4720
  %v5768 = vpop.f32.mrf.mxu0
  %v5769 = vadd.f32 %v5560, %v5768
  %5770 = vmatmul.f32.gmra.mxu0 %v4723
  %v5771 = vpop.f32.mrf.mxu0
  %v5772 = vadd.f32 %v5563, %v5771
  %5773 = vmatmul.f32.gmra.mxu0 %v4726
  %v5774 = vpop.f32.mrf.mxu0
  %v5775 = vadd.f32 %v5566, %v5774
  %5776 = vmatmul.f32.gmra.mxu0 %v4729
  %v5777 = vpop.f32.mrf.mxu0
  %v5778 = vadd.f32 %v5569, %v5777
  %5779 = vmatmul.f32.gmra.mxu0 %v4732
  %v5780 = vpop.f32.mrf.mxu0
  %v5781 = vadd.f32 %v5572, %v5780
  %5782 = vmatmul.f32.gmra.mxu0 %v4735
  %v5783 = vpop.f32.mrf.mxu0
  %v5784 = vadd.f32 %v5575, %v5783
  %5785 = vmatmul.f32.gmra.mxu0 %v4738
  %v5786 = vpop.f32.mrf.mxu0
  %v5787 = vadd.f32 %v5578, %v5786
  %5788 = vdwg.mxu0
  %s5789 = scalar_lea.vmem [#allocation2], 32
  %v5790 = vld [vmem:[%s5789] sm:$0xff]
  %v5791 = vld [vmem:[%s5789 + $0x8] sm:$0xff]
  %v5792 = vld [vmem:[%s5789 + $0x10] sm:$0xff]
  %v5793 = vld [vmem:[%s5789 + $0x18] sm:$0xff]
  %v5794 = vld [vmem:[%s5789 + $0x20] sm:$0xff]
  %v5795 = vld [vmem:[%s5789 + $0x28] sm:$0xff]
  %v5796 = vld [vmem:[%s5789 + $0x30] sm:$0xff]
  %v5797 = vld [vmem:[%s5789 + $0x38] sm:$0xff]
  %v5798 = vld [vmem:[%s5789 + $0x40] sm:$0xff]
  %v5799 = vld [vmem:[%s5789 + $0x48] sm:$0xff]
  %v5800 = vld [vmem:[%s5789 + $0x50] sm:$0xff]
  %v5801 = vld [vmem:[%s5789 + $0x58] sm:$0xff]
  %v5802 = vld [vmem:[%s5789 + $0x60] sm:$0xff]
  %v5803 = vld [vmem:[%s5789 + $0x68] sm:$0xff]
  %v5804 = vld [vmem:[%s5789 + $0x70] sm:$0xff]
  %v5805 = vld [vmem:[%s5789 + $0x78] sm:$0xff]
  %v5806 = vld [vmem:[%s5789 + $0x80] sm:$0xff]
  %v5807 = vld [vmem:[%s5789 + $0x88] sm:$0xff]
  %v5808 = vld [vmem:[%s5789 + $0x90] sm:$0xff]
  %v5809 = vld [vmem:[%s5789 + $0x98] sm:$0xff]
  %v5810 = vld [vmem:[%s5789 + $0xa0] sm:$0xff]
  %v5811 = vld [vmem:[%s5789 + $0xa8] sm:$0xff]
  %v5812 = vld [vmem:[%s5789 + $0xb0] sm:$0xff]
  %v5813 = vld [vmem:[%s5789 + $0xb8] sm:$0xff]
  %v5814 = vld [vmem:[%s5789 + $0xc0] sm:$0xff]
  %v5815 = vld [vmem:[%s5789 + $0xc8] sm:$0xff]
  %v5816 = vld [vmem:[%s5789 + $0xd0] sm:$0xff]
  %v5817 = vld [vmem:[%s5789 + $0xd8] sm:$0xff]
  %v5818 = vld [vmem:[%s5789 + $0xe0] sm:$0xff]
  %v5819 = vld [vmem:[%s5789 + $0xe8] sm:$0xff]
  %v5820 = vld [vmem:[%s5789 + $0xf0] sm:$0xff]
  %v5821 = vld [vmem:[%s5789 + $0xf8] sm:$0xff]
  %v5822 = vld [vmem:[%s5789 + $0x120] sm:$0xff]
  %v5823 = vld [vmem:[%s5789 + $0x128] sm:$0xff]
  %v5824 = vld [vmem:[%s5789 + $0x130] sm:$0xff]
  %v5825 = vld [vmem:[%s5789 + $0x138] sm:$0xff]
  %v5826 = vld [vmem:[%s5789 + $0x140] sm:$0xff]
  %v5827 = vld [vmem:[%s5789 + $0x148] sm:$0xff]
  %v5828 = vld [vmem:[%s5789 + $0x150] sm:$0xff]
  %v5829 = vld [vmem:[%s5789 + $0x158] sm:$0xff]
  %v5830 = vld [vmem:[%s5789 + $0x160] sm:$0xff]
  %v5831 = vld [vmem:[%s5789 + $0x168] sm:$0xff]
  %v5832 = vld [vmem:[%s5789 + $0x170] sm:$0xff]
  %v5833 = vld [vmem:[%s5789 + $0x178] sm:$0xff]
  %v5834 = vld [vmem:[%s5789 + $0x180] sm:$0xff]
  %v5835 = vld [vmem:[%s5789 + $0x188] sm:$0xff]
  %v5836 = vld [vmem:[%s5789 + $0x190] sm:$0xff]
  %v5837 = vld [vmem:[%s5789 + $0x198] sm:$0xff]
  %v5838 = vld [vmem:[%s5789 + $0x1a0] sm:$0xff]
  %v5839 = vld [vmem:[%s5789 + $0x1a8] sm:$0xff]
  %v5840 = vld [vmem:[%s5789 + $0x1b0] sm:$0xff]
  %v5841 = vld [vmem:[%s5789 + $0x1b8] sm:$0xff]
  %v5842 = vld [vmem:[%s5789 + $0x1c0] sm:$0xff]
  %v5843 = vld [vmem:[%s5789 + $0x1c8] sm:$0xff]
  %v5844 = vld [vmem:[%s5789 + $0x1d0] sm:$0xff]
  %v5845 = vld [vmem:[%s5789 + $0x1d8] sm:$0xff]
  %v5846 = vld [vmem:[%s5789 + $0x1e0] sm:$0xff]
  %v5847 = vld [vmem:[%s5789 + $0x1e8] sm:$0xff]
  %v5848 = vld [vmem:[%s5789 + $0x1f0] sm:$0xff]
  %v5849 = vld [vmem:[%s5789 + $0x1f8] sm:$0xff]
  %v5850 = vld [vmem:[%s5789 + $0x200] sm:$0xff]
  %v5851 = vld [vmem:[%s5789 + $0x208] sm:$0xff]
  %v5852 = vld [vmem:[%s5789 + $0x210] sm:$0xff]
  %v5853 = vld [vmem:[%s5789 + $0x218] sm:$0xff]
  %s5854 = scalar_lea.vmem %s5, 48
  %v5855 = vld [vmem:[%s5854] sm:$0xff]
  %v5857 = vsel %vm513, %v5790, 0
  %v5860 = vsel %vm513, %v5791, 0
  %v5863 = vsel %vm513, %v5792, 0
  %v5866 = vsel %vm513, %v5793, 0
  %v5869 = vsel %vm513, %v5794, 0
  %v5872 = vsel %vm513, %v5795, 0
  %v5875 = vsel %vm513, %v5796, 0
  %v5878 = vsel %vm513, %v5797, 0
  %v5881 = vsel %vm513, %v5798, 0
  %v5884 = vsel %vm513, %v5799, 0
  %v5887 = vsel %vm513, %v5800, 0
  %v5890 = vsel %vm513, %v5801, 0
  %v5893 = vsel %vm513, %v5802, 0
  %v5896 = vsel %vm513, %v5803, 0
  %v5899 = vsel %vm513, %v5804, 0
  %v5902 = vsel %vm513, %v5805, 0
  %v5905 = vsel %vm513, %v5806, 0
  %v5908 = vsel %vm513, %v5807, 0
  %v5911 = vsel %vm513, %v5808, 0
  %v5914 = vsel %vm513, %v5809, 0
  %v5917 = vsel %vm513, %v5810, 0
  %v5920 = vsel %vm513, %v5811, 0
  %v5923 = vsel %vm513, %v5812, 0
  %v5926 = vsel %vm513, %v5813, 0
  %v5929 = vsel %vm513, %v5814, 0
  %v5932 = vsel %vm513, %v5815, 0
  %v5935 = vsel %vm513, %v5816, 0
  %v5938 = vsel %vm513, %v5817, 0
  %v5941 = vsel %vm513, %v5818, 0
  %v5944 = vsel %vm513, %v5819, 0
  %v5947 = vsel %vm513, %v5820, 0
  %v5950 = vsel %vm513, %v5821, 0
  %v5953 = vsel %vm513, %v5822, 0
  %v5956 = vsel %vm513, %v5823, 0
  %v5959 = vsel %vm513, %v5824, 0
  %v5962 = vsel %vm513, %v5825, 0
  %v5965 = vsel %vm513, %v5826, 0
  %v5968 = vsel %vm513, %v5827, 0
  %v5971 = vsel %vm513, %v5828, 0
  %v5974 = vsel %vm513, %v5829, 0
  %v5977 = vsel %vm513, %v5830, 0
  %v5980 = vsel %vm513, %v5831, 0
  %v5983 = vsel %vm513, %v5832, 0
  %v5986 = vsel %vm513, %v5833, 0
  %v5989 = vsel %vm513, %v5834, 0
  %v5992 = vsel %vm513, %v5835, 0
  %v5995 = vsel %vm513, %v5836, 0
  %v5998 = vsel %vm513, %v5837, 0
  %v6001 = vsel %vm513, %v5838, 0
  %v6004 = vsel %vm513, %v5839, 0
  %v6007 = vsel %vm513, %v5840, 0
  %v6010 = vsel %vm513, %v5841, 0
  %v6013 = vsel %vm513, %v5842, 0
  %v6016 = vsel %vm513, %v5843, 0
  %v6019 = vsel %vm513, %v5844, 0
  %v6022 = vsel %vm513, %v5845, 0
  %v6025 = vsel %vm513, %v5846, 0
  %v6028 = vsel %vm513, %v5847, 0
  %v6031 = vsel %vm513, %v5848, 0
  %v6034 = vsel %vm513, %v5849, 0
  %v6037 = vsel %vm513, %v5850, 0
  %v6040 = vsel %vm513, %v5851, 0
  %v6043 = vsel %vm513, %v5852, 0
  %v6046 = vsel %vm513, %v5853, 0
  %6048 = vmatpush.msra.mxu0 0.0
  %6049 = vmatpush.msra.mxu0 0.0
  %6050 = vmatpush.msra.mxu0 0.0
  %6051 = vmatpush.msra.mxu0 0.0
  %6052 = vmatpush.msra.mxu0 0.0
  %6053 = vmatpush.msra.mxu0 0.0
  %6054 = vmatpush.msra.mxu0 0.0
  %6055 = vmatpush.msra.mxu0 0.0
  %6056 = vmatpush.msra.mxu0 0.0
  %6057 = vmatpush.msra.mxu0 0.0
  %6058 = vmatpush.msra.mxu0 0.0
  %6059 = vmatpush.msra.mxu0 0.0
  %6060 = vmatpush.msra.mxu0 0.0
  %6061 = vmatpush.msra.mxu0 0.0
  %6062 = vmatpush.msra.mxu0 0.0
  %6063 = vmatpush.msra.mxu0 %v5855
  %6064 = vmatmul.f32.gmra.mxu0 %v5857
  %v6065 = vpop.f32.mrf.mxu0
  %v6066 = vadd.f32 0.0, %v6065
  %6067 = vmatmul.f32.gmra.mxu0 %v5860
  %v6068 = vpop.f32.mrf.mxu0
  %v6069 = vadd.f32 0.0, %v6068
  %6070 = vmatmul.f32.gmra.mxu0 %v5863
  %v6071 = vpop.f32.mrf.mxu0
  %v6072 = vadd.f32 0.0, %v6071
  %6073 = vmatmul.f32.gmra.mxu0 %v5866
  %v6074 = vpop.f32.mrf.mxu0
  %v6075 = vadd.f32 0.0, %v6074
  %6076 = vmatmul.f32.gmra.mxu0 %v5869
  %v6077 = vpop.f32.mrf.mxu0
  %v6078 = vadd.f32 0.0, %v6077
  %6079 = vmatmul.f32.gmra.mxu0 %v5872
  %v6080 = vpop.f32.mrf.mxu0
  %v6081 = vadd.f32 0.0, %v6080
  %6082 = vmatmul.f32.gmra.mxu0 %v5875
  %v6083 = vpop.f32.mrf.mxu0
  %v6084 = vadd.f32 0.0, %v6083
  %6085 = vmatmul.f32.gmra.mxu0 %v5878
  %v6086 = vpop.f32.mrf.mxu0
  %v6087 = vadd.f32 0.0, %v6086
  %6088 = vmatmul.f32.gmra.mxu0 %v5881
  %v6089 = vpop.f32.mrf.mxu0
  %v6090 = vadd.f32 0.0, %v6089
  %6091 = vmatmul.f32.gmra.mxu0 %v5884
  %v6092 = vpop.f32.mrf.mxu0
  %v6093 = vadd.f32 0.0, %v6092
  %6094 = vmatmul.f32.gmra.mxu0 %v5887
  %v6095 = vpop.f32.mrf.mxu0
  %v6096 = vadd.f32 0.0, %v6095
  %6097 = vmatmul.f32.gmra.mxu0 %v5890
  %v6098 = vpop.f32.mrf.mxu0
  %v6099 = vadd.f32 0.0, %v6098
  %6100 = vmatmul.f32.gmra.mxu0 %v5893
  %v6101 = vpop.f32.mrf.mxu0
  %v6102 = vadd.f32 0.0, %v6101
  %6103 = vmatmul.f32.gmra.mxu0 %v5896
  %v6104 = vpop.f32.mrf.mxu0
  %v6105 = vadd.f32 0.0, %v6104
  %6106 = vmatmul.f32.gmra.mxu0 %v5899
  %v6107 = vpop.f32.mrf.mxu0
  %v6108 = vadd.f32 0.0, %v6107
  %6109 = vmatmul.f32.gmra.mxu0 %v5902
  %v6110 = vpop.f32.mrf.mxu0
  %v6111 = vadd.f32 0.0, %v6110
  %6112 = vmatmul.f32.gmra.mxu0 %v5905
  %v6113 = vpop.f32.mrf.mxu0
  %v6114 = vadd.f32 0.0, %v6113
  %6115 = vmatmul.f32.gmra.mxu0 %v5908
  %v6116 = vpop.f32.mrf.mxu0
  %v6117 = vadd.f32 0.0, %v6116
  %6118 = vmatmul.f32.gmra.mxu0 %v5911
  %v6119 = vpop.f32.mrf.mxu0
  %v6120 = vadd.f32 0.0, %v6119
  %6121 = vmatmul.f32.gmra.mxu0 %v5914
  %v6122 = vpop.f32.mrf.mxu0
  %v6123 = vadd.f32 0.0, %v6122
  %6124 = vmatmul.f32.gmra.mxu0 %v5917
  %v6125 = vpop.f32.mrf.mxu0
  %v6126 = vadd.f32 0.0, %v6125
  %6127 = vmatmul.f32.gmra.mxu0 %v5920
  %v6128 = vpop.f32.mrf.mxu0
  %v6129 = vadd.f32 0.0, %v6128
  %6130 = vmatmul.f32.gmra.mxu0 %v5923
  %v6131 = vpop.f32.mrf.mxu0
  %v6132 = vadd.f32 0.0, %v6131
  %6133 = vmatmul.f32.gmra.mxu0 %v5926
  %v6134 = vpop.f32.mrf.mxu0
  %v6135 = vadd.f32 0.0, %v6134
  %6136 = vmatmul.f32.gmra.mxu0 %v5929
  %v6137 = vpop.f32.mrf.mxu0
  %v6138 = vadd.f32 0.0, %v6137
  %6139 = vmatmul.f32.gmra.mxu0 %v5932
  %v6140 = vpop.f32.mrf.mxu0
  %v6141 = vadd.f32 0.0, %v6140
  %6142 = vmatmul.f32.gmra.mxu0 %v5935
  %v6143 = vpop.f32.mrf.mxu0
  %v6144 = vadd.f32 0.0, %v6143
  %6145 = vmatmul.f32.gmra.mxu0 %v5938
  %v6146 = vpop.f32.mrf.mxu0
  %v6147 = vadd.f32 0.0, %v6146
  %6148 = vmatmul.f32.gmra.mxu0 %v5941
  %v6149 = vpop.f32.mrf.mxu0
  %v6150 = vadd.f32 0.0, %v6149
  %6151 = vmatmul.f32.gmra.mxu0 %v5944
  %v6152 = vpop.f32.mrf.mxu0
  %v6153 = vadd.f32 0.0, %v6152
  %6154 = vmatmul.f32.gmra.mxu0 %v5947
  %v6155 = vpop.f32.mrf.mxu0
  %v6156 = vadd.f32 0.0, %v6155
  %6157 = vmatmul.f32.gmra.mxu0 %v5950
  %v6158 = vpop.f32.mrf.mxu0
  %v6159 = vadd.f32 0.0, %v6158
  %6160 = vmatmul.f32.gmra.mxu0 %v5953
  %v6161 = vpop.f32.mrf.mxu0
  %v6162 = vadd.f32 0.0, %v6161
  %6163 = vmatmul.f32.gmra.mxu0 %v5956
  %v6164 = vpop.f32.mrf.mxu0
  %v6165 = vadd.f32 0.0, %v6164
  %6166 = vmatmul.f32.gmra.mxu0 %v5959
  %v6167 = vpop.f32.mrf.mxu0
  %v6168 = vadd.f32 0.0, %v6167
  %6169 = vmatmul.f32.gmra.mxu0 %v5962
  %v6170 = vpop.f32.mrf.mxu0
  %v6171 = vadd.f32 0.0, %v6170
  %6172 = vmatmul.f32.gmra.mxu0 %v5965
  %v6173 = vpop.f32.mrf.mxu0
  %v6174 = vadd.f32 0.0, %v6173
  %6175 = vmatmul.f32.gmra.mxu0 %v5968
  %v6176 = vpop.f32.mrf.mxu0
  %v6177 = vadd.f32 0.0, %v6176
  %6178 = vmatmul.f32.gmra.mxu0 %v5971
  %v6179 = vpop.f32.mrf.mxu0
  %v6180 = vadd.f32 0.0, %v6179
  %6181 = vmatmul.f32.gmra.mxu0 %v5974
  %v6182 = vpop.f32.mrf.mxu0
  %v6183 = vadd.f32 0.0, %v6182
  %6184 = vmatmul.f32.gmra.mxu0 %v5977
  %v6185 = vpop.f32.mrf.mxu0
  %v6186 = vadd.f32 0.0, %v6185
  %6187 = vmatmul.f32.gmra.mxu0 %v5980
  %v6188 = vpop.f32.mrf.mxu0
  %v6189 = vadd.f32 0.0, %v6188
  %6190 = vmatmul.f32.gmra.mxu0 %v5983
  %v6191 = vpop.f32.mrf.mxu0
  %v6192 = vadd.f32 0.0, %v6191
  %6193 = vmatmul.f32.gmra.mxu0 %v5986
  %v6194 = vpop.f32.mrf.mxu0
  %v6195 = vadd.f32 0.0, %v6194
  %6196 = vmatmul.f32.gmra.mxu0 %v5989
  %v6197 = vpop.f32.mrf.mxu0
  %v6198 = vadd.f32 0.0, %v6197
  %6199 = vmatmul.f32.gmra.mxu0 %v5992
  %v6200 = vpop.f32.mrf.mxu0
  %v6201 = vadd.f32 0.0, %v6200
  %6202 = vmatmul.f32.gmra.mxu0 %v5995
  %v6203 = vpop.f32.mrf.mxu0
  %v6204 = vadd.f32 0.0, %v6203
  %6205 = vmatmul.f32.gmra.mxu0 %v5998
  %v6206 = vpop.f32.mrf.mxu0
  %v6207 = vadd.f32 0.0, %v6206
  %6208 = vmatmul.f32.gmra.mxu0 %v6001
  %v6209 = vpop.f32.mrf.mxu0
  %v6210 = vadd.f32 0.0, %v6209
  %6211 = vmatmul.f32.gmra.mxu0 %v6004
  %v6212 = vpop.f32.mrf.mxu0
  %v6213 = vadd.f32 0.0, %v6212
  %6214 = vmatmul.f32.gmra.mxu0 %v6007
  %v6215 = vpop.f32.mrf.mxu0
  %v6216 = vadd.f32 0.0, %v6215
  %6217 = vmatmul.f32.gmra.mxu0 %v6010
  %v6218 = vpop.f32.mrf.mxu0
  %v6219 = vadd.f32 0.0, %v6218
  %6220 = vmatmul.f32.gmra.mxu0 %v6013
  %v6221 = vpop.f32.mrf.mxu0
  %v6222 = vadd.f32 0.0, %v6221
  %6223 = vmatmul.f32.gmra.mxu0 %v6016
  %v6224 = vpop.f32.mrf.mxu0
  %v6225 = vadd.f32 0.0, %v6224
  %6226 = vmatmul.f32.gmra.mxu0 %v6019
  %v6227 = vpop.f32.mrf.mxu0
  %v6228 = vadd.f32 0.0, %v6227
  %6229 = vmatmul.f32.gmra.mxu0 %v6022
  %v6230 = vpop.f32.mrf.mxu0
  %v6231 = vadd.f32 0.0, %v6230
  %6232 = vmatmul.f32.gmra.mxu0 %v6025
  %v6233 = vpop.f32.mrf.mxu0
  %v6234 = vadd.f32 0.0, %v6233
  %6235 = vmatmul.f32.gmra.mxu0 %v6028
  %v6236 = vpop.f32.mrf.mxu0
  %v6237 = vadd.f32 0.0, %v6236
  %6238 = vmatmul.f32.gmra.mxu0 %v6031
  %v6239 = vpop.f32.mrf.mxu0
  %v6240 = vadd.f32 0.0, %v6239
  %6241 = vmatmul.f32.gmra.mxu0 %v6034
  %v6242 = vpop.f32.mrf.mxu0
  %v6243 = vadd.f32 0.0, %v6242
  %6244 = vmatmul.f32.gmra.mxu0 %v6037
  %v6245 = vpop.f32.mrf.mxu0
  %v6246 = vadd.f32 0.0, %v6245
  %6247 = vmatmul.f32.gmra.mxu0 %v6040
  %v6248 = vpop.f32.mrf.mxu0
  %v6249 = vadd.f32 0.0, %v6248
  %6250 = vmatmul.f32.gmra.mxu0 %v6043
  %v6251 = vpop.f32.mrf.mxu0
  %v6252 = vadd.f32 0.0, %v6251
  %6253 = vmatmul.f32.gmra.mxu0 %v6046
  %v6254 = vpop.f32.mrf.mxu0
  %v6255 = vadd.f32 0.0, %v6254
  %6256 = vdwg.mxu0
  %v6257 = vadd.f32 %v4758, %v6066
  %v6258 = vadd.f32 %v4761, %v6069
  %v6259 = vadd.f32 %v4764, %v6072
  %v6260 = vadd.f32 %v4767, %v6075
  %v6261 = vadd.f32 %v4770, %v6078
  %v6262 = vadd.f32 %v4773, %v6081
  %v6263 = vadd.f32 %v4776, %v6084
  %v6264 = vadd.f32 %v4779, %v6087
  %v6265 = vadd.f32 %v4782, %v6090
  %v6266 = vadd.f32 %v4785, %v6093
  %v6267 = vadd.f32 %v4788, %v6096
  %v6268 = vadd.f32 %v4791, %v6099
  %v6269 = vadd.f32 %v4794, %v6102
  %v6270 = vadd.f32 %v4797, %v6105
  %v6271 = vadd.f32 %v4800, %v6108
  %v6272 = vadd.f32 %v4803, %v6111
  %v6273 = vadd.f32 %v4806, %v6114
  %v6274 = vadd.f32 %v4809, %v6117
  %v6275 = vadd.f32 %v4812, %v6120
  %v6276 = vadd.f32 %v4815, %v6123
  %v6277 = vadd.f32 %v4818, %v6126
  %v6278 = vadd.f32 %v4821, %v6129
  %v6279 = vadd.f32 %v4824, %v6132
  %v6280 = vadd.f32 %v4827, %v6135
  %v6281 = vadd.f32 %v4830, %v6138
  %v6282 = vadd.f32 %v4833, %v6141
  %v6283 = vadd.f32 %v4836, %v6144
  %v6284 = vadd.f32 %v4839, %v6147
  %v6285 = vadd.f32 %v4842, %v6150
  %v6286 = vadd.f32 %v4845, %v6153
  %v6287 = vadd.f32 %v4848, %v6156
  %v6288 = vadd.f32 %v4851, %v6159
  %v6289 = vadd.f32 %v4854, %v6162
  %v6290 = vadd.f32 %v4857, %v6165
  %v6291 = vadd.f32 %v4860, %v6168
  %v6292 = vadd.f32 %v4863, %v6171
  %v6293 = vadd.f32 %v4866, %v6174
  %v6294 = vadd.f32 %v4869, %v6177
  %v6295 = vadd.f32 %v4872, %v6180
  %v6296 = vadd.f32 %v4875, %v6183
  %v6297 = vadd.f32 %v4878, %v6186
  %v6298 = vadd.f32 %v4881, %v6189
  %v6299 = vadd.f32 %v4884, %v6192
  %v6300 = vadd.f32 %v4887, %v6195
  %v6301 = vadd.f32 %v4890, %v6198
  %v6302 = vadd.f32 %v4893, %v6201
  %v6303 = vadd.f32 %v4896, %v6204
  %v6304 = vadd.f32 %v4899, %v6207
  %v6305 = vadd.f32 %v4902, %v6210
  %v6306 = vadd.f32 %v4905, %v6213
  %v6307 = vadd.f32 %v4908, %v6216
  %v6308 = vadd.f32 %v4911, %v6219
  %v6309 = vadd.f32 %v4914, %v6222
  %v6310 = vadd.f32 %v4917, %v6225
  %v6311 = vadd.f32 %v4920, %v6228
  %v6312 = vadd.f32 %v4923, %v6231
  %v6313 = vadd.f32 %v4926, %v6234
  %v6314 = vadd.f32 %v4929, %v6237
  %v6315 = vadd.f32 %v4932, %v6240
  %v6316 = vadd.f32 %v4935, %v6243
  %v6317 = vadd.f32 %v4938, %v6246
  %v6318 = vadd.f32 %v4941, %v6249
  %v6319 = vadd.f32 %v4944, %v6252
  %v6320 = vadd.f32 %v4947, %v6255
  %s6321 = scalar_lea.vmem %s5, 56
  %v6322 = vld [vmem:[%s6321] sm:$0xff]
  %6323 = vmatpush.msra.mxu0 0.0
  %6324 = vmatpush.msra.mxu0 0.0
  %6325 = vmatpush.msra.mxu0 0.0
  %6326 = vmatpush.msra.mxu0 0.0
  %6327 = vmatpush.msra.mxu0 0.0
  %6328 = vmatpush.msra.mxu0 0.0
  %6329 = vmatpush.msra.mxu0 0.0
  %6330 = vmatpush.msra.mxu0 0.0
  %6331 = vmatpush.msra.mxu0 0.0
  %6332 = vmatpush.msra.mxu0 0.0
  %6333 = vmatpush.msra.mxu0 0.0
  %6334 = vmatpush.msra.mxu0 0.0
  %6335 = vmatpush.msra.mxu0 0.0
  %6336 = vmatpush.msra.mxu0 0.0
  %6337 = vmatpush.msra.mxu0 0.0
  %6338 = vmatpush.msra.mxu0 %v6322
  %6339 = vmatmul.f32.gmra.mxu0 %v5857
  %v6340 = vpop.f32.mrf.mxu0
  %v6341 = vadd.f32 0.0, %v6340
  %6342 = vmatmul.f32.gmra.mxu0 %v5860
  %v6343 = vpop.f32.mrf.mxu0
  %v6344 = vadd.f32 0.0, %v6343
  %6345 = vmatmul.f32.gmra.mxu0 %v5863
  %v6346 = vpop.f32.mrf.mxu0
  %v6347 = vadd.f32 0.0, %v6346
  %6348 = vmatmul.f32.gmra.mxu0 %v5866
  %v6349 = vpop.f32.mrf.mxu0
  %v6350 = vadd.f32 0.0, %v6349
  %6351 = vmatmul.f32.gmra.mxu0 %v5869
  %v6352 = vpop.f32.mrf.mxu0
  %v6353 = vadd.f32 0.0, %v6352
  %6354 = vmatmul.f32.gmra.mxu0 %v5872
  %v6355 = vpop.f32.mrf.mxu0
  %v6356 = vadd.f32 0.0, %v6355
  %6357 = vmatmul.f32.gmra.mxu0 %v5875
  %v6358 = vpop.f32.mrf.mxu0
  %v6359 = vadd.f32 0.0, %v6358
  %6360 = vmatmul.f32.gmra.mxu0 %v5878
  %v6361 = vpop.f32.mrf.mxu0
  %v6362 = vadd.f32 0.0, %v6361
  %6363 = vmatmul.f32.gmra.mxu0 %v5881
  %v6364 = vpop.f32.mrf.mxu0
  %v6365 = vadd.f32 0.0, %v6364
  %6366 = vmatmul.f32.gmra.mxu0 %v5884
  %v6367 = vpop.f32.mrf.mxu0
  %v6368 = vadd.f32 0.0, %v6367
  %6369 = vmatmul.f32.gmra.mxu0 %v5887
  %v6370 = vpop.f32.mrf.mxu0
  %v6371 = vadd.f32 0.0, %v6370
  %6372 = vmatmul.f32.gmra.mxu0 %v5890
  %v6373 = vpop.f32.mrf.mxu0
  %v6374 = vadd.f32 0.0, %v6373
  %6375 = vmatmul.f32.gmra.mxu0 %v5893
  %v6376 = vpop.f32.mrf.mxu0
  %v6377 = vadd.f32 0.0, %v6376
  %6378 = vmatmul.f32.gmra.mxu0 %v5896
  %v6379 = vpop.f32.mrf.mxu0
  %v6380 = vadd.f32 0.0, %v6379
  %6381 = vmatmul.f32.gmra.mxu0 %v5899
  %v6382 = vpop.f32.mrf.mxu0
  %v6383 = vadd.f32 0.0, %v6382
  %6384 = vmatmul.f32.gmra.mxu0 %v5902
  %v6385 = vpop.f32.mrf.mxu0
  %v6386 = vadd.f32 0.0, %v6385
  %6387 = vmatmul.f32.gmra.mxu0 %v5905
  %v6388 = vpop.f32.mrf.mxu0
  %v6389 = vadd.f32 0.0, %v6388
  %6390 = vmatmul.f32.gmra.mxu0 %v5908
  %v6391 = vpop.f32.mrf.mxu0
  %v6392 = vadd.f32 0.0, %v6391
  %6393 = vmatmul.f32.gmra.mxu0 %v5911
  %v6394 = vpop.f32.mrf.mxu0
  %v6395 = vadd.f32 0.0, %v6394
  %6396 = vmatmul.f32.gmra.mxu0 %v5914
  %v6397 = vpop.f32.mrf.mxu0
  %v6398 = vadd.f32 0.0, %v6397
  %6399 = vmatmul.f32.gmra.mxu0 %v5917
  %v6400 = vpop.f32.mrf.mxu0
  %v6401 = vadd.f32 0.0, %v6400
  %6402 = vmatmul.f32.gmra.mxu0 %v5920
  %v6403 = vpop.f32.mrf.mxu0
  %v6404 = vadd.f32 0.0, %v6403
  %6405 = vmatmul.f32.gmra.mxu0 %v5923
  %v6406 = vpop.f32.mrf.mxu0
  %v6407 = vadd.f32 0.0, %v6406
  %6408 = vmatmul.f32.gmra.mxu0 %v5926
  %v6409 = vpop.f32.mrf.mxu0
  %v6410 = vadd.f32 0.0, %v6409
  %6411 = vmatmul.f32.gmra.mxu0 %v5929
  %v6412 = vpop.f32.mrf.mxu0
  %v6413 = vadd.f32 0.0, %v6412
  %6414 = vmatmul.f32.gmra.mxu0 %v5932
  %v6415 = vpop.f32.mrf.mxu0
  %v6416 = vadd.f32 0.0, %v6415
  %6417 = vmatmul.f32.gmra.mxu0 %v5935
  %v6418 = vpop.f32.mrf.mxu0
  %v6419 = vadd.f32 0.0, %v6418
  %6420 = vmatmul.f32.gmra.mxu0 %v5938
  %v6421 = vpop.f32.mrf.mxu0
  %v6422 = vadd.f32 0.0, %v6421
  %6423 = vmatmul.f32.gmra.mxu0 %v5941
  %v6424 = vpop.f32.mrf.mxu0
  %v6425 = vadd.f32 0.0, %v6424
  %6426 = vmatmul.f32.gmra.mxu0 %v5944
  %v6427 = vpop.f32.mrf.mxu0
  %v6428 = vadd.f32 0.0, %v6427
  %6429 = vmatmul.f32.gmra.mxu0 %v5947
  %v6430 = vpop.f32.mrf.mxu0
  %v6431 = vadd.f32 0.0, %v6430
  %6432 = vmatmul.f32.gmra.mxu0 %v5950
  %v6433 = vpop.f32.mrf.mxu0
  %v6434 = vadd.f32 0.0, %v6433
  %6435 = vmatmul.f32.gmra.mxu0 %v5953
  %v6436 = vpop.f32.mrf.mxu0
  %v6437 = vadd.f32 0.0, %v6436
  %6438 = vmatmul.f32.gmra.mxu0 %v5956
  %v6439 = vpop.f32.mrf.mxu0
  %v6440 = vadd.f32 0.0, %v6439
  %6441 = vmatmul.f32.gmra.mxu0 %v5959
  %v6442 = vpop.f32.mrf.mxu0
  %v6443 = vadd.f32 0.0, %v6442
  %6444 = vmatmul.f32.gmra.mxu0 %v5962
  %v6445 = vpop.f32.mrf.mxu0
  %v6446 = vadd.f32 0.0, %v6445
  %6447 = vmatmul.f32.gmra.mxu0 %v5965
  %v6448 = vpop.f32.mrf.mxu0
  %v6449 = vadd.f32 0.0, %v6448
  %6450 = vmatmul.f32.gmra.mxu0 %v5968
  %v6451 = vpop.f32.mrf.mxu0
  %v6452 = vadd.f32 0.0, %v6451
  %6453 = vmatmul.f32.gmra.mxu0 %v5971
  %v6454 = vpop.f32.mrf.mxu0
  %v6455 = vadd.f32 0.0, %v6454
  %6456 = vmatmul.f32.gmra.mxu0 %v5974
  %v6457 = vpop.f32.mrf.mxu0
  %v6458 = vadd.f32 0.0, %v6457
  %6459 = vmatmul.f32.gmra.mxu0 %v5977
  %v6460 = vpop.f32.mrf.mxu0
  %v6461 = vadd.f32 0.0, %v6460
  %6462 = vmatmul.f32.gmra.mxu0 %v5980
  %v6463 = vpop.f32.mrf.mxu0
  %v6464 = vadd.f32 0.0, %v6463
  %6465 = vmatmul.f32.gmra.mxu0 %v5983
  %v6466 = vpop.f32.mrf.mxu0
  %v6467 = vadd.f32 0.0, %v6466
  %6468 = vmatmul.f32.gmra.mxu0 %v5986
  %v6469 = vpop.f32.mrf.mxu0
  %v6470 = vadd.f32 0.0, %v6469
  %6471 = vmatmul.f32.gmra.mxu0 %v5989
  %v6472 = vpop.f32.mrf.mxu0
  %v6473 = vadd.f32 0.0, %v6472
  %6474 = vmatmul.f32.gmra.mxu0 %v5992
  %v6475 = vpop.f32.mrf.mxu0
  %v6476 = vadd.f32 0.0, %v6475
  %6477 = vmatmul.f32.gmra.mxu0 %v5995
  %v6478 = vpop.f32.mrf.mxu0
  %v6479 = vadd.f32 0.0, %v6478
  %6480 = vmatmul.f32.gmra.mxu0 %v5998
  %v6481 = vpop.f32.mrf.mxu0
  %v6482 = vadd.f32 0.0, %v6481
  %6483 = vmatmul.f32.gmra.mxu0 %v6001
  %v6484 = vpop.f32.mrf.mxu0
  %v6485 = vadd.f32 0.0, %v6484
  %6486 = vmatmul.f32.gmra.mxu0 %v6004
  %v6487 = vpop.f32.mrf.mxu0
  %v6488 = vadd.f32 0.0, %v6487
  %6489 = vmatmul.f32.gmra.mxu0 %v6007
  %v6490 = vpop.f32.mrf.mxu0
  %v6491 = vadd.f32 0.0, %v6490
  %6492 = vmatmul.f32.gmra.mxu0 %v6010
  %v6493 = vpop.f32.mrf.mxu0
  %v6494 = vadd.f32 0.0, %v6493
  %6495 = vmatmul.f32.gmra.mxu0 %v6013
  %v6496 = vpop.f32.mrf.mxu0
  %v6497 = vadd.f32 0.0, %v6496
  %6498 = vmatmul.f32.gmra.mxu0 %v6016
  %v6499 = vpop.f32.mrf.mxu0
  %v6500 = vadd.f32 0.0, %v6499
  %6501 = vmatmul.f32.gmra.mxu0 %v6019
  %v6502 = vpop.f32.mrf.mxu0
  %v6503 = vadd.f32 0.0, %v6502
  %6504 = vmatmul.f32.gmra.mxu0 %v6022
  %v6505 = vpop.f32.mrf.mxu0
  %v6506 = vadd.f32 0.0, %v6505
  %6507 = vmatmul.f32.gmra.mxu0 %v6025
  %v6508 = vpop.f32.mrf.mxu0
  %v6509 = vadd.f32 0.0, %v6508
  %6510 = vmatmul.f32.gmra.mxu0 %v6028
  %v6511 = vpop.f32.mrf.mxu0
  %v6512 = vadd.f32 0.0, %v6511
  %6513 = vmatmul.f32.gmra.mxu0 %v6031
  %v6514 = vpop.f32.mrf.mxu0
  %v6515 = vadd.f32 0.0, %v6514
  %6516 = vmatmul.f32.gmra.mxu0 %v6034
  %v6517 = vpop.f32.mrf.mxu0
  %v6518 = vadd.f32 0.0, %v6517
  %6519 = vmatmul.f32.gmra.mxu0 %v6037
  %v6520 = vpop.f32.mrf.mxu0
  %v6521 = vadd.f32 0.0, %v6520
  %6522 = vmatmul.f32.gmra.mxu0 %v6040
  %v6523 = vpop.f32.mrf.mxu0
  %v6524 = vadd.f32 0.0, %v6523
  %6525 = vmatmul.f32.gmra.mxu0 %v6043
  %v6526 = vpop.f32.mrf.mxu0
  %v6527 = vadd.f32 0.0, %v6526
  %6528 = vmatmul.f32.gmra.mxu0 %v6046
  %v6529 = vpop.f32.mrf.mxu0
  %v6530 = vadd.f32 0.0, %v6529
  %6531 = vdwg.mxu0
  %v6532 = vadd.f32 %v5178, %v6341
  %v6533 = vadd.f32 %v5181, %v6344
  %v6534 = vadd.f32 %v5184, %v6347
  %v6535 = vadd.f32 %v5187, %v6350
  %v6536 = vadd.f32 %v5190, %v6353
  %v6537 = vadd.f32 %v5193, %v6356
  %v6538 = vadd.f32 %v5196, %v6359
  %v6539 = vadd.f32 %v5199, %v6362
  %v6540 = vadd.f32 %v5202, %v6365
  %v6541 = vadd.f32 %v5205, %v6368
  %v6542 = vadd.f32 %v5208, %v6371
  %v6543 = vadd.f32 %v5211, %v6374
  %v6544 = vadd.f32 %v5214, %v6377
  %v6545 = vadd.f32 %v5217, %v6380
  %v6546 = vadd.f32 %v5220, %v6383
  %v6547 = vadd.f32 %v5223, %v6386
  %v6548 = vadd.f32 %v5226, %v6389
  %v6549 = vadd.f32 %v5229, %v6392
  %v6550 = vadd.f32 %v5232, %v6395
  %v6551 = vadd.f32 %v5235, %v6398
  %v6552 = vadd.f32 %v5238, %v6401
  %v6553 = vadd.f32 %v5241, %v6404
  %v6554 = vadd.f32 %v5244, %v6407
  %v6555 = vadd.f32 %v5247, %v6410
  %v6556 = vadd.f32 %v5250, %v6413
  %v6557 = vadd.f32 %v5253, %v6416
  %v6558 = vadd.f32 %v5256, %v6419
  %v6559 = vadd.f32 %v5259, %v6422
  %v6560 = vadd.f32 %v5262, %v6425
  %v6561 = vadd.f32 %v5265, %v6428
  %v6562 = vadd.f32 %v5268, %v6431
  %v6563 = vadd.f32 %v5271, %v6434
  %v6564 = vadd.f32 %v5274, %v6437
  %v6565 = vadd.f32 %v5277, %v6440
  %v6566 = vadd.f32 %v5280, %v6443
  %v6567 = vadd.f32 %v5283, %v6446
  %v6568 = vadd.f32 %v5286, %v6449
  %v6569 = vadd.f32 %v5289, %v6452
  %v6570 = vadd.f32 %v5292, %v6455
  %v6571 = vadd.f32 %v5295, %v6458
  %v6572 = vadd.f32 %v5298, %v6461
  %v6573 = vadd.f32 %v5301, %v6464
  %v6574 = vadd.f32 %v5304, %v6467
  %v6575 = vadd.f32 %v5307, %v6470
  %v6576 = vadd.f32 %v5310, %v6473
  %v6577 = vadd.f32 %v5313, %v6476
  %v6578 = vadd.f32 %v5316, %v6479
  %v6579 = vadd.f32 %v5319, %v6482
  %v6580 = vadd.f32 %v5322, %v6485
  %v6581 = vadd.f32 %v5325, %v6488
  %v6582 = vadd.f32 %v5328, %v6491
  %v6583 = vadd.f32 %v5331, %v6494
  %v6584 = vadd.f32 %v5334, %v6497
  %v6585 = vadd.f32 %v5337, %v6500
  %v6586 = vadd.f32 %v5340, %v6503
  %v6587 = vadd.f32 %v5343, %v6506
  %v6588 = vadd.f32 %v5346, %v6509
  %v6589 = vadd.f32 %v5349, %v6512
  %v6590 = vadd.f32 %v5352, %v6515
  %v6591 = vadd.f32 %v5355, %v6518
  %v6592 = vadd.f32 %v5358, %v6521
  %v6593 = vadd.f32 %v5361, %v6524
  %v6594 = vadd.f32 %v5364, %v6527
  %v6595 = vadd.f32 %v5367, %v6530
  %s6596 = scalar_lea.vmem %s5, 64
  %v6597 = vld [vmem:[%s6596] sm:$0xff]
  %6598 = vmatpush.msra.mxu0 0.0
  %6599 = vmatpush.msra.mxu0 0.0
  %6600 = vmatpush.msra.mxu0 0.0
  %6601 = vmatpush.msra.mxu0 0.0
  %6602 = vmatpush.msra.mxu0 0.0
  %6603 = vmatpush.msra.mxu0 0.0
  %6604 = vmatpush.msra.mxu0 0.0
  %6605 = vmatpush.msra.mxu0 0.0
  %6606 = vmatpush.msra.mxu0 0.0
  %6607 = vmatpush.msra.mxu0 0.0
  %6608 = vmatpush.msra.mxu0 0.0
  %6609 = vmatpush.msra.mxu0 0.0
  %6610 = vmatpush.msra.mxu0 0.0
  %6611 = vmatpush.msra.mxu0 0.0
  %6612 = vmatpush.msra.mxu0 0.0
  %6613 = vmatpush.msra.mxu0 %v6597
  %6614 = vmatmul.f32.gmra.mxu0 %v5857
  %v6615 = vpop.f32.mrf.mxu0
  %v6616 = vadd.f32 0.0, %v6615
  %6617 = vmatmul.f32.gmra.mxu0 %v5860
  %v6618 = vpop.f32.mrf.mxu0
  %v6619 = vadd.f32 0.0, %v6618
  %6620 = vmatmul.f32.gmra.mxu0 %v5863
  %v6621 = vpop.f32.mrf.mxu0
  %v6622 = vadd.f32 0.0, %v6621
  %6623 = vmatmul.f32.gmra.mxu0 %v5866
  %v6624 = vpop.f32.mrf.mxu0
  %v6625 = vadd.f32 0.0, %v6624
  %6626 = vmatmul.f32.gmra.mxu0 %v5869
  %v6627 = vpop.f32.mrf.mxu0
  %v6628 = vadd.f32 0.0, %v6627
  %6629 = vmatmul.f32.gmra.mxu0 %v5872
  %v6630 = vpop.f32.mrf.mxu0
  %v6631 = vadd.f32 0.0, %v6630
  %6632 = vmatmul.f32.gmra.mxu0 %v5875
  %v6633 = vpop.f32.mrf.mxu0
  %v6634 = vadd.f32 0.0, %v6633
  %6635 = vmatmul.f32.gmra.mxu0 %v5878
  %v6636 = vpop.f32.mrf.mxu0
  %v6637 = vadd.f32 0.0, %v6636
  %6638 = vmatmul.f32.gmra.mxu0 %v5881
  %v6639 = vpop.f32.mrf.mxu0
  %v6640 = vadd.f32 0.0, %v6639
  %6641 = vmatmul.f32.gmra.mxu0 %v5884
  %v6642 = vpop.f32.mrf.mxu0
  %v6643 = vadd.f32 0.0, %v6642
  %6644 = vmatmul.f32.gmra.mxu0 %v5887
  %v6645 = vpop.f32.mrf.mxu0
  %v6646 = vadd.f32 0.0, %v6645
  %6647 = vmatmul.f32.gmra.mxu0 %v5890
  %v6648 = vpop.f32.mrf.mxu0
  %v6649 = vadd.f32 0.0, %v6648
  %6650 = vmatmul.f32.gmra.mxu0 %v5893
  %v6651 = vpop.f32.mrf.mxu0
  %v6652 = vadd.f32 0.0, %v6651
  %6653 = vmatmul.f32.gmra.mxu0 %v5896
  %v6654 = vpop.f32.mrf.mxu0
  %v6655 = vadd.f32 0.0, %v6654
  %6656 = vmatmul.f32.gmra.mxu0 %v5899
  %v6657 = vpop.f32.mrf.mxu0
  %v6658 = vadd.f32 0.0, %v6657
  %6659 = vmatmul.f32.gmra.mxu0 %v5902
  %v6660 = vpop.f32.mrf.mxu0
  %v6661 = vadd.f32 0.0, %v6660
  %6662 = vmatmul.f32.gmra.mxu0 %v5905
  %v6663 = vpop.f32.mrf.mxu0
  %v6664 = vadd.f32 0.0, %v6663
  %6665 = vmatmul.f32.gmra.mxu0 %v5908
  %v6666 = vpop.f32.mrf.mxu0
  %v6667 = vadd.f32 0.0, %v6666
  %6668 = vmatmul.f32.gmra.mxu0 %v5911
  %v6669 = vpop.f32.mrf.mxu0
  %v6670 = vadd.f32 0.0, %v6669
  %6671 = vmatmul.f32.gmra.mxu0 %v5914
  %v6672 = vpop.f32.mrf.mxu0
  %v6673 = vadd.f32 0.0, %v6672
  %6674 = vmatmul.f32.gmra.mxu0 %v5917
  %v6675 = vpop.f32.mrf.mxu0
  %v6676 = vadd.f32 0.0, %v6675
  %6677 = vmatmul.f32.gmra.mxu0 %v5920
  %v6678 = vpop.f32.mrf.mxu0
  %v6679 = vadd.f32 0.0, %v6678
  %6680 = vmatmul.f32.gmra.mxu0 %v5923
  %v6681 = vpop.f32.mrf.mxu0
  %v6682 = vadd.f32 0.0, %v6681
  %6683 = vmatmul.f32.gmra.mxu0 %v5926
  %v6684 = vpop.f32.mrf.mxu0
  %v6685 = vadd.f32 0.0, %v6684
  %6686 = vmatmul.f32.gmra.mxu0 %v5929
  %v6687 = vpop.f32.mrf.mxu0
  %v6688 = vadd.f32 0.0, %v6687
  %6689 = vmatmul.f32.gmra.mxu0 %v5932
  %v6690 = vpop.f32.mrf.mxu0
  %v6691 = vadd.f32 0.0, %v6690
  %6692 = vmatmul.f32.gmra.mxu0 %v5935
  %v6693 = vpop.f32.mrf.mxu0
  %v6694 = vadd.f32 0.0, %v6693
  %6695 = vmatmul.f32.gmra.mxu0 %v5938
  %v6696 = vpop.f32.mrf.mxu0
  %v6697 = vadd.f32 0.0, %v6696
  %6698 = vmatmul.f32.gmra.mxu0 %v5941
  %v6699 = vpop.f32.mrf.mxu0
  %v6700 = vadd.f32 0.0, %v6699
  %6701 = vmatmul.f32.gmra.mxu0 %v5944
  %v6702 = vpop.f32.mrf.mxu0
  %v6703 = vadd.f32 0.0, %v6702
  %6704 = vmatmul.f32.gmra.mxu0 %v5947
  %v6705 = vpop.f32.mrf.mxu0
  %v6706 = vadd.f32 0.0, %v6705
  %6707 = vmatmul.f32.gmra.mxu0 %v5950
  %v6708 = vpop.f32.mrf.mxu0
  %v6709 = vadd.f32 0.0, %v6708
  %6710 = vmatmul.f32.gmra.mxu0 %v5953
  %v6711 = vpop.f32.mrf.mxu0
  %v6712 = vadd.f32 0.0, %v6711
  %6713 = vmatmul.f32.gmra.mxu0 %v5956
  %v6714 = vpop.f32.mrf.mxu0
  %v6715 = vadd.f32 0.0, %v6714
  %6716 = vmatmul.f32.gmra.mxu0 %v5959
  %v6717 = vpop.f32.mrf.mxu0
  %v6718 = vadd.f32 0.0, %v6717
  %6719 = vmatmul.f32.gmra.mxu0 %v5962
  %v6720 = vpop.f32.mrf.mxu0
  %v6721 = vadd.f32 0.0, %v6720
  %6722 = vmatmul.f32.gmra.mxu0 %v5965
  %v6723 = vpop.f32.mrf.mxu0
  %v6724 = vadd.f32 0.0, %v6723
  %6725 = vmatmul.f32.gmra.mxu0 %v5968
  %v6726 = vpop.f32.mrf.mxu0
  %v6727 = vadd.f32 0.0, %v6726
  %6728 = vmatmul.f32.gmra.mxu0 %v5971
  %v6729 = vpop.f32.mrf.mxu0
  %v6730 = vadd.f32 0.0, %v6729
  %6731 = vmatmul.f32.gmra.mxu0 %v5974
  %v6732 = vpop.f32.mrf.mxu0
  %v6733 = vadd.f32 0.0, %v6732
  %6734 = vmatmul.f32.gmra.mxu0 %v5977
  %v6735 = vpop.f32.mrf.mxu0
  %v6736 = vadd.f32 0.0, %v6735
  %6737 = vmatmul.f32.gmra.mxu0 %v5980
  %v6738 = vpop.f32.mrf.mxu0
  %v6739 = vadd.f32 0.0, %v6738
  %6740 = vmatmul.f32.gmra.mxu0 %v5983
  %v6741 = vpop.f32.mrf.mxu0
  %v6742 = vadd.f32 0.0, %v6741
  %6743 = vmatmul.f32.gmra.mxu0 %v5986
  %v6744 = vpop.f32.mrf.mxu0
  %v6745 = vadd.f32 0.0, %v6744
  %6746 = vmatmul.f32.gmra.mxu0 %v5989
  %v6747 = vpop.f32.mrf.mxu0
  %v6748 = vadd.f32 0.0, %v6747
  %6749 = vmatmul.f32.gmra.mxu0 %v5992
  %v6750 = vpop.f32.mrf.mxu0
  %v6751 = vadd.f32 0.0, %v6750
  %6752 = vmatmul.f32.gmra.mxu0 %v5995
  %v6753 = vpop.f32.mrf.mxu0
  %v6754 = vadd.f32 0.0, %v6753
  %6755 = vmatmul.f32.gmra.mxu0 %v5998
  %v6756 = vpop.f32.mrf.mxu0
  %v6757 = vadd.f32 0.0, %v6756
  %6758 = vmatmul.f32.gmra.mxu0 %v6001
  %v6759 = vpop.f32.mrf.mxu0
  %v6760 = vadd.f32 0.0, %v6759
  %6761 = vmatmul.f32.gmra.mxu0 %v6004
  %v6762 = vpop.f32.mrf.mxu0
  %v6763 = vadd.f32 0.0, %v6762
  %6764 = vmatmul.f32.gmra.mxu0 %v6007
  %v6765 = vpop.f32.mrf.mxu0
  %v6766 = vadd.f32 0.0, %v6765
  %6767 = vmatmul.f32.gmra.mxu0 %v6010
  %v6768 = vpop.f32.mrf.mxu0
  %v6769 = vadd.f32 0.0, %v6768
  %6770 = vmatmul.f32.gmra.mxu0 %v6013
  %v6771 = vpop.f32.mrf.mxu0
  %v6772 = vadd.f32 0.0, %v6771
  %6773 = vmatmul.f32.gmra.mxu0 %v6016
  %v6774 = vpop.f32.mrf.mxu0
  %v6775 = vadd.f32 0.0, %v6774
  %6776 = vmatmul.f32.gmra.mxu0 %v6019
  %v6777 = vpop.f32.mrf.mxu0
  %v6778 = vadd.f32 0.0, %v6777
  %6779 = vmatmul.f32.gmra.mxu0 %v6022
  %v6780 = vpop.f32.mrf.mxu0
  %v6781 = vadd.f32 0.0, %v6780
  %6782 = vmatmul.f32.gmra.mxu0 %v6025
  %v6783 = vpop.f32.mrf.mxu0
  %v6784 = vadd.f32 0.0, %v6783
  %6785 = vmatmul.f32.gmra.mxu0 %v6028
  %v6786 = vpop.f32.mrf.mxu0
  %v6787 = vadd.f32 0.0, %v6786
  %6788 = vmatmul.f32.gmra.mxu0 %v6031
  %v6789 = vpop.f32.mrf.mxu0
  %v6790 = vadd.f32 0.0, %v6789
  %6791 = vmatmul.f32.gmra.mxu0 %v6034
  %v6792 = vpop.f32.mrf.mxu0
  %v6793 = vadd.f32 0.0, %v6792
  %6794 = vmatmul.f32.gmra.mxu0 %v6037
  %v6795 = vpop.f32.mrf.mxu0
  %v6796 = vadd.f32 0.0, %v6795
  %6797 = vmatmul.f32.gmra.mxu0 %v6040
  %v6798 = vpop.f32.mrf.mxu0
  %v6799 = vadd.f32 0.0, %v6798
  %6800 = vmatmul.f32.gmra.mxu0 %v6043
  %v6801 = vpop.f32.mrf.mxu0
  %v6802 = vadd.f32 0.0, %v6801
  %6803 = vmatmul.f32.gmra.mxu0 %v6046
  %v6804 = vpop.f32.mrf.mxu0
  %v6805 = vadd.f32 0.0, %v6804
  %6806 = vdwg.mxu0
  %v6807 = vadd.f32 %v5598, %v6616
  %v6808 = vadd.f32 %v5601, %v6619
  %v6809 = vadd.f32 %v5604, %v6622
  %v6810 = vadd.f32 %v5607, %v6625
  %v6811 = vadd.f32 %v5610, %v6628
  %v6812 = vadd.f32 %v5613, %v6631
  %v6813 = vadd.f32 %v5616, %v6634
  %v6814 = vadd.f32 %v5619, %v6637
  %v6815 = vadd.f32 %v5622, %v6640
  %v6816 = vadd.f32 %v5625, %v6643
  %v6817 = vadd.f32 %v5628, %v6646
  %v6818 = vadd.f32 %v5631, %v6649
  %v6819 = vadd.f32 %v5634, %v6652
  %v6820 = vadd.f32 %v5637, %v6655
  %v6821 = vadd.f32 %v5640, %v6658
  %v6822 = vadd.f32 %v5643, %v6661
  %v6823 = vadd.f32 %v5646, %v6664
  %v6824 = vadd.f32 %v5649, %v6667
  %v6825 = vadd.f32 %v5652, %v6670
  %v6826 = vadd.f32 %v5655, %v6673
  %v6827 = vadd.f32 %v5658, %v6676
  %v6828 = vadd.f32 %v5661, %v6679
  %v6829 = vadd.f32 %v5664, %v6682
  %v6830 = vadd.f32 %v5667, %v6685
  %v6831 = vadd.f32 %v5670, %v6688
  %v6832 = vadd.f32 %v5673, %v6691
  %v6833 = vadd.f32 %v5676, %v6694
  %v6834 = vadd.f32 %v5679, %v6697
  %v6835 = vadd.f32 %v5682, %v6700
  %v6836 = vadd.f32 %v5685, %v6703
  %v6837 = vadd.f32 %v5688, %v6706
  %v6838 = vadd.f32 %v5691, %v6709
  %v6839 = vadd.f32 %v5694, %v6712
  %v6840 = vadd.f32 %v5697, %v6715
  %v6841 = vadd.f32 %v5700, %v6718
  %v6842 = vadd.f32 %v5703, %v6721
  %v6843 = vadd.f32 %v5706, %v6724
  %v6844 = vadd.f32 %v5709, %v6727
  %v6845 = vadd.f32 %v5712, %v6730
  %v6846 = vadd.f32 %v5715, %v6733
  %v6847 = vadd.f32 %v5718, %v6736
  %v6848 = vadd.f32 %v5721, %v6739
  %v6849 = vadd.f32 %v5724, %v6742
  %v6850 = vadd.f32 %v5727, %v6745
  %v6851 = vadd.f32 %v5730, %v6748
  %v6852 = vadd.f32 %v5733, %v6751
  %v6853 = vadd.f32 %v5736, %v6754
  %v6854 = vadd.f32 %v5739, %v6757
  %v6855 = vadd.f32 %v5742, %v6760
  %v6856 = vadd.f32 %v5745, %v6763
  %v6857 = vadd.f32 %v5748, %v6766
  %v6858 = vadd.f32 %v5751, %v6769
  %v6859 = vadd.f32 %v5754, %v6772
  %v6860 = vadd.f32 %v5757, %v6775
  %v6861 = vadd.f32 %v5760, %v6778
  %v6862 = vadd.f32 %v5763, %v6781
  %v6863 = vadd.f32 %v5766, %v6784
  %v6864 = vadd.f32 %v5769, %v6787
  %v6865 = vadd.f32 %v5772, %v6790
  %v6866 = vadd.f32 %v5775, %v6793
  %v6867 = vadd.f32 %v5778, %v6796
  %v6868 = vadd.f32 %v5781, %v6799
  %v6869 = vadd.f32 %v5784, %v6802
  %v6870 = vadd.f32 %v5787, %v6805
  %vm6871 = vcmask 57344
  %6872 = vst.msk [vmem:[#allocation3] sm:$0x1] %vm6871, 0.0
  %6873 = vst.msk [vmem:[#allocation3 + $0x18] sm:$0x1] %vm6871, 0.0
  %6874 = vst.msk [vmem:[#allocation3 + $0x30] sm:$0x1] %vm6871, 0.0
  %6875 = vst.msk [vmem:[#allocation3 + $0x48] sm:$0x1] %vm6871, 0.0
  %6876 = vst.msk [vmem:[#allocation3 + $0x60] sm:$0x1] %vm6871, 0.0
  %6877 = vst.msk [vmem:[#allocation3 + $0x78] sm:$0x1] %vm6871, 0.0
  %6878 = vst.msk [vmem:[#allocation3 + $0x90] sm:$0x1] %vm6871, 0.0
  %6879 = vst.msk [vmem:[#allocation3 + $0xa8] sm:$0x1] %vm6871, 0.0
  %6880 = vst.msk [vmem:[#allocation3 + $0xc0] sm:$0x1] %vm6871, 0.0
  %6881 = vst.msk [vmem:[#allocation3 + $0xd8] sm:$0x1] %vm6871, 0.0
  %6882 = vst.msk [vmem:[#allocation3 + $0xf0] sm:$0x1] %vm6871, 0.0
  %6883 = vst.msk [vmem:[#allocation3 + $0x108] sm:$0x1] %vm6871, 0.0
  %6884 = vst.msk [vmem:[#allocation3 + $0x120] sm:$0x1] %vm6871, 0.0
  %6885 = vst.msk [vmem:[#allocation3 + $0x138] sm:$0x1] %vm6871, 0.0
  %6886 = vst.msk [vmem:[#allocation3 + $0x150] sm:$0x1] %vm6871, 0.0
  %6887 = vst.msk [vmem:[#allocation3 + $0x168] sm:$0x1] %vm6871, 0.0
  %6888 = vst.msk [vmem:[#allocation3 + $0x180] sm:$0x1] %vm6871, 0.0
  %6889 = vst.msk [vmem:[#allocation3 + $0x198] sm:$0x1] %vm6871, 0.0
  %6890 = vst.msk [vmem:[#allocation3 + $0x1b0] sm:$0x1] %vm6871, 0.0
  %6891 = vst.msk [vmem:[#allocation3 + $0x1c8] sm:$0x1] %vm6871, 0.0
  %6892 = vst.msk [vmem:[#allocation3 + $0x1e0] sm:$0x1] %vm6871, 0.0
  %6893 = vst.msk [vmem:[#allocation3 + $0x1f8] sm:$0x1] %vm6871, 0.0
  %6894 = vst.msk [vmem:[#allocation3 + $0x210] sm:$0x1] %vm6871, 0.0
  %6895 = vst.msk [vmem:[#allocation3 + $0x228] sm:$0x1] %vm6871, 0.0
  %6896 = vst.msk [vmem:[#allocation3 + $0x240] sm:$0x1] %vm6871, 0.0
  %6897 = vst.msk [vmem:[#allocation3 + $0x258] sm:$0x1] %vm6871, 0.0
  %6898 = vst.msk [vmem:[#allocation3 + $0x270] sm:$0x1] %vm6871, 0.0
  %6899 = vst.msk [vmem:[#allocation3 + $0x288] sm:$0x1] %vm6871, 0.0
  %6900 = vst.msk [vmem:[#allocation3 + $0x2a0] sm:$0x1] %vm6871, 0.0
  %6901 = vst.msk [vmem:[#allocation3 + $0x2b8] sm:$0x1] %vm6871, 0.0
  %6902 = vst.msk [vmem:[#allocation3 + $0x2d0] sm:$0x1] %vm6871, 0.0
  %6903 = vst.msk [vmem:[#allocation3 + $0x2e8] sm:$0x1] %vm6871, 0.0
  %6904 = vst.msk [vmem:[#allocation3 + $0x1] sm:$0xff] %vm513, %v6257
  %6905 = vst.msk [vmem:[#allocation3 + $0x9] sm:$0xff] %vm513, %v6258
  %6906 = vst.msk [vmem:[#allocation3 + $0x19] sm:$0xff] %vm513, %v6259
  %6907 = vst.msk [vmem:[#allocation3 + $0x21] sm:$0xff] %vm513, %v6260
  %6908 = vst.msk [vmem:[#allocation3 + $0x31] sm:$0xff] %vm513, %v6261
  %6909 = vst.msk [vmem:[#allocation3 + $0x39] sm:$0xff] %vm513, %v6262
  %6910 = vst.msk [vmem:[#allocation3 + $0x49] sm:$0xff] %vm513, %v6263
  %6911 = vst.msk [vmem:[#allocation3 + $0x51] sm:$0xff] %vm513, %v6264
  %6912 = vst.msk [vmem:[#allocation3 + $0x61] sm:$0xff] %vm513, %v6265
  %6913 = vst.msk [vmem:[#allocation3 + $0x69] sm:$0xff] %vm513, %v6266
  %6914 = vst.msk [vmem:[#allocation3 + $0x79] sm:$0xff] %vm513, %v6267
  %6915 = vst.msk [vmem:[#allocation3 + $0x81] sm:$0xff] %vm513, %v6268
  %6916 = vst.msk [vmem:[#allocation3 + $0x91] sm:$0xff] %vm513, %v6269
  %6917 = vst.msk [vmem:[#allocation3 + $0x99] sm:$0xff] %vm513, %v6270
  %6918 = vst.msk [vmem:[#allocation3 + $0xa9] sm:$0xff] %vm513, %v6271
  %6919 = vst.msk [vmem:[#allocation3 + $0xb1] sm:$0xff] %vm513, %v6272
  %6920 = vst.msk [vmem:[#allocation3 + $0xc1] sm:$0xff] %vm513, %v6273
  %6921 = vst.msk [vmem:[#allocation3 + $0xc9] sm:$0xff] %vm513, %v6274
  %6922 = vst.msk [vmem:[#allocation3 + $0xd9] sm:$0xff] %vm513, %v6275
  %6923 = vst.msk [vmem:[#allocation3 + $0xe1] sm:$0xff] %vm513, %v6276
  %6924 = vst.msk [vmem:[#allocation3 + $0xf1] sm:$0xff] %vm513, %v6277
  %6925 = vst.msk [vmem:[#allocation3 + $0xf9] sm:$0xff] %vm513, %v6278
  %6926 = vst.msk [vmem:[#allocation3 + $0x109] sm:$0xff] %vm513, %v6279
  %6927 = vst.msk [vmem:[#allocation3 + $0x111] sm:$0xff] %vm513, %v6280
  %6928 = vst.msk [vmem:[#allocation3 + $0x121] sm:$0xff] %vm513, %v6281
  %6929 = vst.msk [vmem:[#allocation3 + $0x129] sm:$0xff] %vm513, %v6282
  %6930 = vst.msk [vmem:[#allocation3 + $0x139] sm:$0xff] %vm513, %v6283
  %6931 = vst.msk [vmem:[#allocation3 + $0x141] sm:$0xff] %vm513, %v6284
  %6932 = vst.msk [vmem:[#allocation3 + $0x151] sm:$0xff] %vm513, %v6285
  %6933 = vst.msk [vmem:[#allocation3 + $0x159] sm:$0xff] %vm513, %v6286
  %6934 = vst.msk [vmem:[#allocation3 + $0x169] sm:$0xff] %vm513, %v6287
  %6935 = vst.msk [vmem:[#allocation3 + $0x171] sm:$0xff] %vm513, %v6288
  %6936 = vst.msk [vmem:[#allocation3 + $0x181] sm:$0xff] %vm513, %v6289
  %6937 = vst.msk [vmem:[#allocation3 + $0x189] sm:$0xff] %vm513, %v6290
  %6938 = vst.msk [vmem:[#allocation3 + $0x199] sm:$0xff] %vm513, %v6291
  %6939 = vst.msk [vmem:[#allocation3 + $0x1a1] sm:$0xff] %vm513, %v6292
  %6940 = vst.msk [vmem:[#allocation3 + $0x1b1] sm:$0xff] %vm513, %v6293
  %6941 = vst.msk [vmem:[#allocation3 + $0x1b9] sm:$0xff] %vm513, %v6294
  %6942 = vst.msk [vmem:[#allocation3 + $0x1c9] sm:$0xff] %vm513, %v6295
  %6943 = vst.msk [vmem:[#allocation3 + $0x1d1] sm:$0xff] %vm513, %v6296
  %6944 = vst.msk [vmem:[#allocation3 + $0x1e1] sm:$0xff] %vm513, %v6297
  %6945 = vst.msk [vmem:[#allocation3 + $0x1e9] sm:$0xff] %vm513, %v6298
  %6946 = vst.msk [vmem:[#allocation3 + $0x1f9] sm:$0xff] %vm513, %v6299
  %6947 = vst.msk [vmem:[#allocation3 + $0x201] sm:$0xff] %vm513, %v6300
  %6948 = vst.msk [vmem:[#allocation3 + $0x211] sm:$0xff] %vm513, %v6301
  %6949 = vst.msk [vmem:[#allocation3 + $0x219] sm:$0xff] %vm513, %v6302
  %6950 = vst.msk [vmem:[#allocation3 + $0x229] sm:$0xff] %vm513, %v6303
  %6951 = vst.msk [vmem:[#allocation3 + $0x231] sm:$0xff] %vm513, %v6304
  %6952 = vst.msk [vmem:[#allocation3 + $0x241] sm:$0xff] %vm513, %v6305
  %6953 = vst.msk [vmem:[#allocation3 + $0x249] sm:$0xff] %vm513, %v6306
  %6954 = vst.msk [vmem:[#allocation3 + $0x259] sm:$0xff] %vm513, %v6307
  %6955 = vst.msk [vmem:[#allocation3 + $0x261] sm:$0xff] %vm513, %v6308
  %6956 = vst.msk [vmem:[#allocation3 + $0x271] sm:$0xff] %vm513, %v6309
  %6957 = vst.msk [vmem:[#allocation3 + $0x279] sm:$0xff] %vm513, %v6310
  %6958 = vst.msk [vmem:[#allocation3 + $0x289] sm:$0xff] %vm513, %v6311
  %6959 = vst.msk [vmem:[#allocation3 + $0x291] sm:$0xff] %vm513, %v6312
  %6960 = vst.msk [vmem:[#allocation3 + $0x2a1] sm:$0xff] %vm513, %v6313
  %6961 = vst.msk [vmem:[#allocation3 + $0x2a9] sm:$0xff] %vm513, %v6314
  %6962 = vst.msk [vmem:[#allocation3 + $0x2b9] sm:$0xff] %vm513, %v6315
  %6963 = vst.msk [vmem:[#allocation3 + $0x2c1] sm:$0xff] %vm513, %v6316
  %6964 = vst.msk [vmem:[#allocation3 + $0x2d1] sm:$0xff] %vm513, %v6317
  %6965 = vst.msk [vmem:[#allocation3 + $0x2d9] sm:$0xff] %vm513, %v6318
  %6966 = vst.msk [vmem:[#allocation3 + $0x2e9] sm:$0xff] %vm513, %v6319
  %6967 = vst.msk [vmem:[#allocation3 + $0x2f1] sm:$0xff] %vm513, %v6320
  %v6968 = vld [vmem:[#allocation3] sm:$0xff]
  %v6969 = vld [vmem:[#allocation3 + $0x8] sm:$0xff]
  %v6970 = vld [vmem:[#allocation3 + $0x18] sm:$0xff]
  %v6971 = vld [vmem:[#allocation3 + $0x20] sm:$0xff]
  %v6972 = vld [vmem:[#allocation3 + $0x30] sm:$0xff]
  %v6973 = vld [vmem:[#allocation3 + $0x38] sm:$0xff]
  %v6974 = vld [vmem:[#allocation3 + $0x48] sm:$0xff]
  %v6975 = vld [vmem:[#allocation3 + $0x50] sm:$0xff]
  %v6976 = vld [vmem:[#allocation3 + $0x60] sm:$0xff]
  %v6977 = vld [vmem:[#allocation3 + $0x68] sm:$0xff]
  %v6978 = vld [vmem:[#allocation3 + $0x78] sm:$0xff]
  %v6979 = vld [vmem:[#allocation3 + $0x80] sm:$0xff]
  %v6980 = vld [vmem:[#allocation3 + $0x90] sm:$0xff]
  %v6981 = vld [vmem:[#allocation3 + $0x98] sm:$0xff]
  %v6982 = vld [vmem:[#allocation3 + $0xa8] sm:$0xff]
  %v6983 = vld [vmem:[#allocation3 + $0xb0] sm:$0xff]
  %v6984 = vld [vmem:[#allocation3 + $0xc0] sm:$0xff]
  %v6985 = vld [vmem:[#allocation3 + $0xc8] sm:$0xff]
  %v6986 = vld [vmem:[#allocation3 + $0xd8] sm:$0xff]
  %v6987 = vld [vmem:[#allocation3 + $0xe0] sm:$0xff]
  %v6988 = vld [vmem:[#allocation3 + $0xf0] sm:$0xff]
  %v6989 = vld [vmem:[#allocation3 + $0xf8] sm:$0xff]
  %v6990 = vld [vmem:[#allocation3 + $0x108] sm:$0xff]
  %v6991 = vld [vmem:[#allocation3 + $0x110] sm:$0xff]
  %v6992 = vld [vmem:[#allocation3 + $0x120] sm:$0xff]
  %v6993 = vld [vmem:[#allocation3 + $0x128] sm:$0xff]
  %v6994 = vld [vmem:[#allocation3 + $0x138] sm:$0xff]
  %v6995 = vld [vmem:[#allocation3 + $0x140] sm:$0xff]
  %v6996 = vld [vmem:[#allocation3 + $0x150] sm:$0xff]
  %v6997 = vld [vmem:[#allocation3 + $0x158] sm:$0xff]
  %v6998 = vld [vmem:[#allocation3 + $0x168] sm:$0xff]
  %v6999 = vld [vmem:[#allocation3 + $0x170] sm:$0xff]
  %v7000 = vld [vmem:[#allocation3 + $0x180] sm:$0xff]
  %v7001 = vld [vmem:[#allocation3 + $0x188] sm:$0xff]
  %v7002 = vld [vmem:[#allocation3 + $0x198] sm:$0xff]
  %v7003 = vld [vmem:[#allocation3 + $0x1a0] sm:$0xff]
  %v7004 = vld [vmem:[#allocation3 + $0x1b0] sm:$0xff]
  %v7005 = vld [vmem:[#allocation3 + $0x1b8] sm:$0xff]
  %v7006 = vld [vmem:[#allocation3 + $0x1c8] sm:$0xff]
  %v7007 = vld [vmem:[#allocation3 + $0x1d0] sm:$0xff]
  %v7008 = vld [vmem:[#allocation3 + $0x1e0] sm:$0xff]
  %v7009 = vld [vmem:[#allocation3 + $0x1e8] sm:$0xff]
  %v7010 = vld [vmem:[#allocation3 + $0x1f8] sm:$0xff]
  %v7011 = vld [vmem:[#allocation3 + $0x200] sm:$0xff]
  %v7012 = vld [vmem:[#allocation3 + $0x210] sm:$0xff]
  %v7013 = vld [vmem:[#allocation3 + $0x218] sm:$0xff]
  %v7014 = vld [vmem:[#allocation3 + $0x228] sm:$0xff]
  %v7015 = vld [vmem:[#allocation3 + $0x230] sm:$0xff]
  %v7016 = vld [vmem:[#allocation3 + $0x240] sm:$0xff]
  %v7017 = vld [vmem:[#allocation3 + $0x248] sm:$0xff]
  %v7018 = vld [vmem:[#allocation3 + $0x258] sm:$0xff]
  %v7019 = vld [vmem:[#allocation3 + $0x260] sm:$0xff]
  %v7020 = vld [vmem:[#allocation3 + $0x270] sm:$0xff]
  %v7021 = vld [vmem:[#allocation3 + $0x278] sm:$0xff]
  %v7022 = vld [vmem:[#allocation3 + $0x288] sm:$0xff]
  %v7023 = vld [vmem:[#allocation3 + $0x290] sm:$0xff]
  %v7024 = vld [vmem:[#allocation3 + $0x2a0] sm:$0xff]
  %v7025 = vld [vmem:[#allocation3 + $0x2a8] sm:$0xff]
  %v7026 = vld [vmem:[#allocation3 + $0x2b8] sm:$0xff]
  %v7027 = vld [vmem:[#allocation3 + $0x2c0] sm:$0xff]
  %v7028 = vld [vmem:[#allocation3 + $0x2d0] sm:$0xff]
  %v7029 = vld [vmem:[#allocation3 + $0x2d8] sm:$0xff]
  %v7030 = vld [vmem:[#allocation3 + $0x2e8] sm:$0xff]
  %v7031 = vld [vmem:[#allocation3 + $0x2f0] sm:$0xff]
  %7032 = vst.msk [vmem:[#allocation3] sm:$0xff] %vm513, %v6807
  %7033 = vst.msk [vmem:[#allocation3 + $0x8] sm:$0xff] %vm513, %v6808
  %7034 = vst.msk [vmem:[#allocation3 + $0x18] sm:$0xff] %vm513, %v6809
  %7035 = vst.msk [vmem:[#allocation3 + $0x20] sm:$0xff] %vm513, %v6810
  %7036 = vst.msk [vmem:[#allocation3 + $0x30] sm:$0xff] %vm513, %v6811
  %7037 = vst.msk [vmem:[#allocation3 + $0x38] sm:$0xff] %vm513, %v6812
  %7038 = vst.msk [vmem:[#allocation3 + $0x48] sm:$0xff] %vm513, %v6813
  %7039 = vst.msk [vmem:[#allocation3 + $0x50] sm:$0xff] %vm513, %v6814
  %7040 = vst.msk [vmem:[#allocation3 + $0x60] sm:$0xff] %vm513, %v6815
  %7041 = vst.msk [vmem:[#allocation3 + $0x68] sm:$0xff] %vm513, %v6816
  %7042 = vst.msk [vmem:[#allocation3 + $0x78] sm:$0xff] %vm513, %v6817
  %7043 = vst.msk [vmem:[#allocation3 + $0x80] sm:$0xff] %vm513, %v6818
  %7044 = vst.msk [vmem:[#allocation3 + $0x90] sm:$0xff] %vm513, %v6819
  %7045 = vst.msk [vmem:[#allocation3 + $0x98] sm:$0xff] %vm513, %v6820
  %7046 = vst.msk [vmem:[#allocation3 + $0xa8] sm:$0xff] %vm513, %v6821
  %7047 = vst.msk [vmem:[#allocation3 + $0xb0] sm:$0xff] %vm513, %v6822
  %7048 = vst.msk [vmem:[#allocation3 + $0xc0] sm:$0xff] %vm513, %v6823
  %7049 = vst.msk [vmem:[#allocation3 + $0xc8] sm:$0xff] %vm513, %v6824
  %7050 = vst.msk [vmem:[#allocation3 + $0xd8] sm:$0xff] %vm513, %v6825
  %7051 = vst.msk [vmem:[#allocation3 + $0xe0] sm:$0xff] %vm513, %v6826
  %7052 = vst.msk [vmem:[#allocation3 + $0xf0] sm:$0xff] %vm513, %v6827
  %7053 = vst.msk [vmem:[#allocation3 + $0xf8] sm:$0xff] %vm513, %v6828
  %7054 = vst.msk [vmem:[#allocation3 + $0x108] sm:$0xff] %vm513, %v6829
  %7055 = vst.msk [vmem:[#allocation3 + $0x110] sm:$0xff] %vm513, %v6830
  %7056 = vst.msk [vmem:[#allocation3 + $0x120] sm:$0xff] %vm513, %v6831
  %7057 = vst.msk [vmem:[#allocation3 + $0x128] sm:$0xff] %vm513, %v6832
  %7058 = vst.msk [vmem:[#allocation3 + $0x138] sm:$0xff] %vm513, %v6833
  %7059 = vst.msk [vmem:[#allocation3 + $0x140] sm:$0xff] %vm513, %v6834
  %7060 = vst.msk [vmem:[#allocation3 + $0x150] sm:$0xff] %vm513, %v6835
  %7061 = vst.msk [vmem:[#allocation3 + $0x158] sm:$0xff] %vm513, %v6836
  %7062 = vst.msk [vmem:[#allocation3 + $0x168] sm:$0xff] %vm513, %v6837
  %7063 = vst.msk [vmem:[#allocation3 + $0x170] sm:$0xff] %vm513, %v6838
  %7064 = vst.msk [vmem:[#allocation3 + $0x180] sm:$0xff] %vm513, %v6839
  %7065 = vst.msk [vmem:[#allocation3 + $0x188] sm:$0xff] %vm513, %v6840
  %7066 = vst.msk [vmem:[#allocation3 + $0x198] sm:$0xff] %vm513, %v6841
  %7067 = vst.msk [vmem:[#allocation3 + $0x1a0] sm:$0xff] %vm513, %v6842
  %7068 = vst.msk [vmem:[#allocation3 + $0x1b0] sm:$0xff] %vm513, %v6843
  %7069 = vst.msk [vmem:[#allocation3 + $0x1b8] sm:$0xff] %vm513, %v6844
  %7070 = vst.msk [vmem:[#allocation3 + $0x1c8] sm:$0xff] %vm513, %v6845
  %7071 = vst.msk [vmem:[#allocation3 + $0x1d0] sm:$0xff] %vm513, %v6846
  %7072 = vst.msk [vmem:[#allocation3 + $0x1e0] sm:$0xff] %vm513, %v6847
  %7073 = vst.msk [vmem:[#allocation3 + $0x1e8] sm:$0xff] %vm513, %v6848
  %7074 = vst.msk [vmem:[#allocation3 + $0x1f8] sm:$0xff] %vm513, %v6849
  %7075 = vst.msk [vmem:[#allocation3 + $0x200] sm:$0xff] %vm513, %v6850
  %7076 = vst.msk [vmem:[#allocation3 + $0x210] sm:$0xff] %vm513, %v6851
  %7077 = vst.msk [vmem:[#allocation3 + $0x218] sm:$0xff] %vm513, %v6852
  %7078 = vst.msk [vmem:[#allocation3 + $0x228] sm:$0xff] %vm513, %v6853
  %7079 = vst.msk [vmem:[#allocation3 + $0x230] sm:$0xff] %vm513, %v6854
  %7080 = vst.msk [vmem:[#allocation3 + $0x240] sm:$0xff] %vm513, %v6855
  %7081 = vst.msk [vmem:[#allocation3 + $0x248] sm:$0xff] %vm513, %v6856
  %7082 = vst.msk [vmem:[#allocation3 + $0x258] sm:$0xff] %vm513, %v6857
  %7083 = vst.msk [vmem:[#allocation3 + $0x260] sm:$0xff] %vm513, %v6858
  %7084 = vst.msk [vmem:[#allocation3 + $0x270] sm:$0xff] %vm513, %v6859
  %7085 = vst.msk [vmem:[#allocation3 + $0x278] sm:$0xff] %vm513, %v6860
  %7086 = vst.msk [vmem:[#allocation3 + $0x288] sm:$0xff] %vm513, %v6861
  %7087 = vst.msk [vmem:[#allocation3 + $0x290] sm:$0xff] %vm513, %v6862
  %7088 = vst.msk [vmem:[#allocation3 + $0x2a0] sm:$0xff] %vm513, %v6863
  %7089 = vst.msk [vmem:[#allocation3 + $0x2a8] sm:$0xff] %vm513, %v6864
  %7090 = vst.msk [vmem:[#allocation3 + $0x2b8] sm:$0xff] %vm513, %v6865
  %7091 = vst.msk [vmem:[#allocation3 + $0x2c0] sm:$0xff] %vm513, %v6866
  %7092 = vst.msk [vmem:[#allocation3 + $0x2d0] sm:$0xff] %vm513, %v6867
  %7093 = vst.msk [vmem:[#allocation3 + $0x2d8] sm:$0xff] %vm513, %v6868
  %7094 = vst.msk [vmem:[#allocation3 + $0x2e8] sm:$0xff] %vm513, %v6869
  %7095 = vst.msk [vmem:[#allocation3 + $0x2f0] sm:$0xff] %vm513, %v6870
  %7096 = vst.msk [vmem:[#allocation3 + $0x10] sm:$0x1] %vm6871, 0.0
  %7097 = vst.msk [vmem:[#allocation3 + $0x28] sm:$0x1] %vm6871, 0.0
  %7098 = vst.msk [vmem:[#allocation3 + $0x40] sm:$0x1] %vm6871, 0.0
  %7099 = vst.msk [vmem:[#allocation3 + $0x58] sm:$0x1] %vm6871, 0.0
  %7100 = vst.msk [vmem:[#allocation3 + $0x70] sm:$0x1] %vm6871, 0.0
  %7101 = vst.msk [vmem:[#allocation3 + $0x88] sm:$0x1] %vm6871, 0.0
  %7102 = vst.msk [vmem:[#allocation3 + $0xa0] sm:$0x1] %vm6871, 0.0
  %7103 = vst.msk [vmem:[#allocation3 + $0xb8] sm:$0x1] %vm6871, 0.0
  %7104 = vst.msk [vmem:[#allocation3 + $0xd0] sm:$0x1] %vm6871, 0.0
  %7105 = vst.msk [vmem:[#allocation3 + $0xe8] sm:$0x1] %vm6871, 0.0
  %7106 = vst.msk [vmem:[#allocation3 + $0x100] sm:$0x1] %vm6871, 0.0
  %7107 = vst.msk [vmem:[#allocation3 + $0x118] sm:$0x1] %vm6871, 0.0
  %7108 = vst.msk [vmem:[#allocation3 + $0x130] sm:$0x1] %vm6871, 0.0
  %7109 = vst.msk [vmem:[#allocation3 + $0x148] sm:$0x1] %vm6871, 0.0
  %7110 = vst.msk [vmem:[#allocation3 + $0x160] sm:$0x1] %vm6871, 0.0
  %7111 = vst.msk [vmem:[#allocation3 + $0x178] sm:$0x1] %vm6871, 0.0
  %7112 = vst.msk [vmem:[#allocation3 + $0x190] sm:$0x1] %vm6871, 0.0
  %7113 = vst.msk [vmem:[#allocation3 + $0x1a8] sm:$0x1] %vm6871, 0.0
  %7114 = vst.msk [vmem:[#allocation3 + $0x1c0] sm:$0x1] %vm6871, 0.0
  %7115 = vst.msk [vmem:[#allocation3 + $0x1d8] sm:$0x1] %vm6871, 0.0
  %7116 = vst.msk [vmem:[#allocation3 + $0x1f0] sm:$0x1] %vm6871, 0.0
  %7117 = vst.msk [vmem:[#allocation3 + $0x208] sm:$0x1] %vm6871, 0.0
  %7118 = vst.msk [vmem:[#allocation3 + $0x220] sm:$0x1] %vm6871, 0.0
  %7119 = vst.msk [vmem:[#allocation3 + $0x238] sm:$0x1] %vm6871, 0.0
  %7120 = vst.msk [vmem:[#allocation3 + $0x250] sm:$0x1] %vm6871, 0.0
  %7121 = vst.msk [vmem:[#allocation3 + $0x268] sm:$0x1] %vm6871, 0.0
  %7122 = vst.msk [vmem:[#allocation3 + $0x280] sm:$0x1] %vm6871, 0.0
  %7123 = vst.msk [vmem:[#allocation3 + $0x298] sm:$0x1] %vm6871, 0.0
  %7124 = vst.msk [vmem:[#allocation3 + $0x2b0] sm:$0x1] %vm6871, 0.0
  %7125 = vst.msk [vmem:[#allocation3 + $0x2c8] sm:$0x1] %vm6871, 0.0
  %7126 = vst.msk [vmem:[#allocation3 + $0x2e0] sm:$0x1] %vm6871, 0.0
  %7127 = vst.msk [vmem:[#allocation3 + $0x2f8] sm:$0x1] %vm6871, 0.0
  %v7128 = vld [vmem:[#allocation3 + $0x1] sm:$0xff]
  %v7129 = vld [vmem:[#allocation3 + $0x9] sm:$0xff]
  %v7130 = vld [vmem:[#allocation3 + $0x19] sm:$0xff]
  %v7131 = vld [vmem:[#allocation3 + $0x21] sm:$0xff]
  %v7132 = vld [vmem:[#allocation3 + $0x31] sm:$0xff]
  %v7133 = vld [vmem:[#allocation3 + $0x39] sm:$0xff]
  %v7134 = vld [vmem:[#allocation3 + $0x49] sm:$0xff]
  %v7135 = vld [vmem:[#allocation3 + $0x51] sm:$0xff]
  %v7136 = vld [vmem:[#allocation3 + $0x61] sm:$0xff]
  %v7137 = vld [vmem:[#allocation3 + $0x69] sm:$0xff]
  %v7138 = vld [vmem:[#allocation3 + $0x79] sm:$0xff]
  %v7139 = vld [vmem:[#allocation3 + $0x81] sm:$0xff]
  %v7140 = vld [vmem:[#allocation3 + $0x91] sm:$0xff]
  %v7141 = vld [vmem:[#allocation3 + $0x99] sm:$0xff]
  %v7142 = vld [vmem:[#allocation3 + $0xa9] sm:$0xff]
  %v7143 = vld [vmem:[#allocation3 + $0xb1] sm:$0xff]
  %v7144 = vld [vmem:[#allocation3 + $0xc1] sm:$0xff]
  %v7145 = vld [vmem:[#allocation3 + $0xc9] sm:$0xff]
  %v7146 = vld [vmem:[#allocation3 + $0xd9] sm:$0xff]
  %v7147 = vld [vmem:[#allocation3 + $0xe1] sm:$0xff]
  %v7148 = vld [vmem:[#allocation3 + $0xf1] sm:$0xff]
  %v7149 = vld [vmem:[#allocation3 + $0xf9] sm:$0xff]
  %v7150 = vld [vmem:[#allocation3 + $0x109] sm:$0xff]
  %v7151 = vld [vmem:[#allocation3 + $0x111] sm:$0xff]
  %v7152 = vld [vmem:[#allocation3 + $0x121] sm:$0xff]
  %v7153 = vld [vmem:[#allocation3 + $0x129] sm:$0xff]
  %v7154 = vld [vmem:[#allocation3 + $0x139] sm:$0xff]
  %v7155 = vld [vmem:[#allocation3 + $0x141] sm:$0xff]
  %v7156 = vld [vmem:[#allocation3 + $0x151] sm:$0xff]
  %v7157 = vld [vmem:[#allocation3 + $0x159] sm:$0xff]
  %v7158 = vld [vmem:[#allocation3 + $0x169] sm:$0xff]
  %v7159 = vld [vmem:[#allocation3 + $0x171] sm:$0xff]
  %v7160 = vld [vmem:[#allocation3 + $0x181] sm:$0xff]
  %v7161 = vld [vmem:[#allocation3 + $0x189] sm:$0xff]
  %v7162 = vld [vmem:[#allocation3 + $0x199] sm:$0xff]
  %v7163 = vld [vmem:[#allocation3 + $0x1a1] sm:$0xff]
  %v7164 = vld [vmem:[#allocation3 + $0x1b1] sm:$0xff]
  %v7165 = vld [vmem:[#allocation3 + $0x1b9] sm:$0xff]
  %v7166 = vld [vmem:[#allocation3 + $0x1c9] sm:$0xff]
  %v7167 = vld [vmem:[#allocation3 + $0x1d1] sm:$0xff]
  %v7168 = vld [vmem:[#allocation3 + $0x1e1] sm:$0xff]
  %v7169 = vld [vmem:[#allocation3 + $0x1e9] sm:$0xff]
  %v7170 = vld [vmem:[#allocation3 + $0x1f9] sm:$0xff]
  %v7171 = vld [vmem:[#allocation3 + $0x201] sm:$0xff]
  %v7172 = vld [vmem:[#allocation3 + $0x211] sm:$0xff]
  %v7173 = vld [vmem:[#allocation3 + $0x219] sm:$0xff]
  %v7174 = vld [vmem:[#allocation3 + $0x229] sm:$0xff]
  %v7175 = vld [vmem:[#allocation3 + $0x231] sm:$0xff]
  %v7176 = vld [vmem:[#allocation3 + $0x241] sm:$0xff]
  %v7177 = vld [vmem:[#allocation3 + $0x249] sm:$0xff]
  %v7178 = vld [vmem:[#allocation3 + $0x259] sm:$0xff]
  %v7179 = vld [vmem:[#allocation3 + $0x261] sm:$0xff]
  %v7180 = vld [vmem:[#allocation3 + $0x271] sm:$0xff]
  %v7181 = vld [vmem:[#allocation3 + $0x279] sm:$0xff]
  %v7182 = vld [vmem:[#allocation3 + $0x289] sm:$0xff]
  %v7183 = vld [vmem:[#allocation3 + $0x291] sm:$0xff]
  %v7184 = vld [vmem:[#allocation3 + $0x2a1] sm:$0xff]
  %v7185 = vld [vmem:[#allocation3 + $0x2a9] sm:$0xff]
  %v7186 = vld [vmem:[#allocation3 + $0x2b9] sm:$0xff]
  %v7187 = vld [vmem:[#allocation3 + $0x2c1] sm:$0xff]
  %v7188 = vld [vmem:[#allocation3 + $0x2d1] sm:$0xff]
  %v7189 = vld [vmem:[#allocation3 + $0x2d9] sm:$0xff]
  %v7190 = vld [vmem:[#allocation3 + $0x2e9] sm:$0xff]
  %v7191 = vld [vmem:[#allocation3 + $0x2f1] sm:$0xff]
  %v7192 = vadd.f32 %v6532, %v6968
  %v7193 = vadd.f32 %v6533, %v6969
  %v7194 = vadd.f32 %v6534, %v6970
  %v7195 = vadd.f32 %v6535, %v6971
  %v7196 = vadd.f32 %v6536, %v6972
  %v7197 = vadd.f32 %v6537, %v6973
  %v7198 = vadd.f32 %v6538, %v6974
  %v7199 = vadd.f32 %v6539, %v6975
  %v7200 = vadd.f32 %v6540, %v6976
  %v7201 = vadd.f32 %v6541, %v6977
  %v7202 = vadd.f32 %v6542, %v6978
  %v7203 = vadd.f32 %v6543, %v6979
  %v7204 = vadd.f32 %v6544, %v6980
  %v7205 = vadd.f32 %v6545, %v6981
  %v7206 = vadd.f32 %v6546, %v6982
  %v7207 = vadd.f32 %v6547, %v6983
  %v7208 = vadd.f32 %v6548, %v6984
  %v7209 = vadd.f32 %v6549, %v6985
  %v7210 = vadd.f32 %v6550, %v6986
  %v7211 = vadd.f32 %v6551, %v6987
  %v7212 = vadd.f32 %v6552, %v6988
  %v7213 = vadd.f32 %v6553, %v6989
  %v7214 = vadd.f32 %v6554, %v6990
  %v7215 = vadd.f32 %v6555, %v6991
  %v7216 = vadd.f32 %v6556, %v6992
  %v7217 = vadd.f32 %v6557, %v6993
  %v7218 = vadd.f32 %v6558, %v6994
  %v7219 = vadd.f32 %v6559, %v6995
  %v7220 = vadd.f32 %v6560, %v6996
  %v7221 = vadd.f32 %v6561, %v6997
  %v7222 = vadd.f32 %v6562, %v6998
  %v7223 = vadd.f32 %v6563, %v6999
  %v7224 = vadd.f32 %v6564, %v7000
  %v7225 = vadd.f32 %v6565, %v7001
  %v7226 = vadd.f32 %v6566, %v7002
  %v7227 = vadd.f32 %v6567, %v7003
  %v7228 = vadd.f32 %v6568, %v7004
  %v7229 = vadd.f32 %v6569, %v7005
  %v7230 = vadd.f32 %v6570, %v7006
  %v7231 = vadd.f32 %v6571, %v7007
  %v7232 = vadd.f32 %v6572, %v7008
  %v7233 = vadd.f32 %v6573, %v7009
  %v7234 = vadd.f32 %v6574, %v7010
  %v7235 = vadd.f32 %v6575, %v7011
  %v7236 = vadd.f32 %v6576, %v7012
  %v7237 = vadd.f32 %v6577, %v7013
  %v7238 = vadd.f32 %v6578, %v7014
  %v7239 = vadd.f32 %v6579, %v7015
  %v7240 = vadd.f32 %v6580, %v7016
  %v7241 = vadd.f32 %v6581, %v7017
  %v7242 = vadd.f32 %v6582, %v7018
  %v7243 = vadd.f32 %v6583, %v7019
  %v7244 = vadd.f32 %v6584, %v7020
  %v7245 = vadd.f32 %v6585, %v7021
  %v7246 = vadd.f32 %v6586, %v7022
  %v7247 = vadd.f32 %v6587, %v7023
  %v7248 = vadd.f32 %v6588, %v7024
  %v7249 = vadd.f32 %v6589, %v7025
  %v7250 = vadd.f32 %v6590, %v7026
  %v7251 = vadd.f32 %v6591, %v7027
  %v7252 = vadd.f32 %v6592, %v7028
  %v7253 = vadd.f32 %v6593, %v7029
  %v7254 = vadd.f32 %v6594, %v7030
  %v7255 = vadd.f32 %v6595, %v7031
  %v7256 = vadd.f32 %v7192, %v7128
  %v7257 = vadd.f32 %v7193, %v7129
  %v7258 = vadd.f32 %v7194, %v7130
  %v7259 = vadd.f32 %v7195, %v7131
  %v7260 = vadd.f32 %v7196, %v7132
  %v7261 = vadd.f32 %v7197, %v7133
  %v7262 = vadd.f32 %v7198, %v7134
  %v7263 = vadd.f32 %v7199, %v7135
  %v7264 = vadd.f32 %v7200, %v7136
  %v7265 = vadd.f32 %v7201, %v7137
  %v7266 = vadd.f32 %v7202, %v7138
  %v7267 = vadd.f32 %v7203, %v7139
  %v7268 = vadd.f32 %v7204, %v7140
  %v7269 = vadd.f32 %v7205, %v7141
  %v7270 = vadd.f32 %v7206, %v7142
  %v7271 = vadd.f32 %v7207, %v7143
  %v7272 = vadd.f32 %v7208, %v7144
  %v7273 = vadd.f32 %v7209, %v7145
  %v7274 = vadd.f32 %v7210, %v7146
  %v7275 = vadd.f32 %v7211, %v7147
  %v7276 = vadd.f32 %v7212, %v7148
  %v7277 = vadd.f32 %v7213, %v7149
  %v7278 = vadd.f32 %v7214, %v7150
  %v7279 = vadd.f32 %v7215, %v7151
  %v7280 = vadd.f32 %v7216, %v7152
  %v7281 = vadd.f32 %v7217, %v7153
  %v7282 = vadd.f32 %v7218, %v7154
  %v7283 = vadd.f32 %v7219, %v7155
  %v7284 = vadd.f32 %v7220, %v7156
  %v7285 = vadd.f32 %v7221, %v7157
  %v7286 = vadd.f32 %v7222, %v7158
  %v7287 = vadd.f32 %v7223, %v7159
  %v7288 = vadd.f32 %v7224, %v7160
  %v7289 = vadd.f32 %v7225, %v7161
  %v7290 = vadd.f32 %v7226, %v7162
  %v7291 = vadd.f32 %v7227, %v7163
  %v7292 = vadd.f32 %v7228, %v7164
  %v7293 = vadd.f32 %v7229, %v7165
  %v7294 = vadd.f32 %v7230, %v7166
  %v7295 = vadd.f32 %v7231, %v7167
  %v7296 = vadd.f32 %v7232, %v7168
  %v7297 = vadd.f32 %v7233, %v7169
  %v7298 = vadd.f32 %v7234, %v7170
  %v7299 = vadd.f32 %v7235, %v7171
  %v7300 = vadd.f32 %v7236, %v7172
  %v7301 = vadd.f32 %v7237, %v7173
  %v7302 = vadd.f32 %v7238, %v7174
  %v7303 = vadd.f32 %v7239, %v7175
  %v7304 = vadd.f32 %v7240, %v7176
  %v7305 = vadd.f32 %v7241, %v7177
  %v7306 = vadd.f32 %v7242, %v7178
  %v7307 = vadd.f32 %v7243, %v7179
  %v7308 = vadd.f32 %v7244, %v7180
  %v7309 = vadd.f32 %v7245, %v7181
  %v7310 = vadd.f32 %v7246, %v7182
  %v7311 = vadd.f32 %v7247, %v7183
  %v7312 = vadd.f32 %v7248, %v7184
  %v7313 = vadd.f32 %v7249, %v7185
  %v7314 = vadd.f32 %v7250, %v7186
  %v7315 = vadd.f32 %v7251, %v7187
  %v7316 = vadd.f32 %v7252, %v7188
  %v7317 = vadd.f32 %v7253, %v7189
  %v7318 = vadd.f32 %v7254, %v7190
  %v7319 = vadd.f32 %v7255, %v7191
  %v7320 = vld [vmem:[%s6] sm:$0x1]
  %v7322 = vperm.slane %v7320, 0
  %v7324 = vadd.f32 %v7256, %v7322
  %v7325 = vadd.f32 %v7257, %v7322
  %v7326 = vadd.f32 %v7258, %v7322
  %v7327 = vadd.f32 %v7259, %v7322
  %v7328 = vadd.f32 %v7260, %v7322
  %v7329 = vadd.f32 %v7261, %v7322
  %v7330 = vadd.f32 %v7262, %v7322
  %v7331 = vadd.f32 %v7263, %v7322
  %v7332 = vadd.f32 %v7264, %v7322
  %v7333 = vadd.f32 %v7265, %v7322
  %v7334 = vadd.f32 %v7266, %v7322
  %v7335 = vadd.f32 %v7267, %v7322
  %v7336 = vadd.f32 %v7268, %v7322
  %v7337 = vadd.f32 %v7269, %v7322
  %v7338 = vadd.f32 %v7270, %v7322
  %v7339 = vadd.f32 %v7271, %v7322
  %v7340 = vadd.f32 %v7272, %v7322
  %v7341 = vadd.f32 %v7273, %v7322
  %v7342 = vadd.f32 %v7274, %v7322
  %v7343 = vadd.f32 %v7275, %v7322
  %v7344 = vadd.f32 %v7276, %v7322
  %v7345 = vadd.f32 %v7277, %v7322
  %v7346 = vadd.f32 %v7278, %v7322
  %v7347 = vadd.f32 %v7279, %v7322
  %v7348 = vadd.f32 %v7280, %v7322
  %v7349 = vadd.f32 %v7281, %v7322
  %v7350 = vadd.f32 %v7282, %v7322
  %v7351 = vadd.f32 %v7283, %v7322
  %v7352 = vadd.f32 %v7284, %v7322
  %v7353 = vadd.f32 %v7285, %v7322
  %v7354 = vadd.f32 %v7286, %v7322
  %v7355 = vadd.f32 %v7287, %v7322
  %v7356 = vadd.f32 %v7288, %v7322
  %v7357 = vadd.f32 %v7289, %v7322
  %v7358 = vadd.f32 %v7290, %v7322
  %v7359 = vadd.f32 %v7291, %v7322
  %v7360 = vadd.f32 %v7292, %v7322
  %v7361 = vadd.f32 %v7293, %v7322
  %v7362 = vadd.f32 %v7294, %v7322
  %v7363 = vadd.f32 %v7295, %v7322
  %v7364 = vadd.f32 %v7296, %v7322
  %v7365 = vadd.f32 %v7297, %v7322
  %v7366 = vadd.f32 %v7298, %v7322
  %v7367 = vadd.f32 %v7299, %v7322
  %v7368 = vadd.f32 %v7300, %v7322
  %v7369 = vadd.f32 %v7301, %v7322
  %v7370 = vadd.f32 %v7302, %v7322
  %v7371 = vadd.f32 %v7303, %v7322
  %v7372 = vadd.f32 %v7304, %v7322
  %v7373 = vadd.f32 %v7305, %v7322
  %v7374 = vadd.f32 %v7306, %v7322
  %v7375 = vadd.f32 %v7307, %v7322
  %v7376 = vadd.f32 %v7308, %v7322
  %v7377 = vadd.f32 %v7309, %v7322
  %v7378 = vadd.f32 %v7310, %v7322
  %v7379 = vadd.f32 %v7311, %v7322
  %v7380 = vadd.f32 %v7312, %v7322
  %v7381 = vadd.f32 %v7313, %v7322
  %v7382 = vadd.f32 %v7314, %v7322
  %v7383 = vadd.f32 %v7315, %v7322
  %v7384 = vadd.f32 %v7316, %v7322
  %v7385 = vadd.f32 %v7317, %v7322
  %v7386 = vadd.f32 %v7318, %v7322
  %v7387 = vadd.f32 %v7319, %v7322
  %v7388 = vld [vmem:[%s7] sm:$0x1]
  %v7389 = vld [vmem:[%s8] sm:$0x1]
  %v7390 = vsel %vm513, %v7324, 0.0
  %v7391 = vsel %vm513, %v7325, 0.0
  %v7392 = vadd.f32 %v7390, %v7391
  %v7393 = vsel %vm513, %v7326, 0.0
  %v7394 = vadd.f32 %v7392, %v7393
  %v7395 = vsel %vm513, %v7327, 0.0
  %v7396 = vadd.f32 %v7394, %v7395
  %v7397 = vsel %vm513, %v7328, 0.0
  %v7398 = vadd.f32 %v7396, %v7397
  %v7399 = vsel %vm513, %v7329, 0.0
  %v7400 = vadd.f32 %v7398, %v7399
  %v7401 = vsel %vm513, %v7330, 0.0
  %v7402 = vadd.f32 %v7400, %v7401
  %v7403 = vsel %vm513, %v7331, 0.0
  %v7404 = vadd.f32 %v7402, %v7403
  %v7405 = vsel %vm513, %v7332, 0.0
  %v7406 = vadd.f32 %v7404, %v7405
  %v7407 = vsel %vm513, %v7333, 0.0
  %v7408 = vadd.f32 %v7406, %v7407
  %v7409 = vsel %vm513, %v7334, 0.0
  %v7410 = vadd.f32 %v7408, %v7409
  %v7411 = vsel %vm513, %v7335, 0.0
  %v7412 = vadd.f32 %v7410, %v7411
  %v7413 = vsel %vm513, %v7336, 0.0
  %v7414 = vadd.f32 %v7412, %v7413
  %v7415 = vsel %vm513, %v7337, 0.0
  %v7416 = vadd.f32 %v7414, %v7415
  %v7417 = vsel %vm513, %v7338, 0.0
  %v7418 = vadd.f32 %v7416, %v7417
  %v7419 = vsel %vm513, %v7339, 0.0
  %v7420 = vadd.f32 %v7418, %v7419
  %v7421 = vsel %vm513, %v7340, 0.0
  %v7422 = vadd.f32 %v7420, %v7421
  %v7423 = vsel %vm513, %v7341, 0.0
  %v7424 = vadd.f32 %v7422, %v7423
  %v7425 = vsel %vm513, %v7342, 0.0
  %v7426 = vadd.f32 %v7424, %v7425
  %v7427 = vsel %vm513, %v7343, 0.0
  %v7428 = vadd.f32 %v7426, %v7427
  %v7429 = vsel %vm513, %v7344, 0.0
  %v7430 = vadd.f32 %v7428, %v7429
  %v7431 = vsel %vm513, %v7345, 0.0
  %v7432 = vadd.f32 %v7430, %v7431
  %v7433 = vsel %vm513, %v7346, 0.0
  %v7434 = vadd.f32 %v7432, %v7433
  %v7435 = vsel %vm513, %v7347, 0.0
  %v7436 = vadd.f32 %v7434, %v7435
  %v7437 = vsel %vm513, %v7348, 0.0
  %v7438 = vadd.f32 %v7436, %v7437
  %v7439 = vsel %vm513, %v7349, 0.0
  %v7440 = vadd.f32 %v7438, %v7439
  %v7441 = vsel %vm513, %v7350, 0.0
  %v7442 = vadd.f32 %v7440, %v7441
  %v7443 = vsel %vm513, %v7351, 0.0
  %v7444 = vadd.f32 %v7442, %v7443
  %v7445 = vsel %vm513, %v7352, 0.0
  %v7446 = vadd.f32 %v7444, %v7445
  %v7447 = vsel %vm513, %v7353, 0.0
  %v7448 = vadd.f32 %v7446, %v7447
  %v7449 = vsel %vm513, %v7354, 0.0
  %v7450 = vadd.f32 %v7448, %v7449
  %v7451 = vsel %vm513, %v7355, 0.0
  %v7452 = vadd.f32 %v7450, %v7451
  %v7453 = vsel %vm513, %v7356, 0.0
  %v7454 = vadd.f32 %v7452, %v7453
  %v7455 = vsel %vm513, %v7357, 0.0
  %v7456 = vadd.f32 %v7454, %v7455
  %v7457 = vsel %vm513, %v7358, 0.0
  %v7458 = vadd.f32 %v7456, %v7457
  %v7459 = vsel %vm513, %v7359, 0.0
  %v7460 = vadd.f32 %v7458, %v7459
  %v7461 = vsel %vm513, %v7360, 0.0
  %v7462 = vadd.f32 %v7460, %v7461
  %v7463 = vsel %vm513, %v7361, 0.0
  %v7464 = vadd.f32 %v7462, %v7463
  %v7465 = vsel %vm513, %v7362, 0.0
  %v7466 = vadd.f32 %v7464, %v7465
  %v7467 = vsel %vm513, %v7363, 0.0
  %v7468 = vadd.f32 %v7466, %v7467
  %v7469 = vsel %vm513, %v7364, 0.0
  %v7470 = vadd.f32 %v7468, %v7469
  %v7471 = vsel %vm513, %v7365, 0.0
  %v7472 = vadd.f32 %v7470, %v7471
  %v7473 = vsel %vm513, %v7366, 0.0
  %v7474 = vadd.f32 %v7472, %v7473
  %v7475 = vsel %vm513, %v7367, 0.0
  %v7476 = vadd.f32 %v7474, %v7475
  %v7477 = vsel %vm513, %v7368, 0.0
  %v7478 = vadd.f32 %v7476, %v7477
  %v7479 = vsel %vm513, %v7369, 0.0
  %v7480 = vadd.f32 %v7478, %v7479
  %v7481 = vsel %vm513, %v7370, 0.0
  %v7482 = vadd.f32 %v7480, %v7481
  %v7483 = vsel %vm513, %v7371, 0.0
  %v7484 = vadd.f32 %v7482, %v7483
  %v7485 = vsel %vm513, %v7372, 0.0
  %v7486 = vadd.f32 %v7484, %v7485
  %v7487 = vsel %vm513, %v7373, 0.0
  %v7488 = vadd.f32 %v7486, %v7487
  %v7489 = vsel %vm513, %v7374, 0.0
  %v7490 = vadd.f32 %v7488, %v7489
  %v7491 = vsel %vm513, %v7375, 0.0
  %v7492 = vadd.f32 %v7490, %v7491
  %v7493 = vsel %vm513, %v7376, 0.0
  %v7494 = vadd.f32 %v7492, %v7493
  %v7495 = vsel %vm513, %v7377, 0.0
  %v7496 = vadd.f32 %v7494, %v7495
  %v7497 = vsel %vm513, %v7378, 0.0
  %v7498 = vadd.f32 %v7496, %v7497
  %v7499 = vsel %vm513, %v7379, 0.0
  %v7500 = vadd.f32 %v7498, %v7499
  %v7501 = vsel %vm513, %v7380, 0.0
  %v7502 = vadd.f32 %v7500, %v7501
  %v7503 = vsel %vm513, %v7381, 0.0
  %v7504 = vadd.f32 %v7502, %v7503
  %v7505 = vsel %vm513, %v7382, 0.0
  %v7506 = vadd.f32 %v7504, %v7505
  %v7507 = vsel %vm513, %v7383, 0.0
  %v7508 = vadd.f32 %v7506, %v7507
  %v7509 = vsel %vm513, %v7384, 0.0
  %v7510 = vadd.f32 %v7508, %v7509
  %v7511 = vsel %vm513, %v7385, 0.0
  %v7512 = vadd.f32 %v7510, %v7511
  %v7513 = vsel %vm513, %v7386, 0.0
  %v7514 = vadd.f32 %v7512, %v7513
  %v7515 = vsel %vm513, %v7387, 0.0
  %v7516 = vadd.f32 %v7514, %v7515
  %v7517 = vrot.slane %v7516, 4
  %v7518 = vadd.f32 %v7516, %v7517
  %v7519 = vrot.slane %v7518, 2
  %v7520 = vadd.f32 %v7518, %v7519
  %v7521 = vrot.slane %v7520, 1
  %v7522 = vadd.f32 %v7520, %v7521
  %v7523 = vmul.f32 %v7522, 0.001953125
  %v7524 = vmul.f32 %v7324, %v7324
  %v7525 = vmul.f32 %v7325, %v7325
  %v7526 = vmul.f32 %v7326, %v7326
  %v7527 = vmul.f32 %v7327, %v7327
  %v7528 = vmul.f32 %v7328, %v7328
  %v7529 = vmul.f32 %v7329, %v7329
  %v7530 = vmul.f32 %v7330, %v7330
  %v7531 = vmul.f32 %v7331, %v7331
  %v7532 = vmul.f32 %v7332, %v7332
  %v7533 = vmul.f32 %v7333, %v7333
  %v7534 = vmul.f32 %v7334, %v7334
  %v7535 = vmul.f32 %v7335, %v7335
  %v7536 = vmul.f32 %v7336, %v7336
  %v7537 = vmul.f32 %v7337, %v7337
  %v7538 = vmul.f32 %v7338, %v7338
  %v7539 = vmul.f32 %v7339, %v7339
  %v7540 = vmul.f32 %v7340, %v7340
  %v7541 = vmul.f32 %v7341, %v7341
  %v7542 = vmul.f32 %v7342, %v7342
  %v7543 = vmul.f32 %v7343, %v7343
  %v7544 = vmul.f32 %v7344, %v7344
  %v7545 = vmul.f32 %v7345, %v7345
  %v7546 = vmul.f32 %v7346, %v7346
  %v7547 = vmul.f32 %v7347, %v7347
  %v7548 = vmul.f32 %v7348, %v7348
  %v7549 = vmul.f32 %v7349, %v7349
  %v7550 = vmul.f32 %v7350, %v7350
  %v7551 = vmul.f32 %v7351, %v7351
  %v7552 = vmul.f32 %v7352, %v7352
  %v7553 = vmul.f32 %v7353, %v7353
  %v7554 = vmul.f32 %v7354, %v7354
  %v7555 = vmul.f32 %v7355, %v7355
  %v7556 = vmul.f32 %v7356, %v7356
  %v7557 = vmul.f32 %v7357, %v7357
  %v7558 = vmul.f32 %v7358, %v7358
  %v7559 = vmul.f32 %v7359, %v7359
  %v7560 = vmul.f32 %v7360, %v7360
  %v7561 = vmul.f32 %v7361, %v7361
  %v7562 = vmul.f32 %v7362, %v7362
  %v7563 = vmul.f32 %v7363, %v7363
  %v7564 = vmul.f32 %v7364, %v7364
  %v7565 = vmul.f32 %v7365, %v7365
  %v7566 = vmul.f32 %v7366, %v7366
  %v7567 = vmul.f32 %v7367, %v7367
  %v7568 = vmul.f32 %v7368, %v7368
  %v7569 = vmul.f32 %v7369, %v7369
  %v7570 = vmul.f32 %v7370, %v7370
  %v7571 = vmul.f32 %v7371, %v7371
  %v7572 = vmul.f32 %v7372, %v7372
  %v7573 = vmul.f32 %v7373, %v7373
  %v7574 = vmul.f32 %v7374, %v7374
  %v7575 = vmul.f32 %v7375, %v7375
  %v7576 = vmul.f32 %v7376, %v7376
  %v7577 = vmul.f32 %v7377, %v7377
  %v7578 = vmul.f32 %v7378, %v7378
  %v7579 = vmul.f32 %v7379, %v7379
  %v7580 = vmul.f32 %v7380, %v7380
  %v7581 = vmul.f32 %v7381, %v7381
  %v7582 = vmul.f32 %v7382, %v7382
  %v7583 = vmul.f32 %v7383, %v7383
  %v7584 = vmul.f32 %v7384, %v7384
  %v7585 = vmul.f32 %v7385, %v7385
  %v7586 = vmul.f32 %v7386, %v7386
  %v7587 = vmul.f32 %v7387, %v7387
  %v7588 = vsel %vm513, %v7524, 0.0
  %v7589 = vsel %vm513, %v7525, 0.0
  %v7590 = vadd.f32 %v7588, %v7589
  %v7591 = vsel %vm513, %v7526, 0.0
  %v7592 = vadd.f32 %v7590, %v7591
  %v7593 = vsel %vm513, %v7527, 0.0
  %v7594 = vadd.f32 %v7592, %v7593
  %v7595 = vsel %vm513, %v7528, 0.0
  %v7596 = vadd.f32 %v7594, %v7595
  %v7597 = vsel %vm513, %v7529, 0.0
  %v7598 = vadd.f32 %v7596, %v7597
  %v7599 = vsel %vm513, %v7530, 0.0
  %v7600 = vadd.f32 %v7598, %v7599
  %v7601 = vsel %vm513, %v7531, 0.0
  %v7602 = vadd.f32 %v7600, %v7601
  %v7603 = vsel %vm513, %v7532, 0.0
  %v7604 = vadd.f32 %v7602, %v7603
  %v7605 = vsel %vm513, %v7533, 0.0
  %v7606 = vadd.f32 %v7604, %v7605
  %v7607 = vsel %vm513, %v7534, 0.0
  %v7608 = vadd.f32 %v7606, %v7607
  %v7609 = vsel %vm513, %v7535, 0.0
  %v7610 = vadd.f32 %v7608, %v7609
  %v7611 = vsel %vm513, %v7536, 0.0
  %v7612 = vadd.f32 %v7610, %v7611
  %v7613 = vsel %vm513, %v7537, 0.0
  %v7614 = vadd.f32 %v7612, %v7613
  %v7615 = vsel %vm513, %v7538, 0.0
  %v7616 = vadd.f32 %v7614, %v7615
  %v7617 = vsel %vm513, %v7539, 0.0
  %v7618 = vadd.f32 %v7616, %v7617
  %v7619 = vsel %vm513, %v7540, 0.0
  %v7620 = vadd.f32 %v7618, %v7619
  %v7621 = vsel %vm513, %v7541, 0.0
  %v7622 = vadd.f32 %v7620, %v7621
  %v7623 = vsel %vm513, %v7542, 0.0
  %v7624 = vadd.f32 %v7622, %v7623
  %v7625 = vsel %vm513, %v7543, 0.0
  %v7626 = vadd.f32 %v7624, %v7625
  %v7627 = vsel %vm513, %v7544, 0.0
  %v7628 = vadd.f32 %v7626, %v7627
  %v7629 = vsel %vm513, %v7545, 0.0
  %v7630 = vadd.f32 %v7628, %v7629
  %v7631 = vsel %vm513, %v7546, 0.0
  %v7632 = vadd.f32 %v7630, %v7631
  %v7633 = vsel %vm513, %v7547, 0.0
  %v7634 = vadd.f32 %v7632, %v7633
  %v7635 = vsel %vm513, %v7548, 0.0
  %v7636 = vadd.f32 %v7634, %v7635
  %v7637 = vsel %vm513, %v7549, 0.0
  %v7638 = vadd.f32 %v7636, %v7637
  %v7639 = vsel %vm513, %v7550, 0.0
  %v7640 = vadd.f32 %v7638, %v7639
  %v7641 = vsel %vm513, %v7551, 0.0
  %v7642 = vadd.f32 %v7640, %v7641
  %v7643 = vsel %vm513, %v7552, 0.0
  %v7644 = vadd.f32 %v7642, %v7643
  %v7645 = vsel %vm513, %v7553, 0.0
  %v7646 = vadd.f32 %v7644, %v7645
  %v7647 = vsel %vm513, %v7554, 0.0
  %v7648 = vadd.f32 %v7646, %v7647
  %v7649 = vsel %vm513, %v7555, 0.0
  %v7650 = vadd.f32 %v7648, %v7649
  %v7651 = vsel %vm513, %v7556, 0.0
  %v7652 = vadd.f32 %v7650, %v7651
  %v7653 = vsel %vm513, %v7557, 0.0
  %v7654 = vadd.f32 %v7652, %v7653
  %v7655 = vsel %vm513, %v7558, 0.0
  %v7656 = vadd.f32 %v7654, %v7655
  %v7657 = vsel %vm513, %v7559, 0.0
  %v7658 = vadd.f32 %v7656, %v7657
  %v7659 = vsel %vm513, %v7560, 0.0
  %v7660 = vadd.f32 %v7658, %v7659
  %v7661 = vsel %vm513, %v7561, 0.0
  %v7662 = vadd.f32 %v7660, %v7661
  %v7663 = vsel %vm513, %v7562, 0.0
  %v7664 = vadd.f32 %v7662, %v7663
  %v7665 = vsel %vm513, %v7563, 0.0
  %v7666 = vadd.f32 %v7664, %v7665
  %v7667 = vsel %vm513, %v7564, 0.0
  %v7668 = vadd.f32 %v7666, %v7667
  %v7669 = vsel %vm513, %v7565, 0.0
  %v7670 = vadd.f32 %v7668, %v7669
  %v7671 = vsel %vm513, %v7566, 0.0
  %v7672 = vadd.f32 %v7670, %v7671
  %v7673 = vsel %vm513, %v7567, 0.0
  %v7674 = vadd.f32 %v7672, %v7673
  %v7675 = vsel %vm513, %v7568, 0.0
  %v7676 = vadd.f32 %v7674, %v7675
  %v7677 = vsel %vm513, %v7569, 0.0
  %v7678 = vadd.f32 %v7676, %v7677
  %v7679 = vsel %vm513, %v7570, 0.0
  %v7680 = vadd.f32 %v7678, %v7679
  %v7681 = vsel %vm513, %v7571, 0.0
  %v7682 = vadd.f32 %v7680, %v7681
  %v7683 = vsel %vm513, %v7572, 0.0
  %v7684 = vadd.f32 %v7682, %v7683
  %v7685 = vsel %vm513, %v7573, 0.0
  %v7686 = vadd.f32 %v7684, %v7685
  %v7687 = vsel %vm513, %v7574, 0.0
  %v7688 = vadd.f32 %v7686, %v7687
  %v7689 = vsel %vm513, %v7575, 0.0
  %v7690 = vadd.f32 %v7688, %v7689
  %v7691 = vsel %vm513, %v7576, 0.0
  %v7692 = vadd.f32 %v7690, %v7691
  %v7693 = vsel %vm513, %v7577, 0.0
  %v7694 = vadd.f32 %v7692, %v7693
  %v7695 = vsel %vm513, %v7578, 0.0
  %v7696 = vadd.f32 %v7694, %v7695
  %v7697 = vsel %vm513, %v7579, 0.0
  %v7698 = vadd.f32 %v7696, %v7697
  %v7699 = vsel %vm513, %v7580, 0.0
  %v7700 = vadd.f32 %v7698, %v7699
  %v7701 = vsel %vm513, %v7581, 0.0
  %v7702 = vadd.f32 %v7700, %v7701
  %v7703 = vsel %vm513, %v7582, 0.0
  %v7704 = vadd.f32 %v7702, %v7703
  %v7705 = vsel %vm513, %v7583, 0.0
  %v7706 = vadd.f32 %v7704, %v7705
  %v7707 = vsel %vm513, %v7584, 0.0
  %v7708 = vadd.f32 %v7706, %v7707
  %v7709 = vsel %vm513, %v7585, 0.0
  %v7710 = vadd.f32 %v7708, %v7709
  %v7711 = vsel %vm513, %v7586, 0.0
  %v7712 = vadd.f32 %v7710, %v7711
  %v7713 = vsel %vm513, %v7587, 0.0
  %v7714 = vadd.f32 %v7712, %v7713
  %v7715 = vrot.slane %v7714, 4
  %v7716 = vadd.f32 %v7714, %v7715
  %v7717 = vrot.slane %v7716, 2
  %v7718 = vadd.f32 %v7716, %v7717
  %v7719 = vrot.slane %v7718, 1
  %v7720 = vadd.f32 %v7718, %v7719
  %v7721 = vmul.f32 %v7720, 0.001953125
  %v7722 = vmul.f32 %v7523, %v7523
  %v7723 = vsub.f32 %v7721, %v7722
  %v7724 = vmax.f32 %v7723, 0.0
  %v7725 = vsub.f32 %v7324, %v7523
  %v7726 = vsub.f32 %v7325, %v7523
  %v7727 = vsub.f32 %v7326, %v7523
  %v7728 = vsub.f32 %v7327, %v7523
  %v7729 = vsub.f32 %v7328, %v7523
  %v7730 = vsub.f32 %v7329, %v7523
  %v7731 = vsub.f32 %v7330, %v7523
  %v7732 = vsub.f32 %v7331, %v7523
  %v7733 = vsub.f32 %v7332, %v7523
  %v7734 = vsub.f32 %v7333, %v7523
  %v7735 = vsub.f32 %v7334, %v7523
  %v7736 = vsub.f32 %v7335, %v7523
  %v7737 = vsub.f32 %v7336, %v7523
  %v7738 = vsub.f32 %v7337, %v7523
  %v7739 = vsub.f32 %v7338, %v7523
  %v7740 = vsub.f32 %v7339, %v7523
  %v7741 = vsub.f32 %v7340, %v7523
  %v7742 = vsub.f32 %v7341, %v7523
  %v7743 = vsub.f32 %v7342, %v7523
  %v7744 = vsub.f32 %v7343, %v7523
  %v7745 = vsub.f32 %v7344, %v7523
  %v7746 = vsub.f32 %v7345, %v7523
  %v7747 = vsub.f32 %v7346, %v7523
  %v7748 = vsub.f32 %v7347, %v7523
  %v7749 = vsub.f32 %v7348, %v7523
  %v7750 = vsub.f32 %v7349, %v7523
  %v7751 = vsub.f32 %v7350, %v7523
  %v7752 = vsub.f32 %v7351, %v7523
  %v7753 = vsub.f32 %v7352, %v7523
  %v7754 = vsub.f32 %v7353, %v7523
  %v7755 = vsub.f32 %v7354, %v7523
  %v7756 = vsub.f32 %v7355, %v7523
  %v7757 = vsub.f32 %v7356, %v7523
  %v7758 = vsub.f32 %v7357, %v7523
  %v7759 = vsub.f32 %v7358, %v7523
  %v7760 = vsub.f32 %v7359, %v7523
  %v7761 = vsub.f32 %v7360, %v7523
  %v7762 = vsub.f32 %v7361, %v7523
  %v7763 = vsub.f32 %v7362, %v7523
  %v7764 = vsub.f32 %v7363, %v7523
  %v7765 = vsub.f32 %v7364, %v7523
  %v7766 = vsub.f32 %v7365, %v7523
  %v7767 = vsub.f32 %v7366, %v7523
  %v7768 = vsub.f32 %v7367, %v7523
  %v7769 = vsub.f32 %v7368, %v7523
  %v7770 = vsub.f32 %v7369, %v7523
  %v7771 = vsub.f32 %v7370, %v7523
  %v7772 = vsub.f32 %v7371, %v7523
  %v7773 = vsub.f32 %v7372, %v7523
  %v7774 = vsub.f32 %v7373, %v7523
  %v7775 = vsub.f32 %v7374, %v7523
  %v7776 = vsub.f32 %v7375, %v7523
  %v7777 = vsub.f32 %v7376, %v7523
  %v7778 = vsub.f32 %v7377, %v7523
  %v7779 = vsub.f32 %v7378, %v7523
  %v7780 = vsub.f32 %v7379, %v7523
  %v7781 = vsub.f32 %v7380, %v7523
  %v7782 = vsub.f32 %v7381, %v7523
  %v7783 = vsub.f32 %v7382, %v7523
  %v7784 = vsub.f32 %v7383, %v7523
  %v7785 = vsub.f32 %v7384, %v7523
  %v7786 = vsub.f32 %v7385, %v7523
  %v7787 = vsub.f32 %v7386, %v7523
  %v7788 = vsub.f32 %v7387, %v7523
  %v7789 = vadd.f32 %v7724, 1e-05
  %v7790 = vrsqrt.pop %v7789
  %v7791 = vmul.f32 %v7790, %v7789
  %v7792 = vmul.f32 %v7791, %v7790
  %v7793 = vmul.f32 0.5, %v7792
  %v7794 = vsub.f32 1.5, %v7793
  %v7795 = vmul.f32 %v7790, %v7794
  %vm7796 = vweird.f32 %v7789
  %vm7797 = vweird.f32 %v7790
  %vm7798 = vmor %vm7796, %vm7797
  %v7799 = vsel %vm7798, %v7790, %v7795
  %v7800 = vmul.f32 %v7725, %v7799
  %v7801 = vmul.f32 %v7726, %v7799
  %v7802 = vmul.f32 %v7727, %v7799
  %v7803 = vmul.f32 %v7728, %v7799
  %v7804 = vmul.f32 %v7729, %v7799
  %v7805 = vmul.f32 %v7730, %v7799
  %v7806 = vmul.f32 %v7731, %v7799
  %v7807 = vmul.f32 %v7732, %v7799
  %v7808 = vmul.f32 %v7733, %v7799
  %v7809 = vmul.f32 %v7734, %v7799
  %v7810 = vmul.f32 %v7735, %v7799
  %v7811 = vmul.f32 %v7736, %v7799
  %v7812 = vmul.f32 %v7737, %v7799
  %v7813 = vmul.f32 %v7738, %v7799
  %v7814 = vmul.f32 %v7739, %v7799
  %v7815 = vmul.f32 %v7740, %v7799
  %v7816 = vmul.f32 %v7741, %v7799
  %v7817 = vmul.f32 %v7742, %v7799
  %v7818 = vmul.f32 %v7743, %v7799
  %v7819 = vmul.f32 %v7744, %v7799
  %v7820 = vmul.f32 %v7745, %v7799
  %v7821 = vmul.f32 %v7746, %v7799
  %v7822 = vmul.f32 %v7747, %v7799
  %v7823 = vmul.f32 %v7748, %v7799
  %v7824 = vmul.f32 %v7749, %v7799
  %v7825 = vmul.f32 %v7750, %v7799
  %v7826 = vmul.f32 %v7751, %v7799
  %v7827 = vmul.f32 %v7752, %v7799
  %v7828 = vmul.f32 %v7753, %v7799
  %v7829 = vmul.f32 %v7754, %v7799
  %v7830 = vmul.f32 %v7755, %v7799
  %v7831 = vmul.f32 %v7756, %v7799
  %v7832 = vmul.f32 %v7757, %v7799
  %v7833 = vmul.f32 %v7758, %v7799
  %v7834 = vmul.f32 %v7759, %v7799
  %v7835 = vmul.f32 %v7760, %v7799
  %v7836 = vmul.f32 %v7761, %v7799
  %v7837 = vmul.f32 %v7762, %v7799
  %v7838 = vmul.f32 %v7763, %v7799
  %v7839 = vmul.f32 %v7764, %v7799
  %v7840 = vmul.f32 %v7765, %v7799
  %v7841 = vmul.f32 %v7766, %v7799
  %v7842 = vmul.f32 %v7767, %v7799
  %v7843 = vmul.f32 %v7768, %v7799
  %v7844 = vmul.f32 %v7769, %v7799
  %v7845 = vmul.f32 %v7770, %v7799
  %v7846 = vmul.f32 %v7771, %v7799
  %v7847 = vmul.f32 %v7772, %v7799
  %v7848 = vmul.f32 %v7773, %v7799
  %v7849 = vmul.f32 %v7774, %v7799
  %v7850 = vmul.f32 %v7775, %v7799
  %v7851 = vmul.f32 %v7776, %v7799
  %v7852 = vmul.f32 %v7777, %v7799
  %v7853 = vmul.f32 %v7778, %v7799
  %v7854 = vmul.f32 %v7779, %v7799
  %v7855 = vmul.f32 %v7780, %v7799
  %v7856 = vmul.f32 %v7781, %v7799
  %v7857 = vmul.f32 %v7782, %v7799
  %v7858 = vmul.f32 %v7783, %v7799
  %v7859 = vmul.f32 %v7784, %v7799
  %v7860 = vmul.f32 %v7785, %v7799
  %v7861 = vmul.f32 %v7786, %v7799
  %v7862 = vmul.f32 %v7787, %v7799
  %v7863 = vmul.f32 %v7788, %v7799
  %v7865 = vperm.slane %v7388, 0
  %v7867 = vmul.f32 %v7800, %v7865
  %v7868 = vmul.f32 %v7801, %v7865
  %v7869 = vmul.f32 %v7802, %v7865
  %v7870 = vmul.f32 %v7803, %v7865
  %v7871 = vmul.f32 %v7804, %v7865
  %v7872 = vmul.f32 %v7805, %v7865
  %v7873 = vmul.f32 %v7806, %v7865
  %v7874 = vmul.f32 %v7807, %v7865
  %v7875 = vmul.f32 %v7808, %v7865
  %v7876 = vmul.f32 %v7809, %v7865
  %v7877 = vmul.f32 %v7810, %v7865
  %v7878 = vmul.f32 %v7811, %v7865
  %v7879 = vmul.f32 %v7812, %v7865
  %v7880 = vmul.f32 %v7813, %v7865
  %v7881 = vmul.f32 %v7814, %v7865
  %v7882 = vmul.f32 %v7815, %v7865
  %v7883 = vmul.f32 %v7816, %v7865
  %v7884 = vmul.f32 %v7817, %v7865
  %v7885 = vmul.f32 %v7818, %v7865
  %v7886 = vmul.f32 %v7819, %v7865
  %v7887 = vmul.f32 %v7820, %v7865
  %v7888 = vmul.f32 %v7821, %v7865
  %v7889 = vmul.f32 %v7822, %v7865
  %v7890 = vmul.f32 %v7823, %v7865
  %v7891 = vmul.f32 %v7824, %v7865
  %v7892 = vmul.f32 %v7825, %v7865
  %v7893 = vmul.f32 %v7826, %v7865
  %v7894 = vmul.f32 %v7827, %v7865
  %v7895 = vmul.f32 %v7828, %v7865
  %v7896 = vmul.f32 %v7829, %v7865
  %v7897 = vmul.f32 %v7830, %v7865
  %v7898 = vmul.f32 %v7831, %v7865
  %v7899 = vmul.f32 %v7832, %v7865
  %v7900 = vmul.f32 %v7833, %v7865
  %v7901 = vmul.f32 %v7834, %v7865
  %v7902 = vmul.f32 %v7835, %v7865
  %v7903 = vmul.f32 %v7836, %v7865
  %v7904 = vmul.f32 %v7837, %v7865
  %v7905 = vmul.f32 %v7838, %v7865
  %v7906 = vmul.f32 %v7839, %v7865
  %v7907 = vmul.f32 %v7840, %v7865
  %v7908 = vmul.f32 %v7841, %v7865
  %v7909 = vmul.f32 %v7842, %v7865
  %v7910 = vmul.f32 %v7843, %v7865
  %v7911 = vmul.f32 %v7844, %v7865
  %v7912 = vmul.f32 %v7845, %v7865
  %v7913 = vmul.f32 %v7846, %v7865
  %v7914 = vmul.f32 %v7847, %v7865
  %v7915 = vmul.f32 %v7848, %v7865
  %v7916 = vmul.f32 %v7849, %v7865
  %v7917 = vmul.f32 %v7850, %v7865
  %v7918 = vmul.f32 %v7851, %v7865
  %v7919 = vmul.f32 %v7852, %v7865
  %v7920 = vmul.f32 %v7853, %v7865
  %v7921 = vmul.f32 %v7854, %v7865
  %v7922 = vmul.f32 %v7855, %v7865
  %v7923 = vmul.f32 %v7856, %v7865
  %v7924 = vmul.f32 %v7857, %v7865
  %v7925 = vmul.f32 %v7858, %v7865
  %v7926 = vmul.f32 %v7859, %v7865
  %v7927 = vmul.f32 %v7860, %v7865
  %v7928 = vmul.f32 %v7861, %v7865
  %v7929 = vmul.f32 %v7862, %v7865
  %v7930 = vmul.f32 %v7863, %v7865
  %v7932 = vperm.slane %v7389, 0
  %v7934 = vadd.f32 %v7867, %v7932
  %v7935 = vadd.f32 %v7868, %v7932
  %v7936 = vadd.f32 %v7869, %v7932
  %v7937 = vadd.f32 %v7870, %v7932
  %v7938 = vadd.f32 %v7871, %v7932
  %v7939 = vadd.f32 %v7872, %v7932
  %v7940 = vadd.f32 %v7873, %v7932
  %v7941 = vadd.f32 %v7874, %v7932
  %v7942 = vadd.f32 %v7875, %v7932
  %v7943 = vadd.f32 %v7876, %v7932
  %v7944 = vadd.f32 %v7877, %v7932
  %v7945 = vadd.f32 %v7878, %v7932
  %v7946 = vadd.f32 %v7879, %v7932
  %v7947 = vadd.f32 %v7880, %v7932
  %v7948 = vadd.f32 %v7881, %v7932
  %v7949 = vadd.f32 %v7882, %v7932
  %v7950 = vadd.f32 %v7883, %v7932
  %v7951 = vadd.f32 %v7884, %v7932
  %v7952 = vadd.f32 %v7885, %v7932
  %v7953 = vadd.f32 %v7886, %v7932
  %v7954 = vadd.f32 %v7887, %v7932
  %v7955 = vadd.f32 %v7888, %v7932
  %v7956 = vadd.f32 %v7889, %v7932
  %v7957 = vadd.f32 %v7890, %v7932
  %v7958 = vadd.f32 %v7891, %v7932
  %v7959 = vadd.f32 %v7892, %v7932
  %v7960 = vadd.f32 %v7893, %v7932
  %v7961 = vadd.f32 %v7894, %v7932
  %v7962 = vadd.f32 %v7895, %v7932
  %v7963 = vadd.f32 %v7896, %v7932
  %v7964 = vadd.f32 %v7897, %v7932
  %v7965 = vadd.f32 %v7898, %v7932
  %v7966 = vadd.f32 %v7899, %v7932
  %v7967 = vadd.f32 %v7900, %v7932
  %v7968 = vadd.f32 %v7901, %v7932
  %v7969 = vadd.f32 %v7902, %v7932
  %v7970 = vadd.f32 %v7903, %v7932
  %v7971 = vadd.f32 %v7904, %v7932
  %v7972 = vadd.f32 %v7905, %v7932
  %v7973 = vadd.f32 %v7906, %v7932
  %v7974 = vadd.f32 %v7907, %v7932
  %v7975 = vadd.f32 %v7908, %v7932
  %v7976 = vadd.f32 %v7909, %v7932
  %v7977 = vadd.f32 %v7910, %v7932
  %v7978 = vadd.f32 %v7911, %v7932
  %v7979 = vadd.f32 %v7912, %v7932
  %v7980 = vadd.f32 %v7913, %v7932
  %v7981 = vadd.f32 %v7914, %v7932
  %v7982 = vadd.f32 %v7915, %v7932
  %v7983 = vadd.f32 %v7916, %v7932
  %v7984 = vadd.f32 %v7917, %v7932
  %v7985 = vadd.f32 %v7918, %v7932
  %v7986 = vadd.f32 %v7919, %v7932
  %v7987 = vadd.f32 %v7920, %v7932
  %v7988 = vadd.f32 %v7921, %v7932
  %v7989 = vadd.f32 %v7922, %v7932
  %v7990 = vadd.f32 %v7923, %v7932
  %v7991 = vadd.f32 %v7924, %v7932
  %v7992 = vadd.f32 %v7925, %v7932
  %v7993 = vadd.f32 %v7926, %v7932
  %v7994 = vadd.f32 %v7927, %v7932
  %v7995 = vadd.f32 %v7928, %v7932
  %v7996 = vadd.f32 %v7929, %v7932
  %v7997 = vadd.f32 %v7930, %v7932
  %v7998 = vmul.f32 %v7934, 0.5
  %v7999 = vmul.f32 %v7935, 0.5
  %v8000 = vmul.f32 %v7936, 0.5
  %v8001 = vmul.f32 %v7937, 0.5
  %v8002 = vmul.f32 %v7938, 0.5
  %v8003 = vmul.f32 %v7939, 0.5
  %v8004 = vmul.f32 %v7940, 0.5
  %v8005 = vmul.f32 %v7941, 0.5
  %v8006 = vmul.f32 %v7942, 0.5
  %v8007 = vmul.f32 %v7943, 0.5
  %v8008 = vmul.f32 %v7944, 0.5
  %v8009 = vmul.f32 %v7945, 0.5
  %v8010 = vmul.f32 %v7946, 0.5
  %v8011 = vmul.f32 %v7947, 0.5
  %v8012 = vmul.f32 %v7948, 0.5
  %v8013 = vmul.f32 %v7949, 0.5
  %v8014 = vmul.f32 %v7950, 0.5
  %v8015 = vmul.f32 %v7951, 0.5
  %v8016 = vmul.f32 %v7952, 0.5
  %v8017 = vmul.f32 %v7953, 0.5
  %v8018 = vmul.f32 %v7954, 0.5
  %v8019 = vmul.f32 %v7955, 0.5
  %v8020 = vmul.f32 %v7956, 0.5
  %v8021 = vmul.f32 %v7957, 0.5
  %v8022 = vmul.f32 %v7958, 0.5
  %v8023 = vmul.f32 %v7959, 0.5
  %v8024 = vmul.f32 %v7960, 0.5
  %v8025 = vmul.f32 %v7961, 0.5
  %v8026 = vmul.f32 %v7962, 0.5
  %v8027 = vmul.f32 %v7963, 0.5
  %v8028 = vmul.f32 %v7964, 0.5
  %v8029 = vmul.f32 %v7965, 0.5
  %v8030 = vmul.f32 %v7966, 0.5
  %v8031 = vmul.f32 %v7967, 0.5
  %v8032 = vmul.f32 %v7968, 0.5
  %v8033 = vmul.f32 %v7969, 0.5
  %v8034 = vmul.f32 %v7970, 0.5
  %v8035 = vmul.f32 %v7971, 0.5
  %v8036 = vmul.f32 %v7972, 0.5
  %v8037 = vmul.f32 %v7973, 0.5
  %v8038 = vmul.f32 %v7974, 0.5
  %v8039 = vmul.f32 %v7975, 0.5
  %v8040 = vmul.f32 %v7976, 0.5
  %v8041 = vmul.f32 %v7977, 0.5
  %v8042 = vmul.f32 %v7978, 0.5
  %v8043 = vmul.f32 %v7979, 0.5
  %v8044 = vmul.f32 %v7980, 0.5
  %v8045 = vmul.f32 %v7981, 0.5
  %v8046 = vmul.f32 %v7982, 0.5
  %v8047 = vmul.f32 %v7983, 0.5
  %v8048 = vmul.f32 %v7984, 0.5
  %v8049 = vmul.f32 %v7985, 0.5
  %v8050 = vmul.f32 %v7986, 0.5
  %v8051 = vmul.f32 %v7987, 0.5
  %v8052 = vmul.f32 %v7988, 0.5
  %v8053 = vmul.f32 %v7989, 0.5
  %v8054 = vmul.f32 %v7990, 0.5
  %v8055 = vmul.f32 %v7991, 0.5
  %v8056 = vmul.f32 %v7992, 0.5
  %v8057 = vmul.f32 %v7993, 0.5
  %v8058 = vmul.f32 %v7994, 0.5
  %v8059 = vmul.f32 %v7995, 0.5
  %v8060 = vmul.f32 %v7996, 0.5
  %v8061 = vmul.f32 %v7997, 0.5
  %v8062 = vmul.f32 %v7934, 0.70710677
  %v8063 = vmul.f32 %v7935, 0.70710677
  %v8064 = vmul.f32 %v7936, 0.70710677
  %v8065 = vmul.f32 %v7937, 0.70710677
  %v8066 = vmul.f32 %v7938, 0.70710677
  %v8067 = vmul.f32 %v7939, 0.70710677
  %v8068 = vmul.f32 %v7940, 0.70710677
  %v8069 = vmul.f32 %v7941, 0.70710677
  %v8070 = vmul.f32 %v7942, 0.70710677
  %v8071 = vmul.f32 %v7943, 0.70710677
  %v8072 = vmul.f32 %v7944, 0.70710677
  %v8073 = vmul.f32 %v7945, 0.70710677
  %v8074 = vmul.f32 %v7946, 0.70710677
  %v8075 = vmul.f32 %v7947, 0.70710677
  %v8076 = vmul.f32 %v7948, 0.70710677
  %v8077 = vmul.f32 %v7949, 0.70710677
  %v8078 = vmul.f32 %v7950, 0.70710677
  %v8079 = vmul.f32 %v7951, 0.70710677
  %v8080 = vmul.f32 %v7952, 0.70710677
  %v8081 = vmul.f32 %v7953, 0.70710677
  %v8082 = vmul.f32 %v7954, 0.70710677
  %v8083 = vmul.f32 %v7955, 0.70710677
  %v8084 = vmul.f32 %v7956, 0.70710677
  %v8085 = vmul.f32 %v7957, 0.70710677
  %v8086 = vmul.f32 %v7958, 0.70710677
  %v8087 = vmul.f32 %v7959, 0.70710677
  %v8088 = vmul.f32 %v7960, 0.70710677
  %v8089 = vmul.f32 %v7961, 0.70710677
  %v8090 = vmul.f32 %v7962, 0.70710677
  %v8091 = vmul.f32 %v7963, 0.70710677
  %v8092 = vmul.f32 %v7964, 0.70710677
  %v8093 = vmul.f32 %v7965, 0.70710677
  %v8094 = vmul.f32 %v7966, 0.70710677
  %v8095 = vmul.f32 %v7967, 0.70710677
  %v8096 = vmul.f32 %v7968, 0.70710677
  %v8097 = vmul.f32 %v7969, 0.70710677
  %v8098 = vmul.f32 %v7970, 0.70710677
  %v8099 = vmul.f32 %v7971, 0.70710677
  %v8100 = vmul.f32 %v7972, 0.70710677
  %v8101 = vmul.f32 %v7973, 0.70710677
  %v8102 = vmul.f32 %v7974, 0.70710677
  %v8103 = vmul.f32 %v7975, 0.70710677
  %v8104 = vmul.f32 %v7976, 0.70710677
  %v8105 = vmul.f32 %v7977, 0.70710677
  %v8106 = vmul.f32 %v7978, 0.70710677
  %v8107 = vmul.f32 %v7979, 0.70710677
  %v8108 = vmul.f32 %v7980, 0.70710677
  %v8109 = vmul.f32 %v7981, 0.70710677
  %v8110 = vmul.f32 %v7982, 0.70710677
  %v8111 = vmul.f32 %v7983, 0.70710677
  %v8112 = vmul.f32 %v7984, 0.70710677
  %v8113 = vmul.f32 %v7985, 0.70710677
  %v8114 = vmul.f32 %v7986, 0.70710677
  %v8115 = vmul.f32 %v7987, 0.70710677
  %v8116 = vmul.f32 %v7988, 0.70710677
  %v8117 = vmul.f32 %v7989, 0.70710677
  %v8118 = vmul.f32 %v7990, 0.70710677
  %v8119 = vmul.f32 %v7991, 0.70710677
  %v8120 = vmul.f32 %v7992, 0.70710677
  %v8121 = vmul.f32 %v7993, 0.70710677
  %v8122 = vmul.f32 %v7994, 0.70710677
  %v8123 = vmul.f32 %v7995, 0.70710677
  %v8124 = vmul.f32 %v7996, 0.70710677
  %v8125 = vmul.f32 %v7997, 0.70710677
  %v8126 = vmul.f32 %v8062, %v8062
  %v8127 = vmin.f32 16.0, %v8126
  %v8128 = vmul.f32 %v8127, 2.1237322e-06
  %v8129 = vadd.f32 %v8128, 0.00028619796
  %v8130 = vmul.f32 %v8127, %v8129
  %v8131 = vadd.f32 %v8130, 0.0036580483
  %v8132 = vmul.f32 %v8127, %v8131
  %v8133 = vadd.f32 %v8132, 0.05243302
  %v8134 = vmul.f32 %v8127, %v8133
  %v8135 = vadd.f32 %v8134, 0.18741608
  %v8136 = vmul.f32 %v8127, %v8135
  %v8137 = vadd.f32 %v8136, 1.1283791
  %v8138 = vmul.f32 %v8062, %v8137
  %v8139 = vmul.f32 %v8127, 3.8918573e-05
  %v8140 = vadd.f32 %v8139, 0.001143296
  %v8141 = vmul.f32 %v8127, %v8140
  %v8142 = vadd.f32 %v8141, 0.014752088
  %v8143 = vmul.f32 %v8127, %v8142
  %v8144 = vadd.f32 %v8143, 0.112945676
  %v8145 = vmul.f32 %v8127, %v8144
  %v8146 = vadd.f32 %v8145, 0.4994258
  %v8147 = vmul.f32 %v8127, %v8146
  %v8148 = vadd.f32 %v8147, 1.0
  %v8149 = vrcp.pop %v8148
  %v8150 = vmul.f32 %v8148, %v8149
  %v8151 = vsub.f32 1.0, %v8150
  %v8152 = vmul.f32 %v8149, %v8151
  %v8153 = vadd.f32 %v8149, %v8152
  %vm8154 = vweird.f32 %v8148
  %vm8155 = vweird.f32 %v8149
  %vm8156 = vmor %vm8154, %vm8155
  %v8157 = vsel %vm8156, %v8149, %v8153
  %v8158 = vand.u32 2147483647, %v8148
  %vm8159 = vcmp.eq.f32.partialorder %v8158, 8.507059e+37
  %v8160 = vand.u32 %v8148, 2147483648
  %v8161 = vor.u32 1.1754944e-38, %v8160
  %v8162 = vsel %vm8159, %v8161, %v8157
  %v8163 = vmul.f32 %v8138, %v8162
  %v8164 = vmin.f32 %v8163, 1.0
  %v8165 = vmax.f32 %v8164, -1.0
  %v8166 = vmul.f32 %v8063, %v8063
  %v8167 = vmin.f32 16.0, %v8166
  %v8168 = vmul.f32 %v8167, 2.1237322e-06
  %v8169 = vadd.f32 %v8168, 0.00028619796
  %v8170 = vmul.f32 %v8167, %v8169
  %v8171 = vadd.f32 %v8170, 0.0036580483
  %v8172 = vmul.f32 %v8167, %v8171
  %v8173 = vadd.f32 %v8172, 0.05243302
  %v8174 = vmul.f32 %v8167, %v8173
  %v8175 = vadd.f32 %v8174, 0.18741608
  %v8176 = vmul.f32 %v8167, %v8175
  %v8177 = vadd.f32 %v8176, 1.1283791
  %v8178 = vmul.f32 %v8063, %v8177
  %v8179 = vmul.f32 %v8167, 3.8918573e-05
  %v8180 = vadd.f32 %v8179, 0.001143296
  %v8181 = vmul.f32 %v8167, %v8180
  %v8182 = vadd.f32 %v8181, 0.014752088
  %v8183 = vmul.f32 %v8167, %v8182
  %v8184 = vadd.f32 %v8183, 0.112945676
  %v8185 = vmul.f32 %v8167, %v8184
  %v8186 = vadd.f32 %v8185, 0.4994258
  %v8187 = vmul.f32 %v8167, %v8186
  %v8188 = vadd.f32 %v8187, 1.0
  %v8189 = vrcp.pop %v8188
  %v8190 = vmul.f32 %v8188, %v8189
  %v8191 = vsub.f32 1.0, %v8190
  %v8192 = vmul.f32 %v8189, %v8191
  %v8193 = vadd.f32 %v8189, %v8192
  %vm8194 = vweird.f32 %v8188
  %vm8195 = vweird.f32 %v8189
  %vm8196 = vmor %vm8194, %vm8195
  %v8197 = vsel %vm8196, %v8189, %v8193
  %v8198 = vand.u32 2147483647, %v8188
  %vm8199 = vcmp.eq.f32.partialorder %v8198, 8.507059e+37
  %v8200 = vand.u32 %v8188, 2147483648
  %v8201 = vor.u32 1.1754944e-38, %v8200
  %v8202 = vsel %vm8199, %v8201, %v8197
  %v8203 = vmul.f32 %v8178, %v8202
  %v8204 = vmin.f32 %v8203, 1.0
  %v8205 = vmax.f32 %v8204, -1.0
  %v8206 = vmul.f32 %v8064, %v8064
  %v8207 = vmin.f32 16.0, %v8206
  %v8208 = vmul.f32 %v8207, 2.1237322e-06
  %v8209 = vadd.f32 %v8208, 0.00028619796
  %v8210 = vmul.f32 %v8207, %v8209
  %v8211 = vadd.f32 %v8210, 0.0036580483
  %v8212 = vmul.f32 %v8207, %v8211
  %v8213 = vadd.f32 %v8212, 0.05243302
  %v8214 = vmul.f32 %v8207, %v8213
  %v8215 = vadd.f32 %v8214, 0.18741608
  %v8216 = vmul.f32 %v8207, %v8215
  %v8217 = vadd.f32 %v8216, 1.1283791
  %v8218 = vmul.f32 %v8064, %v8217
  %v8219 = vmul.f32 %v8207, 3.8918573e-05
  %v8220 = vadd.f32 %v8219, 0.001143296
  %v8221 = vmul.f32 %v8207, %v8220
  %v8222 = vadd.f32 %v8221, 0.014752088
  %v8223 = vmul.f32 %v8207, %v8222
  %v8224 = vadd.f32 %v8223, 0.112945676
  %v8225 = vmul.f32 %v8207, %v8224
  %v8226 = vadd.f32 %v8225, 0.4994258
  %v8227 = vmul.f32 %v8207, %v8226
  %v8228 = vadd.f32 %v8227, 1.0
  %v8229 = vrcp.pop %v8228
  %v8230 = vmul.f32 %v8228, %v8229
  %v8231 = vsub.f32 1.0, %v8230
  %v8232 = vmul.f32 %v8229, %v8231
  %v8233 = vadd.f32 %v8229, %v8232
  %vm8234 = vweird.f32 %v8228
  %vm8235 = vweird.f32 %v8229
  %vm8236 = vmor %vm8234, %vm8235
  %v8237 = vsel %vm8236, %v8229, %v8233
  %v8238 = vand.u32 2147483647, %v8228
  %vm8239 = vcmp.eq.f32.partialorder %v8238, 8.507059e+37
  %v8240 = vand.u32 %v8228, 2147483648
  %v8241 = vor.u32 1.1754944e-38, %v8240
  %v8242 = vsel %vm8239, %v8241, %v8237
  %v8243 = vmul.f32 %v8218, %v8242
  %v8244 = vmin.f32 %v8243, 1.0
  %v8245 = vmax.f32 %v8244, -1.0
  %v8246 = vmul.f32 %v8065, %v8065
  %v8247 = vmin.f32 16.0, %v8246
  %v8248 = vmul.f32 %v8247, 2.1237322e-06
  %v8249 = vadd.f32 %v8248, 0.00028619796
  %v8250 = vmul.f32 %v8247, %v8249
  %v8251 = vadd.f32 %v8250, 0.0036580483
  %v8252 = vmul.f32 %v8247, %v8251
  %v8253 = vadd.f32 %v8252, 0.05243302
  %v8254 = vmul.f32 %v8247, %v8253
  %v8255 = vadd.f32 %v8254, 0.18741608
  %v8256 = vmul.f32 %v8247, %v8255
  %v8257 = vadd.f32 %v8256, 1.1283791
  %v8258 = vmul.f32 %v8065, %v8257
  %v8259 = vmul.f32 %v8247, 3.8918573e-05
  %v8260 = vadd.f32 %v8259, 0.001143296
  %v8261 = vmul.f32 %v8247, %v8260
  %v8262 = vadd.f32 %v8261, 0.014752088
  %v8263 = vmul.f32 %v8247, %v8262
  %v8264 = vadd.f32 %v8263, 0.112945676
  %v8265 = vmul.f32 %v8247, %v8264
  %v8266 = vadd.f32 %v8265, 0.4994258
  %v8267 = vmul.f32 %v8247, %v8266
  %v8268 = vadd.f32 %v8267, 1.0
  %v8269 = vrcp.pop %v8268
  %v8270 = vmul.f32 %v8268, %v8269
  %v8271 = vsub.f32 1.0, %v8270
  %v8272 = vmul.f32 %v8269, %v8271
  %v8273 = vadd.f32 %v8269, %v8272
  %vm8274 = vweird.f32 %v8268
  %vm8275 = vweird.f32 %v8269
  %vm8276 = vmor %vm8274, %vm8275
  %v8277 = vsel %vm8276, %v8269, %v8273
  %v8278 = vand.u32 2147483647, %v8268
  %vm8279 = vcmp.eq.f32.partialorder %v8278, 8.507059e+37
  %v8280 = vand.u32 %v8268, 2147483648
  %v8281 = vor.u32 1.1754944e-38, %v8280
  %v8282 = vsel %vm8279, %v8281, %v8277
  %v8283 = vmul.f32 %v8258, %v8282
  %v8284 = vmin.f32 %v8283, 1.0
  %v8285 = vmax.f32 %v8284, -1.0
  %v8286 = vmul.f32 %v8066, %v8066
  %v8287 = vmin.f32 16.0, %v8286
  %v8288 = vmul.f32 %v8287, 2.1237322e-06
  %v8289 = vadd.f32 %v8288, 0.00028619796
  %v8290 = vmul.f32 %v8287, %v8289
  %v8291 = vadd.f32 %v8290, 0.0036580483
  %v8292 = vmul.f32 %v8287, %v8291
  %v8293 = vadd.f32 %v8292, 0.05243302
  %v8294 = vmul.f32 %v8287, %v8293
  %v8295 = vadd.f32 %v8294, 0.18741608
  %v8296 = vmul.f32 %v8287, %v8295
  %v8297 = vadd.f32 %v8296, 1.1283791
  %v8298 = vmul.f32 %v8066, %v8297
  %v8299 = vmul.f32 %v8287, 3.8918573e-05
  %v8300 = vadd.f32 %v8299, 0.001143296
  %v8301 = vmul.f32 %v8287, %v8300
  %v8302 = vadd.f32 %v8301, 0.014752088
  %v8303 = vmul.f32 %v8287, %v8302
  %v8304 = vadd.f32 %v8303, 0.112945676
  %v8305 = vmul.f32 %v8287, %v8304
  %v8306 = vadd.f32 %v8305, 0.4994258
  %v8307 = vmul.f32 %v8287, %v8306
  %v8308 = vadd.f32 %v8307, 1.0
  %v8309 = vrcp.pop %v8308
  %v8310 = vmul.f32 %v8308, %v8309
  %v8311 = vsub.f32 1.0, %v8310
  %v8312 = vmul.f32 %v8309, %v8311
  %v8313 = vadd.f32 %v8309, %v8312
  %vm8314 = vweird.f32 %v8308
  %vm8315 = vweird.f32 %v8309
  %vm8316 = vmor %vm8314, %vm8315
  %v8317 = vsel %vm8316, %v8309, %v8313
  %v8318 = vand.u32 2147483647, %v8308
  %vm8319 = vcmp.eq.f32.partialorder %v8318, 8.507059e+37
  %v8320 = vand.u32 %v8308, 2147483648
  %v8321 = vor.u32 1.1754944e-38, %v8320
  %v8322 = vsel %vm8319, %v8321, %v8317
  %v8323 = vmul.f32 %v8298, %v8322
  %v8324 = vmin.f32 %v8323, 1.0
  %v8325 = vmax.f32 %v8324, -1.0
  %v8326 = vmul.f32 %v8067, %v8067
  %v8327 = vmin.f32 16.0, %v8326
  %v8328 = vmul.f32 %v8327, 2.1237322e-06
  %v8329 = vadd.f32 %v8328, 0.00028619796
  %v8330 = vmul.f32 %v8327, %v8329
  %v8331 = vadd.f32 %v8330, 0.0036580483
  %v8332 = vmul.f32 %v8327, %v8331
  %v8333 = vadd.f32 %v8332, 0.05243302
  %v8334 = vmul.f32 %v8327, %v8333
  %v8335 = vadd.f32 %v8334, 0.18741608
  %v8336 = vmul.f32 %v8327, %v8335
  %v8337 = vadd.f32 %v8336, 1.1283791
  %v8338 = vmul.f32 %v8067, %v8337
  %v8339 = vmul.f32 %v8327, 3.8918573e-05
  %v8340 = vadd.f32 %v8339, 0.001143296
  %v8341 = vmul.f32 %v8327, %v8340
  %v8342 = vadd.f32 %v8341, 0.014752088
  %v8343 = vmul.f32 %v8327, %v8342
  %v8344 = vadd.f32 %v8343, 0.112945676
  %v8345 = vmul.f32 %v8327, %v8344
  %v8346 = vadd.f32 %v8345, 0.4994258
  %v8347 = vmul.f32 %v8327, %v8346
  %v8348 = vadd.f32 %v8347, 1.0
  %v8349 = vrcp.pop %v8348
  %v8350 = vmul.f32 %v8348, %v8349
  %v8351 = vsub.f32 1.0, %v8350
  %v8352 = vmul.f32 %v8349, %v8351
  %v8353 = vadd.f32 %v8349, %v8352
  %vm8354 = vweird.f32 %v8348
  %vm8355 = vweird.f32 %v8349
  %vm8356 = vmor %vm8354, %vm8355
  %v8357 = vsel %vm8356, %v8349, %v8353
  %v8358 = vand.u32 2147483647, %v8348
  %vm8359 = vcmp.eq.f32.partialorder %v8358, 8.507059e+37
  %v8360 = vand.u32 %v8348, 2147483648
  %v8361 = vor.u32 1.1754944e-38, %v8360
  %v8362 = vsel %vm8359, %v8361, %v8357
  %v8363 = vmul.f32 %v8338, %v8362
  %v8364 = vmin.f32 %v8363, 1.0
  %v8365 = vmax.f32 %v8364, -1.0
  %v8366 = vmul.f32 %v8068, %v8068
  %v8367 = vmin.f32 16.0, %v8366
  %v8368 = vmul.f32 %v8367, 2.1237322e-06
  %v8369 = vadd.f32 %v8368, 0.00028619796
  %v8370 = vmul.f32 %v8367, %v8369
  %v8371 = vadd.f32 %v8370, 0.0036580483
  %v8372 = vmul.f32 %v8367, %v8371
  %v8373 = vadd.f32 %v8372, 0.05243302
  %v8374 = vmul.f32 %v8367, %v8373
  %v8375 = vadd.f32 %v8374, 0.18741608
  %v8376 = vmul.f32 %v8367, %v8375
  %v8377 = vadd.f32 %v8376, 1.1283791
  %v8378 = vmul.f32 %v8068, %v8377
  %v8379 = vmul.f32 %v8367, 3.8918573e-05
  %v8380 = vadd.f32 %v8379, 0.001143296
  %v8381 = vmul.f32 %v8367, %v8380
  %v8382 = vadd.f32 %v8381, 0.014752088
  %v8383 = vmul.f32 %v8367, %v8382
  %v8384 = vadd.f32 %v8383, 0.112945676
  %v8385 = vmul.f32 %v8367, %v8384
  %v8386 = vadd.f32 %v8385, 0.4994258
  %v8387 = vmul.f32 %v8367, %v8386
  %v8388 = vadd.f32 %v8387, 1.0
  %v8389 = vrcp.pop %v8388
  %v8390 = vmul.f32 %v8388, %v8389
  %v8391 = vsub.f32 1.0, %v8390
  %v8392 = vmul.f32 %v8389, %v8391
  %v8393 = vadd.f32 %v8389, %v8392
  %vm8394 = vweird.f32 %v8388
  %vm8395 = vweird.f32 %v8389
  %vm8396 = vmor %vm8394, %vm8395
  %v8397 = vsel %vm8396, %v8389, %v8393
  %v8398 = vand.u32 2147483647, %v8388
  %vm8399 = vcmp.eq.f32.partialorder %v8398, 8.507059e+37
  %v8400 = vand.u32 %v8388, 2147483648
  %v8401 = vor.u32 1.1754944e-38, %v8400
  %v8402 = vsel %vm8399, %v8401, %v8397
  %v8403 = vmul.f32 %v8378, %v8402
  %v8404 = vmin.f32 %v8403, 1.0
  %v8405 = vmax.f32 %v8404, -1.0
  %v8406 = vmul.f32 %v8069, %v8069
  %v8407 = vmin.f32 16.0, %v8406
  %v8408 = vmul.f32 %v8407, 2.1237322e-06
  %v8409 = vadd.f32 %v8408, 0.00028619796
  %v8410 = vmul.f32 %v8407, %v8409
  %v8411 = vadd.f32 %v8410, 0.0036580483
  %v8412 = vmul.f32 %v8407, %v8411
  %v8413 = vadd.f32 %v8412, 0.05243302
  %v8414 = vmul.f32 %v8407, %v8413
  %v8415 = vadd.f32 %v8414, 0.18741608
  %v8416 = vmul.f32 %v8407, %v8415
  %v8417 = vadd.f32 %v8416, 1.1283791
  %v8418 = vmul.f32 %v8069, %v8417
  %v8419 = vmul.f32 %v8407, 3.8918573e-05
  %v8420 = vadd.f32 %v8419, 0.001143296
  %v8421 = vmul.f32 %v8407, %v8420
  %v8422 = vadd.f32 %v8421, 0.014752088
  %v8423 = vmul.f32 %v8407, %v8422
  %v8424 = vadd.f32 %v8423, 0.112945676
  %v8425 = vmul.f32 %v8407, %v8424
  %v8426 = vadd.f32 %v8425, 0.4994258
  %v8427 = vmul.f32 %v8407, %v8426
  %v8428 = vadd.f32 %v8427, 1.0
  %v8429 = vrcp.pop %v8428
  %v8430 = vmul.f32 %v8428, %v8429
  %v8431 = vsub.f32 1.0, %v8430
  %v8432 = vmul.f32 %v8429, %v8431
  %v8433 = vadd.f32 %v8429, %v8432
  %vm8434 = vweird.f32 %v8428
  %vm8435 = vweird.f32 %v8429
  %vm8436 = vmor %vm8434, %vm8435
  %v8437 = vsel %vm8436, %v8429, %v8433
  %v8438 = vand.u32 2147483647, %v8428
  %vm8439 = vcmp.eq.f32.partialorder %v8438, 8.507059e+37
  %v8440 = vand.u32 %v8428, 2147483648
  %v8441 = vor.u32 1.1754944e-38, %v8440
  %v8442 = vsel %vm8439, %v8441, %v8437
  %v8443 = vmul.f32 %v8418, %v8442
  %v8444 = vmin.f32 %v8443, 1.0
  %v8445 = vmax.f32 %v8444, -1.0
  %v8446 = vmul.f32 %v8070, %v8070
  %v8447 = vmin.f32 16.0, %v8446
  %v8448 = vmul.f32 %v8447, 2.1237322e-06
  %v8449 = vadd.f32 %v8448, 0.00028619796
  %v8450 = vmul.f32 %v8447, %v8449
  %v8451 = vadd.f32 %v8450, 0.0036580483
  %v8452 = vmul.f32 %v8447, %v8451
  %v8453 = vadd.f32 %v8452, 0.05243302
  %v8454 = vmul.f32 %v8447, %v8453
  %v8455 = vadd.f32 %v8454, 0.18741608
  %v8456 = vmul.f32 %v8447, %v8455
  %v8457 = vadd.f32 %v8456, 1.1283791
  %v8458 = vmul.f32 %v8070, %v8457
  %v8459 = vmul.f32 %v8447, 3.8918573e-05
  %v8460 = vadd.f32 %v8459, 0.001143296
  %v8461 = vmul.f32 %v8447, %v8460
  %v8462 = vadd.f32 %v8461, 0.014752088
  %v8463 = vmul.f32 %v8447, %v8462
  %v8464 = vadd.f32 %v8463, 0.112945676
  %v8465 = vmul.f32 %v8447, %v8464
  %v8466 = vadd.f32 %v8465, 0.4994258
  %v8467 = vmul.f32 %v8447, %v8466
  %v8468 = vadd.f32 %v8467, 1.0
  %v8469 = vrcp.pop %v8468
  %v8470 = vmul.f32 %v8468, %v8469
  %v8471 = vsub.f32 1.0, %v8470
  %v8472 = vmul.f32 %v8469, %v8471
  %v8473 = vadd.f32 %v8469, %v8472
  %vm8474 = vweird.f32 %v8468
  %vm8475 = vweird.f32 %v8469
  %vm8476 = vmor %vm8474, %vm8475
  %v8477 = vsel %vm8476, %v8469, %v8473
  %v8478 = vand.u32 2147483647, %v8468
  %vm8479 = vcmp.eq.f32.partialorder %v8478, 8.507059e+37
  %v8480 = vand.u32 %v8468, 2147483648
  %v8481 = vor.u32 1.1754944e-38, %v8480
  %v8482 = vsel %vm8479, %v8481, %v8477
  %v8483 = vmul.f32 %v8458, %v8482
  %v8484 = vmin.f32 %v8483, 1.0
  %v8485 = vmax.f32 %v8484, -1.0
  %v8486 = vmul.f32 %v8071, %v8071
  %v8487 = vmin.f32 16.0, %v8486
  %v8488 = vmul.f32 %v8487, 2.1237322e-06
  %v8489 = vadd.f32 %v8488, 0.00028619796
  %v8490 = vmul.f32 %v8487, %v8489
  %v8491 = vadd.f32 %v8490, 0.0036580483
  %v8492 = vmul.f32 %v8487, %v8491
  %v8493 = vadd.f32 %v8492, 0.05243302
  %v8494 = vmul.f32 %v8487, %v8493
  %v8495 = vadd.f32 %v8494, 0.18741608
  %v8496 = vmul.f32 %v8487, %v8495
  %v8497 = vadd.f32 %v8496, 1.1283791
  %v8498 = vmul.f32 %v8071, %v8497
  %v8499 = vmul.f32 %v8487, 3.8918573e-05
  %v8500 = vadd.f32 %v8499, 0.001143296
  %v8501 = vmul.f32 %v8487, %v8500
  %v8502 = vadd.f32 %v8501, 0.014752088
  %v8503 = vmul.f32 %v8487, %v8502
  %v8504 = vadd.f32 %v8503, 0.112945676
  %v8505 = vmul.f32 %v8487, %v8504
  %v8506 = vadd.f32 %v8505, 0.4994258
  %v8507 = vmul.f32 %v8487, %v8506
  %v8508 = vadd.f32 %v8507, 1.0
  %v8509 = vrcp.pop %v8508
  %v8510 = vmul.f32 %v8508, %v8509
  %v8511 = vsub.f32 1.0, %v8510
  %v8512 = vmul.f32 %v8509, %v8511
  %v8513 = vadd.f32 %v8509, %v8512
  %vm8514 = vweird.f32 %v8508
  %vm8515 = vweird.f32 %v8509
  %vm8516 = vmor %vm8514, %vm8515
  %v8517 = vsel %vm8516, %v8509, %v8513
  %v8518 = vand.u32 2147483647, %v8508
  %vm8519 = vcmp.eq.f32.partialorder %v8518, 8.507059e+37
  %v8520 = vand.u32 %v8508, 2147483648
  %v8521 = vor.u32 1.1754944e-38, %v8520
  %v8522 = vsel %vm8519, %v8521, %v8517
  %v8523 = vmul.f32 %v8498, %v8522
  %v8524 = vmin.f32 %v8523, 1.0
  %v8525 = vmax.f32 %v8524, -1.0
  %v8526 = vmul.f32 %v8072, %v8072
  %v8527 = vmin.f32 16.0, %v8526
  %v8528 = vmul.f32 %v8527, 2.1237322e-06
  %v8529 = vadd.f32 %v8528, 0.00028619796
  %v8530 = vmul.f32 %v8527, %v8529
  %v8531 = vadd.f32 %v8530, 0.0036580483
  %v8532 = vmul.f32 %v8527, %v8531
  %v8533 = vadd.f32 %v8532, 0.05243302
  %v8534 = vmul.f32 %v8527, %v8533
  %v8535 = vadd.f32 %v8534, 0.18741608
  %v8536 = vmul.f32 %v8527, %v8535
  %v8537 = vadd.f32 %v8536, 1.1283791
  %v8538 = vmul.f32 %v8072, %v8537
  %v8539 = vmul.f32 %v8527, 3.8918573e-05
  %v8540 = vadd.f32 %v8539, 0.001143296
  %v8541 = vmul.f32 %v8527, %v8540
  %v8542 = vadd.f32 %v8541, 0.014752088
  %v8543 = vmul.f32 %v8527, %v8542
  %v8544 = vadd.f32 %v8543, 0.112945676
  %v8545 = vmul.f32 %v8527, %v8544
  %v8546 = vadd.f32 %v8545, 0.4994258
  %v8547 = vmul.f32 %v8527, %v8546
  %v8548 = vadd.f32 %v8547, 1.0
  %v8549 = vrcp.pop %v8548
  %v8550 = vmul.f32 %v8548, %v8549
  %v8551 = vsub.f32 1.0, %v8550
  %v8552 = vmul.f32 %v8549, %v8551
  %v8553 = vadd.f32 %v8549, %v8552
  %vm8554 = vweird.f32 %v8548
  %vm8555 = vweird.f32 %v8549
  %vm8556 = vmor %vm8554, %vm8555
  %v8557 = vsel %vm8556, %v8549, %v8553
  %v8558 = vand.u32 2147483647, %v8548
  %vm8559 = vcmp.eq.f32.partialorder %v8558, 8.507059e+37
  %v8560 = vand.u32 %v8548, 2147483648
  %v8561 = vor.u32 1.1754944e-38, %v8560
  %v8562 = vsel %vm8559, %v8561, %v8557
  %v8563 = vmul.f32 %v8538, %v8562
  %v8564 = vmin.f32 %v8563, 1.0
  %v8565 = vmax.f32 %v8564, -1.0
  %v8566 = vmul.f32 %v8073, %v8073
  %v8567 = vmin.f32 16.0, %v8566
  %v8568 = vmul.f32 %v8567, 2.1237322e-06
  %v8569 = vadd.f32 %v8568, 0.00028619796
  %v8570 = vmul.f32 %v8567, %v8569
  %v8571 = vadd.f32 %v8570, 0.0036580483
  %v8572 = vmul.f32 %v8567, %v8571
  %v8573 = vadd.f32 %v8572, 0.05243302
  %v8574 = vmul.f32 %v8567, %v8573
  %v8575 = vadd.f32 %v8574, 0.18741608
  %v8576 = vmul.f32 %v8567, %v8575
  %v8577 = vadd.f32 %v8576, 1.1283791
  %v8578 = vmul.f32 %v8073, %v8577
  %v8579 = vmul.f32 %v8567, 3.8918573e-05
  %v8580 = vadd.f32 %v8579, 0.001143296
  %v8581 = vmul.f32 %v8567, %v8580
  %v8582 = vadd.f32 %v8581, 0.014752088
  %v8583 = vmul.f32 %v8567, %v8582
  %v8584 = vadd.f32 %v8583, 0.112945676
  %v8585 = vmul.f32 %v8567, %v8584
  %v8586 = vadd.f32 %v8585, 0.4994258
  %v8587 = vmul.f32 %v8567, %v8586
  %v8588 = vadd.f32 %v8587, 1.0
  %v8589 = vrcp.pop %v8588
  %v8590 = vmul.f32 %v8588, %v8589
  %v8591 = vsub.f32 1.0, %v8590
  %v8592 = vmul.f32 %v8589, %v8591
  %v8593 = vadd.f32 %v8589, %v8592
  %vm8594 = vweird.f32 %v8588
  %vm8595 = vweird.f32 %v8589
  %vm8596 = vmor %vm8594, %vm8595
  %v8597 = vsel %vm8596, %v8589, %v8593
  %v8598 = vand.u32 2147483647, %v8588
  %vm8599 = vcmp.eq.f32.partialorder %v8598, 8.507059e+37
  %v8600 = vand.u32 %v8588, 2147483648
  %v8601 = vor.u32 1.1754944e-38, %v8600
  %v8602 = vsel %vm8599, %v8601, %v8597
  %v8603 = vmul.f32 %v8578, %v8602
  %v8604 = vmin.f32 %v8603, 1.0
  %v8605 = vmax.f32 %v8604, -1.0
  %v8606 = vmul.f32 %v8074, %v8074
  %v8607 = vmin.f32 16.0, %v8606
  %v8608 = vmul.f32 %v8607, 2.1237322e-06
  %v8609 = vadd.f32 %v8608, 0.00028619796
  %v8610 = vmul.f32 %v8607, %v8609
  %v8611 = vadd.f32 %v8610, 0.0036580483
  %v8612 = vmul.f32 %v8607, %v8611
  %v8613 = vadd.f32 %v8612, 0.05243302
  %v8614 = vmul.f32 %v8607, %v8613
  %v8615 = vadd.f32 %v8614, 0.18741608
  %v8616 = vmul.f32 %v8607, %v8615
  %v8617 = vadd.f32 %v8616, 1.1283791
  %v8618 = vmul.f32 %v8074, %v8617
  %v8619 = vmul.f32 %v8607, 3.8918573e-05
  %v8620 = vadd.f32 %v8619, 0.001143296
  %v8621 = vmul.f32 %v8607, %v8620
  %v8622 = vadd.f32 %v8621, 0.014752088
  %v8623 = vmul.f32 %v8607, %v8622
  %v8624 = vadd.f32 %v8623, 0.112945676
  %v8625 = vmul.f32 %v8607, %v8624
  %v8626 = vadd.f32 %v8625, 0.4994258
  %v8627 = vmul.f32 %v8607, %v8626
  %v8628 = vadd.f32 %v8627, 1.0
  %v8629 = vrcp.pop %v8628
  %v8630 = vmul.f32 %v8628, %v8629
  %v8631 = vsub.f32 1.0, %v8630
  %v8632 = vmul.f32 %v8629, %v8631
  %v8633 = vadd.f32 %v8629, %v8632
  %vm8634 = vweird.f32 %v8628
  %vm8635 = vweird.f32 %v8629
  %vm8636 = vmor %vm8634, %vm8635
  %v8637 = vsel %vm8636, %v8629, %v8633
  %v8638 = vand.u32 2147483647, %v8628
  %vm8639 = vcmp.eq.f32.partialorder %v8638, 8.507059e+37
  %v8640 = vand.u32 %v8628, 2147483648
  %v8641 = vor.u32 1.1754944e-38, %v8640
  %v8642 = vsel %vm8639, %v8641, %v8637
  %v8643 = vmul.f32 %v8618, %v8642
  %v8644 = vmin.f32 %v8643, 1.0
  %v8645 = vmax.f32 %v8644, -1.0
  %v8646 = vmul.f32 %v8075, %v8075
  %v8647 = vmin.f32 16.0, %v8646
  %v8648 = vmul.f32 %v8647, 2.1237322e-06
  %v8649 = vadd.f32 %v8648, 0.00028619796
  %v8650 = vmul.f32 %v8647, %v8649
  %v8651 = vadd.f32 %v8650, 0.0036580483
  %v8652 = vmul.f32 %v8647, %v8651
  %v8653 = vadd.f32 %v8652, 0.05243302
  %v8654 = vmul.f32 %v8647, %v8653
  %v8655 = vadd.f32 %v8654, 0.18741608
  %v8656 = vmul.f32 %v8647, %v8655
  %v8657 = vadd.f32 %v8656, 1.1283791
  %v8658 = vmul.f32 %v8075, %v8657
  %v8659 = vmul.f32 %v8647, 3.8918573e-05
  %v8660 = vadd.f32 %v8659, 0.001143296
  %v8661 = vmul.f32 %v8647, %v8660
  %v8662 = vadd.f32 %v8661, 0.014752088
  %v8663 = vmul.f32 %v8647, %v8662
  %v8664 = vadd.f32 %v8663, 0.112945676
  %v8665 = vmul.f32 %v8647, %v8664
  %v8666 = vadd.f32 %v8665, 0.4994258
  %v8667 = vmul.f32 %v8647, %v8666
  %v8668 = vadd.f32 %v8667, 1.0
  %v8669 = vrcp.pop %v8668
  %v8670 = vmul.f32 %v8668, %v8669
  %v8671 = vsub.f32 1.0, %v8670
  %v8672 = vmul.f32 %v8669, %v8671
  %v8673 = vadd.f32 %v8669, %v8672
  %vm8674 = vweird.f32 %v8668
  %vm8675 = vweird.f32 %v8669
  %vm8676 = vmor %vm8674, %vm8675
  %v8677 = vsel %vm8676, %v8669, %v8673
  %v8678 = vand.u32 2147483647, %v8668
  %vm8679 = vcmp.eq.f32.partialorder %v8678, 8.507059e+37
  %v8680 = vand.u32 %v8668, 2147483648
  %v8681 = vor.u32 1.1754944e-38, %v8680
  %v8682 = vsel %vm8679, %v8681, %v8677
  %v8683 = vmul.f32 %v8658, %v8682
  %v8684 = vmin.f32 %v8683, 1.0
  %v8685 = vmax.f32 %v8684, -1.0
  %v8686 = vmul.f32 %v8076, %v8076
  %v8687 = vmin.f32 16.0, %v8686
  %v8688 = vmul.f32 %v8687, 2.1237322e-06
  %v8689 = vadd.f32 %v8688, 0.00028619796
  %v8690 = vmul.f32 %v8687, %v8689
  %v8691 = vadd.f32 %v8690, 0.0036580483
  %v8692 = vmul.f32 %v8687, %v8691
  %v8693 = vadd.f32 %v8692, 0.05243302
  %v8694 = vmul.f32 %v8687, %v8693
  %v8695 = vadd.f32 %v8694, 0.18741608
  %v8696 = vmul.f32 %v8687, %v8695
  %v8697 = vadd.f32 %v8696, 1.1283791
  %v8698 = vmul.f32 %v8076, %v8697
  %v8699 = vmul.f32 %v8687, 3.8918573e-05
  %v8700 = vadd.f32 %v8699, 0.001143296
  %v8701 = vmul.f32 %v8687, %v8700
  %v8702 = vadd.f32 %v8701, 0.014752088
  %v8703 = vmul.f32 %v8687, %v8702
  %v8704 = vadd.f32 %v8703, 0.112945676
  %v8705 = vmul.f32 %v8687, %v8704
  %v8706 = vadd.f32 %v8705, 0.4994258
  %v8707 = vmul.f32 %v8687, %v8706
  %v8708 = vadd.f32 %v8707, 1.0
  %v8709 = vrcp.pop %v8708
  %v8710 = vmul.f32 %v8708, %v8709
  %v8711 = vsub.f32 1.0, %v8710
  %v8712 = vmul.f32 %v8709, %v8711
  %v8713 = vadd.f32 %v8709, %v8712
  %vm8714 = vweird.f32 %v8708
  %vm8715 = vweird.f32 %v8709
  %vm8716 = vmor %vm8714, %vm8715
  %v8717 = vsel %vm8716, %v8709, %v8713
  %v8718 = vand.u32 2147483647, %v8708
  %vm8719 = vcmp.eq.f32.partialorder %v8718, 8.507059e+37
  %v8720 = vand.u32 %v8708, 2147483648
  %v8721 = vor.u32 1.1754944e-38, %v8720
  %v8722 = vsel %vm8719, %v8721, %v8717
  %v8723 = vmul.f32 %v8698, %v8722
  %v8724 = vmin.f32 %v8723, 1.0
  %v8725 = vmax.f32 %v8724, -1.0
  %v8726 = vmul.f32 %v8077, %v8077
  %v8727 = vmin.f32 16.0, %v8726
  %v8728 = vmul.f32 %v8727, 2.1237322e-06
  %v8729 = vadd.f32 %v8728, 0.00028619796
  %v8730 = vmul.f32 %v8727, %v8729
  %v8731 = vadd.f32 %v8730, 0.0036580483
  %v8732 = vmul.f32 %v8727, %v8731
  %v8733 = vadd.f32 %v8732, 0.05243302
  %v8734 = vmul.f32 %v8727, %v8733
  %v8735 = vadd.f32 %v8734, 0.18741608
  %v8736 = vmul.f32 %v8727, %v8735
  %v8737 = vadd.f32 %v8736, 1.1283791
  %v8738 = vmul.f32 %v8077, %v8737
  %v8739 = vmul.f32 %v8727, 3.8918573e-05
  %v8740 = vadd.f32 %v8739, 0.001143296
  %v8741 = vmul.f32 %v8727, %v8740
  %v8742 = vadd.f32 %v8741, 0.014752088
  %v8743 = vmul.f32 %v8727, %v8742
  %v8744 = vadd.f32 %v8743, 0.112945676
  %v8745 = vmul.f32 %v8727, %v8744
  %v8746 = vadd.f32 %v8745, 0.4994258
  %v8747 = vmul.f32 %v8727, %v8746
  %v8748 = vadd.f32 %v8747, 1.0
  %v8749 = vrcp.pop %v8748
  %v8750 = vmul.f32 %v8748, %v8749
  %v8751 = vsub.f32 1.0, %v8750
  %v8752 = vmul.f32 %v8749, %v8751
  %v8753 = vadd.f32 %v8749, %v8752
  %vm8754 = vweird.f32 %v8748
  %vm8755 = vweird.f32 %v8749
  %vm8756 = vmor %vm8754, %vm8755
  %v8757 = vsel %vm8756, %v8749, %v8753
  %v8758 = vand.u32 2147483647, %v8748
  %vm8759 = vcmp.eq.f32.partialorder %v8758, 8.507059e+37
  %v8760 = vand.u32 %v8748, 2147483648
  %v8761 = vor.u32 1.1754944e-38, %v8760
  %v8762 = vsel %vm8759, %v8761, %v8757
  %v8763 = vmul.f32 %v8738, %v8762
  %v8764 = vmin.f32 %v8763, 1.0
  %v8765 = vmax.f32 %v8764, -1.0
  %v8766 = vmul.f32 %v8078, %v8078
  %v8767 = vmin.f32 16.0, %v8766
  %v8768 = vmul.f32 %v8767, 2.1237322e-06
  %v8769 = vadd.f32 %v8768, 0.00028619796
  %v8770 = vmul.f32 %v8767, %v8769
  %v8771 = vadd.f32 %v8770, 0.0036580483
  %v8772 = vmul.f32 %v8767, %v8771
  %v8773 = vadd.f32 %v8772, 0.05243302
  %v8774 = vmul.f32 %v8767, %v8773
  %v8775 = vadd.f32 %v8774, 0.18741608
  %v8776 = vmul.f32 %v8767, %v8775
  %v8777 = vadd.f32 %v8776, 1.1283791
  %v8778 = vmul.f32 %v8078, %v8777
  %v8779 = vmul.f32 %v8767, 3.8918573e-05
  %v8780 = vadd.f32 %v8779, 0.001143296
  %v8781 = vmul.f32 %v8767, %v8780
  %v8782 = vadd.f32 %v8781, 0.014752088
  %v8783 = vmul.f32 %v8767, %v8782
  %v8784 = vadd.f32 %v8783, 0.112945676
  %v8785 = vmul.f32 %v8767, %v8784
  %v8786 = vadd.f32 %v8785, 0.4994258
  %v8787 = vmul.f32 %v8767, %v8786
  %v8788 = vadd.f32 %v8787, 1.0
  %v8789 = vrcp.pop %v8788
  %v8790 = vmul.f32 %v8788, %v8789
  %v8791 = vsub.f32 1.0, %v8790
  %v8792 = vmul.f32 %v8789, %v8791
  %v8793 = vadd.f32 %v8789, %v8792
  %vm8794 = vweird.f32 %v8788
  %vm8795 = vweird.f32 %v8789
  %vm8796 = vmor %vm8794, %vm8795
  %v8797 = vsel %vm8796, %v8789, %v8793
  %v8798 = vand.u32 2147483647, %v8788
  %vm8799 = vcmp.eq.f32.partialorder %v8798, 8.507059e+37
  %v8800 = vand.u32 %v8788, 2147483648
  %v8801 = vor.u32 1.1754944e-38, %v8800
  %v8802 = vsel %vm8799, %v8801, %v8797
  %v8803 = vmul.f32 %v8778, %v8802
  %v8804 = vmin.f32 %v8803, 1.0
  %v8805 = vmax.f32 %v8804, -1.0
  %v8806 = vmul.f32 %v8079, %v8079
  %v8807 = vmin.f32 16.0, %v8806
  %v8808 = vmul.f32 %v8807, 2.1237322e-06
  %v8809 = vadd.f32 %v8808, 0.00028619796
  %v8810 = vmul.f32 %v8807, %v8809
  %v8811 = vadd.f32 %v8810, 0.0036580483
  %v8812 = vmul.f32 %v8807, %v8811
  %v8813 = vadd.f32 %v8812, 0.05243302
  %v8814 = vmul.f32 %v8807, %v8813
  %v8815 = vadd.f32 %v8814, 0.18741608
  %v8816 = vmul.f32 %v8807, %v8815
  %v8817 = vadd.f32 %v8816, 1.1283791
  %v8818 = vmul.f32 %v8079, %v8817
  %v8819 = vmul.f32 %v8807, 3.8918573e-05
  %v8820 = vadd.f32 %v8819, 0.001143296
  %v8821 = vmul.f32 %v8807, %v8820
  %v8822 = vadd.f32 %v8821, 0.014752088
  %v8823 = vmul.f32 %v8807, %v8822
  %v8824 = vadd.f32 %v8823, 0.112945676
  %v8825 = vmul.f32 %v8807, %v8824
  %v8826 = vadd.f32 %v8825, 0.4994258
  %v8827 = vmul.f32 %v8807, %v8826
  %v8828 = vadd.f32 %v8827, 1.0
  %v8829 = vrcp.pop %v8828
  %v8830 = vmul.f32 %v8828, %v8829
  %v8831 = vsub.f32 1.0, %v8830
  %v8832 = vmul.f32 %v8829, %v8831
  %v8833 = vadd.f32 %v8829, %v8832
  %vm8834 = vweird.f32 %v8828
  %vm8835 = vweird.f32 %v8829
  %vm8836 = vmor %vm8834, %vm8835
  %v8837 = vsel %vm8836, %v8829, %v8833
  %v8838 = vand.u32 2147483647, %v8828
  %vm8839 = vcmp.eq.f32.partialorder %v8838, 8.507059e+37
  %v8840 = vand.u32 %v8828, 2147483648
  %v8841 = vor.u32 1.1754944e-38, %v8840
  %v8842 = vsel %vm8839, %v8841, %v8837
  %v8843 = vmul.f32 %v8818, %v8842
  %v8844 = vmin.f32 %v8843, 1.0
  %v8845 = vmax.f32 %v8844, -1.0
  %v8846 = vmul.f32 %v8080, %v8080
  %v8847 = vmin.f32 16.0, %v8846
  %v8848 = vmul.f32 %v8847, 2.1237322e-06
  %v8849 = vadd.f32 %v8848, 0.00028619796
  %v8850 = vmul.f32 %v8847, %v8849
  %v8851 = vadd.f32 %v8850, 0.0036580483
  %v8852 = vmul.f32 %v8847, %v8851
  %v8853 = vadd.f32 %v8852, 0.05243302
  %v8854 = vmul.f32 %v8847, %v8853
  %v8855 = vadd.f32 %v8854, 0.18741608
  %v8856 = vmul.f32 %v8847, %v8855
  %v8857 = vadd.f32 %v8856, 1.1283791
  %v8858 = vmul.f32 %v8080, %v8857
  %v8859 = vmul.f32 %v8847, 3.8918573e-05
  %v8860 = vadd.f32 %v8859, 0.001143296
  %v8861 = vmul.f32 %v8847, %v8860
  %v8862 = vadd.f32 %v8861, 0.014752088
  %v8863 = vmul.f32 %v8847, %v8862
  %v8864 = vadd.f32 %v8863, 0.112945676
  %v8865 = vmul.f32 %v8847, %v8864
  %v8866 = vadd.f32 %v8865, 0.4994258
  %v8867 = vmul.f32 %v8847, %v8866
  %v8868 = vadd.f32 %v8867, 1.0
  %v8869 = vrcp.pop %v8868
  %v8870 = vmul.f32 %v8868, %v8869
  %v8871 = vsub.f32 1.0, %v8870
  %v8872 = vmul.f32 %v8869, %v8871
  %v8873 = vadd.f32 %v8869, %v8872
  %vm8874 = vweird.f32 %v8868
  %vm8875 = vweird.f32 %v8869
  %vm8876 = vmor %vm8874, %vm8875
  %v8877 = vsel %vm8876, %v8869, %v8873
  %v8878 = vand.u32 2147483647, %v8868
  %vm8879 = vcmp.eq.f32.partialorder %v8878, 8.507059e+37
  %v8880 = vand.u32 %v8868, 2147483648
  %v8881 = vor.u32 1.1754944e-38, %v8880
  %v8882 = vsel %vm8879, %v8881, %v8877
  %v8883 = vmul.f32 %v8858, %v8882
  %v8884 = vmin.f32 %v8883, 1.0
  %v8885 = vmax.f32 %v8884, -1.0
  %v8886 = vmul.f32 %v8081, %v8081
  %v8887 = vmin.f32 16.0, %v8886
  %v8888 = vmul.f32 %v8887, 2.1237322e-06
  %v8889 = vadd.f32 %v8888, 0.00028619796
  %v8890 = vmul.f32 %v8887, %v8889
  %v8891 = vadd.f32 %v8890, 0.0036580483
  %v8892 = vmul.f32 %v8887, %v8891
  %v8893 = vadd.f32 %v8892, 0.05243302
  %v8894 = vmul.f32 %v8887, %v8893
  %v8895 = vadd.f32 %v8894, 0.18741608
  %v8896 = vmul.f32 %v8887, %v8895
  %v8897 = vadd.f32 %v8896, 1.1283791
  %v8898 = vmul.f32 %v8081, %v8897
  %v8899 = vmul.f32 %v8887, 3.8918573e-05
  %v8900 = vadd.f32 %v8899, 0.001143296
  %v8901 = vmul.f32 %v8887, %v8900
  %v8902 = vadd.f32 %v8901, 0.014752088
  %v8903 = vmul.f32 %v8887, %v8902
  %v8904 = vadd.f32 %v8903, 0.112945676
  %v8905 = vmul.f32 %v8887, %v8904
  %v8906 = vadd.f32 %v8905, 0.4994258
  %v8907 = vmul.f32 %v8887, %v8906
  %v8908 = vadd.f32 %v8907, 1.0
  %v8909 = vrcp.pop %v8908
  %v8910 = vmul.f32 %v8908, %v8909
  %v8911 = vsub.f32 1.0, %v8910
  %v8912 = vmul.f32 %v8909, %v8911
  %v8913 = vadd.f32 %v8909, %v8912
  %vm8914 = vweird.f32 %v8908
  %vm8915 = vweird.f32 %v8909
  %vm8916 = vmor %vm8914, %vm8915
  %v8917 = vsel %vm8916, %v8909, %v8913
  %v8918 = vand.u32 2147483647, %v8908
  %vm8919 = vcmp.eq.f32.partialorder %v8918, 8.507059e+37
  %v8920 = vand.u32 %v8908, 2147483648
  %v8921 = vor.u32 1.1754944e-38, %v8920
  %v8922 = vsel %vm8919, %v8921, %v8917
  %v8923 = vmul.f32 %v8898, %v8922
  %v8924 = vmin.f32 %v8923, 1.0
  %v8925 = vmax.f32 %v8924, -1.0
  %v8926 = vmul.f32 %v8082, %v8082
  %v8927 = vmin.f32 16.0, %v8926
  %v8928 = vmul.f32 %v8927, 2.1237322e-06
  %v8929 = vadd.f32 %v8928, 0.00028619796
  %v8930 = vmul.f32 %v8927, %v8929
  %v8931 = vadd.f32 %v8930, 0.0036580483
  %v8932 = vmul.f32 %v8927, %v8931
  %v8933 = vadd.f32 %v8932, 0.05243302
  %v8934 = vmul.f32 %v8927, %v8933
  %v8935 = vadd.f32 %v8934, 0.18741608
  %v8936 = vmul.f32 %v8927, %v8935
  %v8937 = vadd.f32 %v8936, 1.1283791
  %v8938 = vmul.f32 %v8082, %v8937
  %v8939 = vmul.f32 %v8927, 3.8918573e-05
  %v8940 = vadd.f32 %v8939, 0.001143296
  %v8941 = vmul.f32 %v8927, %v8940
  %v8942 = vadd.f32 %v8941, 0.014752088
  %v8943 = vmul.f32 %v8927, %v8942
  %v8944 = vadd.f32 %v8943, 0.112945676
  %v8945 = vmul.f32 %v8927, %v8944
  %v8946 = vadd.f32 %v8945, 0.4994258
  %v8947 = vmul.f32 %v8927, %v8946
  %v8948 = vadd.f32 %v8947, 1.0
  %v8949 = vrcp.pop %v8948
  %v8950 = vmul.f32 %v8948, %v8949
  %v8951 = vsub.f32 1.0, %v8950
  %v8952 = vmul.f32 %v8949, %v8951
  %v8953 = vadd.f32 %v8949, %v8952
  %vm8954 = vweird.f32 %v8948
  %vm8955 = vweird.f32 %v8949
  %vm8956 = vmor %vm8954, %vm8955
  %v8957 = vsel %vm8956, %v8949, %v8953
  %v8958 = vand.u32 2147483647, %v8948
  %vm8959 = vcmp.eq.f32.partialorder %v8958, 8.507059e+37
  %v8960 = vand.u32 %v8948, 2147483648
  %v8961 = vor.u32 1.1754944e-38, %v8960
  %v8962 = vsel %vm8959, %v8961, %v8957
  %v8963 = vmul.f32 %v8938, %v8962
  %v8964 = vmin.f32 %v8963, 1.0
  %v8965 = vmax.f32 %v8964, -1.0
  %v8966 = vmul.f32 %v8083, %v8083
  %v8967 = vmin.f32 16.0, %v8966
  %v8968 = vmul.f32 %v8967, 2.1237322e-06
  %v8969 = vadd.f32 %v8968, 0.00028619796
  %v8970 = vmul.f32 %v8967, %v8969
  %v8971 = vadd.f32 %v8970, 0.0036580483
  %v8972 = vmul.f32 %v8967, %v8971
  %v8973 = vadd.f32 %v8972, 0.05243302
  %v8974 = vmul.f32 %v8967, %v8973
  %v8975 = vadd.f32 %v8974, 0.18741608
  %v8976 = vmul.f32 %v8967, %v8975
  %v8977 = vadd.f32 %v8976, 1.1283791
  %v8978 = vmul.f32 %v8083, %v8977
  %v8979 = vmul.f32 %v8967, 3.8918573e-05
  %v8980 = vadd.f32 %v8979, 0.001143296
  %v8981 = vmul.f32 %v8967, %v8980
  %v8982 = vadd.f32 %v8981, 0.014752088
  %v8983 = vmul.f32 %v8967, %v8982
  %v8984 = vadd.f32 %v8983, 0.112945676
  %v8985 = vmul.f32 %v8967, %v8984
  %v8986 = vadd.f32 %v8985, 0.4994258
  %v8987 = vmul.f32 %v8967, %v8986
  %v8988 = vadd.f32 %v8987, 1.0
  %v8989 = vrcp.pop %v8988
  %v8990 = vmul.f32 %v8988, %v8989
  %v8991 = vsub.f32 1.0, %v8990
  %v8992 = vmul.f32 %v8989, %v8991
  %v8993 = vadd.f32 %v8989, %v8992
  %vm8994 = vweird.f32 %v8988
  %vm8995 = vweird.f32 %v8989
  %vm8996 = vmor %vm8994, %vm8995
  %v8997 = vsel %vm8996, %v8989, %v8993
  %v8998 = vand.u32 2147483647, %v8988
  %vm8999 = vcmp.eq.f32.partialorder %v8998, 8.507059e+37
  %v9000 = vand.u32 %v8988, 2147483648
  %v9001 = vor.u32 1.1754944e-38, %v9000
  %v9002 = vsel %vm8999, %v9001, %v8997
  %v9003 = vmul.f32 %v8978, %v9002
  %v9004 = vmin.f32 %v9003, 1.0
  %v9005 = vmax.f32 %v9004, -1.0
  %v9006 = vmul.f32 %v8084, %v8084
  %v9007 = vmin.f32 16.0, %v9006
  %v9008 = vmul.f32 %v9007, 2.1237322e-06
  %v9009 = vadd.f32 %v9008, 0.00028619796
  %v9010 = vmul.f32 %v9007, %v9009
  %v9011 = vadd.f32 %v9010, 0.0036580483
  %v9012 = vmul.f32 %v9007, %v9011
  %v9013 = vadd.f32 %v9012, 0.05243302
  %v9014 = vmul.f32 %v9007, %v9013
  %v9015 = vadd.f32 %v9014, 0.18741608
  %v9016 = vmul.f32 %v9007, %v9015
  %v9017 = vadd.f32 %v9016, 1.1283791
  %v9018 = vmul.f32 %v8084, %v9017
  %v9019 = vmul.f32 %v9007, 3.8918573e-05
  %v9020 = vadd.f32 %v9019, 0.001143296
  %v9021 = vmul.f32 %v9007, %v9020
  %v9022 = vadd.f32 %v9021, 0.014752088
  %v9023 = vmul.f32 %v9007, %v9022
  %v9024 = vadd.f32 %v9023, 0.112945676
  %v9025 = vmul.f32 %v9007, %v9024
  %v9026 = vadd.f32 %v9025, 0.4994258
  %v9027 = vmul.f32 %v9007, %v9026
  %v9028 = vadd.f32 %v9027, 1.0
  %v9029 = vrcp.pop %v9028
  %v9030 = vmul.f32 %v9028, %v9029
  %v9031 = vsub.f32 1.0, %v9030
  %v9032 = vmul.f32 %v9029, %v9031
  %v9033 = vadd.f32 %v9029, %v9032
  %vm9034 = vweird.f32 %v9028
  %vm9035 = vweird.f32 %v9029
  %vm9036 = vmor %vm9034, %vm9035
  %v9037 = vsel %vm9036, %v9029, %v9033
  %v9038 = vand.u32 2147483647, %v9028
  %vm9039 = vcmp.eq.f32.partialorder %v9038, 8.507059e+37
  %v9040 = vand.u32 %v9028, 2147483648
  %v9041 = vor.u32 1.1754944e-38, %v9040
  %v9042 = vsel %vm9039, %v9041, %v9037
  %v9043 = vmul.f32 %v9018, %v9042
  %v9044 = vmin.f32 %v9043, 1.0
  %v9045 = vmax.f32 %v9044, -1.0
  %v9046 = vmul.f32 %v8085, %v8085
  %v9047 = vmin.f32 16.0, %v9046
  %v9048 = vmul.f32 %v9047, 2.1237322e-06
  %v9049 = vadd.f32 %v9048, 0.00028619796
  %v9050 = vmul.f32 %v9047, %v9049
  %v9051 = vadd.f32 %v9050, 0.0036580483
  %v9052 = vmul.f32 %v9047, %v9051
  %v9053 = vadd.f32 %v9052, 0.05243302
  %v9054 = vmul.f32 %v9047, %v9053
  %v9055 = vadd.f32 %v9054, 0.18741608
  %v9056 = vmul.f32 %v9047, %v9055
  %v9057 = vadd.f32 %v9056, 1.1283791
  %v9058 = vmul.f32 %v8085, %v9057
  %v9059 = vmul.f32 %v9047, 3.8918573e-05
  %v9060 = vadd.f32 %v9059, 0.001143296
  %v9061 = vmul.f32 %v9047, %v9060
  %v9062 = vadd.f32 %v9061, 0.014752088
  %v9063 = vmul.f32 %v9047, %v9062
  %v9064 = vadd.f32 %v9063, 0.112945676
  %v9065 = vmul.f32 %v9047, %v9064
  %v9066 = vadd.f32 %v9065, 0.4994258
  %v9067 = vmul.f32 %v9047, %v9066
  %v9068 = vadd.f32 %v9067, 1.0
  %v9069 = vrcp.pop %v9068
  %v9070 = vmul.f32 %v9068, %v9069
  %v9071 = vsub.f32 1.0, %v9070
  %v9072 = vmul.f32 %v9069, %v9071
  %v9073 = vadd.f32 %v9069, %v9072
  %vm9074 = vweird.f32 %v9068
  %vm9075 = vweird.f32 %v9069
  %vm9076 = vmor %vm9074, %vm9075
  %v9077 = vsel %vm9076, %v9069, %v9073
  %v9078 = vand.u32 2147483647, %v9068
  %vm9079 = vcmp.eq.f32.partialorder %v9078, 8.507059e+37
  %v9080 = vand.u32 %v9068, 2147483648
  %v9081 = vor.u32 1.1754944e-38, %v9080
  %v9082 = vsel %vm9079, %v9081, %v9077
  %v9083 = vmul.f32 %v9058, %v9082
  %v9084 = vmin.f32 %v9083, 1.0
  %v9085 = vmax.f32 %v9084, -1.0
  %v9086 = vmul.f32 %v8086, %v8086
  %v9087 = vmin.f32 16.0, %v9086
  %v9088 = vmul.f32 %v9087, 2.1237322e-06
  %v9089 = vadd.f32 %v9088, 0.00028619796
  %v9090 = vmul.f32 %v9087, %v9089
  %v9091 = vadd.f32 %v9090, 0.0036580483
  %v9092 = vmul.f32 %v9087, %v9091
  %v9093 = vadd.f32 %v9092, 0.05243302
  %v9094 = vmul.f32 %v9087, %v9093
  %v9095 = vadd.f32 %v9094, 0.18741608
  %v9096 = vmul.f32 %v9087, %v9095
  %v9097 = vadd.f32 %v9096, 1.1283791
  %v9098 = vmul.f32 %v8086, %v9097
  %v9099 = vmul.f32 %v9087, 3.8918573e-05
  %v9100 = vadd.f32 %v9099, 0.001143296
  %v9101 = vmul.f32 %v9087, %v9100
  %v9102 = vadd.f32 %v9101, 0.014752088
  %v9103 = vmul.f32 %v9087, %v9102
  %v9104 = vadd.f32 %v9103, 0.112945676
  %v9105 = vmul.f32 %v9087, %v9104
  %v9106 = vadd.f32 %v9105, 0.4994258
  %v9107 = vmul.f32 %v9087, %v9106
  %v9108 = vadd.f32 %v9107, 1.0
  %v9109 = vrcp.pop %v9108
  %v9110 = vmul.f32 %v9108, %v9109
  %v9111 = vsub.f32 1.0, %v9110
  %v9112 = vmul.f32 %v9109, %v9111
  %v9113 = vadd.f32 %v9109, %v9112
  %vm9114 = vweird.f32 %v9108
  %vm9115 = vweird.f32 %v9109
  %vm9116 = vmor %vm9114, %vm9115
  %v9117 = vsel %vm9116, %v9109, %v9113
  %v9118 = vand.u32 2147483647, %v9108
  %vm9119 = vcmp.eq.f32.partialorder %v9118, 8.507059e+37
  %v9120 = vand.u32 %v9108, 2147483648
  %v9121 = vor.u32 1.1754944e-38, %v9120
  %v9122 = vsel %vm9119, %v9121, %v9117
  %v9123 = vmul.f32 %v9098, %v9122
  %v9124 = vmin.f32 %v9123, 1.0
  %v9125 = vmax.f32 %v9124, -1.0
  %v9126 = vmul.f32 %v8087, %v8087
  %v9127 = vmin.f32 16.0, %v9126
  %v9128 = vmul.f32 %v9127, 2.1237322e-06
  %v9129 = vadd.f32 %v9128, 0.00028619796
  %v9130 = vmul.f32 %v9127, %v9129
  %v9131 = vadd.f32 %v9130, 0.0036580483
  %v9132 = vmul.f32 %v9127, %v9131
  %v9133 = vadd.f32 %v9132, 0.05243302
  %v9134 = vmul.f32 %v9127, %v9133
  %v9135 = vadd.f32 %v9134, 0.18741608
  %v9136 = vmul.f32 %v9127, %v9135
  %v9137 = vadd.f32 %v9136, 1.1283791
  %v9138 = vmul.f32 %v8087, %v9137
  %v9139 = vmul.f32 %v9127, 3.8918573e-05
  %v9140 = vadd.f32 %v9139, 0.001143296
  %v9141 = vmul.f32 %v9127, %v9140
  %v9142 = vadd.f32 %v9141, 0.014752088
  %v9143 = vmul.f32 %v9127, %v9142
  %v9144 = vadd.f32 %v9143, 0.112945676
  %v9145 = vmul.f32 %v9127, %v9144
  %v9146 = vadd.f32 %v9145, 0.4994258
  %v9147 = vmul.f32 %v9127, %v9146
  %v9148 = vadd.f32 %v9147, 1.0
  %v9149 = vrcp.pop %v9148
  %v9150 = vmul.f32 %v9148, %v9149
  %v9151 = vsub.f32 1.0, %v9150
  %v9152 = vmul.f32 %v9149, %v9151
  %v9153 = vadd.f32 %v9149, %v9152
  %vm9154 = vweird.f32 %v9148
  %vm9155 = vweird.f32 %v9149
  %vm9156 = vmor %vm9154, %vm9155
  %v9157 = vsel %vm9156, %v9149, %v9153
  %v9158 = vand.u32 2147483647, %v9148
  %vm9159 = vcmp.eq.f32.partialorder %v9158, 8.507059e+37
  %v9160 = vand.u32 %v9148, 2147483648
  %v9161 = vor.u32 1.1754944e-38, %v9160
  %v9162 = vsel %vm9159, %v9161, %v9157
  %v9163 = vmul.f32 %v9138, %v9162
  %v9164 = vmin.f32 %v9163, 1.0
  %v9165 = vmax.f32 %v9164, -1.0
  %v9166 = vmul.f32 %v8088, %v8088
  %v9167 = vmin.f32 16.0, %v9166
  %v9168 = vmul.f32 %v9167, 2.1237322e-06
  %v9169 = vadd.f32 %v9168, 0.00028619796
  %v9170 = vmul.f32 %v9167, %v9169
  %v9171 = vadd.f32 %v9170, 0.0036580483
  %v9172 = vmul.f32 %v9167, %v9171
  %v9173 = vadd.f32 %v9172, 0.05243302
  %v9174 = vmul.f32 %v9167, %v9173
  %v9175 = vadd.f32 %v9174, 0.18741608
  %v9176 = vmul.f32 %v9167, %v9175
  %v9177 = vadd.f32 %v9176, 1.1283791
  %v9178 = vmul.f32 %v8088, %v9177
  %v9179 = vmul.f32 %v9167, 3.8918573e-05
  %v9180 = vadd.f32 %v9179, 0.001143296
  %v9181 = vmul.f32 %v9167, %v9180
  %v9182 = vadd.f32 %v9181, 0.014752088
  %v9183 = vmul.f32 %v9167, %v9182
  %v9184 = vadd.f32 %v9183, 0.112945676
  %v9185 = vmul.f32 %v9167, %v9184
  %v9186 = vadd.f32 %v9185, 0.4994258
  %v9187 = vmul.f32 %v9167, %v9186
  %v9188 = vadd.f32 %v9187, 1.0
  %v9189 = vrcp.pop %v9188
  %v9190 = vmul.f32 %v9188, %v9189
  %v9191 = vsub.f32 1.0, %v9190
  %v9192 = vmul.f32 %v9189, %v9191
  %v9193 = vadd.f32 %v9189, %v9192
  %vm9194 = vweird.f32 %v9188
  %vm9195 = vweird.f32 %v9189
  %vm9196 = vmor %vm9194, %vm9195
  %v9197 = vsel %vm9196, %v9189, %v9193
  %v9198 = vand.u32 2147483647, %v9188
  %vm9199 = vcmp.eq.f32.partialorder %v9198, 8.507059e+37
  %v9200 = vand.u32 %v9188, 2147483648
  %v9201 = vor.u32 1.1754944e-38, %v9200
  %v9202 = vsel %vm9199, %v9201, %v9197
  %v9203 = vmul.f32 %v9178, %v9202
  %v9204 = vmin.f32 %v9203, 1.0
  %v9205 = vmax.f32 %v9204, -1.0
  %v9206 = vmul.f32 %v8089, %v8089
  %v9207 = vmin.f32 16.0, %v9206
  %v9208 = vmul.f32 %v9207, 2.1237322e-06
  %v9209 = vadd.f32 %v9208, 0.00028619796
  %v9210 = vmul.f32 %v9207, %v9209
  %v9211 = vadd.f32 %v9210, 0.0036580483
  %v9212 = vmul.f32 %v9207, %v9211
  %v9213 = vadd.f32 %v9212, 0.05243302
  %v9214 = vmul.f32 %v9207, %v9213
  %v9215 = vadd.f32 %v9214, 0.18741608
  %v9216 = vmul.f32 %v9207, %v9215
  %v9217 = vadd.f32 %v9216, 1.1283791
  %v9218 = vmul.f32 %v8089, %v9217
  %v9219 = vmul.f32 %v9207, 3.8918573e-05
  %v9220 = vadd.f32 %v9219, 0.001143296
  %v9221 = vmul.f32 %v9207, %v9220
  %v9222 = vadd.f32 %v9221, 0.014752088
  %v9223 = vmul.f32 %v9207, %v9222
  %v9224 = vadd.f32 %v9223, 0.112945676
  %v9225 = vmul.f32 %v9207, %v9224
  %v9226 = vadd.f32 %v9225, 0.4994258
  %v9227 = vmul.f32 %v9207, %v9226
  %v9228 = vadd.f32 %v9227, 1.0
  %v9229 = vrcp.pop %v9228
  %v9230 = vmul.f32 %v9228, %v9229
  %v9231 = vsub.f32 1.0, %v9230
  %v9232 = vmul.f32 %v9229, %v9231
  %v9233 = vadd.f32 %v9229, %v9232
  %vm9234 = vweird.f32 %v9228
  %vm9235 = vweird.f32 %v9229
  %vm9236 = vmor %vm9234, %vm9235
  %v9237 = vsel %vm9236, %v9229, %v9233
  %v9238 = vand.u32 2147483647, %v9228
  %vm9239 = vcmp.eq.f32.partialorder %v9238, 8.507059e+37
  %v9240 = vand.u32 %v9228, 2147483648
  %v9241 = vor.u32 1.1754944e-38, %v9240
  %v9242 = vsel %vm9239, %v9241, %v9237
  %v9243 = vmul.f32 %v9218, %v9242
  %v9244 = vmin.f32 %v9243, 1.0
  %v9245 = vmax.f32 %v9244, -1.0
  %v9246 = vmul.f32 %v8090, %v8090
  %v9247 = vmin.f32 16.0, %v9246
  %v9248 = vmul.f32 %v9247, 2.1237322e-06
  %v9249 = vadd.f32 %v9248, 0.00028619796
  %v9250 = vmul.f32 %v9247, %v9249
  %v9251 = vadd.f32 %v9250, 0.0036580483
  %v9252 = vmul.f32 %v9247, %v9251
  %v9253 = vadd.f32 %v9252, 0.05243302
  %v9254 = vmul.f32 %v9247, %v9253
  %v9255 = vadd.f32 %v9254, 0.18741608
  %v9256 = vmul.f32 %v9247, %v9255
  %v9257 = vadd.f32 %v9256, 1.1283791
  %v9258 = vmul.f32 %v8090, %v9257
  %v9259 = vmul.f32 %v9247, 3.8918573e-05
  %v9260 = vadd.f32 %v9259, 0.001143296
  %v9261 = vmul.f32 %v9247, %v9260
  %v9262 = vadd.f32 %v9261, 0.014752088
  %v9263 = vmul.f32 %v9247, %v9262
  %v9264 = vadd.f32 %v9263, 0.112945676
  %v9265 = vmul.f32 %v9247, %v9264
  %v9266 = vadd.f32 %v9265, 0.4994258
  %v9267 = vmul.f32 %v9247, %v9266
  %v9268 = vadd.f32 %v9267, 1.0
  %v9269 = vrcp.pop %v9268
  %v9270 = vmul.f32 %v9268, %v9269
  %v9271 = vsub.f32 1.0, %v9270
  %v9272 = vmul.f32 %v9269, %v9271
  %v9273 = vadd.f32 %v9269, %v9272
  %vm9274 = vweird.f32 %v9268
  %vm9275 = vweird.f32 %v9269
  %vm9276 = vmor %vm9274, %vm9275
  %v9277 = vsel %vm9276, %v9269, %v9273
  %v9278 = vand.u32 2147483647, %v9268
  %vm9279 = vcmp.eq.f32.partialorder %v9278, 8.507059e+37
  %v9280 = vand.u32 %v9268, 2147483648
  %v9281 = vor.u32 1.1754944e-38, %v9280
  %v9282 = vsel %vm9279, %v9281, %v9277
  %v9283 = vmul.f32 %v9258, %v9282
  %v9284 = vmin.f32 %v9283, 1.0
  %v9285 = vmax.f32 %v9284, -1.0
  %v9286 = vmul.f32 %v8091, %v8091
  %v9287 = vmin.f32 16.0, %v9286
  %v9288 = vmul.f32 %v9287, 2.1237322e-06
  %v9289 = vadd.f32 %v9288, 0.00028619796
  %v9290 = vmul.f32 %v9287, %v9289
  %v9291 = vadd.f32 %v9290, 0.0036580483
  %v9292 = vmul.f32 %v9287, %v9291
  %v9293 = vadd.f32 %v9292, 0.05243302
  %v9294 = vmul.f32 %v9287, %v9293
  %v9295 = vadd.f32 %v9294, 0.18741608
  %v9296 = vmul.f32 %v9287, %v9295
  %v9297 = vadd.f32 %v9296, 1.1283791
  %v9298 = vmul.f32 %v8091, %v9297
  %v9299 = vmul.f32 %v9287, 3.8918573e-05
  %v9300 = vadd.f32 %v9299, 0.001143296
  %v9301 = vmul.f32 %v9287, %v9300
  %v9302 = vadd.f32 %v9301, 0.014752088
  %v9303 = vmul.f32 %v9287, %v9302
  %v9304 = vadd.f32 %v9303, 0.112945676
  %v9305 = vmul.f32 %v9287, %v9304
  %v9306 = vadd.f32 %v9305, 0.4994258
  %v9307 = vmul.f32 %v9287, %v9306
  %v9308 = vadd.f32 %v9307, 1.0
  %v9309 = vrcp.pop %v9308
  %v9310 = vmul.f32 %v9308, %v9309
  %v9311 = vsub.f32 1.0, %v9310
  %v9312 = vmul.f32 %v9309, %v9311
  %v9313 = vadd.f32 %v9309, %v9312
  %vm9314 = vweird.f32 %v9308
  %vm9315 = vweird.f32 %v9309
  %vm9316 = vmor %vm9314, %vm9315
  %v9317 = vsel %vm9316, %v9309, %v9313
  %v9318 = vand.u32 2147483647, %v9308
  %vm9319 = vcmp.eq.f32.partialorder %v9318, 8.507059e+37
  %v9320 = vand.u32 %v9308, 2147483648
  %v9321 = vor.u32 1.1754944e-38, %v9320
  %v9322 = vsel %vm9319, %v9321, %v9317
  %v9323 = vmul.f32 %v9298, %v9322
  %v9324 = vmin.f32 %v9323, 1.0
  %v9325 = vmax.f32 %v9324, -1.0
  %v9326 = vmul.f32 %v8092, %v8092
  %v9327 = vmin.f32 16.0, %v9326
  %v9328 = vmul.f32 %v9327, 2.1237322e-06
  %v9329 = vadd.f32 %v9328, 0.00028619796
  %v9330 = vmul.f32 %v9327, %v9329
  %v9331 = vadd.f32 %v9330, 0.0036580483
  %v9332 = vmul.f32 %v9327, %v9331
  %v9333 = vadd.f32 %v9332, 0.05243302
  %v9334 = vmul.f32 %v9327, %v9333
  %v9335 = vadd.f32 %v9334, 0.18741608
  %v9336 = vmul.f32 %v9327, %v9335
  %v9337 = vadd.f32 %v9336, 1.1283791
  %v9338 = vmul.f32 %v8092, %v9337
  %v9339 = vmul.f32 %v9327, 3.8918573e-05
  %v9340 = vadd.f32 %v9339, 0.001143296
  %v9341 = vmul.f32 %v9327, %v9340
  %v9342 = vadd.f32 %v9341, 0.014752088
  %v9343 = vmul.f32 %v9327, %v9342
  %v9344 = vadd.f32 %v9343, 0.112945676
  %v9345 = vmul.f32 %v9327, %v9344
  %v9346 = vadd.f32 %v9345, 0.4994258
  %v9347 = vmul.f32 %v9327, %v9346
  %v9348 = vadd.f32 %v9347, 1.0
  %v9349 = vrcp.pop %v9348
  %v9350 = vmul.f32 %v9348, %v9349
  %v9351 = vsub.f32 1.0, %v9350
  %v9352 = vmul.f32 %v9349, %v9351
  %v9353 = vadd.f32 %v9349, %v9352
  %vm9354 = vweird.f32 %v9348
  %vm9355 = vweird.f32 %v9349
  %vm9356 = vmor %vm9354, %vm9355
  %v9357 = vsel %vm9356, %v9349, %v9353
  %v9358 = vand.u32 2147483647, %v9348
  %vm9359 = vcmp.eq.f32.partialorder %v9358, 8.507059e+37
  %v9360 = vand.u32 %v9348, 2147483648
  %v9361 = vor.u32 1.1754944e-38, %v9360
  %v9362 = vsel %vm9359, %v9361, %v9357
  %v9363 = vmul.f32 %v9338, %v9362
  %v9364 = vmin.f32 %v9363, 1.0
  %v9365 = vmax.f32 %v9364, -1.0
  %v9366 = vmul.f32 %v8093, %v8093
  %v9367 = vmin.f32 16.0, %v9366
  %v9368 = vmul.f32 %v9367, 2.1237322e-06
  %v9369 = vadd.f32 %v9368, 0.00028619796
  %v9370 = vmul.f32 %v9367, %v9369
  %v9371 = vadd.f32 %v9370, 0.0036580483
  %v9372 = vmul.f32 %v9367, %v9371
  %v9373 = vadd.f32 %v9372, 0.05243302
  %v9374 = vmul.f32 %v9367, %v9373
  %v9375 = vadd.f32 %v9374, 0.18741608
  %v9376 = vmul.f32 %v9367, %v9375
  %v9377 = vadd.f32 %v9376, 1.1283791
  %v9378 = vmul.f32 %v8093, %v9377
  %v9379 = vmul.f32 %v9367, 3.8918573e-05
  %v9380 = vadd.f32 %v9379, 0.001143296
  %v9381 = vmul.f32 %v9367, %v9380
  %v9382 = vadd.f32 %v9381, 0.014752088
  %v9383 = vmul.f32 %v9367, %v9382
  %v9384 = vadd.f32 %v9383, 0.112945676
  %v9385 = vmul.f32 %v9367, %v9384
  %v9386 = vadd.f32 %v9385, 0.4994258
  %v9387 = vmul.f32 %v9367, %v9386
  %v9388 = vadd.f32 %v9387, 1.0
  %v9389 = vrcp.pop %v9388
  %v9390 = vmul.f32 %v9388, %v9389
  %v9391 = vsub.f32 1.0, %v9390
  %v9392 = vmul.f32 %v9389, %v9391
  %v9393 = vadd.f32 %v9389, %v9392
  %vm9394 = vweird.f32 %v9388
  %vm9395 = vweird.f32 %v9389
  %vm9396 = vmor %vm9394, %vm9395
  %v9397 = vsel %vm9396, %v9389, %v9393
  %v9398 = vand.u32 2147483647, %v9388
  %vm9399 = vcmp.eq.f32.partialorder %v9398, 8.507059e+37
  %v9400 = vand.u32 %v9388, 2147483648
  %v9401 = vor.u32 1.1754944e-38, %v9400
  %v9402 = vsel %vm9399, %v9401, %v9397
  %v9403 = vmul.f32 %v9378, %v9402
  %v9404 = vmin.f32 %v9403, 1.0
  %v9405 = vmax.f32 %v9404, -1.0
  %v9406 = vmul.f32 %v8094, %v8094
  %v9407 = vmin.f32 16.0, %v9406
  %v9408 = vmul.f32 %v9407, 2.1237322e-06
  %v9409 = vadd.f32 %v9408, 0.00028619796
  %v9410 = vmul.f32 %v9407, %v9409
  %v9411 = vadd.f32 %v9410, 0.0036580483
  %v9412 = vmul.f32 %v9407, %v9411
  %v9413 = vadd.f32 %v9412, 0.05243302
  %v9414 = vmul.f32 %v9407, %v9413
  %v9415 = vadd.f32 %v9414, 0.18741608
  %v9416 = vmul.f32 %v9407, %v9415
  %v9417 = vadd.f32 %v9416, 1.1283791
  %v9418 = vmul.f32 %v8094, %v9417
  %v9419 = vmul.f32 %v9407, 3.8918573e-05
  %v9420 = vadd.f32 %v9419, 0.001143296
  %v9421 = vmul.f32 %v9407, %v9420
  %v9422 = vadd.f32 %v9421, 0.014752088
  %v9423 = vmul.f32 %v9407, %v9422
  %v9424 = vadd.f32 %v9423, 0.112945676
  %v9425 = vmul.f32 %v9407, %v9424
  %v9426 = vadd.f32 %v9425, 0.4994258
  %v9427 = vmul.f32 %v9407, %v9426
  %v9428 = vadd.f32 %v9427, 1.0
  %v9429 = vrcp.pop %v9428
  %v9430 = vmul.f32 %v9428, %v9429
  %v9431 = vsub.f32 1.0, %v9430
  %v9432 = vmul.f32 %v9429, %v9431
  %v9433 = vadd.f32 %v9429, %v9432
  %vm9434 = vweird.f32 %v9428
  %vm9435 = vweird.f32 %v9429
  %vm9436 = vmor %vm9434, %vm9435
  %v9437 = vsel %vm9436, %v9429, %v9433
  %v9438 = vand.u32 2147483647, %v9428
  %vm9439 = vcmp.eq.f32.partialorder %v9438, 8.507059e+37
  %v9440 = vand.u32 %v9428, 2147483648
  %v9441 = vor.u32 1.1754944e-38, %v9440
  %v9442 = vsel %vm9439, %v9441, %v9437
  %v9443 = vmul.f32 %v9418, %v9442
  %v9444 = vmin.f32 %v9443, 1.0
  %v9445 = vmax.f32 %v9444, -1.0
  %v9446 = vmul.f32 %v8095, %v8095
  %v9447 = vmin.f32 16.0, %v9446
  %v9448 = vmul.f32 %v9447, 2.1237322e-06
  %v9449 = vadd.f32 %v9448, 0.00028619796
  %v9450 = vmul.f32 %v9447, %v9449
  %v9451 = vadd.f32 %v9450, 0.0036580483
  %v9452 = vmul.f32 %v9447, %v9451
  %v9453 = vadd.f32 %v9452, 0.05243302
  %v9454 = vmul.f32 %v9447, %v9453
  %v9455 = vadd.f32 %v9454, 0.18741608
  %v9456 = vmul.f32 %v9447, %v9455
  %v9457 = vadd.f32 %v9456, 1.1283791
  %v9458 = vmul.f32 %v8095, %v9457
  %v9459 = vmul.f32 %v9447, 3.8918573e-05
  %v9460 = vadd.f32 %v9459, 0.001143296
  %v9461 = vmul.f32 %v9447, %v9460
  %v9462 = vadd.f32 %v9461, 0.014752088
  %v9463 = vmul.f32 %v9447, %v9462
  %v9464 = vadd.f32 %v9463, 0.112945676
  %v9465 = vmul.f32 %v9447, %v9464
  %v9466 = vadd.f32 %v9465, 0.4994258
  %v9467 = vmul.f32 %v9447, %v9466
  %v9468 = vadd.f32 %v9467, 1.0
  %v9469 = vrcp.pop %v9468
  %v9470 = vmul.f32 %v9468, %v9469
  %v9471 = vsub.f32 1.0, %v9470
  %v9472 = vmul.f32 %v9469, %v9471
  %v9473 = vadd.f32 %v9469, %v9472
  %vm9474 = vweird.f32 %v9468
  %vm9475 = vweird.f32 %v9469
  %vm9476 = vmor %vm9474, %vm9475
  %v9477 = vsel %vm9476, %v9469, %v9473
  %v9478 = vand.u32 2147483647, %v9468
  %vm9479 = vcmp.eq.f32.partialorder %v9478, 8.507059e+37
  %v9480 = vand.u32 %v9468, 2147483648
  %v9481 = vor.u32 1.1754944e-38, %v9480
  %v9482 = vsel %vm9479, %v9481, %v9477
  %v9483 = vmul.f32 %v9458, %v9482
  %v9484 = vmin.f32 %v9483, 1.0
  %v9485 = vmax.f32 %v9484, -1.0
  %v9486 = vmul.f32 %v8096, %v8096
  %v9487 = vmin.f32 16.0, %v9486
  %v9488 = vmul.f32 %v9487, 2.1237322e-06
  %v9489 = vadd.f32 %v9488, 0.00028619796
  %v9490 = vmul.f32 %v9487, %v9489
  %v9491 = vadd.f32 %v9490, 0.0036580483
  %v9492 = vmul.f32 %v9487, %v9491
  %v9493 = vadd.f32 %v9492, 0.05243302
  %v9494 = vmul.f32 %v9487, %v9493
  %v9495 = vadd.f32 %v9494, 0.18741608
  %v9496 = vmul.f32 %v9487, %v9495
  %v9497 = vadd.f32 %v9496, 1.1283791
  %v9498 = vmul.f32 %v8096, %v9497
  %v9499 = vmul.f32 %v9487, 3.8918573e-05
  %v9500 = vadd.f32 %v9499, 0.001143296
  %v9501 = vmul.f32 %v9487, %v9500
  %v9502 = vadd.f32 %v9501, 0.014752088
  %v9503 = vmul.f32 %v9487, %v9502
  %v9504 = vadd.f32 %v9503, 0.112945676
  %v9505 = vmul.f32 %v9487, %v9504
  %v9506 = vadd.f32 %v9505, 0.4994258
  %v9507 = vmul.f32 %v9487, %v9506
  %v9508 = vadd.f32 %v9507, 1.0
  %v9509 = vrcp.pop %v9508
  %v9510 = vmul.f32 %v9508, %v9509
  %v9511 = vsub.f32 1.0, %v9510
  %v9512 = vmul.f32 %v9509, %v9511
  %v9513 = vadd.f32 %v9509, %v9512
  %vm9514 = vweird.f32 %v9508
  %vm9515 = vweird.f32 %v9509
  %vm9516 = vmor %vm9514, %vm9515
  %v9517 = vsel %vm9516, %v9509, %v9513
  %v9518 = vand.u32 2147483647, %v9508
  %vm9519 = vcmp.eq.f32.partialorder %v9518, 8.507059e+37
  %v9520 = vand.u32 %v9508, 2147483648
  %v9521 = vor.u32 1.1754944e-38, %v9520
  %v9522 = vsel %vm9519, %v9521, %v9517
  %v9523 = vmul.f32 %v9498, %v9522
  %v9524 = vmin.f32 %v9523, 1.0
  %v9525 = vmax.f32 %v9524, -1.0
  %v9526 = vmul.f32 %v8097, %v8097
  %v9527 = vmin.f32 16.0, %v9526
  %v9528 = vmul.f32 %v9527, 2.1237322e-06
  %v9529 = vadd.f32 %v9528, 0.00028619796
  %v9530 = vmul.f32 %v9527, %v9529
  %v9531 = vadd.f32 %v9530, 0.0036580483
  %v9532 = vmul.f32 %v9527, %v9531
  %v9533 = vadd.f32 %v9532, 0.05243302
  %v9534 = vmul.f32 %v9527, %v9533
  %v9535 = vadd.f32 %v9534, 0.18741608
  %v9536 = vmul.f32 %v9527, %v9535
  %v9537 = vadd.f32 %v9536, 1.1283791
  %v9538 = vmul.f32 %v8097, %v9537
  %v9539 = vmul.f32 %v9527, 3.8918573e-05
  %v9540 = vadd.f32 %v9539, 0.001143296
  %v9541 = vmul.f32 %v9527, %v9540
  %v9542 = vadd.f32 %v9541, 0.014752088
  %v9543 = vmul.f32 %v9527, %v9542
  %v9544 = vadd.f32 %v9543, 0.112945676
  %v9545 = vmul.f32 %v9527, %v9544
  %v9546 = vadd.f32 %v9545, 0.4994258
  %v9547 = vmul.f32 %v9527, %v9546
  %v9548 = vadd.f32 %v9547, 1.0
  %v9549 = vrcp.pop %v9548
  %v9550 = vmul.f32 %v9548, %v9549
  %v9551 = vsub.f32 1.0, %v9550
  %v9552 = vmul.f32 %v9549, %v9551
  %v9553 = vadd.f32 %v9549, %v9552
  %vm9554 = vweird.f32 %v9548
  %vm9555 = vweird.f32 %v9549
  %vm9556 = vmor %vm9554, %vm9555
  %v9557 = vsel %vm9556, %v9549, %v9553
  %v9558 = vand.u32 2147483647, %v9548
  %vm9559 = vcmp.eq.f32.partialorder %v9558, 8.507059e+37
  %v9560 = vand.u32 %v9548, 2147483648
  %v9561 = vor.u32 1.1754944e-38, %v9560
  %v9562 = vsel %vm9559, %v9561, %v9557
  %v9563 = vmul.f32 %v9538, %v9562
  %v9564 = vmin.f32 %v9563, 1.0
  %v9565 = vmax.f32 %v9564, -1.0
  %v9566 = vmul.f32 %v8098, %v8098
  %v9567 = vmin.f32 16.0, %v9566
  %v9568 = vmul.f32 %v9567, 2.1237322e-06
  %v9569 = vadd.f32 %v9568, 0.00028619796
  %v9570 = vmul.f32 %v9567, %v9569
  %v9571 = vadd.f32 %v9570, 0.0036580483
  %v9572 = vmul.f32 %v9567, %v9571
  %v9573 = vadd.f32 %v9572, 0.05243302
  %v9574 = vmul.f32 %v9567, %v9573
  %v9575 = vadd.f32 %v9574, 0.18741608
  %v9576 = vmul.f32 %v9567, %v9575
  %v9577 = vadd.f32 %v9576, 1.1283791
  %v9578 = vmul.f32 %v8098, %v9577
  %v9579 = vmul.f32 %v9567, 3.8918573e-05
  %v9580 = vadd.f32 %v9579, 0.001143296
  %v9581 = vmul.f32 %v9567, %v9580
  %v9582 = vadd.f32 %v9581, 0.014752088
  %v9583 = vmul.f32 %v9567, %v9582
  %v9584 = vadd.f32 %v9583, 0.112945676
  %v9585 = vmul.f32 %v9567, %v9584
  %v9586 = vadd.f32 %v9585, 0.4994258
  %v9587 = vmul.f32 %v9567, %v9586
  %v9588 = vadd.f32 %v9587, 1.0
  %v9589 = vrcp.pop %v9588
  %v9590 = vmul.f32 %v9588, %v9589
  %v9591 = vsub.f32 1.0, %v9590
  %v9592 = vmul.f32 %v9589, %v9591
  %v9593 = vadd.f32 %v9589, %v9592
  %vm9594 = vweird.f32 %v9588
  %vm9595 = vweird.f32 %v9589
  %vm9596 = vmor %vm9594, %vm9595
  %v9597 = vsel %vm9596, %v9589, %v9593
  %v9598 = vand.u32 2147483647, %v9588
  %vm9599 = vcmp.eq.f32.partialorder %v9598, 8.507059e+37
  %v9600 = vand.u32 %v9588, 2147483648
  %v9601 = vor.u32 1.1754944e-38, %v9600
  %v9602 = vsel %vm9599, %v9601, %v9597
  %v9603 = vmul.f32 %v9578, %v9602
  %v9604 = vmin.f32 %v9603, 1.0
  %v9605 = vmax.f32 %v9604, -1.0
  %v9606 = vmul.f32 %v8099, %v8099
  %v9607 = vmin.f32 16.0, %v9606
  %v9608 = vmul.f32 %v9607, 2.1237322e-06
  %v9609 = vadd.f32 %v9608, 0.00028619796
  %v9610 = vmul.f32 %v9607, %v9609
  %v9611 = vadd.f32 %v9610, 0.0036580483
  %v9612 = vmul.f32 %v9607, %v9611
  %v9613 = vadd.f32 %v9612, 0.05243302
  %v9614 = vmul.f32 %v9607, %v9613
  %v9615 = vadd.f32 %v9614, 0.18741608
  %v9616 = vmul.f32 %v9607, %v9615
  %v9617 = vadd.f32 %v9616, 1.1283791
  %v9618 = vmul.f32 %v8099, %v9617
  %v9619 = vmul.f32 %v9607, 3.8918573e-05
  %v9620 = vadd.f32 %v9619, 0.001143296
  %v9621 = vmul.f32 %v9607, %v9620
  %v9622 = vadd.f32 %v9621, 0.014752088
  %v9623 = vmul.f32 %v9607, %v9622
  %v9624 = vadd.f32 %v9623, 0.112945676
  %v9625 = vmul.f32 %v9607, %v9624
  %v9626 = vadd.f32 %v9625, 0.4994258
  %v9627 = vmul.f32 %v9607, %v9626
  %v9628 = vadd.f32 %v9627, 1.0
  %v9629 = vrcp.pop %v9628
  %v9630 = vmul.f32 %v9628, %v9629
  %v9631 = vsub.f32 1.0, %v9630
  %v9632 = vmul.f32 %v9629, %v9631
  %v9633 = vadd.f32 %v9629, %v9632
  %vm9634 = vweird.f32 %v9628
  %vm9635 = vweird.f32 %v9629
  %vm9636 = vmor %vm9634, %vm9635
  %v9637 = vsel %vm9636, %v9629, %v9633
  %v9638 = vand.u32 2147483647, %v9628
  %vm9639 = vcmp.eq.f32.partialorder %v9638, 8.507059e+37
  %v9640 = vand.u32 %v9628, 2147483648
  %v9641 = vor.u32 1.1754944e-38, %v9640
  %v9642 = vsel %vm9639, %v9641, %v9637
  %v9643 = vmul.f32 %v9618, %v9642
  %v9644 = vmin.f32 %v9643, 1.0
  %v9645 = vmax.f32 %v9644, -1.0
  %v9646 = vmul.f32 %v8100, %v8100
  %v9647 = vmin.f32 16.0, %v9646
  %v9648 = vmul.f32 %v9647, 2.1237322e-06
  %v9649 = vadd.f32 %v9648, 0.00028619796
  %v9650 = vmul.f32 %v9647, %v9649
  %v9651 = vadd.f32 %v9650, 0.0036580483
  %v9652 = vmul.f32 %v9647, %v9651
  %v9653 = vadd.f32 %v9652, 0.05243302
  %v9654 = vmul.f32 %v9647, %v9653
  %v9655 = vadd.f32 %v9654, 0.18741608
  %v9656 = vmul.f32 %v9647, %v9655
  %v9657 = vadd.f32 %v9656, 1.1283791
  %v9658 = vmul.f32 %v8100, %v9657
  %v9659 = vmul.f32 %v9647, 3.8918573e-05
  %v9660 = vadd.f32 %v9659, 0.001143296
  %v9661 = vmul.f32 %v9647, %v9660
  %v9662 = vadd.f32 %v9661, 0.014752088
  %v9663 = vmul.f32 %v9647, %v9662
  %v9664 = vadd.f32 %v9663, 0.112945676
  %v9665 = vmul.f32 %v9647, %v9664
  %v9666 = vadd.f32 %v9665, 0.4994258
  %v9667 = vmul.f32 %v9647, %v9666
  %v9668 = vadd.f32 %v9667, 1.0
  %v9669 = vrcp.pop %v9668
  %v9670 = vmul.f32 %v9668, %v9669
  %v9671 = vsub.f32 1.0, %v9670
  %v9672 = vmul.f32 %v9669, %v9671
  %v9673 = vadd.f32 %v9669, %v9672
  %vm9674 = vweird.f32 %v9668
  %vm9675 = vweird.f32 %v9669
  %vm9676 = vmor %vm9674, %vm9675
  %v9677 = vsel %vm9676, %v9669, %v9673
  %v9678 = vand.u32 2147483647, %v9668
  %vm9679 = vcmp.eq.f32.partialorder %v9678, 8.507059e+37
  %v9680 = vand.u32 %v9668, 2147483648
  %v9681 = vor.u32 1.1754944e-38, %v9680
  %v9682 = vsel %vm9679, %v9681, %v9677
  %v9683 = vmul.f32 %v9658, %v9682
  %v9684 = vmin.f32 %v9683, 1.0
  %v9685 = vmax.f32 %v9684, -1.0
  %v9686 = vmul.f32 %v8101, %v8101
  %v9687 = vmin.f32 16.0, %v9686
  %v9688 = vmul.f32 %v9687, 2.1237322e-06
  %v9689 = vadd.f32 %v9688, 0.00028619796
  %v9690 = vmul.f32 %v9687, %v9689
  %v9691 = vadd.f32 %v9690, 0.0036580483
  %v9692 = vmul.f32 %v9687, %v9691
  %v9693 = vadd.f32 %v9692, 0.05243302
  %v9694 = vmul.f32 %v9687, %v9693
  %v9695 = vadd.f32 %v9694, 0.18741608
  %v9696 = vmul.f32 %v9687, %v9695
  %v9697 = vadd.f32 %v9696, 1.1283791
  %v9698 = vmul.f32 %v8101, %v9697
  %v9699 = vmul.f32 %v9687, 3.8918573e-05
  %v9700 = vadd.f32 %v9699, 0.001143296
  %v9701 = vmul.f32 %v9687, %v9700
  %v9702 = vadd.f32 %v9701, 0.014752088
  %v9703 = vmul.f32 %v9687, %v9702
  %v9704 = vadd.f32 %v9703, 0.112945676
  %v9705 = vmul.f32 %v9687, %v9704
  %v9706 = vadd.f32 %v9705, 0.4994258
  %v9707 = vmul.f32 %v9687, %v9706
  %v9708 = vadd.f32 %v9707, 1.0
  %v9709 = vrcp.pop %v9708
  %v9710 = vmul.f32 %v9708, %v9709
  %v9711 = vsub.f32 1.0, %v9710
  %v9712 = vmul.f32 %v9709, %v9711
  %v9713 = vadd.f32 %v9709, %v9712
  %vm9714 = vweird.f32 %v9708
  %vm9715 = vweird.f32 %v9709
  %vm9716 = vmor %vm9714, %vm9715
  %v9717 = vsel %vm9716, %v9709, %v9713
  %v9718 = vand.u32 2147483647, %v9708
  %vm9719 = vcmp.eq.f32.partialorder %v9718, 8.507059e+37
  %v9720 = vand.u32 %v9708, 2147483648
  %v9721 = vor.u32 1.1754944e-38, %v9720
  %v9722 = vsel %vm9719, %v9721, %v9717
  %v9723 = vmul.f32 %v9698, %v9722
  %v9724 = vmin.f32 %v9723, 1.0
  %v9725 = vmax.f32 %v9724, -1.0
  %v9726 = vmul.f32 %v8102, %v8102
  %v9727 = vmin.f32 16.0, %v9726
  %v9728 = vmul.f32 %v9727, 2.1237322e-06
  %v9729 = vadd.f32 %v9728, 0.00028619796
  %v9730 = vmul.f32 %v9727, %v9729
  %v9731 = vadd.f32 %v9730, 0.0036580483
  %v9732 = vmul.f32 %v9727, %v9731
  %v9733 = vadd.f32 %v9732, 0.05243302
  %v9734 = vmul.f32 %v9727, %v9733
  %v9735 = vadd.f32 %v9734, 0.18741608
  %v9736 = vmul.f32 %v9727, %v9735
  %v9737 = vadd.f32 %v9736, 1.1283791
  %v9738 = vmul.f32 %v8102, %v9737
  %v9739 = vmul.f32 %v9727, 3.8918573e-05
  %v9740 = vadd.f32 %v9739, 0.001143296
  %v9741 = vmul.f32 %v9727, %v9740
  %v9742 = vadd.f32 %v9741, 0.014752088
  %v9743 = vmul.f32 %v9727, %v9742
  %v9744 = vadd.f32 %v9743, 0.112945676
  %v9745 = vmul.f32 %v9727, %v9744
  %v9746 = vadd.f32 %v9745, 0.4994258
  %v9747 = vmul.f32 %v9727, %v9746
  %v9748 = vadd.f32 %v9747, 1.0
  %v9749 = vrcp.pop %v9748
  %v9750 = vmul.f32 %v9748, %v9749
  %v9751 = vsub.f32 1.0, %v9750
  %v9752 = vmul.f32 %v9749, %v9751
  %v9753 = vadd.f32 %v9749, %v9752
  %vm9754 = vweird.f32 %v9748
  %vm9755 = vweird.f32 %v9749
  %vm9756 = vmor %vm9754, %vm9755
  %v9757 = vsel %vm9756, %v9749, %v9753
  %v9758 = vand.u32 2147483647, %v9748
  %vm9759 = vcmp.eq.f32.partialorder %v9758, 8.507059e+37
  %v9760 = vand.u32 %v9748, 2147483648
  %v9761 = vor.u32 1.1754944e-38, %v9760
  %v9762 = vsel %vm9759, %v9761, %v9757
  %v9763 = vmul.f32 %v9738, %v9762
  %v9764 = vmin.f32 %v9763, 1.0
  %v9765 = vmax.f32 %v9764, -1.0
  %v9766 = vmul.f32 %v8103, %v8103
  %v9767 = vmin.f32 16.0, %v9766
  %v9768 = vmul.f32 %v9767, 2.1237322e-06
  %v9769 = vadd.f32 %v9768, 0.00028619796
  %v9770 = vmul.f32 %v9767, %v9769
  %v9771 = vadd.f32 %v9770, 0.0036580483
  %v9772 = vmul.f32 %v9767, %v9771
  %v9773 = vadd.f32 %v9772, 0.05243302
  %v9774 = vmul.f32 %v9767, %v9773
  %v9775 = vadd.f32 %v9774, 0.18741608
  %v9776 = vmul.f32 %v9767, %v9775
  %v9777 = vadd.f32 %v9776, 1.1283791
  %v9778 = vmul.f32 %v8103, %v9777
  %v9779 = vmul.f32 %v9767, 3.8918573e-05
  %v9780 = vadd.f32 %v9779, 0.001143296
  %v9781 = vmul.f32 %v9767, %v9780
  %v9782 = vadd.f32 %v9781, 0.014752088
  %v9783 = vmul.f32 %v9767, %v9782
  %v9784 = vadd.f32 %v9783, 0.112945676
  %v9785 = vmul.f32 %v9767, %v9784
  %v9786 = vadd.f32 %v9785, 0.4994258
  %v9787 = vmul.f32 %v9767, %v9786
  %v9788 = vadd.f32 %v9787, 1.0
  %v9789 = vrcp.pop %v9788
  %v9790 = vmul.f32 %v9788, %v9789
  %v9791 = vsub.f32 1.0, %v9790
  %v9792 = vmul.f32 %v9789, %v9791
  %v9793 = vadd.f32 %v9789, %v9792
  %vm9794 = vweird.f32 %v9788
  %vm9795 = vweird.f32 %v9789
  %vm9796 = vmor %vm9794, %vm9795
  %v9797 = vsel %vm9796, %v9789, %v9793
  %v9798 = vand.u32 2147483647, %v9788
  %vm9799 = vcmp.eq.f32.partialorder %v9798, 8.507059e+37
  %v9800 = vand.u32 %v9788, 2147483648
  %v9801 = vor.u32 1.1754944e-38, %v9800
  %v9802 = vsel %vm9799, %v9801, %v9797
  %v9803 = vmul.f32 %v9778, %v9802
  %v9804 = vmin.f32 %v9803, 1.0
  %v9805 = vmax.f32 %v9804, -1.0
  %v9806 = vmul.f32 %v8104, %v8104
  %v9807 = vmin.f32 16.0, %v9806
  %v9808 = vmul.f32 %v9807, 2.1237322e-06
  %v9809 = vadd.f32 %v9808, 0.00028619796
  %v9810 = vmul.f32 %v9807, %v9809
  %v9811 = vadd.f32 %v9810, 0.0036580483
  %v9812 = vmul.f32 %v9807, %v9811
  %v9813 = vadd.f32 %v9812, 0.05243302
  %v9814 = vmul.f32 %v9807, %v9813
  %v9815 = vadd.f32 %v9814, 0.18741608
  %v9816 = vmul.f32 %v9807, %v9815
  %v9817 = vadd.f32 %v9816, 1.1283791
  %v9818 = vmul.f32 %v8104, %v9817
  %v9819 = vmul.f32 %v9807, 3.8918573e-05
  %v9820 = vadd.f32 %v9819, 0.001143296
  %v9821 = vmul.f32 %v9807, %v9820
  %v9822 = vadd.f32 %v9821, 0.014752088
  %v9823 = vmul.f32 %v9807, %v9822
  %v9824 = vadd.f32 %v9823, 0.112945676
  %v9825 = vmul.f32 %v9807, %v9824
  %v9826 = vadd.f32 %v9825, 0.4994258
  %v9827 = vmul.f32 %v9807, %v9826
  %v9828 = vadd.f32 %v9827, 1.0
  %v9829 = vrcp.pop %v9828
  %v9830 = vmul.f32 %v9828, %v9829
  %v9831 = vsub.f32 1.0, %v9830
  %v9832 = vmul.f32 %v9829, %v9831
  %v9833 = vadd.f32 %v9829, %v9832
  %vm9834 = vweird.f32 %v9828
  %vm9835 = vweird.f32 %v9829
  %vm9836 = vmor %vm9834, %vm9835
  %v9837 = vsel %vm9836, %v9829, %v9833
  %v9838 = vand.u32 2147483647, %v9828
  %vm9839 = vcmp.eq.f32.partialorder %v9838, 8.507059e+37
  %v9840 = vand.u32 %v9828, 2147483648
  %v9841 = vor.u32 1.1754944e-38, %v9840
  %v9842 = vsel %vm9839, %v9841, %v9837
  %v9843 = vmul.f32 %v9818, %v9842
  %v9844 = vmin.f32 %v9843, 1.0
  %v9845 = vmax.f32 %v9844, -1.0
  %v9846 = vmul.f32 %v8105, %v8105
  %v9847 = vmin.f32 16.0, %v9846
  %v9848 = vmul.f32 %v9847, 2.1237322e-06
  %v9849 = vadd.f32 %v9848, 0.00028619796
  %v9850 = vmul.f32 %v9847, %v9849
  %v9851 = vadd.f32 %v9850, 0.0036580483
  %v9852 = vmul.f32 %v9847, %v9851
  %v9853 = vadd.f32 %v9852, 0.05243302
  %v9854 = vmul.f32 %v9847, %v9853
  %v9855 = vadd.f32 %v9854, 0.18741608
  %v9856 = vmul.f32 %v9847, %v9855
  %v9857 = vadd.f32 %v9856, 1.1283791
  %v9858 = vmul.f32 %v8105, %v9857
  %v9859 = vmul.f32 %v9847, 3.8918573e-05
  %v9860 = vadd.f32 %v9859, 0.001143296
  %v9861 = vmul.f32 %v9847, %v9860
  %v9862 = vadd.f32 %v9861, 0.014752088
  %v9863 = vmul.f32 %v9847, %v9862
  %v9864 = vadd.f32 %v9863, 0.112945676
  %v9865 = vmul.f32 %v9847, %v9864
  %v9866 = vadd.f32 %v9865, 0.4994258
  %v9867 = vmul.f32 %v9847, %v9866
  %v9868 = vadd.f32 %v9867, 1.0
  %v9869 = vrcp.pop %v9868
  %v9870 = vmul.f32 %v9868, %v9869
  %v9871 = vsub.f32 1.0, %v9870
  %v9872 = vmul.f32 %v9869, %v9871
  %v9873 = vadd.f32 %v9869, %v9872
  %vm9874 = vweird.f32 %v9868
  %vm9875 = vweird.f32 %v9869
  %vm9876 = vmor %vm9874, %vm9875
  %v9877 = vsel %vm9876, %v9869, %v9873
  %v9878 = vand.u32 2147483647, %v9868
  %vm9879 = vcmp.eq.f32.partialorder %v9878, 8.507059e+37
  %v9880 = vand.u32 %v9868, 2147483648
  %v9881 = vor.u32 1.1754944e-38, %v9880
  %v9882 = vsel %vm9879, %v9881, %v9877
  %v9883 = vmul.f32 %v9858, %v9882
  %v9884 = vmin.f32 %v9883, 1.0
  %v9885 = vmax.f32 %v9884, -1.0
  %v9886 = vmul.f32 %v8106, %v8106
  %v9887 = vmin.f32 16.0, %v9886
  %v9888 = vmul.f32 %v9887, 2.1237322e-06
  %v9889 = vadd.f32 %v9888, 0.00028619796
  %v9890 = vmul.f32 %v9887, %v9889
  %v9891 = vadd.f32 %v9890, 0.0036580483
  %v9892 = vmul.f32 %v9887, %v9891
  %v9893 = vadd.f32 %v9892, 0.05243302
  %v9894 = vmul.f32 %v9887, %v9893
  %v9895 = vadd.f32 %v9894, 0.18741608
  %v9896 = vmul.f32 %v9887, %v9895
  %v9897 = vadd.f32 %v9896, 1.1283791
  %v9898 = vmul.f32 %v8106, %v9897
  %v9899 = vmul.f32 %v9887, 3.8918573e-05
  %v9900 = vadd.f32 %v9899, 0.001143296
  %v9901 = vmul.f32 %v9887, %v9900
  %v9902 = vadd.f32 %v9901, 0.014752088
  %v9903 = vmul.f32 %v9887, %v9902
  %v9904 = vadd.f32 %v9903, 0.112945676
  %v9905 = vmul.f32 %v9887, %v9904
  %v9906 = vadd.f32 %v9905, 0.4994258
  %v9907 = vmul.f32 %v9887, %v9906
  %v9908 = vadd.f32 %v9907, 1.0
  %v9909 = vrcp.pop %v9908
  %v9910 = vmul.f32 %v9908, %v9909
  %v9911 = vsub.f32 1.0, %v9910
  %v9912 = vmul.f32 %v9909, %v9911
  %v9913 = vadd.f32 %v9909, %v9912
  %vm9914 = vweird.f32 %v9908
  %vm9915 = vweird.f32 %v9909
  %vm9916 = vmor %vm9914, %vm9915
  %v9917 = vsel %vm9916, %v9909, %v9913
  %v9918 = vand.u32 2147483647, %v9908
  %vm9919 = vcmp.eq.f32.partialorder %v9918, 8.507059e+37
  %v9920 = vand.u32 %v9908, 2147483648
  %v9921 = vor.u32 1.1754944e-38, %v9920
  %v9922 = vsel %vm9919, %v9921, %v9917
  %v9923 = vmul.f32 %v9898, %v9922
  %v9924 = vmin.f32 %v9923, 1.0
  %v9925 = vmax.f32 %v9924, -1.0
  %v9926 = vmul.f32 %v8107, %v8107
  %v9927 = vmin.f32 16.0, %v9926
  %v9928 = vmul.f32 %v9927, 2.1237322e-06
  %v9929 = vadd.f32 %v9928, 0.00028619796
  %v9930 = vmul.f32 %v9927, %v9929
  %v9931 = vadd.f32 %v9930, 0.0036580483
  %v9932 = vmul.f32 %v9927, %v9931
  %v9933 = vadd.f32 %v9932, 0.05243302
  %v9934 = vmul.f32 %v9927, %v9933
  %v9935 = vadd.f32 %v9934, 0.18741608
  %v9936 = vmul.f32 %v9927, %v9935
  %v9937 = vadd.f32 %v9936, 1.1283791
  %v9938 = vmul.f32 %v8107, %v9937
  %v9939 = vmul.f32 %v9927, 3.8918573e-05
  %v9940 = vadd.f32 %v9939, 0.001143296
  %v9941 = vmul.f32 %v9927, %v9940
  %v9942 = vadd.f32 %v9941, 0.014752088
  %v9943 = vmul.f32 %v9927, %v9942
  %v9944 = vadd.f32 %v9943, 0.112945676
  %v9945 = vmul.f32 %v9927, %v9944
  %v9946 = vadd.f32 %v9945, 0.4994258
  %v9947 = vmul.f32 %v9927, %v9946
  %v9948 = vadd.f32 %v9947, 1.0
  %v9949 = vrcp.pop %v9948
  %v9950 = vmul.f32 %v9948, %v9949
  %v9951 = vsub.f32 1.0, %v9950
  %v9952 = vmul.f32 %v9949, %v9951
  %v9953 = vadd.f32 %v9949, %v9952
  %vm9954 = vweird.f32 %v9948
  %vm9955 = vweird.f32 %v9949
  %vm9956 = vmor %vm9954, %vm9955
  %v9957 = vsel %vm9956, %v9949, %v9953
  %v9958 = vand.u32 2147483647, %v9948
  %vm9959 = vcmp.eq.f32.partialorder %v9958, 8.507059e+37
  %v9960 = vand.u32 %v9948, 2147483648
  %v9961 = vor.u32 1.1754944e-38, %v9960
  %v9962 = vsel %vm9959, %v9961, %v9957
  %v9963 = vmul.f32 %v9938, %v9962
  %v9964 = vmin.f32 %v9963, 1.0
  %v9965 = vmax.f32 %v9964, -1.0
  %v9966 = vmul.f32 %v8108, %v8108
  %v9967 = vmin.f32 16.0, %v9966
  %v9968 = vmul.f32 %v9967, 2.1237322e-06
  %v9969 = vadd.f32 %v9968, 0.00028619796
  %v9970 = vmul.f32 %v9967, %v9969
  %v9971 = vadd.f32 %v9970, 0.0036580483
  %v9972 = vmul.f32 %v9967, %v9971
  %v9973 = vadd.f32 %v9972, 0.05243302
  %v9974 = vmul.f32 %v9967, %v9973
  %v9975 = vadd.f32 %v9974, 0.18741608
  %v9976 = vmul.f32 %v9967, %v9975
  %v9977 = vadd.f32 %v9976, 1.1283791
  %v9978 = vmul.f32 %v8108, %v9977
  %v9979 = vmul.f32 %v9967, 3.8918573e-05
  %v9980 = vadd.f32 %v9979, 0.001143296
  %v9981 = vmul.f32 %v9967, %v9980
  %v9982 = vadd.f32 %v9981, 0.014752088
  %v9983 = vmul.f32 %v9967, %v9982
  %v9984 = vadd.f32 %v9983, 0.112945676
  %v9985 = vmul.f32 %v9967, %v9984
  %v9986 = vadd.f32 %v9985, 0.4994258
  %v9987 = vmul.f32 %v9967, %v9986
  %v9988 = vadd.f32 %v9987, 1.0
  %v9989 = vrcp.pop %v9988
  %v9990 = vmul.f32 %v9988, %v9989
  %v9991 = vsub.f32 1.0, %v9990
  %v9992 = vmul.f32 %v9989, %v9991
  %v9993 = vadd.f32 %v9989, %v9992
  %vm9994 = vweird.f32 %v9988
  %vm9995 = vweird.f32 %v9989
  %vm9996 = vmor %vm9994, %vm9995
  %v9997 = vsel %vm9996, %v9989, %v9993
  %v9998 = vand.u32 2147483647, %v9988
  %vm9999 = vcmp.eq.f32.partialorder %v9998, 8.507059e+37
  %v10000 = vand.u32 %v9988, 2147483648
  %v10001 = vor.u32 1.1754944e-38, %v10000
  %v10002 = vsel %vm9999, %v10001, %v9997
  %v10003 = vmul.f32 %v9978, %v10002
  %v10004 = vmin.f32 %v10003, 1.0
  %v10005 = vmax.f32 %v10004, -1.0
  %v10006 = vmul.f32 %v8109, %v8109
  %v10007 = vmin.f32 16.0, %v10006
  %v10008 = vmul.f32 %v10007, 2.1237322e-06
  %v10009 = vadd.f32 %v10008, 0.00028619796
  %v10010 = vmul.f32 %v10007, %v10009
  %v10011 = vadd.f32 %v10010, 0.0036580483
  %v10012 = vmul.f32 %v10007, %v10011
  %v10013 = vadd.f32 %v10012, 0.05243302
  %v10014 = vmul.f32 %v10007, %v10013
  %v10015 = vadd.f32 %v10014, 0.18741608
  %v10016 = vmul.f32 %v10007, %v10015
  %v10017 = vadd.f32 %v10016, 1.1283791
  %v10018 = vmul.f32 %v8109, %v10017
  %v10019 = vmul.f32 %v10007, 3.8918573e-05
  %v10020 = vadd.f32 %v10019, 0.001143296
  %v10021 = vmul.f32 %v10007, %v10020
  %v10022 = vadd.f32 %v10021, 0.014752088
  %v10023 = vmul.f32 %v10007, %v10022
  %v10024 = vadd.f32 %v10023, 0.112945676
  %v10025 = vmul.f32 %v10007, %v10024
  %v10026 = vadd.f32 %v10025, 0.4994258
  %v10027 = vmul.f32 %v10007, %v10026
  %v10028 = vadd.f32 %v10027, 1.0
  %v10029 = vrcp.pop %v10028
  %v10030 = vmul.f32 %v10028, %v10029
  %v10031 = vsub.f32 1.0, %v10030
  %v10032 = vmul.f32 %v10029, %v10031
  %v10033 = vadd.f32 %v10029, %v10032
  %vm10034 = vweird.f32 %v10028
  %vm10035 = vweird.f32 %v10029
  %vm10036 = vmor %vm10034, %vm10035
  %v10037 = vsel %vm10036, %v10029, %v10033
  %v10038 = vand.u32 2147483647, %v10028
  %vm10039 = vcmp.eq.f32.partialorder %v10038, 8.507059e+37
  %v10040 = vand.u32 %v10028, 2147483648
  %v10041 = vor.u32 1.1754944e-38, %v10040
  %v10042 = vsel %vm10039, %v10041, %v10037
  %v10043 = vmul.f32 %v10018, %v10042
  %v10044 = vmin.f32 %v10043, 1.0
  %v10045 = vmax.f32 %v10044, -1.0
  %v10046 = vmul.f32 %v8110, %v8110
  %v10047 = vmin.f32 16.0, %v10046
  %v10048 = vmul.f32 %v10047, 2.1237322e-06
  %v10049 = vadd.f32 %v10048, 0.00028619796
  %v10050 = vmul.f32 %v10047, %v10049
  %v10051 = vadd.f32 %v10050, 0.0036580483
  %v10052 = vmul.f32 %v10047, %v10051
  %v10053 = vadd.f32 %v10052, 0.05243302
  %v10054 = vmul.f32 %v10047, %v10053
  %v10055 = vadd.f32 %v10054, 0.18741608
  %v10056 = vmul.f32 %v10047, %v10055
  %v10057 = vadd.f32 %v10056, 1.1283791
  %v10058 = vmul.f32 %v8110, %v10057
  %v10059 = vmul.f32 %v10047, 3.8918573e-05
  %v10060 = vadd.f32 %v10059, 0.001143296
  %v10061 = vmul.f32 %v10047, %v10060
  %v10062 = vadd.f32 %v10061, 0.014752088
  %v10063 = vmul.f32 %v10047, %v10062
  %v10064 = vadd.f32 %v10063, 0.112945676
  %v10065 = vmul.f32 %v10047, %v10064
  %v10066 = vadd.f32 %v10065, 0.4994258
  %v10067 = vmul.f32 %v10047, %v10066
  %v10068 = vadd.f32 %v10067, 1.0
  %v10069 = vrcp.pop %v10068
  %v10070 = vmul.f32 %v10068, %v10069
  %v10071 = vsub.f32 1.0, %v10070
  %v10072 = vmul.f32 %v10069, %v10071
  %v10073 = vadd.f32 %v10069, %v10072
  %vm10074 = vweird.f32 %v10068
  %vm10075 = vweird.f32 %v10069
  %vm10076 = vmor %vm10074, %vm10075
  %v10077 = vsel %vm10076, %v10069, %v10073
  %v10078 = vand.u32 2147483647, %v10068
  %vm10079 = vcmp.eq.f32.partialorder %v10078, 8.507059e+37
  %v10080 = vand.u32 %v10068, 2147483648
  %v10081 = vor.u32 1.1754944e-38, %v10080
  %v10082 = vsel %vm10079, %v10081, %v10077
  %v10083 = vmul.f32 %v10058, %v10082
  %v10084 = vmin.f32 %v10083, 1.0
  %v10085 = vmax.f32 %v10084, -1.0
  %v10086 = vmul.f32 %v8111, %v8111
  %v10087 = vmin.f32 16.0, %v10086
  %v10088 = vmul.f32 %v10087, 2.1237322e-06
  %v10089 = vadd.f32 %v10088, 0.00028619796
  %v10090 = vmul.f32 %v10087, %v10089
  %v10091 = vadd.f32 %v10090, 0.0036580483
  %v10092 = vmul.f32 %v10087, %v10091
  %v10093 = vadd.f32 %v10092, 0.05243302
  %v10094 = vmul.f32 %v10087, %v10093
  %v10095 = vadd.f32 %v10094, 0.18741608
  %v10096 = vmul.f32 %v10087, %v10095
  %v10097 = vadd.f32 %v10096, 1.1283791
  %v10098 = vmul.f32 %v8111, %v10097
  %v10099 = vmul.f32 %v10087, 3.8918573e-05
  %v10100 = vadd.f32 %v10099, 0.001143296
  %v10101 = vmul.f32 %v10087, %v10100
  %v10102 = vadd.f32 %v10101, 0.014752088
  %v10103 = vmul.f32 %v10087, %v10102
  %v10104 = vadd.f32 %v10103, 0.112945676
  %v10105 = vmul.f32 %v10087, %v10104
  %v10106 = vadd.f32 %v10105, 0.4994258
  %v10107 = vmul.f32 %v10087, %v10106
  %v10108 = vadd.f32 %v10107, 1.0
  %v10109 = vrcp.pop %v10108
  %v10110 = vmul.f32 %v10108, %v10109
  %v10111 = vsub.f32 1.0, %v10110
  %v10112 = vmul.f32 %v10109, %v10111
  %v10113 = vadd.f32 %v10109, %v10112
  %vm10114 = vweird.f32 %v10108
  %vm10115 = vweird.f32 %v10109
  %vm10116 = vmor %vm10114, %vm10115
  %v10117 = vsel %vm10116, %v10109, %v10113
  %v10118 = vand.u32 2147483647, %v10108
  %vm10119 = vcmp.eq.f32.partialorder %v10118, 8.507059e+37
  %v10120 = vand.u32 %v10108, 2147483648
  %v10121 = vor.u32 1.1754944e-38, %v10120
  %v10122 = vsel %vm10119, %v10121, %v10117
  %v10123 = vmul.f32 %v10098, %v10122
  %v10124 = vmin.f32 %v10123, 1.0
  %v10125 = vmax.f32 %v10124, -1.0
  %v10126 = vmul.f32 %v8112, %v8112
  %v10127 = vmin.f32 16.0, %v10126
  %v10128 = vmul.f32 %v10127, 2.1237322e-06
  %v10129 = vadd.f32 %v10128, 0.00028619796
  %v10130 = vmul.f32 %v10127, %v10129
  %v10131 = vadd.f32 %v10130, 0.0036580483
  %v10132 = vmul.f32 %v10127, %v10131
  %v10133 = vadd.f32 %v10132, 0.05243302
  %v10134 = vmul.f32 %v10127, %v10133
  %v10135 = vadd.f32 %v10134, 0.18741608
  %v10136 = vmul.f32 %v10127, %v10135
  %v10137 = vadd.f32 %v10136, 1.1283791
  %v10138 = vmul.f32 %v8112, %v10137
  %v10139 = vmul.f32 %v10127, 3.8918573e-05
  %v10140 = vadd.f32 %v10139, 0.001143296
  %v10141 = vmul.f32 %v10127, %v10140
  %v10142 = vadd.f32 %v10141, 0.014752088
  %v10143 = vmul.f32 %v10127, %v10142
  %v10144 = vadd.f32 %v10143, 0.112945676
  %v10145 = vmul.f32 %v10127, %v10144
  %v10146 = vadd.f32 %v10145, 0.4994258
  %v10147 = vmul.f32 %v10127, %v10146
  %v10148 = vadd.f32 %v10147, 1.0
  %v10149 = vrcp.pop %v10148
  %v10150 = vmul.f32 %v10148, %v10149
  %v10151 = vsub.f32 1.0, %v10150
  %v10152 = vmul.f32 %v10149, %v10151
  %v10153 = vadd.f32 %v10149, %v10152
  %vm10154 = vweird.f32 %v10148
  %vm10155 = vweird.f32 %v10149
  %vm10156 = vmor %vm10154, %vm10155
  %v10157 = vsel %vm10156, %v10149, %v10153
  %v10158 = vand.u32 2147483647, %v10148
  %vm10159 = vcmp.eq.f32.partialorder %v10158, 8.507059e+37
  %v10160 = vand.u32 %v10148, 2147483648
  %v10161 = vor.u32 1.1754944e-38, %v10160
  %v10162 = vsel %vm10159, %v10161, %v10157
  %v10163 = vmul.f32 %v10138, %v10162
  %v10164 = vmin.f32 %v10163, 1.0
  %v10165 = vmax.f32 %v10164, -1.0
  %v10166 = vmul.f32 %v8113, %v8113
  %v10167 = vmin.f32 16.0, %v10166
  %v10168 = vmul.f32 %v10167, 2.1237322e-06
  %v10169 = vadd.f32 %v10168, 0.00028619796
  %v10170 = vmul.f32 %v10167, %v10169
  %v10171 = vadd.f32 %v10170, 0.0036580483
  %v10172 = vmul.f32 %v10167, %v10171
  %v10173 = vadd.f32 %v10172, 0.05243302
  %v10174 = vmul.f32 %v10167, %v10173
  %v10175 = vadd.f32 %v10174, 0.18741608
  %v10176 = vmul.f32 %v10167, %v10175
  %v10177 = vadd.f32 %v10176, 1.1283791
  %v10178 = vmul.f32 %v8113, %v10177
  %v10179 = vmul.f32 %v10167, 3.8918573e-05
  %v10180 = vadd.f32 %v10179, 0.001143296
  %v10181 = vmul.f32 %v10167, %v10180
  %v10182 = vadd.f32 %v10181, 0.014752088
  %v10183 = vmul.f32 %v10167, %v10182
  %v10184 = vadd.f32 %v10183, 0.112945676
  %v10185 = vmul.f32 %v10167, %v10184
  %v10186 = vadd.f32 %v10185, 0.4994258
  %v10187 = vmul.f32 %v10167, %v10186
  %v10188 = vadd.f32 %v10187, 1.0
  %v10189 = vrcp.pop %v10188
  %v10190 = vmul.f32 %v10188, %v10189
  %v10191 = vsub.f32 1.0, %v10190
  %v10192 = vmul.f32 %v10189, %v10191
  %v10193 = vadd.f32 %v10189, %v10192
  %vm10194 = vweird.f32 %v10188
  %vm10195 = vweird.f32 %v10189
  %vm10196 = vmor %vm10194, %vm10195
  %v10197 = vsel %vm10196, %v10189, %v10193
  %v10198 = vand.u32 2147483647, %v10188
  %vm10199 = vcmp.eq.f32.partialorder %v10198, 8.507059e+37
  %v10200 = vand.u32 %v10188, 2147483648
  %v10201 = vor.u32 1.1754944e-38, %v10200
  %v10202 = vsel %vm10199, %v10201, %v10197
  %v10203 = vmul.f32 %v10178, %v10202
  %v10204 = vmin.f32 %v10203, 1.0
  %v10205 = vmax.f32 %v10204, -1.0
  %v10206 = vmul.f32 %v8114, %v8114
  %v10207 = vmin.f32 16.0, %v10206
  %v10208 = vmul.f32 %v10207, 2.1237322e-06
  %v10209 = vadd.f32 %v10208, 0.00028619796
  %v10210 = vmul.f32 %v10207, %v10209
  %v10211 = vadd.f32 %v10210, 0.0036580483
  %v10212 = vmul.f32 %v10207, %v10211
  %v10213 = vadd.f32 %v10212, 0.05243302
  %v10214 = vmul.f32 %v10207, %v10213
  %v10215 = vadd.f32 %v10214, 0.18741608
  %v10216 = vmul.f32 %v10207, %v10215
  %v10217 = vadd.f32 %v10216, 1.1283791
  %v10218 = vmul.f32 %v8114, %v10217
  %v10219 = vmul.f32 %v10207, 3.8918573e-05
  %v10220 = vadd.f32 %v10219, 0.001143296
  %v10221 = vmul.f32 %v10207, %v10220
  %v10222 = vadd.f32 %v10221, 0.014752088
  %v10223 = vmul.f32 %v10207, %v10222
  %v10224 = vadd.f32 %v10223, 0.112945676
  %v10225 = vmul.f32 %v10207, %v10224
  %v10226 = vadd.f32 %v10225, 0.4994258
  %v10227 = vmul.f32 %v10207, %v10226
  %v10228 = vadd.f32 %v10227, 1.0
  %v10229 = vrcp.pop %v10228
  %v10230 = vmul.f32 %v10228, %v10229
  %v10231 = vsub.f32 1.0, %v10230
  %v10232 = vmul.f32 %v10229, %v10231
  %v10233 = vadd.f32 %v10229, %v10232
  %vm10234 = vweird.f32 %v10228
  %vm10235 = vweird.f32 %v10229
  %vm10236 = vmor %vm10234, %vm10235
  %v10237 = vsel %vm10236, %v10229, %v10233
  %v10238 = vand.u32 2147483647, %v10228
  %vm10239 = vcmp.eq.f32.partialorder %v10238, 8.507059e+37
  %v10240 = vand.u32 %v10228, 2147483648
  %v10241 = vor.u32 1.1754944e-38, %v10240
  %v10242 = vsel %vm10239, %v10241, %v10237
  %v10243 = vmul.f32 %v10218, %v10242
  %v10244 = vmin.f32 %v10243, 1.0
  %v10245 = vmax.f32 %v10244, -1.0
  %v10246 = vmul.f32 %v8115, %v8115
  %v10247 = vmin.f32 16.0, %v10246
  %v10248 = vmul.f32 %v10247, 2.1237322e-06
  %v10249 = vadd.f32 %v10248, 0.00028619796
  %v10250 = vmul.f32 %v10247, %v10249
  %v10251 = vadd.f32 %v10250, 0.0036580483
  %v10252 = vmul.f32 %v10247, %v10251
  %v10253 = vadd.f32 %v10252, 0.05243302
  %v10254 = vmul.f32 %v10247, %v10253
  %v10255 = vadd.f32 %v10254, 0.18741608
  %v10256 = vmul.f32 %v10247, %v10255
  %v10257 = vadd.f32 %v10256, 1.1283791
  %v10258 = vmul.f32 %v8115, %v10257
  %v10259 = vmul.f32 %v10247, 3.8918573e-05
  %v10260 = vadd.f32 %v10259, 0.001143296
  %v10261 = vmul.f32 %v10247, %v10260
  %v10262 = vadd.f32 %v10261, 0.014752088
  %v10263 = vmul.f32 %v10247, %v10262
  %v10264 = vadd.f32 %v10263, 0.112945676
  %v10265 = vmul.f32 %v10247, %v10264
  %v10266 = vadd.f32 %v10265, 0.4994258
  %v10267 = vmul.f32 %v10247, %v10266
  %v10268 = vadd.f32 %v10267, 1.0
  %v10269 = vrcp.pop %v10268
  %v10270 = vmul.f32 %v10268, %v10269
  %v10271 = vsub.f32 1.0, %v10270
  %v10272 = vmul.f32 %v10269, %v10271
  %v10273 = vadd.f32 %v10269, %v10272
  %vm10274 = vweird.f32 %v10268
  %vm10275 = vweird.f32 %v10269
  %vm10276 = vmor %vm10274, %vm10275
  %v10277 = vsel %vm10276, %v10269, %v10273
  %v10278 = vand.u32 2147483647, %v10268
  %vm10279 = vcmp.eq.f32.partialorder %v10278, 8.507059e+37
  %v10280 = vand.u32 %v10268, 2147483648
  %v10281 = vor.u32 1.1754944e-38, %v10280
  %v10282 = vsel %vm10279, %v10281, %v10277
  %v10283 = vmul.f32 %v10258, %v10282
  %v10284 = vmin.f32 %v10283, 1.0
  %v10285 = vmax.f32 %v10284, -1.0
  %v10286 = vmul.f32 %v8116, %v8116
  %v10287 = vmin.f32 16.0, %v10286
  %v10288 = vmul.f32 %v10287, 2.1237322e-06
  %v10289 = vadd.f32 %v10288, 0.00028619796
  %v10290 = vmul.f32 %v10287, %v10289
  %v10291 = vadd.f32 %v10290, 0.0036580483
  %v10292 = vmul.f32 %v10287, %v10291
  %v10293 = vadd.f32 %v10292, 0.05243302
  %v10294 = vmul.f32 %v10287, %v10293
  %v10295 = vadd.f32 %v10294, 0.18741608
  %v10296 = vmul.f32 %v10287, %v10295
  %v10297 = vadd.f32 %v10296, 1.1283791
  %v10298 = vmul.f32 %v8116, %v10297
  %v10299 = vmul.f32 %v10287, 3.8918573e-05
  %v10300 = vadd.f32 %v10299, 0.001143296
  %v10301 = vmul.f32 %v10287, %v10300
  %v10302 = vadd.f32 %v10301, 0.014752088
  %v10303 = vmul.f32 %v10287, %v10302
  %v10304 = vadd.f32 %v10303, 0.112945676
  %v10305 = vmul.f32 %v10287, %v10304
  %v10306 = vadd.f32 %v10305, 0.4994258
  %v10307 = vmul.f32 %v10287, %v10306
  %v10308 = vadd.f32 %v10307, 1.0
  %v10309 = vrcp.pop %v10308
  %v10310 = vmul.f32 %v10308, %v10309
  %v10311 = vsub.f32 1.0, %v10310
  %v10312 = vmul.f32 %v10309, %v10311
  %v10313 = vadd.f32 %v10309, %v10312
  %vm10314 = vweird.f32 %v10308
  %vm10315 = vweird.f32 %v10309
  %vm10316 = vmor %vm10314, %vm10315
  %v10317 = vsel %vm10316, %v10309, %v10313
  %v10318 = vand.u32 2147483647, %v10308
  %vm10319 = vcmp.eq.f32.partialorder %v10318, 8.507059e+37
  %v10320 = vand.u32 %v10308, 2147483648
  %v10321 = vor.u32 1.1754944e-38, %v10320
  %v10322 = vsel %vm10319, %v10321, %v10317
  %v10323 = vmul.f32 %v10298, %v10322
  %v10324 = vmin.f32 %v10323, 1.0
  %v10325 = vmax.f32 %v10324, -1.0
  %v10326 = vmul.f32 %v8117, %v8117
  %v10327 = vmin.f32 16.0, %v10326
  %v10328 = vmul.f32 %v10327, 2.1237322e-06
  %v10329 = vadd.f32 %v10328, 0.00028619796
  %v10330 = vmul.f32 %v10327, %v10329
  %v10331 = vadd.f32 %v10330, 0.0036580483
  %v10332 = vmul.f32 %v10327, %v10331
  %v10333 = vadd.f32 %v10332, 0.05243302
  %v10334 = vmul.f32 %v10327, %v10333
  %v10335 = vadd.f32 %v10334, 0.18741608
  %v10336 = vmul.f32 %v10327, %v10335
  %v10337 = vadd.f32 %v10336, 1.1283791
  %v10338 = vmul.f32 %v8117, %v10337
  %v10339 = vmul.f32 %v10327, 3.8918573e-05
  %v10340 = vadd.f32 %v10339, 0.001143296
  %v10341 = vmul.f32 %v10327, %v10340
  %v10342 = vadd.f32 %v10341, 0.014752088
  %v10343 = vmul.f32 %v10327, %v10342
  %v10344 = vadd.f32 %v10343, 0.112945676
  %v10345 = vmul.f32 %v10327, %v10344
  %v10346 = vadd.f32 %v10345, 0.4994258
  %v10347 = vmul.f32 %v10327, %v10346
  %v10348 = vadd.f32 %v10347, 1.0
  %v10349 = vrcp.pop %v10348
  %v10350 = vmul.f32 %v10348, %v10349
  %v10351 = vsub.f32 1.0, %v10350
  %v10352 = vmul.f32 %v10349, %v10351
  %v10353 = vadd.f32 %v10349, %v10352
  %vm10354 = vweird.f32 %v10348
  %vm10355 = vweird.f32 %v10349
  %vm10356 = vmor %vm10354, %vm10355
  %v10357 = vsel %vm10356, %v10349, %v10353
  %v10358 = vand.u32 2147483647, %v10348
  %vm10359 = vcmp.eq.f32.partialorder %v10358, 8.507059e+37
  %v10360 = vand.u32 %v10348, 2147483648
  %v10361 = vor.u32 1.1754944e-38, %v10360
  %v10362 = vsel %vm10359, %v10361, %v10357
  %v10363 = vmul.f32 %v10338, %v10362
  %v10364 = vmin.f32 %v10363, 1.0
  %v10365 = vmax.f32 %v10364, -1.0
  %v10366 = vmul.f32 %v8118, %v8118
  %v10367 = vmin.f32 16.0, %v10366
  %v10368 = vmul.f32 %v10367, 2.1237322e-06
  %v10369 = vadd.f32 %v10368, 0.00028619796
  %v10370 = vmul.f32 %v10367, %v10369
  %v10371 = vadd.f32 %v10370, 0.0036580483
  %v10372 = vmul.f32 %v10367, %v10371
  %v10373 = vadd.f32 %v10372, 0.05243302
  %v10374 = vmul.f32 %v10367, %v10373
  %v10375 = vadd.f32 %v10374, 0.18741608
  %v10376 = vmul.f32 %v10367, %v10375
  %v10377 = vadd.f32 %v10376, 1.1283791
  %v10378 = vmul.f32 %v8118, %v10377
  %v10379 = vmul.f32 %v10367, 3.8918573e-05
  %v10380 = vadd.f32 %v10379, 0.001143296
  %v10381 = vmul.f32 %v10367, %v10380
  %v10382 = vadd.f32 %v10381, 0.014752088
  %v10383 = vmul.f32 %v10367, %v10382
  %v10384 = vadd.f32 %v10383, 0.112945676
  %v10385 = vmul.f32 %v10367, %v10384
  %v10386 = vadd.f32 %v10385, 0.4994258
  %v10387 = vmul.f32 %v10367, %v10386
  %v10388 = vadd.f32 %v10387, 1.0
  %v10389 = vrcp.pop %v10388
  %v10390 = vmul.f32 %v10388, %v10389
  %v10391 = vsub.f32 1.0, %v10390
  %v10392 = vmul.f32 %v10389, %v10391
  %v10393 = vadd.f32 %v10389, %v10392
  %vm10394 = vweird.f32 %v10388
  %vm10395 = vweird.f32 %v10389
  %vm10396 = vmor %vm10394, %vm10395
  %v10397 = vsel %vm10396, %v10389, %v10393
  %v10398 = vand.u32 2147483647, %v10388
  %vm10399 = vcmp.eq.f32.partialorder %v10398, 8.507059e+37
  %v10400 = vand.u32 %v10388, 2147483648
  %v10401 = vor.u32 1.1754944e-38, %v10400
  %v10402 = vsel %vm10399, %v10401, %v10397
  %v10403 = vmul.f32 %v10378, %v10402
  %v10404 = vmin.f32 %v10403, 1.0
  %v10405 = vmax.f32 %v10404, -1.0
  %v10406 = vmul.f32 %v8119, %v8119
  %v10407 = vmin.f32 16.0, %v10406
  %v10408 = vmul.f32 %v10407, 2.1237322e-06
  %v10409 = vadd.f32 %v10408, 0.00028619796
  %v10410 = vmul.f32 %v10407, %v10409
  %v10411 = vadd.f32 %v10410, 0.0036580483
  %v10412 = vmul.f32 %v10407, %v10411
  %v10413 = vadd.f32 %v10412, 0.05243302
  %v10414 = vmul.f32 %v10407, %v10413
  %v10415 = vadd.f32 %v10414, 0.18741608
  %v10416 = vmul.f32 %v10407, %v10415
  %v10417 = vadd.f32 %v10416, 1.1283791
  %v10418 = vmul.f32 %v8119, %v10417
  %v10419 = vmul.f32 %v10407, 3.8918573e-05
  %v10420 = vadd.f32 %v10419, 0.001143296
  %v10421 = vmul.f32 %v10407, %v10420
  %v10422 = vadd.f32 %v10421, 0.014752088
  %v10423 = vmul.f32 %v10407, %v10422
  %v10424 = vadd.f32 %v10423, 0.112945676
  %v10425 = vmul.f32 %v10407, %v10424
  %v10426 = vadd.f32 %v10425, 0.4994258
  %v10427 = vmul.f32 %v10407, %v10426
  %v10428 = vadd.f32 %v10427, 1.0
  %v10429 = vrcp.pop %v10428
  %v10430 = vmul.f32 %v10428, %v10429
  %v10431 = vsub.f32 1.0, %v10430
  %v10432 = vmul.f32 %v10429, %v10431
  %v10433 = vadd.f32 %v10429, %v10432
  %vm10434 = vweird.f32 %v10428
  %vm10435 = vweird.f32 %v10429
  %vm10436 = vmor %vm10434, %vm10435
  %v10437 = vsel %vm10436, %v10429, %v10433
  %v10438 = vand.u32 2147483647, %v10428
  %vm10439 = vcmp.eq.f32.partialorder %v10438, 8.507059e+37
  %v10440 = vand.u32 %v10428, 2147483648
  %v10441 = vor.u32 1.1754944e-38, %v10440
  %v10442 = vsel %vm10439, %v10441, %v10437
  %v10443 = vmul.f32 %v10418, %v10442
  %v10444 = vmin.f32 %v10443, 1.0
  %v10445 = vmax.f32 %v10444, -1.0
  %v10446 = vmul.f32 %v8120, %v8120
  %v10447 = vmin.f32 16.0, %v10446
  %v10448 = vmul.f32 %v10447, 2.1237322e-06
  %v10449 = vadd.f32 %v10448, 0.00028619796
  %v10450 = vmul.f32 %v10447, %v10449
  %v10451 = vadd.f32 %v10450, 0.0036580483
  %v10452 = vmul.f32 %v10447, %v10451
  %v10453 = vadd.f32 %v10452, 0.05243302
  %v10454 = vmul.f32 %v10447, %v10453
  %v10455 = vadd.f32 %v10454, 0.18741608
  %v10456 = vmul.f32 %v10447, %v10455
  %v10457 = vadd.f32 %v10456, 1.1283791
  %v10458 = vmul.f32 %v8120, %v10457
  %v10459 = vmul.f32 %v10447, 3.8918573e-05
  %v10460 = vadd.f32 %v10459, 0.001143296
  %v10461 = vmul.f32 %v10447, %v10460
  %v10462 = vadd.f32 %v10461, 0.014752088
  %v10463 = vmul.f32 %v10447, %v10462
  %v10464 = vadd.f32 %v10463, 0.112945676
  %v10465 = vmul.f32 %v10447, %v10464
  %v10466 = vadd.f32 %v10465, 0.4994258
  %v10467 = vmul.f32 %v10447, %v10466
  %v10468 = vadd.f32 %v10467, 1.0
  %v10469 = vrcp.pop %v10468
  %v10470 = vmul.f32 %v10468, %v10469
  %v10471 = vsub.f32 1.0, %v10470
  %v10472 = vmul.f32 %v10469, %v10471
  %v10473 = vadd.f32 %v10469, %v10472
  %vm10474 = vweird.f32 %v10468
  %vm10475 = vweird.f32 %v10469
  %vm10476 = vmor %vm10474, %vm10475
  %v10477 = vsel %vm10476, %v10469, %v10473
  %v10478 = vand.u32 2147483647, %v10468
  %vm10479 = vcmp.eq.f32.partialorder %v10478, 8.507059e+37
  %v10480 = vand.u32 %v10468, 2147483648
  %v10481 = vor.u32 1.1754944e-38, %v10480
  %v10482 = vsel %vm10479, %v10481, %v10477
  %v10483 = vmul.f32 %v10458, %v10482
  %v10484 = vmin.f32 %v10483, 1.0
  %v10485 = vmax.f32 %v10484, -1.0
  %v10486 = vmul.f32 %v8121, %v8121
  %v10487 = vmin.f32 16.0, %v10486
  %v10488 = vmul.f32 %v10487, 2.1237322e-06
  %v10489 = vadd.f32 %v10488, 0.00028619796
  %v10490 = vmul.f32 %v10487, %v10489
  %v10491 = vadd.f32 %v10490, 0.0036580483
  %v10492 = vmul.f32 %v10487, %v10491
  %v10493 = vadd.f32 %v10492, 0.05243302
  %v10494 = vmul.f32 %v10487, %v10493
  %v10495 = vadd.f32 %v10494, 0.18741608
  %v10496 = vmul.f32 %v10487, %v10495
  %v10497 = vadd.f32 %v10496, 1.1283791
  %v10498 = vmul.f32 %v8121, %v10497
  %v10499 = vmul.f32 %v10487, 3.8918573e-05
  %v10500 = vadd.f32 %v10499, 0.001143296
  %v10501 = vmul.f32 %v10487, %v10500
  %v10502 = vadd.f32 %v10501, 0.014752088
  %v10503 = vmul.f32 %v10487, %v10502
  %v10504 = vadd.f32 %v10503, 0.112945676
  %v10505 = vmul.f32 %v10487, %v10504
  %v10506 = vadd.f32 %v10505, 0.4994258
  %v10507 = vmul.f32 %v10487, %v10506
  %v10508 = vadd.f32 %v10507, 1.0
  %v10509 = vrcp.pop %v10508
  %v10510 = vmul.f32 %v10508, %v10509
  %v10511 = vsub.f32 1.0, %v10510
  %v10512 = vmul.f32 %v10509, %v10511
  %v10513 = vadd.f32 %v10509, %v10512
  %vm10514 = vweird.f32 %v10508
  %vm10515 = vweird.f32 %v10509
  %vm10516 = vmor %vm10514, %vm10515
  %v10517 = vsel %vm10516, %v10509, %v10513
  %v10518 = vand.u32 2147483647, %v10508
  %vm10519 = vcmp.eq.f32.partialorder %v10518, 8.507059e+37
  %v10520 = vand.u32 %v10508, 2147483648
  %v10521 = vor.u32 1.1754944e-38, %v10520
  %v10522 = vsel %vm10519, %v10521, %v10517
  %v10523 = vmul.f32 %v10498, %v10522
  %v10524 = vmin.f32 %v10523, 1.0
  %v10525 = vmax.f32 %v10524, -1.0
  %v10526 = vmul.f32 %v8122, %v8122
  %v10527 = vmin.f32 16.0, %v10526
  %v10528 = vmul.f32 %v10527, 2.1237322e-06
  %v10529 = vadd.f32 %v10528, 0.00028619796
  %v10530 = vmul.f32 %v10527, %v10529
  %v10531 = vadd.f32 %v10530, 0.0036580483
  %v10532 = vmul.f32 %v10527, %v10531
  %v10533 = vadd.f32 %v10532, 0.05243302
  %v10534 = vmul.f32 %v10527, %v10533
  %v10535 = vadd.f32 %v10534, 0.18741608
  %v10536 = vmul.f32 %v10527, %v10535
  %v10537 = vadd.f32 %v10536, 1.1283791
  %v10538 = vmul.f32 %v8122, %v10537
  %v10539 = vmul.f32 %v10527, 3.8918573e-05
  %v10540 = vadd.f32 %v10539, 0.001143296
  %v10541 = vmul.f32 %v10527, %v10540
  %v10542 = vadd.f32 %v10541, 0.014752088
  %v10543 = vmul.f32 %v10527, %v10542
  %v10544 = vadd.f32 %v10543, 0.112945676
  %v10545 = vmul.f32 %v10527, %v10544
  %v10546 = vadd.f32 %v10545, 0.4994258
  %v10547 = vmul.f32 %v10527, %v10546
  %v10548 = vadd.f32 %v10547, 1.0
  %v10549 = vrcp.pop %v10548
  %v10550 = vmul.f32 %v10548, %v10549
  %v10551 = vsub.f32 1.0, %v10550
  %v10552 = vmul.f32 %v10549, %v10551
  %v10553 = vadd.f32 %v10549, %v10552
  %vm10554 = vweird.f32 %v10548
  %vm10555 = vweird.f32 %v10549
  %vm10556 = vmor %vm10554, %vm10555
  %v10557 = vsel %vm10556, %v10549, %v10553
  %v10558 = vand.u32 2147483647, %v10548
  %vm10559 = vcmp.eq.f32.partialorder %v10558, 8.507059e+37
  %v10560 = vand.u32 %v10548, 2147483648
  %v10561 = vor.u32 1.1754944e-38, %v10560
  %v10562 = vsel %vm10559, %v10561, %v10557
  %v10563 = vmul.f32 %v10538, %v10562
  %v10564 = vmin.f32 %v10563, 1.0
  %v10565 = vmax.f32 %v10564, -1.0
  %v10566 = vmul.f32 %v8123, %v8123
  %v10567 = vmin.f32 16.0, %v10566
  %v10568 = vmul.f32 %v10567, 2.1237322e-06
  %v10569 = vadd.f32 %v10568, 0.00028619796
  %v10570 = vmul.f32 %v10567, %v10569
  %v10571 = vadd.f32 %v10570, 0.0036580483
  %v10572 = vmul.f32 %v10567, %v10571
  %v10573 = vadd.f32 %v10572, 0.05243302
  %v10574 = vmul.f32 %v10567, %v10573
  %v10575 = vadd.f32 %v10574, 0.18741608
  %v10576 = vmul.f32 %v10567, %v10575
  %v10577 = vadd.f32 %v10576, 1.1283791
  %v10578 = vmul.f32 %v8123, %v10577
  %v10579 = vmul.f32 %v10567, 3.8918573e-05
  %v10580 = vadd.f32 %v10579, 0.001143296
  %v10581 = vmul.f32 %v10567, %v10580
  %v10582 = vadd.f32 %v10581, 0.014752088
  %v10583 = vmul.f32 %v10567, %v10582
  %v10584 = vadd.f32 %v10583, 0.112945676
  %v10585 = vmul.f32 %v10567, %v10584
  %v10586 = vadd.f32 %v10585, 0.4994258
  %v10587 = vmul.f32 %v10567, %v10586
  %v10588 = vadd.f32 %v10587, 1.0
  %v10589 = vrcp.pop %v10588
  %v10590 = vmul.f32 %v10588, %v10589
  %v10591 = vsub.f32 1.0, %v10590
  %v10592 = vmul.f32 %v10589, %v10591
  %v10593 = vadd.f32 %v10589, %v10592
  %vm10594 = vweird.f32 %v10588
  %vm10595 = vweird.f32 %v10589
  %vm10596 = vmor %vm10594, %vm10595
  %v10597 = vsel %vm10596, %v10589, %v10593
  %v10598 = vand.u32 2147483647, %v10588
  %vm10599 = vcmp.eq.f32.partialorder %v10598, 8.507059e+37
  %v10600 = vand.u32 %v10588, 2147483648
  %v10601 = vor.u32 1.1754944e-38, %v10600
  %v10602 = vsel %vm10599, %v10601, %v10597
  %v10603 = vmul.f32 %v10578, %v10602
  %v10604 = vmin.f32 %v10603, 1.0
  %v10605 = vmax.f32 %v10604, -1.0
  %v10606 = vmul.f32 %v8124, %v8124
  %v10607 = vmin.f32 16.0, %v10606
  %v10608 = vmul.f32 %v10607, 2.1237322e-06
  %v10609 = vadd.f32 %v10608, 0.00028619796
  %v10610 = vmul.f32 %v10607, %v10609
  %v10611 = vadd.f32 %v10610, 0.0036580483
  %v10612 = vmul.f32 %v10607, %v10611
  %v10613 = vadd.f32 %v10612, 0.05243302
  %v10614 = vmul.f32 %v10607, %v10613
  %v10615 = vadd.f32 %v10614, 0.18741608
  %v10616 = vmul.f32 %v10607, %v10615
  %v10617 = vadd.f32 %v10616, 1.1283791
  %v10618 = vmul.f32 %v8124, %v10617
  %v10619 = vmul.f32 %v10607, 3.8918573e-05
  %v10620 = vadd.f32 %v10619, 0.001143296
  %v10621 = vmul.f32 %v10607, %v10620
  %v10622 = vadd.f32 %v10621, 0.014752088
  %v10623 = vmul.f32 %v10607, %v10622
  %v10624 = vadd.f32 %v10623, 0.112945676
  %v10625 = vmul.f32 %v10607, %v10624
  %v10626 = vadd.f32 %v10625, 0.4994258
  %v10627 = vmul.f32 %v10607, %v10626
  %v10628 = vadd.f32 %v10627, 1.0
  %v10629 = vrcp.pop %v10628
  %v10630 = vmul.f32 %v10628, %v10629
  %v10631 = vsub.f32 1.0, %v10630
  %v10632 = vmul.f32 %v10629, %v10631
  %v10633 = vadd.f32 %v10629, %v10632
  %vm10634 = vweird.f32 %v10628
  %vm10635 = vweird.f32 %v10629
  %vm10636 = vmor %vm10634, %vm10635
  %v10637 = vsel %vm10636, %v10629, %v10633
  %v10638 = vand.u32 2147483647, %v10628
  %vm10639 = vcmp.eq.f32.partialorder %v10638, 8.507059e+37
  %v10640 = vand.u32 %v10628, 2147483648
  %v10641 = vor.u32 1.1754944e-38, %v10640
  %v10642 = vsel %vm10639, %v10641, %v10637
  %v10643 = vmul.f32 %v10618, %v10642
  %v10644 = vmin.f32 %v10643, 1.0
  %v10645 = vmax.f32 %v10644, -1.0
  %v10646 = vmul.f32 %v8125, %v8125
  %v10647 = vmin.f32 16.0, %v10646
  %v10648 = vmul.f32 %v10647, 2.1237322e-06
  %v10649 = vadd.f32 %v10648, 0.00028619796
  %v10650 = vmul.f32 %v10647, %v10649
  %v10651 = vadd.f32 %v10650, 0.0036580483
  %v10652 = vmul.f32 %v10647, %v10651
  %v10653 = vadd.f32 %v10652, 0.05243302
  %v10654 = vmul.f32 %v10647, %v10653
  %v10655 = vadd.f32 %v10654, 0.18741608
  %v10656 = vmul.f32 %v10647, %v10655
  %v10657 = vadd.f32 %v10656, 1.1283791
  %v10658 = vmul.f32 %v8125, %v10657
  %v10659 = vmul.f32 %v10647, 3.8918573e-05
  %v10660 = vadd.f32 %v10659, 0.001143296
  %v10661 = vmul.f32 %v10647, %v10660
  %v10662 = vadd.f32 %v10661, 0.014752088
  %v10663 = vmul.f32 %v10647, %v10662
  %v10664 = vadd.f32 %v10663, 0.112945676
  %v10665 = vmul.f32 %v10647, %v10664
  %v10666 = vadd.f32 %v10665, 0.4994258
  %v10667 = vmul.f32 %v10647, %v10666
  %v10668 = vadd.f32 %v10667, 1.0
  %v10669 = vrcp.pop %v10668
  %v10670 = vmul.f32 %v10668, %v10669
  %v10671 = vsub.f32 1.0, %v10670
  %v10672 = vmul.f32 %v10669, %v10671
  %v10673 = vadd.f32 %v10669, %v10672
  %vm10674 = vweird.f32 %v10668
  %vm10675 = vweird.f32 %v10669
  %vm10676 = vmor %vm10674, %vm10675
  %v10677 = vsel %vm10676, %v10669, %v10673
  %v10678 = vand.u32 2147483647, %v10668
  %vm10679 = vcmp.eq.f32.partialorder %v10678, 8.507059e+37
  %v10680 = vand.u32 %v10668, 2147483648
  %v10681 = vor.u32 1.1754944e-38, %v10680
  %v10682 = vsel %vm10679, %v10681, %v10677
  %v10683 = vmul.f32 %v10658, %v10682
  %v10684 = vmin.f32 %v10683, 1.0
  %v10685 = vmax.f32 %v10684, -1.0
  %v10686 = vadd.f32 %v8165, 1.0
  %v10687 = vadd.f32 %v8205, 1.0
  %v10688 = vadd.f32 %v8245, 1.0
  %v10689 = vadd.f32 %v8285, 1.0
  %v10690 = vadd.f32 %v8325, 1.0
  %v10691 = vadd.f32 %v8365, 1.0
  %v10692 = vadd.f32 %v8405, 1.0
  %v10693 = vadd.f32 %v8445, 1.0
  %v10694 = vadd.f32 %v8485, 1.0
  %v10695 = vadd.f32 %v8525, 1.0
  %v10696 = vadd.f32 %v8565, 1.0
  %v10697 = vadd.f32 %v8605, 1.0
  %v10698 = vadd.f32 %v8645, 1.0
  %v10699 = vadd.f32 %v8685, 1.0
  %v10700 = vadd.f32 %v8725, 1.0
  %v10701 = vadd.f32 %v8765, 1.0
  %v10702 = vadd.f32 %v8805, 1.0
  %v10703 = vadd.f32 %v8845, 1.0
  %v10704 = vadd.f32 %v8885, 1.0
  %v10705 = vadd.f32 %v8925, 1.0
  %v10706 = vadd.f32 %v8965, 1.0
  %v10707 = vadd.f32 %v9005, 1.0
  %v10708 = vadd.f32 %v9045, 1.0
  %v10709 = vadd.f32 %v9085, 1.0
  %v10710 = vadd.f32 %v9125, 1.0
  %v10711 = vadd.f32 %v9165, 1.0
  %v10712 = vadd.f32 %v9205, 1.0
  %v10713 = vadd.f32 %v9245, 1.0
  %v10714 = vadd.f32 %v9285, 1.0
  %v10715 = vadd.f32 %v9325, 1.0
  %v10716 = vadd.f32 %v9365, 1.0
  %v10717 = vadd.f32 %v9405, 1.0
  %v10718 = vadd.f32 %v9445, 1.0
  %v10719 = vadd.f32 %v9485, 1.0
  %v10720 = vadd.f32 %v9525, 1.0
  %v10721 = vadd.f32 %v9565, 1.0
  %v10722 = vadd.f32 %v9605, 1.0
  %v10723 = vadd.f32 %v9645, 1.0
  %v10724 = vadd.f32 %v9685, 1.0
  %v10725 = vadd.f32 %v9725, 1.0
  %v10726 = vadd.f32 %v9765, 1.0
  %v10727 = vadd.f32 %v9805, 1.0
  %v10728 = vadd.f32 %v9845, 1.0
  %v10729 = vadd.f32 %v9885, 1.0
  %v10730 = vadd.f32 %v9925, 1.0
  %v10731 = vadd.f32 %v9965, 1.0
  %v10732 = vadd.f32 %v10005, 1.0
  %v10733 = vadd.f32 %v10045, 1.0
  %v10734 = vadd.f32 %v10085, 1.0
  %v10735 = vadd.f32 %v10125, 1.0
  %v10736 = vadd.f32 %v10165, 1.0
  %v10737 = vadd.f32 %v10205, 1.0
  %v10738 = vadd.f32 %v10245, 1.0
  %v10739 = vadd.f32 %v10285, 1.0
  %v10740 = vadd.f32 %v10325, 1.0
  %v10741 = vadd.f32 %v10365, 1.0
  %v10742 = vadd.f32 %v10405, 1.0
  %v10743 = vadd.f32 %v10445, 1.0
  %v10744 = vadd.f32 %v10485, 1.0
  %v10745 = vadd.f32 %v10525, 1.0
  %v10746 = vadd.f32 %v10565, 1.0
  %v10747 = vadd.f32 %v10605, 1.0
  %v10748 = vadd.f32 %v10645, 1.0
  %v10749 = vadd.f32 %v10685, 1.0
  %v10750 = vmul.f32 %v7998, %v10686
  %v10751 = vmul.f32 %v7999, %v10687
  %v10752 = vmul.f32 %v8000, %v10688
  %v10753 = vmul.f32 %v8001, %v10689
  %v10754 = vmul.f32 %v8002, %v10690
  %v10755 = vmul.f32 %v8003, %v10691
  %v10756 = vmul.f32 %v8004, %v10692
  %v10757 = vmul.f32 %v8005, %v10693
  %v10758 = vmul.f32 %v8006, %v10694
  %v10759 = vmul.f32 %v8007, %v10695
  %v10760 = vmul.f32 %v8008, %v10696
  %v10761 = vmul.f32 %v8009, %v10697
  %v10762 = vmul.f32 %v8010, %v10698
  %v10763 = vmul.f32 %v8011, %v10699
  %v10764 = vmul.f32 %v8012, %v10700
  %v10765 = vmul.f32 %v8013, %v10701
  %v10766 = vmul.f32 %v8014, %v10702
  %v10767 = vmul.f32 %v8015, %v10703
  %v10768 = vmul.f32 %v8016, %v10704
  %v10769 = vmul.f32 %v8017, %v10705
  %v10770 = vmul.f32 %v8018, %v10706
  %v10771 = vmul.f32 %v8019, %v10707
  %v10772 = vmul.f32 %v8020, %v10708
  %v10773 = vmul.f32 %v8021, %v10709
  %v10774 = vmul.f32 %v8022, %v10710
  %v10775 = vmul.f32 %v8023, %v10711
  %v10776 = vmul.f32 %v8024, %v10712
  %v10777 = vmul.f32 %v8025, %v10713
  %v10778 = vmul.f32 %v8026, %v10714
  %v10779 = vmul.f32 %v8027, %v10715
  %v10780 = vmul.f32 %v8028, %v10716
  %v10781 = vmul.f32 %v8029, %v10717
  %v10782 = vmul.f32 %v8030, %v10718
  %v10783 = vmul.f32 %v8031, %v10719
  %v10784 = vmul.f32 %v8032, %v10720
  %v10785 = vmul.f32 %v8033, %v10721
  %v10786 = vmul.f32 %v8034, %v10722
  %v10787 = vmul.f32 %v8035, %v10723
  %v10788 = vmul.f32 %v8036, %v10724
  %v10789 = vmul.f32 %v8037, %v10725
  %v10790 = vmul.f32 %v8038, %v10726
  %v10791 = vmul.f32 %v8039, %v10727
  %v10792 = vmul.f32 %v8040, %v10728
  %v10793 = vmul.f32 %v8041, %v10729
  %v10794 = vmul.f32 %v8042, %v10730
  %v10795 = vmul.f32 %v8043, %v10731
  %v10796 = vmul.f32 %v8044, %v10732
  %v10797 = vmul.f32 %v8045, %v10733
  %v10798 = vmul.f32 %v8046, %v10734
  %v10799 = vmul.f32 %v8047, %v10735
  %v10800 = vmul.f32 %v8048, %v10736
  %v10801 = vmul.f32 %v8049, %v10737
  %v10802 = vmul.f32 %v8050, %v10738
  %v10803 = vmul.f32 %v8051, %v10739
  %v10804 = vmul.f32 %v8052, %v10740
  %v10805 = vmul.f32 %v8053, %v10741
  %v10806 = vmul.f32 %v8054, %v10742
  %v10807 = vmul.f32 %v8055, %v10743
  %v10808 = vmul.f32 %v8056, %v10744
  %v10809 = vmul.f32 %v8057, %v10745
  %v10810 = vmul.f32 %v8058, %v10746
  %v10811 = vmul.f32 %v8059, %v10747
  %v10812 = vmul.f32 %v8060, %v10748
  %v10813 = vmul.f32 %v8061, %v10749
  %v10814 = vmax.f32 %v10750, %v10752
  %v10815 = vmax.f32 %v10751, %v10753
  %v10816 = vmax.f32 %v10754, %v10756
  %v10817 = vmax.f32 %v10755, %v10757
  %v10818 = vmax.f32 %v10758, %v10760
  %v10819 = vmax.f32 %v10759, %v10761
  %v10820 = vmax.f32 %v10762, %v10764
  %v10821 = vmax.f32 %v10763, %v10765
  %v10822 = vmax.f32 %v10766, %v10768
  %v10823 = vmax.f32 %v10767, %v10769
  %v10824 = vmax.f32 %v10770, %v10772
  %v10825 = vmax.f32 %v10771, %v10773
  %v10826 = vmax.f32 %v10774, %v10776
  %v10827 = vmax.f32 %v10775, %v10777
  %v10828 = vmax.f32 %v10778, %v10780
  %v10829 = vmax.f32 %v10779, %v10781
  %v10830 = vmax.f32 %v10782, %v10784
  %v10831 = vmax.f32 %v10783, %v10785
  %v10832 = vmax.f32 %v10786, %v10788
  %v10833 = vmax.f32 %v10787, %v10789
  %v10834 = vmax.f32 %v10790, %v10792
  %v10835 = vmax.f32 %v10791, %v10793
  %v10836 = vmax.f32 %v10794, %v10796
  %v10837 = vmax.f32 %v10795, %v10797
  %v10838 = vmax.f32 %v10798, %v10800
  %v10839 = vmax.f32 %v10799, %v10801
  %v10840 = vmax.f32 %v10802, %v10804
  %v10841 = vmax.f32 %v10803, %v10805
  %v10842 = vmax.f32 %v10806, %v10808
  %v10843 = vmax.f32 %v10807, %v10809
  %v10844 = vmax.f32 %v10810, %v10812
  %v10845 = vmax.f32 %v10811, %v10813
  %10846 = vst.msk [vmem:[#allocation4] sm:$0xff] %vm513, %v10814
  %10847 = vst.msk [vmem:[#allocation4 + $0x8] sm:$0xff] %vm513, %v10815
  %10848 = vst.msk [vmem:[#allocation4 + $0x10] sm:$0xff] %vm513, %v10816
  %10849 = vst.msk [vmem:[#allocation4 + $0x18] sm:$0xff] %vm513, %v10817
  %10850 = vst.msk [vmem:[#allocation4 + $0x20] sm:$0xff] %vm513, %v10818
  %10851 = vst.msk [vmem:[#allocation4 + $0x28] sm:$0xff] %vm513, %v10819
  %10852 = vst.msk [vmem:[#allocation4 + $0x30] sm:$0xff] %vm513, %v10820
  %10853 = vst.msk [vmem:[#allocation4 + $0x38] sm:$0xff] %vm513, %v10821
  %10854 = vst.msk [vmem:[#allocation4 + $0x40] sm:$0xff] %vm513, %v10822
  %10855 = vst.msk [vmem:[#allocation4 + $0x48] sm:$0xff] %vm513, %v10823
  %10856 = vst.msk [vmem:[#allocation4 + $0x50] sm:$0xff] %vm513, %v10824
  %10857 = vst.msk [vmem:[#allocation4 + $0x58] sm:$0xff] %vm513, %v10825
  %10858 = vst.msk [vmem:[#allocation4 + $0x60] sm:$0xff] %vm513, %v10826
  %10859 = vst.msk [vmem:[#allocation4 + $0x68] sm:$0xff] %vm513, %v10827
  %10860 = vst.msk [vmem:[#allocation4 + $0x70] sm:$0xff] %vm513, %v10828
  %10861 = vst.msk [vmem:[#allocation4 + $0x78] sm:$0xff] %vm513, %v10829
  %10862 = vst.msk [vmem:[#allocation4 + $0x80] sm:$0xff] %vm513, %v10830
  %10863 = vst.msk [vmem:[#allocation4 + $0x88] sm:$0xff] %vm513, %v10831
  %10864 = vst.msk [vmem:[#allocation4 + $0x90] sm:$0xff] %vm513, %v10832
  %10865 = vst.msk [vmem:[#allocation4 + $0x98] sm:$0xff] %vm513, %v10833
  %10866 = vst.msk [vmem:[#allocation4 + $0xa0] sm:$0xff] %vm513, %v10834
  %10867 = vst.msk [vmem:[#allocation4 + $0xa8] sm:$0xff] %vm513, %v10835
  %10868 = vst.msk [vmem:[#allocation4 + $0xb0] sm:$0xff] %vm513, %v10836
  %10869 = vst.msk [vmem:[#allocation4 + $0xb8] sm:$0xff] %vm513, %v10837
  %10870 = vst.msk [vmem:[#allocation4 + $0xc0] sm:$0xff] %vm513, %v10838
  %10871 = vst.msk [vmem:[#allocation4 + $0xc8] sm:$0xff] %vm513, %v10839
  %10872 = vst.msk [vmem:[#allocation4 + $0xd0] sm:$0xff] %vm513, %v10840
  %10873 = vst.msk [vmem:[#allocation4 + $0xd8] sm:$0xff] %vm513, %v10841
  %10874 = vst.msk [vmem:[#allocation4 + $0xe0] sm:$0xff] %vm513, %v10842
  %10875 = vst.msk [vmem:[#allocation4 + $0xe8] sm:$0xff] %vm513, %v10843
  %10876 = vst.msk [vmem:[#allocation4 + $0xf0] sm:$0xff] %vm513, %v10844
  %10877 = vst.msk [vmem:[#allocation4 + $0xf8] sm:$0xff] %vm513, %v10845
  %v10878 = vld [vmem:[#allocation4] ss:$2 sm:$0xff]
  %s10879 = scalar_lea.vmem [#allocation4], 16
  %v10880 = vld [vmem:[%s10879] ss:$2 sm:$0xff]
  %s10881 = scalar_lea.vmem [#allocation4], 32
  %v10882 = vld [vmem:[%s10881] ss:$2 sm:$0xff]
  %s10883 = scalar_lea.vmem [#allocation4], 48
  %v10884 = vld [vmem:[%s10883] ss:$2 sm:$0xff]
  %s10885 = scalar_lea.vmem [#allocation4], 64
  %v10886 = vld [vmem:[%s10885] ss:$2 sm:$0xff]
  %s10887 = scalar_lea.vmem [#allocation4], 80
  %v10888 = vld [vmem:[%s10887] ss:$2 sm:$0xff]
  %s10889 = scalar_lea.vmem [#allocation4], 96
  %v10890 = vld [vmem:[%s10889] ss:$2 sm:$0xff]
  %s10891 = scalar_lea.vmem [#allocation4], 112
  %v10892 = vld [vmem:[%s10891] ss:$2 sm:$0xff]
  %s10893 = scalar_lea.vmem [#allocation4], 128
  %v10894 = vld [vmem:[%s10893] ss:$2 sm:$0xff]
  %s10895 = scalar_lea.vmem [#allocation4], 144
  %v10896 = vld [vmem:[%s10895] ss:$2 sm:$0xff]
  %s10897 = scalar_lea.vmem [#allocation4], 160
  %v10898 = vld [vmem:[%s10897] ss:$2 sm:$0xff]
  %s10899 = scalar_lea.vmem [#allocation4], 176
  %v10900 = vld [vmem:[%s10899] ss:$2 sm:$0xff]
  %s10901 = scalar_lea.vmem [#allocation4], 192
  %v10902 = vld [vmem:[%s10901] ss:$2 sm:$0xff]
  %s10903 = scalar_lea.vmem [#allocation4], 208
  %v10904 = vld [vmem:[%s10903] ss:$2 sm:$0xff]
  %s10905 = scalar_lea.vmem [#allocation4], 224
  %v10906 = vld [vmem:[%s10905] ss:$2 sm:$0xff]
  %s10907 = scalar_lea.vmem [#allocation4], 240
  %v10908 = vld [vmem:[%s10907] ss:$2 sm:$0xff]
  %s10909 = scalar_lea.vmem [#allocation4], 1
  %v10910 = vld [vmem:[%s10909] ss:$2 sm:$0xff]
  %s10911 = scalar_lea.vmem [#allocation4], 17
  %v10912 = vld [vmem:[%s10911] ss:$2 sm:$0xff]
  %s10913 = scalar_lea.vmem [#allocation4], 33
  %v10914 = vld [vmem:[%s10913] ss:$2 sm:$0xff]
  %s10915 = scalar_lea.vmem [#allocation4], 49
  %v10916 = vld [vmem:[%s10915] ss:$2 sm:$0xff]
  %s10917 = scalar_lea.vmem [#allocation4], 65
  %v10918 = vld [vmem:[%s10917] ss:$2 sm:$0xff]
  %s10919 = scalar_lea.vmem [#allocation4], 81
  %v10920 = vld [vmem:[%s10919] ss:$2 sm:$0xff]
  %s10921 = scalar_lea.vmem [#allocation4], 97
  %v10922 = vld [vmem:[%s10921] ss:$2 sm:$0xff]
  %s10923 = scalar_lea.vmem [#allocation4], 113
  %v10924 = vld [vmem:[%s10923] ss:$2 sm:$0xff]
  %s10925 = scalar_lea.vmem [#allocation4], 129
  %v10926 = vld [vmem:[%s10925] ss:$2 sm:$0xff]
  %s10927 = scalar_lea.vmem [#allocation4], 145
  %v10928 = vld [vmem:[%s10927] ss:$2 sm:$0xff]
  %s10929 = scalar_lea.vmem [#allocation4], 161
  %v10930 = vld [vmem:[%s10929] ss:$2 sm:$0xff]
  %s10931 = scalar_lea.vmem [#allocation4], 177
  %v10932 = vld [vmem:[%s10931] ss:$2 sm:$0xff]
  %s10933 = scalar_lea.vmem [#allocation4], 193
  %v10934 = vld [vmem:[%s10933] ss:$2 sm:$0xff]
  %s10935 = scalar_lea.vmem [#allocation4], 209
  %v10936 = vld [vmem:[%s10935] ss:$2 sm:$0xff]
  %s10937 = scalar_lea.vmem [#allocation4], 225
  %v10938 = vld [vmem:[%s10937] ss:$2 sm:$0xff]
  %s10939 = scalar_lea.vmem [#allocation4], 241
  %v10940 = vld [vmem:[%s10939] ss:$2 sm:$0xff]
  %v10941 = vmax.f32 %v10878, %v10910
  %v10942 = vmax.f32 %v10880, %v10912
  %v10943 = vmax.f32 %v10882, %v10914
  %v10944 = vmax.f32 %v10884, %v10916
  %v10945 = vmax.f32 %v10886, %v10918
  %v10946 = vmax.f32 %v10888, %v10920
  %v10947 = vmax.f32 %v10890, %v10922
  %v10948 = vmax.f32 %v10892, %v10924
  %v10949 = vmax.f32 %v10894, %v10926
  %v10950 = vmax.f32 %v10896, %v10928
  %v10951 = vmax.f32 %v10898, %v10930
  %v10952 = vmax.f32 %v10900, %v10932
  %v10953 = vmax.f32 %v10902, %v10934
  %v10954 = vmax.f32 %v10904, %v10936
  %v10955 = vmax.f32 %v10906, %v10938
  %v10956 = vmax.f32 %v10908, %v10940
  %10957 = vst.msk [vmem:[%s9] sm:$0xff] %vm513, %v10941
  %10958 = vst.msk [vmem:[%s9 + $0x8] sm:$0xff] %vm513, %v10942
  %10959 = vst.msk [vmem:[%s9 + $0x10] sm:$0xff] %vm513, %v10943
  %10960 = vst.msk [vmem:[%s9 + $0x18] sm:$0xff] %vm513, %v10944
  %10961 = vst.msk [vmem:[%s9 + $0x20] sm:$0xff] %vm513, %v10945
  %10962 = vst.msk [vmem:[%s9 + $0x28] sm:$0xff] %vm513, %v10946
  %10963 = vst.msk [vmem:[%s9 + $0x30] sm:$0xff] %vm513, %v10947
  %10964 = vst.msk [vmem:[%s9 + $0x38] sm:$0xff] %vm513, %v10948
  %10965 = vst.msk [vmem:[%s9 + $0x40] sm:$0xff] %vm513, %v10949
  %10966 = vst.msk [vmem:[%s9 + $0x48] sm:$0xff] %vm513, %v10950
  %10967 = vst.msk [vmem:[%s9 + $0x50] sm:$0xff] %vm513, %v10951
  %10968 = vst.msk [vmem:[%s9 + $0x58] sm:$0xff] %vm513, %v10952
  %10969 = vst.msk [vmem:[%s9 + $0x60] sm:$0xff] %vm513, %v10953
  %10970 = vst.msk [vmem:[%s9 + $0x68] sm:$0xff] %vm513, %v10954
  %10971 = vst.msk [vmem:[%s9 + $0x70] sm:$0xff] %vm513, %v10955
  %10972 = vst.msk [vmem:[%s9 + $0x78] sm:$0xff] %vm513, %v10956
  // Predicated region
  $region38: #{unet_down.1} parent=0 // pred_check
    _
  $region39: #{unet_down.1} parent=0 // pred_check_branch
    %10974 = sbr.rel (0) target = $region41
  $region40: #{unet_down.1} parent=0 // pred_region
    _
  $region41: #{unet_down.1} parent=0 // pred_fallthru
    _
  // Predicated region
  $region42: #{unet_down.1} parent=0 // pred_check
    _
  $region43: #{unet_down.1} parent=0 // pred_check_branch
    %10976 = sbr.rel (0) target = $region45
  $region44: #{unet_down.1} parent=0 // pred_region
    _
  $region45: #{unet_down.1} parent=0 // pred_fallthru
    _

</llo_original>
